<compile_context>
chip_gen: v6e
topology: v6e:2x2x1
jax: 0.10.0
libtpu: 0.0.40
codegen_flags: <defaults>
</compile_context>

<pallas_src>
import functools
import random

import jax
import jax.numpy as jnp
from jax import lax
from jax.experimental import pallas as pl
from jax.experimental.pallas import tpu as pltpu

SUB = 8      # sublane width  -> pad batch
LANE = 128   # lane width     -> pad E / H / V


def _ceil_to(x, m):
    return ((x + m - 1) // m) * m


# ------------------------------ fused kernel ------------------------------

def _seq2seq_kernel(src_ids_ref, tgt_ids_ref, tf_ref,            # SMEM (scalar prefetch)
                    enc_emb_ref, enc_w_ref, enc_b_ref,            # VMEM-resident weights
                    dec_emb_ref, dec_w_ref, dec_b_ref,
                    wout_ref, bout_ref,
                    out_ref,                                      # (L, BP, VP) logits
                    xh_ref, c_ref,                                # VMEM scratch
                    *, batch, src_len, steps, ep, hp, svp, vp):
    bp = xh_ref.shape[0]

    def onehot(ids_ref, base, width):
        """(BP, width) f32 one-hot from SMEM token ids (padded batch rows -> 0)."""
        row = lax.broadcasted_iota(jnp.int32, (bp, width), 0)
        lane = lax.broadcasted_iota(jnp.int32, (bp, width), 1)
        ids = jnp.full((bp, width), -1, jnp.int32)
        for b in range(batch):                         # static unroll, tiny
            ids = jnp.where(row == b, ids_ref[base + b], ids)
        return (lane == ids).astype(jnp.float32)

    def lstm_step(w_ref, b_ref):
        """Merged [x | h] @ [W_ih; W_hh] gate matmul; updates h (in xh) and c."""
        gates = jnp.dot(xh_ref[...].astype(jnp.bfloat16), w_ref[...],
                        preferred_element_type=jnp.float32) + b_ref[...]
        i_g = jax.nn.sigmoid(gates[:, 0 * hp:1 * hp])
        f_g = jax.nn.sigmoid(gates[:, 1 * hp:2 * hp])
        g_g = jnp.tanh(gates[:, 2 * hp:3 * hp])
        o_g = jax.nn.sigmoid(gates[:, 3 * hp:4 * hp])
        c_new = f_g * c_ref[...] + i_g * g_g
        h_new = o_g * jnp.tanh(c_new)
        c_ref[...] = c_new
        xh_ref[:, ep:ep + hp] = h_new
        return h_new

    # zero initial hidden / cell (nn.LSTM default) and outputs[:, 0, :] = 0
    xh_ref[:, ep:ep + hp] = jnp.zeros((bp, hp), jnp.float32)
    c_ref[...] = jnp.zeros_like(c_ref)
    out_ref[0] = jnp.zeros((bp, vp), jnp.float32)

    # ---------------- encoder: fully-unrolled recurrence over src_len ----------------
    for s in range(src_len):
        x_oh = onehot(src_ids_ref, s * batch, svp)
        x_emb = jnp.dot(x_oh.astype(jnp.bfloat16), enc_emb_ref[...],
                        preferred_element_type=jnp.float32)
        xh_ref[:, 0:ep] = x_emb
        lstm_step(enc_w_ref, enc_b_ref)

    # encoder final h/c already sit in xh_ref[:, ep:] / c_ref; num_layers match
    # (1 == 1) so hidden/cell pass straight through to the decoder.

    # ---------------- decoder: fully-unrolled greedy / teacher-forced loop ----------------
    prev_oh = None
    for d in range(steps):                             # decode step d -> outputs[:, d+1]
        teacher_oh = onehot(tgt_ids_ref, d * batch, vp)       # one-hot of target[:, d]
        if d == 0:
            x_oh = teacher_oh                          # first input is always target[:, 0]
        else:
            # teacher-forcing decision drawn at the end of the previous ref step
            use_t = (tf_ref[d - 1] != 0).astype(jnp.float32)
            x_oh = use_t * teacher_oh + (1.0 - use_t) * prev_oh

        x_emb = jnp.dot(x_oh.astype(jnp.bfloat16), dec_emb_ref[...],
                        preferred_element_type=jnp.float32)
        xh_ref[:, 0:ep] = x_emb
        h_new = lstm_step(dec_w_ref, dec_b_ref)

        # fused output projection (padded vocab lanes carry a -1e30 bias)
        logits = jnp.dot(h_new.astype(jnp.bfloat16), wout_ref[...],
                         preferred_element_type=jnp.float32) + bout_ref[...]
        out_ref[d + 1] = logits

        if d + 1 < steps:
            # greedy next-token one-hot (first-max semantics, like torch.argmax)
            m = jnp.max(logits, axis=-1, keepdims=True)
            lane = lax.broadcasted_iota(jnp.int32, logits.shape, 1)
            first = jnp.min(jnp.where(logits == m, lane, vp), axis=-1, keepdims=True)
            prev_oh = (lane == first).astype(jnp.float32)


# ------------------------------ pallas_call wrapper ------------------------------

def seq2seq_pallas(src_flat, tgt_flat, tf_mask, kp, *, batch, src_len, tgt_len,
                   bp, ep, hp, svp, vp):
    steps = tgt_len - 1
    kernel = functools.partial(_seq2seq_kernel, batch=batch, src_len=src_len,
                               steps=steps, ep=ep, hp=hp, svp=svp, vp=vp)
    const2 = lambda i, src, tgt, tf: (0, 0)
    const3 = lambda i, src, tgt, tf: (0, 0, 0)
    return pl.pallas_call(
        kernel,
        out_shape=jax.ShapeDtypeStruct((tgt_len, bp, vp), jnp.float32),
        grid_spec=pltpu.PrefetchScalarGridSpec(
            num_scalar_prefetch=3,        # src ids, tgt ids, teacher-forcing mask (SMEM)
            grid=(1,),                    # whole recurrence runs in a single grid step
            in_specs=[
                pl.BlockSpec((svp, ep), const2),             # enc_emb   (resident)
                pl.BlockSpec((ep + hp, 4 * hp), const2),     # enc W_lstm
                pl.BlockSpec((1, 4 * hp), const2),           # enc b_lstm
                pl.BlockSpec((vp, ep), const2),              # dec_emb
                pl.BlockSpec((ep + hp, 4 * hp), const2),     # dec W_lstm
                pl.BlockSpec((1, 4 * hp), const2),           # dec b_lstm
                pl.BlockSpec((hp, vp), const2),              # W_out
                pl.BlockSpec((1, vp), const2),               # b_out
            ],
            out_specs=pl.BlockSpec((tgt_len, bp, vp), const3),
            scratch_shapes=[pltpu.VMEM((bp, ep + hp), jnp.float32),   # [x | h]
                            pltpu.VMEM((bp, hp), jnp.float32)]),      # c
        compiler_params=pltpu.CompilerParams(
            dimension_semantics=("arbitrary",)),
    )(src_flat, tgt_flat, tf_mask,
      kp["enc_emb"], kp["enc_w"], kp["enc_b"],
      kp["dec_emb"], kp["dec_w"], kp["dec_b"],
      kp["dec_wout"], kp["dec_bout"])


# ------------------------------ Parameters ------------------------------

def init_params(key, src_vocab, tgt_vocab, emb_dim, hidden):
    ks = jax.random.split(key, 12)
    s = 1.0 / jnp.sqrt(hidden)

    def u(k, shape):
        return jax.random.uniform(k, shape, jnp.float32, -s, s)

    return dict(
        enc_emb=u(ks[0], (src_vocab, emb_dim)),
        enc_wih=u(ks[1], (emb_dim, 4 * hidden)),
        enc_whh=u(ks[2], (hidden, 4 * hidden)),
        enc_bih=u(ks[3], (1, 4 * hidden)),
        enc_bhh=u(ks[4], (1, 4 * hidden)),
        dec_emb=u(ks[5], (tgt_vocab, emb_dim)),
        dec_wih=u(ks[6], (emb_dim, 4 * hidden)),
        dec_whh=u(ks[7], (hidden, 4 * hidden)),
        dec_bih=u(ks[8], (1, 4 * hidden)),
        dec_bhh=u(ks[9], (1, 4 * hidden)),
        dec_wout=u(ks[10], (hidden, tgt_vocab)),
        dec_bout=u(ks[11], (1, tgt_vocab)),
    )


def prepare_params(p, emb_dim, hidden, src_vocab, tgt_vocab):
    """One-time layout prep: pad E/H/V to 128 lanes, merge W_ih/W_hh, cast MXU
    operands (weights / embedding tables) to bf16; biases stay f32."""
    E, H = emb_dim, hidden
    EP, HP = _ceil_to(E, LANE), _ceil_to(H, LANE)
    SVP, VP = _ceil_to(src_vocab, LANE), _ceil_to(tgt_vocab, LANE)

    def pad_gate_cols(w):                       # (K, 4H) -> (K, 4*HP), gate-wise
        k = w.shape[0]
        w4 = w.reshape(k, 4, H)
        return jnp.pad(w4, ((0, 0), (0, 0), (0, HP - H))).reshape(k, 4 * HP)

    def merged_lstm_w(wih, whh):                # -> (EP + HP, 4*HP) bf16
        wih_p = jnp.pad(pad_gate_cols(wih), ((0, EP - E), (0, 0)))
        whh_p = jnp.pad(pad_gate_cols(whh), ((0, HP - H), (0, 0)))
        return jnp.concatenate([wih_p, whh_p], axis=0).astype(jnp.bfloat16)

    wout = jnp.pad(p["dec_wout"], ((0, HP - H), (0, VP - tgt_vocab)))
    bout = jnp.full((1, VP), -1e30, jnp.float32).at[:, :tgt_vocab].set(p["dec_bout"])

    kp = dict(
        enc_emb=jnp.pad(p["enc_emb"], ((0, SVP - src_vocab), (0, EP - E))).astype(jnp.bfloat16),
        enc_w=merged_lstm_w(p["enc_wih"], p["enc_whh"]),
        enc_b=pad_gate_cols(p["enc_bih"] + p["enc_bhh"]),
        dec_emb=jnp.pad(p["dec_emb"], ((0, VP - tgt_vocab), (0, EP - E))).astype(jnp.bfloat16),
        dec_w=merged_lstm_w(p["dec_wih"], p["dec_whh"]),
        dec_b=pad_gate_cols(p["dec_bih"] + p["dec_bhh"]),
        dec_wout=wout.astype(jnp.bfloat16),
        dec_bout=bout,
    )
    return kp, (EP, HP, SVP, VP)


# ------------------------------ Seq2Seq forward ------------------------------

@functools.partial(jax.jit,
                   static_argnames=("emb_dim", "hidden", "src_vocab", "tgt_vocab"))
def _seq2seq_jit(kp, source, target, tf_mask, *, emb_dim, hidden, src_vocab, tgt_vocab):
    B, src_len = source.shape
    _, tgt_len = target.shape
    EP, HP = _ceil_to(emb_dim, LANE), _ceil_to(hidden, LANE)
    SVP, VP = _ceil_to(src_vocab, LANE), _ceil_to(tgt_vocab, LANE)
    BP = _ceil_to(B, SUB)

    # time-major flattened token ids -> scalar-prefetched into SMEM by the kernel
    src_flat = jnp.transpose(source).reshape(-1).astype(jnp.int32)                   # (S*B,)
    tgt_flat = jnp.transpose(target[:, :tgt_len - 1]).reshape(-1).astype(jnp.int32)  # ((L-1)*B,)

    out = seq2seq_pallas(src_flat, tgt_flat, tf_mask, kp,
                         batch=B, src_len=src_len, tgt_len=tgt_len,
                         bp=BP, ep=EP, hp=HP, svp=SVP, vp=VP)   # (L, BP, VP)
    # outputs[:, 0, :] is already zero inside the kernel; strip batch/vocab padding.
    return jnp.transpose(out, (1, 0, 2))[:B, :, :tgt_vocab]      # (B, L, V)


def seq2seq_forward(kp, source, target, *, emb_dim, hidden, src_vocab, tgt_vocab,
                    teacher_forcing_ratio=0.5):
    """Mirrors Seq2Seq.forward with cell_type='lstm', num_layers=1 enc & dec."""
    tgt_len = target.shape[1]
    # Teacher-forcing decisions consume the host global `random` RNG exactly like
    # the PyTorch module: one draw per decode step t = 1..L-1 (the last draw is
    # consumed but its result is never used).  They reach the kernel as an int32
    # SMEM scalar-prefetch mask so the whole decode loop stays in one pallas_call.
    tf_mask = jnp.asarray(
        [int(random.random() < teacher_forcing_ratio) for _ in range(1, tgt_len)],
        dtype=jnp.int32)
    return _seq2seq_jit(kp, source, target, tf_mask,
                        emb_dim=emb_dim, hidden=hidden,
                        src_vocab=src_vocab, tgt_vocab=tgt_vocab)


# ------------------------------ Main ------------------------------

if __name__ == "__main__":
    B, SRC_LEN, TGT_LEN = 4, 8, 8
    SRC_VOCAB, TGT_VOCAB = 12, 12
    EMB, HIDDEN = 16, 32

    key = jax.random.PRNGKey(0)
    k_par, k_src, k_tgt = jax.random.split(key, 3)

    params = init_params(k_par, SRC_VOCAB, TGT_VOCAB, EMB, HIDDEN)
    kparams, _ = prepare_params(params, EMB, HIDDEN, SRC_VOCAB, TGT_VOCAB)

    source = jax.random.randint(k_src, (B, SRC_LEN), 0, SRC_VOCAB, dtype=jnp.int32)
    target = jax.random.randint(k_tgt, (B, TGT_LEN), 0, TGT_VOCAB, dtype=jnp.int32)

    random.seed(0)   # deterministic teacher-forcing draws for this test harness
    out = seq2seq_forward(kparams, source, target,
                          emb_dim=EMB, hidden=HIDDEN,
                          src_vocab=SRC_VOCAB, tgt_vocab=TGT_VOCAB,
                          teacher_forcing_ratio=0.5)
    out = jax.block_until_ready(out)

    assert out.shape == (B, TGT_LEN, TGT_VOCAB)
    assert bool(jnp.all(out[:, 0, :] == 0.0))
    assert bool(jnp.all(jnp.isfinite(out)))
    print("KERNEL_OK")
</pallas_src>

<mosaic_0001>
module attributes {stable_mosaic.version = 11 : i64} {
  func.func @_seq2seq_kernel(%arg0: i32, %arg1: memref<32xi32, #tpu.memory_space<smem>>, %arg2: memref<28xi32, #tpu.memory_space<smem>>, %arg3: memref<7xi32, #tpu.memory_space<smem>>, %arg4: memref<128x128xbf16, #tpu.memory_space<vmem>>, %arg5: memref<256x512xbf16, #tpu.memory_space<vmem>>, %arg6: memref<1x512xf32, #tpu.memory_space<vmem>>, %arg7: memref<128x128xbf16, #tpu.memory_space<vmem>>, %arg8: memref<256x512xbf16, #tpu.memory_space<vmem>>, %arg9: memref<1x512xf32, #tpu.memory_space<vmem>>, %arg10: memref<128x128xbf16, #tpu.memory_space<vmem>>, %arg11: memref<1x128xf32, #tpu.memory_space<vmem>>, %arg12: memref<8x8x128xf32, #tpu.memory_space<vmem>>, %arg13: memref<8x256xf32, #tpu.memory_space<vmem>>, %arg14: memref<8x128xf32, #tpu.memory_space<vmem>>) attributes {dimension_semantics = [#tpu.dimension_semantics<arbitrary>], iteration_bounds = array<i64: 1>, scalar_prefetch = 3 : i64, scratch_operands = 2 : i64, tpu.core_type = #tpu.core_type<tc>, window_params = [{pipeline_mode = #tpu.pipeline_mode<synchronous>, transform_indices = @transform_0, window_bounds = array<i64: 128, 128>}, {pipeline_mode = #tpu.pipeline_mode<synchronous>, transform_indices = @transform_1, window_bounds = array<i64: 256, 512>}, {pipeline_mode = #tpu.pipeline_mode<synchronous>, transform_indices = @transform_2, window_bounds = array<i64: 1, 512>}, {pipeline_mode = #tpu.pipeline_mode<synchronous>, transform_indices = @transform_3, window_bounds = array<i64: 128, 128>}, {pipeline_mode = #tpu.pipeline_mode<synchronous>, transform_indices = @transform_4, window_bounds = array<i64: 256, 512>}, {pipeline_mode = #tpu.pipeline_mode<synchronous>, transform_indices = @transform_5, window_bounds = array<i64: 1, 512>}, {pipeline_mode = #tpu.pipeline_mode<synchronous>, transform_indices = @transform_6, window_bounds = array<i64: 128, 128>}, {pipeline_mode = #tpu.pipeline_mode<synchronous>, transform_indices = @transform_7, window_bounds = array<i64: 1, 128>}, {pipeline_mode = #tpu.pipeline_mode<synchronous>, transform_indices = @transform_8, window_bounds = array<i64: 8, 8, 128>}]} {
    %cst = arith.constant 0.000000e+00 : f32
    %0 = vector.broadcast %cst : f32 to vector<8x128xf32>
    %c0 = arith.constant 0 : index
    %c128 = arith.constant 128 : index
    %1 = vector.load %arg13[%c0, %c128] : memref<8x256xf32, #tpu.memory_space<vmem>>, vector<8x128xf32>
    tpu.vector_store %arg13[%c0, %c128], %0 {strides = array<i32>} : memref<8x256xf32, #tpu.memory_space<vmem>>, vector<8x128xf32>,
    %cst_0 = arith.constant 0.000000e+00 : f32
    %2 = vector.broadcast %cst_0 : f32 to vector<8x128xf32>
    %c0_1 = arith.constant 0 : index
    %c0_2 = arith.constant 0 : index
    %3 = vector.load %arg14[%c0_1, %c0_2] : memref<8x128xf32, #tpu.memory_space<vmem>>, vector<8x128xf32>
    tpu.vector_store %arg14[%c0_1, %c0_2], %2 {strides = array<i32>} : memref<8x128xf32, #tpu.memory_space<vmem>>, vector<8x128xf32>,
    %cst_3 = arith.constant 0.000000e+00 : f32
    %4 = vector.broadcast %cst_3 : f32 to vector<8x128xf32>
    %c0_4 = arith.constant 0 : index
    %c0_5 = arith.constant 0 : index
    %c0_6 = arith.constant 0 : index
    %5 = vector.load %arg12[%c0_4, %c0_5, %c0_6] : memref<8x8x128xf32, #tpu.memory_space<vmem>>, vector<1x8x128xf32>
    %6 = vector.shape_cast %5 : vector<1x8x128xf32> to vector<8x128xf32>
    %7 = vector.shape_cast %4 : vector<8x128xf32> to vector<1x8x128xf32>
    tpu.vector_store %arg12[%c0_4, %c0_5, %c0_6], %7 {strides = array<i32>} : memref<8x8x128xf32, #tpu.memory_space<vmem>>, vector<1x8x128xf32>,
    %8 = tpu.iota {dimensions = array<i32: 0>} : vector<8x128xi32>
    %9 = tpu.iota {dimensions = array<i32: 1>} : vector<8x128xi32>
    %c-1_i32 = arith.constant -1 : i32
    %10 = vector.broadcast %c-1_i32 : i32 to vector<8x128xi32>
    %c0_i32 = arith.constant 0 : i32
    %11 = vector.broadcast %c0_i32 : i32 to vector<8x128xi32>
    %12 = arith.cmpi eq, %8, %11 : vector<8x128xi32>
    %c0_7 = arith.constant 0 : index
    %13 = memref.load %arg1[%c0_7] : memref<32xi32, #tpu.memory_space<smem>>
    %14 = vector.broadcast %13 : i32 to vector<8x128xi32>
    %15 = arith.select %12, %14, %10 : vector<8x128xi1>, vector<8x128xi32>
    %c1_i32 = arith.constant 1 : i32
    %16 = vector.broadcast %c1_i32 : i32 to vector<8x128xi32>
    %17 = arith.cmpi eq, %8, %16 : vector<8x128xi32>
    %c1 = arith.constant 1 : index
    %18 = memref.load %arg1[%c1] : memref<32xi32, #tpu.memory_space<smem>>
    %19 = vector.broadcast %18 : i32 to vector<8x128xi32>
    %20 = arith.select %17, %19, %15 : vector<8x128xi1>, vector<8x128xi32>
    %c2_i32 = arith.constant 2 : i32
    %21 = vector.broadcast %c2_i32 : i32 to vector<8x128xi32>
    %22 = arith.cmpi eq, %8, %21 : vector<8x128xi32>
    %c2 = arith.constant 2 : index
    %23 = memref.load %arg1[%c2] : memref<32xi32, #tpu.memory_space<smem>>
    %24 = vector.broadcast %23 : i32 to vector<8x128xi32>
    %25 = arith.select %22, %24, %20 : vector<8x128xi1>, vector<8x128xi32>
    %c3_i32 = arith.constant 3 : i32
    %26 = vector.broadcast %c3_i32 : i32 to vector<8x128xi32>
    %27 = arith.cmpi eq, %8, %26 : vector<8x128xi32>
    %c3 = arith.constant 3 : index
    %28 = memref.load %arg1[%c3] : memref<32xi32, #tpu.memory_space<smem>>
    %29 = vector.broadcast %28 : i32 to vector<8x128xi32>
    %30 = arith.select %27, %29, %25 : vector<8x128xi1>, vector<8x128xi32>
    %31 = arith.cmpi eq, %9, %30 : vector<8x128xi32>
    %32 = arith.extui %31 : vector<8x128xi1> to vector<8x128xi32>
    %33 = arith.sitofp %32 : vector<8x128xi32> to vector<8x128xf32>
    %34 = arith.truncf %33 : vector<8x128xf32> to vector<8x128xbf16>
    %c0_8 = arith.constant 0 : index
    %c0_9 = arith.constant 0 : index
    %35 = vector.load %arg4[%c0_8, %c0_9] : memref<128x128xbf16, #tpu.memory_space<vmem>>, vector<128x128xbf16>
    %cst_10 = arith.constant dense<0.000000e+00> : vector<8x128xf32>
    %36 = tpu.matmul %34, %35, %cst_10 {dimension_numbers = #tpu.dot_dimension_numbers<[1], [0], [0], [1], [0, 0, 1, 1], [], []>} : vector<8x128xbf16>, vector<128x128xbf16>, vector<8x128xf32> -> vector<8x128xf32>
    %c0_11 = arith.constant 0 : index
    %c0_12 = arith.constant 0 : index
    %37 = vector.load %arg13[%c0_11, %c0_12] : memref<8x256xf32, #tpu.memory_space<vmem>>, vector<8x128xf32>
    tpu.vector_store %arg13[%c0_11, %c0_12], %36 {strides = array<i32>} : memref<8x256xf32, #tpu.memory_space<vmem>>, vector<8x128xf32>,
    %c0_13 = arith.constant 0 : index
    %c0_14 = arith.constant 0 : index
    %38 = vector.load %arg13[%c0_13, %c0_14] : memref<8x256xf32, #tpu.memory_space<vmem>>, vector<8x256xf32>
    %39 = arith.truncf %38 : vector<8x256xf32> to vector<8x256xbf16>
    %c0_15 = arith.constant 0 : index
    %c0_16 = arith.constant 0 : index
    %40 = vector.load %arg5[%c0_15, %c0_16] : memref<256x512xbf16, #tpu.memory_space<vmem>>, vector<256x512xbf16>
    %cst_17 = arith.constant dense<0.000000e+00> : vector<8x512xf32>
    %41 = tpu.matmul %39, %40, %cst_17 {dimension_numbers = #tpu.dot_dimension_numbers<[1], [0], [0], [1], [0, 0, 1, 1], [], []>} : vector<8x256xbf16>, vector<256x512xbf16>, vector<8x512xf32> -> vector<8x512xf32>
    %c0_18 = arith.constant 0 : index
    %c0_19 = arith.constant 0 : index
    %42 = vector.load %arg6[%c0_18, %c0_19] : memref<1x512xf32, #tpu.memory_space<vmem>>, vector<1x512xf32>
    %43 = vector.broadcast %42 : vector<1x512xf32> to vector<8x512xf32>
    %44 = arith.addf %41, %43 : vector<8x512xf32>
    %45 = vector.extract_strided_slice %44 {offsets = [0, 0], sizes = [8, 128], strides = [1, 1]} : vector<8x512xf32> to vector<8x128xf32>
    %46 = arith.negf %45 : vector<8x128xf32>
    %47 = math.exp %46 : vector<8x128xf32>
    %cst_20 = arith.constant 1.000000e+00 : f32
    %48 = vector.broadcast %cst_20 : f32 to vector<8x128xf32>
    %49 = arith.addf %48, %47 : vector<8x128xf32>
    %50 = arith.divf %48, %49 : vector<8x128xf32>
    %51 = vector.extract_strided_slice %44 {offsets = [0, 128], sizes = [8, 128], strides = [1, 1]} : vector<8x512xf32> to vector<8x128xf32>
    %52 = arith.negf %51 : vector<8x128xf32>
    %53 = math.exp %52 : vector<8x128xf32>
    %cst_21 = arith.constant 1.000000e+00 : f32
    %54 = vector.broadcast %cst_21 : f32 to vector<8x128xf32>
    %55 = arith.addf %54, %53 : vector<8x128xf32>
    %56 = arith.divf %54, %55 : vector<8x128xf32>
    %57 = vector.extract_strided_slice %44 {offsets = [0, 256], sizes = [8, 128], strides = [1, 1]} : vector<8x512xf32> to vector<8x128xf32>
    %58 = math.tanh %57 : vector<8x128xf32>
    %59 = vector.extract_strided_slice %44 {offsets = [0, 384], sizes = [8, 128], strides = [1, 1]} : vector<8x512xf32> to vector<8x128xf32>
    %60 = arith.negf %59 : vector<8x128xf32>
    %61 = math.exp %60 : vector<8x128xf32>
    %cst_22 = arith.constant 1.000000e+00 : f32
    %62 = vector.broadcast %cst_22 : f32 to vector<8x128xf32>
    %63 = arith.addf %62, %61 : vector<8x128xf32>
    %64 = arith.divf %62, %63 : vector<8x128xf32>
    %c0_23 = arith.constant 0 : index
    %c0_24 = arith.constant 0 : index
    %65 = vector.load %arg14[%c0_23, %c0_24] : memref<8x128xf32, #tpu.memory_space<vmem>>, vector<8x128xf32>
    %66 = arith.mulf %56, %65 : vector<8x128xf32>
    %67 = arith.mulf %50, %58 : vector<8x128xf32>
    %68 = arith.addf %66, %67 : vector<8x128xf32>
    %69 = math.tanh %68 : vector<8x128xf32>
    %70 = arith.mulf %64, %69 : vector<8x128xf32>
    %c0_25 = arith.constant 0 : index
    %c0_26 = arith.constant 0 : index
    %71 = vector.load %arg14[%c0_25, %c0_26] : memref<8x128xf32, #tpu.memory_space<vmem>>, vector<8x128xf32>
    tpu.vector_store %arg14[%c0_25, %c0_26], %68 {strides = array<i32>} : memref<8x128xf32, #tpu.memory_space<vmem>>, vector<8x128xf32>,
    %c0_27 = arith.constant 0 : index
    %c128_28 = arith.constant 128 : index
    %72 = vector.load %arg13[%c0_27, %c128_28] : memref<8x256xf32, #tpu.memory_space<vmem>>, vector<8x128xf32>
    tpu.vector_store %arg13[%c0_27, %c128_28], %70 {strides = array<i32>} : memref<8x256xf32, #tpu.memory_space<vmem>>, vector<8x128xf32>,
    %73 = tpu.iota {dimensions = array<i32: 0>} : vector<8x128xi32>
    %74 = tpu.iota {dimensions = array<i32: 1>} : vector<8x128xi32>
    %c-1_i32_29 = arith.constant -1 : i32
    %75 = vector.broadcast %c-1_i32_29 : i32 to vector<8x128xi32>
    %c0_i32_30 = arith.constant 0 : i32
    %76 = vector.broadcast %c0_i32_30 : i32 to vector<8x128xi32>
    %77 = arith.cmpi eq, %73, %76 : vector<8x128xi32>
    %c4 = arith.constant 4 : index
    %78 = memref.load %arg1[%c4] : memref<32xi32, #tpu.memory_space<smem>>
    %79 = vector.broadcast %78 : i32 to vector<8x128xi32>
    %80 = arith.select %77, %79, %75 : vector<8x128xi1>, vector<8x128xi32>
    %c1_i32_31 = arith.constant 1 : i32
    %81 = vector.broadcast %c1_i32_31 : i32 to vector<8x128xi32>
    %82 = arith.cmpi eq, %73, %81 : vector<8x128xi32>
    %c5 = arith.constant 5 : index
    %83 = memref.load %arg1[%c5] : memref<32xi32, #tpu.memory_space<smem>>
    %84 = vector.broadcast %83 : i32 to vector<8x128xi32>
    %85 = arith.select %82, %84, %80 : vector<8x128xi1>, vector<8x128xi32>
    %c2_i32_32 = arith.constant 2 : i32
    %86 = vector.broadcast %c2_i32_32 : i32 to vector<8x128xi32>
    %87 = arith.cmpi eq, %73, %86 : vector<8x128xi32>
    %c6 = arith.constant 6 : index
    %88 = memref.load %arg1[%c6] : memref<32xi32, #tpu.memory_space<smem>>
    %89 = vector.broadcast %88 : i32 to vector<8x128xi32>
    %90 = arith.select %87, %89, %85 : vector<8x128xi1>, vector<8x128xi32>
    %c3_i32_33 = arith.constant 3 : i32
    %91 = vector.broadcast %c3_i32_33 : i32 to vector<8x128xi32>
    %92 = arith.cmpi eq, %73, %91 : vector<8x128xi32>
    %c7 = arith.constant 7 : index
    %93 = memref.load %arg1[%c7] : memref<32xi32, #tpu.memory_space<smem>>
    %94 = vector.broadcast %93 : i32 to vector<8x128xi32>
    %95 = arith.select %92, %94, %90 : vector<8x128xi1>, vector<8x128xi32>
    %96 = arith.cmpi eq, %74, %95 : vector<8x128xi32>
    %97 = arith.extui %96 : vector<8x128xi1> to vector<8x128xi32>
    %98 = arith.sitofp %97 : vector<8x128xi32> to vector<8x128xf32>
    %99 = arith.truncf %98 : vector<8x128xf32> to vector<8x128xbf16>
    %c0_34 = arith.constant 0 : index
    %c0_35 = arith.constant 0 : index
    %100 = vector.load %arg4[%c0_34, %c0_35] : memref<128x128xbf16, #tpu.memory_space<vmem>>, vector<128x128xbf16>
    %cst_36 = arith.constant dense<0.000000e+00> : vector<8x128xf32>
    %101 = tpu.matmul %99, %100, %cst_36 {dimension_numbers = #tpu.dot_dimension_numbers<[1], [0], [0], [1], [0, 0, 1, 1], [], []>} : vector<8x128xbf16>, vector<128x128xbf16>, vector<8x128xf32> -> vector<8x128xf32>
    %c0_37 = arith.constant 0 : index
    %c0_38 = arith.constant 0 : index
    %102 = vector.load %arg13[%c0_37, %c0_38] : memref<8x256xf32, #tpu.memory_space<vmem>>, vector<8x128xf32>
    tpu.vector_store %arg13[%c0_37, %c0_38], %101 {strides = array<i32>} : memref<8x256xf32, #tpu.memory_space<vmem>>, vector<8x128xf32>,
    %c0_39 = arith.constant 0 : index
    %c0_40 = arith.constant 0 : index
    %103 = vector.load %arg13[%c0_39, %c0_40] : memref<8x256xf32, #tpu.memory_space<vmem>>, vector<8x256xf32>
    %104 = arith.truncf %103 : vector<8x256xf32> to vector<8x256xbf16>
    %c0_41 = arith.constant 0 : index
    %c0_42 = arith.constant 0 : index
    %105 = vector.load %arg5[%c0_41, %c0_42] : memref<256x512xbf16, #tpu.memory_space<vmem>>, vector<256x512xbf16>
    %cst_43 = arith.constant dense<0.000000e+00> : vector<8x512xf32>
    %106 = tpu.matmul %104, %105, %cst_43 {dimension_numbers = #tpu.dot_dimension_numbers<[1], [0], [0], [1], [0, 0, 1, 1], [], []>} : vector<8x256xbf16>, vector<256x512xbf16>, vector<8x512xf32> -> vector<8x512xf32>
    %c0_44 = arith.constant 0 : index
    %c0_45 = arith.constant 0 : index
    %107 = vector.load %arg6[%c0_44, %c0_45] : memref<1x512xf32, #tpu.memory_space<vmem>>, vector<1x512xf32>
    %108 = vector.broadcast %107 : vector<1x512xf32> to vector<8x512xf32>
    %109 = arith.addf %106, %108 : vector<8x512xf32>
    %110 = vector.extract_strided_slice %109 {offsets = [0, 0], sizes = [8, 128], strides = [1, 1]} : vector<8x512xf32> to vector<8x128xf32>
    %111 = arith.negf %110 : vector<8x128xf32>
    %112 = math.exp %111 : vector<8x128xf32>
    %cst_46 = arith.constant 1.000000e+00 : f32
    %113 = vector.broadcast %cst_46 : f32 to vector<8x128xf32>
    %114 = arith.addf %113, %112 : vector<8x128xf32>
    %115 = arith.divf %113, %114 : vector<8x128xf32>
    %116 = vector.extract_strided_slice %109 {offsets = [0, 128], sizes = [8, 128], strides = [1, 1]} : vector<8x512xf32> to vector<8x128xf32>
    %117 = arith.negf %116 : vector<8x128xf32>
    %118 = math.exp %117 : vector<8x128xf32>
    %cst_47 = arith.constant 1.000000e+00 : f32
    %119 = vector.broadcast %cst_47 : f32 to vector<8x128xf32>
    %120 = arith.addf %119, %118 : vector<8x128xf32>
    %121 = arith.divf %119, %120 : vector<8x128xf32>
    %122 = vector.extract_strided_slice %109 {offsets = [0, 256], sizes = [8, 128], strides = [1, 1]} : vector<8x512xf32> to vector<8x128xf32>
    %123 = math.tanh %122 : vector<8x128xf32>
    %124 = vector.extract_strided_slice %109 {offsets = [0, 384], sizes = [8, 128], strides = [1, 1]} : vector<8x512xf32> to vector<8x128xf32>
    %125 = arith.negf %124 : vector<8x128xf32>
    %126 = math.exp %125 : vector<8x128xf32>
    %cst_48 = arith.constant 1.000000e+00 : f32
    %127 = vector.broadcast %cst_48 : f32 to vector<8x128xf32>
    %128 = arith.addf %127, %126 : vector<8x128xf32>
    %129 = arith.divf %127, %128 : vector<8x128xf32>
    %c0_49 = arith.constant 0 : index
    %c0_50 = arith.constant 0 : index
    %130 = vector.load %arg14[%c0_49, %c0_50] : memref<8x128xf32, #tpu.memory_space<vmem>>, vector<8x128xf32>
    %131 = arith.mulf %121, %130 : vector<8x128xf32>
    %132 = arith.mulf %115, %123 : vector<8x128xf32>
    %133 = arith.addf %131, %132 : vector<8x128xf32>
    %134 = math.tanh %133 : vector<8x128xf32>
    %135 = arith.mulf %129, %134 : vector<8x128xf32>
    %c0_51 = arith.constant 0 : index
    %c0_52 = arith.constant 0 : index
    %136 = vector.load %arg14[%c0_51, %c0_52] : memref<8x128xf32, #tpu.memory_space<vmem>>, vector<8x128xf32>
    tpu.vector_store %arg14[%c0_51, %c0_52], %133 {strides = array<i32>} : memref<8x128xf32, #tpu.memory_space<vmem>>, vector<8x128xf32>,
    %c0_53 = arith.constant 0 : index
    %c128_54 = arith.constant 128 : index
    %137 = vector.load %arg13[%c0_53, %c128_54] : memref<8x256xf32, #tpu.memory_space<vmem>>, vector<8x128xf32>
    tpu.vector_store %arg13[%c0_53, %c128_54], %135 {strides = array<i32>} : memref<8x256xf32, #tpu.memory_space<vmem>>, vector<8x128xf32>,
    %138 = tpu.iota {dimensions = array<i32: 0>} : vector<8x128xi32>
    %139 = tpu.iota {dimensions = array<i32: 1>} : vector<8x128xi32>
    %c-1_i32_55 = arith.constant -1 : i32
    %140 = vector.broadcast %c-1_i32_55 : i32 to vector<8x128xi32>
    %c0_i32_56 = arith.constant 0 : i32
    %141 = vector.broadcast %c0_i32_56 : i32 to vector<8x128xi32>
    %142 = arith.cmpi eq, %138, %141 : vector<8x128xi32>
    %c8 = arith.constant 8 : index
    %143 = memref.load %arg1[%c8] : memref<32xi32, #tpu.memory_space<smem>>
    %144 = vector.broadcast %143 : i32 to vector<8x128xi32>
    %145 = arith.select %142, %144, %140 : vector<8x128xi1>, vector<8x128xi32>
    %c1_i32_57 = arith.constant 1 : i32
    %146 = vector.broadcast %c1_i32_57 : i32 to vector<8x128xi32>
    %147 = arith.cmpi eq, %138, %146 : vector<8x128xi32>
    %c9 = arith.constant 9 : index
    %148 = memref.load %arg1[%c9] : memref<32xi32, #tpu.memory_space<smem>>
    %149 = vector.broadcast %148 : i32 to vector<8x128xi32>
    %150 = arith.select %147, %149, %145 : vector<8x128xi1>, vector<8x128xi32>
    %c2_i32_58 = arith.constant 2 : i32
    %151 = vector.broadcast %c2_i32_58 : i32 to vector<8x128xi32>
    %152 = arith.cmpi eq, %138, %151 : vector<8x128xi32>
    %c10 = arith.constant 10 : index
    %153 = memref.load %arg1[%c10] : memref<32xi32, #tpu.memory_space<smem>>
    %154 = vector.broadcast %153 : i32 to vector<8x128xi32>
    %155 = arith.select %152, %154, %150 : vector<8x128xi1>, vector<8x128xi32>
    %c3_i32_59 = arith.constant 3 : i32
    %156 = vector.broadcast %c3_i32_59 : i32 to vector<8x128xi32>
    %157 = arith.cmpi eq, %138, %156 : vector<8x128xi32>
    %c11 = arith.constant 11 : index
    %158 = memref.load %arg1[%c11] : memref<32xi32, #tpu.memory_space<smem>>
    %159 = vector.broadcast %158 : i32 to vector<8x128xi32>
    %160 = arith.select %157, %159, %155 : vector<8x128xi1>, vector<8x128xi32>
    %161 = arith.cmpi eq, %139, %160 : vector<8x128xi32>
    %162 = arith.extui %161 : vector<8x128xi1> to vector<8x128xi32>
    %163 = arith.sitofp %162 : vector<8x128xi32> to vector<8x128xf32>
    %164 = arith.truncf %163 : vector<8x128xf32> to vector<8x128xbf16>
    %c0_60 = arith.constant 0 : index
    %c0_61 = arith.constant 0 : index
    %165 = vector.load %arg4[%c0_60, %c0_61] : memref<128x128xbf16, #tpu.memory_space<vmem>>, vector<128x128xbf16>
    %cst_62 = arith.constant dense<0.000000e+00> : vector<8x128xf32>
    %166 = tpu.matmul %164, %165, %cst_62 {dimension_numbers = #tpu.dot_dimension_numbers<[1], [0], [0], [1], [0, 0, 1, 1], [], []>} : vector<8x128xbf16>, vector<128x128xbf16>, vector<8x128xf32> -> vector<8x128xf32>
    %c0_63 = arith.constant 0 : index
    %c0_64 = arith.constant 0 : index
    %167 = vector.load %arg13[%c0_63, %c0_64] : memref<8x256xf32, #tpu.memory_space<vmem>>, vector<8x128xf32>
    tpu.vector_store %arg13[%c0_63, %c0_64], %166 {strides = array<i32>} : memref<8x256xf32, #tpu.memory_space<vmem>>, vector<8x128xf32>,
    %c0_65 = arith.constant 0 : index
    %c0_66 = arith.constant 0 : index
    %168 = vector.load %arg13[%c0_65, %c0_66] : memref<8x256xf32, #tpu.memory_space<vmem>>, vector<8x256xf32>
    %169 = arith.truncf %168 : vector<8x256xf32> to vector<8x256xbf16>
    %c0_67 = arith.constant 0 : index
    %c0_68 = arith.constant 0 : index
    %170 = vector.load %arg5[%c0_67, %c0_68] : memref<256x512xbf16, #tpu.memory_space<vmem>>, vector<256x512xbf16>
    %cst_69 = arith.constant dense<0.000000e+00> : vector<8x512xf32>
    %171 = tpu.matmul %169, %170, %cst_69 {dimension_numbers = #tpu.dot_dimension_numbers<[1], [0], [0], [1], [0, 0, 1, 1], [], []>} : vector<8x256xbf16>, vector<256x512xbf16>, vector<8x512xf32> -> vector<8x512xf32>
    %c0_70 = arith.constant 0 : index
    %c0_71 = arith.constant 0 : index
    %172 = vector.load %arg6[%c0_70, %c0_71] : memref<1x512xf32, #tpu.memory_space<vmem>>, vector<1x512xf32>
    %173 = vector.broadcast %172 : vector<1x512xf32> to vector<8x512xf32>
    %174 = arith.addf %171, %173 : vector<8x512xf32>
    %175 = vector.extract_strided_slice %174 {offsets = [0, 0], sizes = [8, 128], strides = [1, 1]} : vector<8x512xf32> to vector<8x128xf32>
    %176 = arith.negf %175 : vector<8x128xf32>
    %177 = math.exp %176 : vector<8x128xf32>
    %cst_72 = arith.constant 1.000000e+00 : f32
    %178 = vector.broadcast %cst_72 : f32 to vector<8x128xf32>
    %179 = arith.addf %178, %177 : vector<8x128xf32>
    %180 = arith.divf %178, %179 : vector<8x128xf32>
    %181 = vector.extract_strided_slice %174 {offsets = [0, 128], sizes = [8, 128], strides = [1, 1]} : vector<8x512xf32> to vector<8x128xf32>
    %182 = arith.negf %181 : vector<8x128xf32>
    %183 = math.exp %182 : vector<8x128xf32>
    %cst_73 = arith.constant 1.000000e+00 : f32
    %184 = vector.broadcast %cst_73 : f32 to vector<8x128xf32>
    %185 = arith.addf %184, %183 : vector<8x128xf32>
    %186 = arith.divf %184, %185 : vector<8x128xf32>
    %187 = vector.extract_strided_slice %174 {offsets = [0, 256], sizes = [8, 128], strides = [1, 1]} : vector<8x512xf32> to vector<8x128xf32>
    %188 = math.tanh %187 : vector<8x128xf32>
    %189 = vector.extract_strided_slice %174 {offsets = [0, 384], sizes = [8, 128], strides = [1, 1]} : vector<8x512xf32> to vector<8x128xf32>
    %190 = arith.negf %189 : vector<8x128xf32>
    %191 = math.exp %190 : vector<8x128xf32>
    %cst_74 = arith.constant 1.000000e+00 : f32
    %192 = vector.broadcast %cst_74 : f32 to vector<8x128xf32>
    %193 = arith.addf %192, %191 : vector<8x128xf32>
    %194 = arith.divf %192, %193 : vector<8x128xf32>
    %c0_75 = arith.constant 0 : index
    %c0_76 = arith.constant 0 : index
    %195 = vector.load %arg14[%c0_75, %c0_76] : memref<8x128xf32, #tpu.memory_space<vmem>>, vector<8x128xf32>
    %196 = arith.mulf %186, %195 : vector<8x128xf32>
    %197 = arith.mulf %180, %188 : vector<8x128xf32>
    %198 = arith.addf %196, %197 : vector<8x128xf32>
    %199 = math.tanh %198 : vector<8x128xf32>
    %200 = arith.mulf %194, %199 : vector<8x128xf32>
    %c0_77 = arith.constant 0 : index
    %c0_78 = arith.constant 0 : index
    %201 = vector.load %arg14[%c0_77, %c0_78] : memref<8x128xf32, #tpu.memory_space<vmem>>, vector<8x128xf32>
    tpu.vector_store %arg14[%c0_77, %c0_78], %198 {strides = array<i32>} : memref<8x128xf32, #tpu.memory_space<vmem>>, vector<8x128xf32>,
    %c0_79 = arith.constant 0 : index
    %c128_80 = arith.constant 128 : index
    %202 = vector.load %arg13[%c0_79, %c128_80] : memref<8x256xf32, #tpu.memory_space<vmem>>, vector<8x128xf32>
    tpu.vector_store %arg13[%c0_79, %c128_80], %200 {strides = array<i32>} : memref<8x256xf32, #tpu.memory_space<vmem>>, vector<8x128xf32>,
    %203 = tpu.iota {dimensions = array<i32: 0>} : vector<8x128xi32>
    %204 = tpu.iota {dimensions = array<i32: 1>} : vector<8x128xi32>
    %c-1_i32_81 = arith.constant -1 : i32
    %205 = vector.broadcast %c-1_i32_81 : i32 to vector<8x128xi32>
    %c0_i32_82 = arith.constant 0 : i32
    %206 = vector.broadcast %c0_i32_82 : i32 to vector<8x128xi32>
    %207 = arith.cmpi eq, %203, %206 : vector<8x128xi32>
    %c12 = arith.constant 12 : index
    %208 = memref.load %arg1[%c12] : memref<32xi32, #tpu.memory_space<smem>>
    %209 = vector.broadcast %208 : i32 to vector<8x128xi32>
    %210 = arith.select %207, %209, %205 : vector<8x128xi1>, vector<8x128xi32>
    %c1_i32_83 = arith.constant 1 : i32
    %211 = vector.broadcast %c1_i32_83 : i32 to vector<8x128xi32>
    %212 = arith.cmpi eq, %203, %211 : vector<8x128xi32>
    %c13 = arith.constant 13 : index
    %213 = memref.load %arg1[%c13] : memref<32xi32, #tpu.memory_space<smem>>
    %214 = vector.broadcast %213 : i32 to vector<8x128xi32>
    %215 = arith.select %212, %214, %210 : vector<8x128xi1>, vector<8x128xi32>
    %c2_i32_84 = arith.constant 2 : i32
    %216 = vector.broadcast %c2_i32_84 : i32 to vector<8x128xi32>
    %217 = arith.cmpi eq, %203, %216 : vector<8x128xi32>
    %c14 = arith.constant 14 : index
    %218 = memref.load %arg1[%c14] : memref<32xi32, #tpu.memory_space<smem>>
    %219 = vector.broadcast %218 : i32 to vector<8x128xi32>
    %220 = arith.select %217, %219, %215 : vector<8x128xi1>, vector<8x128xi32>
    %c3_i32_85 = arith.constant 3 : i32
    %221 = vector.broadcast %c3_i32_85 : i32 to vector<8x128xi32>
    %222 = arith.cmpi eq, %203, %221 : vector<8x128xi32>
    %c15 = arith.constant 15 : index
    %223 = memref.load %arg1[%c15] : memref<32xi32, #tpu.memory_space<smem>>
    %224 = vector.broadcast %223 : i32 to vector<8x128xi32>
    %225 = arith.select %222, %224, %220 : vector<8x128xi1>, vector<8x128xi32>
    %226 = arith.cmpi eq, %204, %225 : vector<8x128xi32>
    %227 = arith.extui %226 : vector<8x128xi1> to vector<8x128xi32>
    %228 = arith.sitofp %227 : vector<8x128xi32> to vector<8x128xf32>
    %229 = arith.truncf %228 : vector<8x128xf32> to vector<8x128xbf16>
    %c0_86 = arith.constant 0 : index
    %c0_87 = arith.constant 0 : index
    %230 = vector.load %arg4[%c0_86, %c0_87] : memref<128x128xbf16, #tpu.memory_space<vmem>>, vector<128x128xbf16>
    %cst_88 = arith.constant dense<0.000000e+00> : vector<8x128xf32>
    %231 = tpu.matmul %229, %230, %cst_88 {dimension_numbers = #tpu.dot_dimension_numbers<[1], [0], [0], [1], [0, 0, 1, 1], [], []>} : vector<8x128xbf16>, vector<128x128xbf16>, vector<8x128xf32> -> vector<8x128xf32>
    %c0_89 = arith.constant 0 : index
    %c0_90 = arith.constant 0 : index
    %232 = vector.load %arg13[%c0_89, %c0_90] : memref<8x256xf32, #tpu.memory_space<vmem>>, vector<8x128xf32>
    tpu.vector_store %arg13[%c0_89, %c0_90], %231 {strides = array<i32>} : memref<8x256xf32, #tpu.memory_space<vmem>>, vector<8x128xf32>,
    %c0_91 = arith.constant 0 : index
    %c0_92 = arith.constant 0 : index
    %233 = vector.load %arg13[%c0_91, %c0_92] : memref<8x256xf32, #tpu.memory_space<vmem>>, vector<8x256xf32>
    %234 = arith.truncf %233 : vector<8x256xf32> to vector<8x256xbf16>
    %c0_93 = arith.constant 0 : index
    %c0_94 = arith.constant 0 : index
    %235 = vector.load %arg5[%c0_93, %c0_94] : memref<256x512xbf16, #tpu.memory_space<vmem>>, vector<256x512xbf16>
    %cst_95 = arith.constant dense<0.000000e+00> : vector<8x512xf32>
    %236 = tpu.matmul %234, %235, %cst_95 {dimension_numbers = #tpu.dot_dimension_numbers<[1], [0], [0], [1], [0, 0, 1, 1], [], []>} : vector<8x256xbf16>, vector<256x512xbf16>, vector<8x512xf32> -> vector<8x512xf32>
    %c0_96 = arith.constant 0 : index
    %c0_97 = arith.constant 0 : index
    %237 = vector.load %arg6[%c0_96, %c0_97] : memref<1x512xf32, #tpu.memory_space<vmem>>, vector<1x512xf32>
    %238 = vector.broadcast %237 : vector<1x512xf32> to vector<8x512xf32>
    %239 = arith.addf %236, %238 : vector<8x512xf32>
    %240 = vector.extract_strided_slice %239 {offsets = [0, 0], sizes = [8, 128], strides = [1, 1]} : vector<8x512xf32> to vector<8x128xf32>
    %241 = arith.negf %240 : vector<8x128xf32>
    %242 = math.exp %241 : vector<8x128xf32>
    %cst_98 = arith.constant 1.000000e+00 : f32
    %243 = vector.broadcast %cst_98 : f32 to vector<8x128xf32>
    %244 = arith.addf %243, %242 : vector<8x128xf32>
    %245 = arith.divf %243, %244 : vector<8x128xf32>
    %246 = vector.extract_strided_slice %239 {offsets = [0, 128], sizes = [8, 128], strides = [1, 1]} : vector<8x512xf32> to vector<8x128xf32>
    %247 = arith.negf %246 : vector<8x128xf32>
    %248 = math.exp %247 : vector<8x128xf32>
    %cst_99 = arith.constant 1.000000e+00 : f32
    %249 = vector.broadcast %cst_99 : f32 to vector<8x128xf32>
    %250 = arith.addf %249, %248 : vector<8x128xf32>
    %251 = arith.divf %249, %250 : vector<8x128xf32>
    %252 = vector.extract_strided_slice %239 {offsets = [0, 256], sizes = [8, 128], strides = [1, 1]} : vector<8x512xf32> to vector<8x128xf32>
    %253 = math.tanh %252 : vector<8x128xf32>
    %254 = vector.extract_strided_slice %239 {offsets = [0, 384], sizes = [8, 128], strides = [1, 1]} : vector<8x512xf32> to vector<8x128xf32>
    %255 = arith.negf %254 : vector<8x128xf32>
    %256 = math.exp %255 : vector<8x128xf32>
    %cst_100 = arith.constant 1.000000e+00 : f32
    %257 = vector.broadcast %cst_100 : f32 to vector<8x128xf32>
    %258 = arith.addf %257, %256 : vector<8x128xf32>
    %259 = arith.divf %257, %258 : vector<8x128xf32>
    %c0_101 = arith.constant 0 : index
    %c0_102 = arith.constant 0 : index
    %260 = vector.load %arg14[%c0_101, %c0_102] : memref<8x128xf32, #tpu.memory_space<vmem>>, vector<8x128xf32>
    %261 = arith.mulf %251, %260 : vector<8x128xf32>
    %262 = arith.mulf %245, %253 : vector<8x128xf32>
    %263 = arith.addf %261, %262 : vector<8x128xf32>
    %264 = math.tanh %263 : vector<8x128xf32>
    %265 = arith.mulf %259, %264 : vector<8x128xf32>
    %c0_103 = arith.constant 0 : index
    %c0_104 = arith.constant 0 : index
    %266 = vector.load %arg14[%c0_103, %c0_104] : memref<8x128xf32, #tpu.memory_space<vmem>>, vector<8x128xf32>
    tpu.vector_store %arg14[%c0_103, %c0_104], %263 {strides = array<i32>} : memref<8x128xf32, #tpu.memory_space<vmem>>, vector<8x128xf32>,
    %c0_105 = arith.constant 0 : index
    %c128_106 = arith.constant 128 : index
    %267 = vector.load %arg13[%c0_105, %c128_106] : memref<8x256xf32, #tpu.memory_space<vmem>>, vector<8x128xf32>
    tpu.vector_store %arg13[%c0_105, %c128_106], %265 {strides = array<i32>} : memref<8x256xf32, #tpu.memory_space<vmem>>, vector<8x128xf32>,
    %268 = tpu.iota {dimensions = array<i32: 0>} : vector<8x128xi32>
    %269 = tpu.iota {dimensions = array<i32: 1>} : vector<8x128xi32>
    %c-1_i32_107 = arith.constant -1 : i32
    %270 = vector.broadcast %c-1_i32_107 : i32 to vector<8x128xi32>
    %c0_i32_108 = arith.constant 0 : i32
    %271 = vector.broadcast %c0_i32_108 : i32 to vector<8x128xi32>
    %272 = arith.cmpi eq, %268, %271 : vector<8x128xi32>
    %c16 = arith.constant 16 : index
    %273 = memref.load %arg1[%c16] : memref<32xi32, #tpu.memory_space<smem>>
    %274 = vector.broadcast %273 : i32 to vector<8x128xi32>
    %275 = arith.select %272, %274, %270 : vector<8x128xi1>, vector<8x128xi32>
    %c1_i32_109 = arith.constant 1 : i32
    %276 = vector.broadcast %c1_i32_109 : i32 to vector<8x128xi32>
    %277 = arith.cmpi eq, %268, %276 : vector<8x128xi32>
    %c17 = arith.constant 17 : index
    %278 = memref.load %arg1[%c17] : memref<32xi32, #tpu.memory_space<smem>>
    %279 = vector.broadcast %278 : i32 to vector<8x128xi32>
    %280 = arith.select %277, %279, %275 : vector<8x128xi1>, vector<8x128xi32>
    %c2_i32_110 = arith.constant 2 : i32
    %281 = vector.broadcast %c2_i32_110 : i32 to vector<8x128xi32>
    %282 = arith.cmpi eq, %268, %281 : vector<8x128xi32>
    %c18 = arith.constant 18 : index
    %283 = memref.load %arg1[%c18] : memref<32xi32, #tpu.memory_space<smem>>
    %284 = vector.broadcast %283 : i32 to vector<8x128xi32>
    %285 = arith.select %282, %284, %280 : vector<8x128xi1>, vector<8x128xi32>
    %c3_i32_111 = arith.constant 3 : i32
    %286 = vector.broadcast %c3_i32_111 : i32 to vector<8x128xi32>
    %287 = arith.cmpi eq, %268, %286 : vector<8x128xi32>
    %c19 = arith.constant 19 : index
    %288 = memref.load %arg1[%c19] : memref<32xi32, #tpu.memory_space<smem>>
    %289 = vector.broadcast %288 : i32 to vector<8x128xi32>
    %290 = arith.select %287, %289, %285 : vector<8x128xi1>, vector<8x128xi32>
    %291 = arith.cmpi eq, %269, %290 : vector<8x128xi32>
    %292 = arith.extui %291 : vector<8x128xi1> to vector<8x128xi32>
    %293 = arith.sitofp %292 : vector<8x128xi32> to vector<8x128xf32>
    %294 = arith.truncf %293 : vector<8x128xf32> to vector<8x128xbf16>
    %c0_112 = arith.constant 0 : index
    %c0_113 = arith.constant 0 : index
    %295 = vector.load %arg4[%c0_112, %c0_113] : memref<128x128xbf16, #tpu.memory_space<vmem>>, vector<128x128xbf16>
    %cst_114 = arith.constant dense<0.000000e+00> : vector<8x128xf32>
    %296 = tpu.matmul %294, %295, %cst_114 {dimension_numbers = #tpu.dot_dimension_numbers<[1], [0], [0], [1], [0, 0, 1, 1], [], []>} : vector<8x128xbf16>, vector<128x128xbf16>, vector<8x128xf32> -> vector<8x128xf32>
    %c0_115 = arith.constant 0 : index
    %c0_116 = arith.constant 0 : index
    %297 = vector.load %arg13[%c0_115, %c0_116] : memref<8x256xf32, #tpu.memory_space<vmem>>, vector<8x128xf32>
    tpu.vector_store %arg13[%c0_115, %c0_116], %296 {strides = array<i32>} : memref<8x256xf32, #tpu.memory_space<vmem>>, vector<8x128xf32>,
    %c0_117 = arith.constant 0 : index
    %c0_118 = arith.constant 0 : index
    %298 = vector.load %arg13[%c0_117, %c0_118] : memref<8x256xf32, #tpu.memory_space<vmem>>, vector<8x256xf32>
    %299 = arith.truncf %298 : vector<8x256xf32> to vector<8x256xbf16>
    %c0_119 = arith.constant 0 : index
    %c0_120 = arith.constant 0 : index
    %300 = vector.load %arg5[%c0_119, %c0_120] : memref<256x512xbf16, #tpu.memory_space<vmem>>, vector<256x512xbf16>
    %cst_121 = arith.constant dense<0.000000e+00> : vector<8x512xf32>
    %301 = tpu.matmul %299, %300, %cst_121 {dimension_numbers = #tpu.dot_dimension_numbers<[1], [0], [0], [1], [0, 0, 1, 1], [], []>} : vector<8x256xbf16>, vector<256x512xbf16>, vector<8x512xf32> -> vector<8x512xf32>
    %c0_122 = arith.constant 0 : index
    %c0_123 = arith.constant 0 : index
    %302 = vector.load %arg6[%c0_122, %c0_123] : memref<1x512xf32, #tpu.memory_space<vmem>>, vector<1x512xf32>
    %303 = vector.broadcast %302 : vector<1x512xf32> to vector<8x512xf32>
    %304 = arith.addf %301, %303 : vector<8x512xf32>
    %305 = vector.extract_strided_slice %304 {offsets = [0, 0], sizes = [8, 128], strides = [1, 1]} : vector<8x512xf32> to vector<8x128xf32>
    %306 = arith.negf %305 : vector<8x128xf32>
    %307 = math.exp %306 : vector<8x128xf32>
    %cst_124 = arith.constant 1.000000e+00 : f32
    %308 = vector.broadcast %cst_124 : f32 to vector<8x128xf32>
    %309 = arith.addf %308, %307 : vector<8x128xf32>
    %310 = arith.divf %308, %309 : vector<8x128xf32>
    %311 = vector.extract_strided_slice %304 {offsets = [0, 128], sizes = [8, 128], strides = [1, 1]} : vector<8x512xf32> to vector<8x128xf32>
    %312 = arith.negf %311 : vector<8x128xf32>
    %313 = math.exp %312 : vector<8x128xf32>
    %cst_125 = arith.constant 1.000000e+00 : f32
    %314 = vector.broadcast %cst_125 : f32 to vector<8x128xf32>
    %315 = arith.addf %314, %313 : vector<8x128xf32>
    %316 = arith.divf %314, %315 : vector<8x128xf32>
    %317 = vector.extract_strided_slice %304 {offsets = [0, 256], sizes = [8, 128], strides = [1, 1]} : vector<8x512xf32> to vector<8x128xf32>
    %318 = math.tanh %317 : vector<8x128xf32>
    %319 = vector.extract_strided_slice %304 {offsets = [0, 384], sizes = [8, 128], strides = [1, 1]} : vector<8x512xf32> to vector<8x128xf32>
    %320 = arith.negf %319 : vector<8x128xf32>
    %321 = math.exp %320 : vector<8x128xf32>
    %cst_126 = arith.constant 1.000000e+00 : f32
    %322 = vector.broadcast %cst_126 : f32 to vector<8x128xf32>
    %323 = arith.addf %322, %321 : vector<8x128xf32>
    %324 = arith.divf %322, %323 : vector<8x128xf32>
    %c0_127 = arith.constant 0 : index
    %c0_128 = arith.constant 0 : index
    %325 = vector.load %arg14[%c0_127, %c0_128] : memref<8x128xf32, #tpu.memory_space<vmem>>, vector<8x128xf32>
    %326 = arith.mulf %316, %325 : vector<8x128xf32>
    %327 = arith.mulf %310, %318 : vector<8x128xf32>
    %328 = arith.addf %326, %327 : vector<8x128xf32>
    %329 = math.tanh %328 : vector<8x128xf32>
    %330 = arith.mulf %324, %329 : vector<8x128xf32>
    %c0_129 = arith.constant 0 : index
    %c0_130 = arith.constant 0 : index
    %331 = vector.load %arg14[%c0_129, %c0_130] : memref<8x128xf32, #tpu.memory_space<vmem>>, vector<8x128xf32>
    tpu.vector_store %arg14[%c0_129, %c0_130], %328 {strides = array<i32>} : memref<8x128xf32, #tpu.memory_space<vmem>>, vector<8x128xf32>,
    %c0_131 = arith.constant 0 : index
    %c128_132 = arith.constant 128 : index
    %332 = vector.load %arg13[%c0_131, %c128_132] : memref<8x256xf32, #tpu.memory_space<vmem>>, vector<8x128xf32>
    tpu.vector_store %arg13[%c0_131, %c128_132], %330 {strides = array<i32>} : memref<8x256xf32, #tpu.memory_space<vmem>>, vector<8x128xf32>,
    %333 = tpu.iota {dimensions = array<i32: 0>} : vector<8x128xi32>
    %334 = tpu.iota {dimensions = array<i32: 1>} : vector<8x128xi32>
    %c-1_i32_133 = arith.constant -1 : i32
    %335 = vector.broadcast %c-1_i32_133 : i32 to vector<8x128xi32>
    %c0_i32_134 = arith.constant 0 : i32
    %336 = vector.broadcast %c0_i32_134 : i32 to vector<8x128xi32>
    %337 = arith.cmpi eq, %333, %336 : vector<8x128xi32>
    %c20 = arith.constant 20 : index
    %338 = memref.load %arg1[%c20] : memref<32xi32, #tpu.memory_space<smem>>
    %339 = vector.broadcast %338 : i32 to vector<8x128xi32>
    %340 = arith.select %337, %339, %335 : vector<8x128xi1>, vector<8x128xi32>
    %c1_i32_135 = arith.constant 1 : i32
    %341 = vector.broadcast %c1_i32_135 : i32 to vector<8x128xi32>
    %342 = arith.cmpi eq, %333, %341 : vector<8x128xi32>
    %c21 = arith.constant 21 : index
    %343 = memref.load %arg1[%c21] : memref<32xi32, #tpu.memory_space<smem>>
    %344 = vector.broadcast %343 : i32 to vector<8x128xi32>
    %345 = arith.select %342, %344, %340 : vector<8x128xi1>, vector<8x128xi32>
    %c2_i32_136 = arith.constant 2 : i32
    %346 = vector.broadcast %c2_i32_136 : i32 to vector<8x128xi32>
    %347 = arith.cmpi eq, %333, %346 : vector<8x128xi32>
    %c22 = arith.constant 22 : index
    %348 = memref.load %arg1[%c22] : memref<32xi32, #tpu.memory_space<smem>>
    %349 = vector.broadcast %348 : i32 to vector<8x128xi32>
    %350 = arith.select %347, %349, %345 : vector<8x128xi1>, vector<8x128xi32>
    %c3_i32_137 = arith.constant 3 : i32
    %351 = vector.broadcast %c3_i32_137 : i32 to vector<8x128xi32>
    %352 = arith.cmpi eq, %333, %351 : vector<8x128xi32>
    %c23 = arith.constant 23 : index
    %353 = memref.load %arg1[%c23] : memref<32xi32, #tpu.memory_space<smem>>
    %354 = vector.broadcast %353 : i32 to vector<8x128xi32>
    %355 = arith.select %352, %354, %350 : vector<8x128xi1>, vector<8x128xi32>
    %356 = arith.cmpi eq, %334, %355 : vector<8x128xi32>
    %357 = arith.extui %356 : vector<8x128xi1> to vector<8x128xi32>
    %358 = arith.sitofp %357 : vector<8x128xi32> to vector<8x128xf32>
    %359 = arith.truncf %358 : vector<8x128xf32> to vector<8x128xbf16>
    %c0_138 = arith.constant 0 : index
    %c0_139 = arith.constant 0 : index
    %360 = vector.load %arg4[%c0_138, %c0_139] : memref<128x128xbf16, #tpu.memory_space<vmem>>, vector<128x128xbf16>
    %cst_140 = arith.constant dense<0.000000e+00> : vector<8x128xf32>
    %361 = tpu.matmul %359, %360, %cst_140 {dimension_numbers = #tpu.dot_dimension_numbers<[1], [0], [0], [1], [0, 0, 1, 1], [], []>} : vector<8x128xbf16>, vector<128x128xbf16>, vector<8x128xf32> -> vector<8x128xf32>
    %c0_141 = arith.constant 0 : index
    %c0_142 = arith.constant 0 : index
    %362 = vector.load %arg13[%c0_141, %c0_142] : memref<8x256xf32, #tpu.memory_space<vmem>>, vector<8x128xf32>
    tpu.vector_store %arg13[%c0_141, %c0_142], %361 {strides = array<i32>} : memref<8x256xf32, #tpu.memory_space<vmem>>, vector<8x128xf32>,
    %c0_143 = arith.constant 0 : index
    %c0_144 = arith.constant 0 : index
    %363 = vector.load %arg13[%c0_143, %c0_144] : memref<8x256xf32, #tpu.memory_space<vmem>>, vector<8x256xf32>
    %364 = arith.truncf %363 : vector<8x256xf32> to vector<8x256xbf16>
    %c0_145 = arith.constant 0 : index
    %c0_146 = arith.constant 0 : index
    %365 = vector.load %arg5[%c0_145, %c0_146] : memref<256x512xbf16, #tpu.memory_space<vmem>>, vector<256x512xbf16>
    %cst_147 = arith.constant dense<0.000000e+00> : vector<8x512xf32>
    %366 = tpu.matmul %364, %365, %cst_147 {dimension_numbers = #tpu.dot_dimension_numbers<[1], [0], [0], [1], [0, 0, 1, 1], [], []>} : vector<8x256xbf16>, vector<256x512xbf16>, vector<8x512xf32> -> vector<8x512xf32>
    %c0_148 = arith.constant 0 : index
    %c0_149 = arith.constant 0 : index
    %367 = vector.load %arg6[%c0_148, %c0_149] : memref<1x512xf32, #tpu.memory_space<vmem>>, vector<1x512xf32>
    %368 = vector.broadcast %367 : vector<1x512xf32> to vector<8x512xf32>
    %369 = arith.addf %366, %368 : vector<8x512xf32>
    %370 = vector.extract_strided_slice %369 {offsets = [0, 0], sizes = [8, 128], strides = [1, 1]} : vector<8x512xf32> to vector<8x128xf32>
    %371 = arith.negf %370 : vector<8x128xf32>
    %372 = math.exp %371 : vector<8x128xf32>
    %cst_150 = arith.constant 1.000000e+00 : f32
    %373 = vector.broadcast %cst_150 : f32 to vector<8x128xf32>
    %374 = arith.addf %373, %372 : vector<8x128xf32>
    %375 = arith.divf %373, %374 : vector<8x128xf32>
    %376 = vector.extract_strided_slice %369 {offsets = [0, 128], sizes = [8, 128], strides = [1, 1]} : vector<8x512xf32> to vector<8x128xf32>
    %377 = arith.negf %376 : vector<8x128xf32>
    %378 = math.exp %377 : vector<8x128xf32>
    %cst_151 = arith.constant 1.000000e+00 : f32
    %379 = vector.broadcast %cst_151 : f32 to vector<8x128xf32>
    %380 = arith.addf %379, %378 : vector<8x128xf32>
    %381 = arith.divf %379, %380 : vector<8x128xf32>
    %382 = vector.extract_strided_slice %369 {offsets = [0, 256], sizes = [8, 128], strides = [1, 1]} : vector<8x512xf32> to vector<8x128xf32>
    %383 = math.tanh %382 : vector<8x128xf32>
    %384 = vector.extract_strided_slice %369 {offsets = [0, 384], sizes = [8, 128], strides = [1, 1]} : vector<8x512xf32> to vector<8x128xf32>
    %385 = arith.negf %384 : vector<8x128xf32>
    %386 = math.exp %385 : vector<8x128xf32>
    %cst_152 = arith.constant 1.000000e+00 : f32
    %387 = vector.broadcast %cst_152 : f32 to vector<8x128xf32>
    %388 = arith.addf %387, %386 : vector<8x128xf32>
    %389 = arith.divf %387, %388 : vector<8x128xf32>
    %c0_153 = arith.constant 0 : index
    %c0_154 = arith.constant 0 : index
    %390 = vector.load %arg14[%c0_153, %c0_154] : memref<8x128xf32, #tpu.memory_space<vmem>>, vector<8x128xf32>
    %391 = arith.mulf %381, %390 : vector<8x128xf32>
    %392 = arith.mulf %375, %383 : vector<8x128xf32>
    %393 = arith.addf %391, %392 : vector<8x128xf32>
    %394 = math.tanh %393 : vector<8x128xf32>
    %395 = arith.mulf %389, %394 : vector<8x128xf32>
    %c0_155 = arith.constant 0 : index
    %c0_156 = arith.constant 0 : index
    %396 = vector.load %arg14[%c0_155, %c0_156] : memref<8x128xf32, #tpu.memory_space<vmem>>, vector<8x128xf32>
    tpu.vector_store %arg14[%c0_155, %c0_156], %393 {strides = array<i32>} : memref<8x128xf32, #tpu.memory_space<vmem>>, vector<8x128xf32>,
    %c0_157 = arith.constant 0 : index
    %c128_158 = arith.constant 128 : index
    %397 = vector.load %arg13[%c0_157, %c128_158] : memref<8x256xf32, #tpu.memory_space<vmem>>, vector<8x128xf32>
    tpu.vector_store %arg13[%c0_157, %c128_158], %395 {strides = array<i32>} : memref<8x256xf32, #tpu.memory_space<vmem>>, vector<8x128xf32>,
    %398 = tpu.iota {dimensions = array<i32: 0>} : vector<8x128xi32>
    %399 = tpu.iota {dimensions = array<i32: 1>} : vector<8x128xi32>
    %c-1_i32_159 = arith.constant -1 : i32
    %400 = vector.broadcast %c-1_i32_159 : i32 to vector<8x128xi32>
    %c0_i32_160 = arith.constant 0 : i32
    %401 = vector.broadcast %c0_i32_160 : i32 to vector<8x128xi32>
    %402 = arith.cmpi eq, %398, %401 : vector<8x128xi32>
    %c24 = arith.constant 24 : index
    %403 = memref.load %arg1[%c24] : memref<32xi32, #tpu.memory_space<smem>>
    %404 = vector.broadcast %403 : i32 to vector<8x128xi32>
    %405 = arith.select %402, %404, %400 : vector<8x128xi1>, vector<8x128xi32>
    %c1_i32_161 = arith.constant 1 : i32
    %406 = vector.broadcast %c1_i32_161 : i32 to vector<8x128xi32>
    %407 = arith.cmpi eq, %398, %406 : vector<8x128xi32>
    %c25 = arith.constant 25 : index
    %408 = memref.load %arg1[%c25] : memref<32xi32, #tpu.memory_space<smem>>
    %409 = vector.broadcast %408 : i32 to vector<8x128xi32>
    %410 = arith.select %407, %409, %405 : vector<8x128xi1>, vector<8x128xi32>
    %c2_i32_162 = arith.constant 2 : i32
    %411 = vector.broadcast %c2_i32_162 : i32 to vector<8x128xi32>
    %412 = arith.cmpi eq, %398, %411 : vector<8x128xi32>
    %c26 = arith.constant 26 : index
    %413 = memref.load %arg1[%c26] : memref<32xi32, #tpu.memory_space<smem>>
    %414 = vector.broadcast %413 : i32 to vector<8x128xi32>
    %415 = arith.select %412, %414, %410 : vector<8x128xi1>, vector<8x128xi32>
    %c3_i32_163 = arith.constant 3 : i32
    %416 = vector.broadcast %c3_i32_163 : i32 to vector<8x128xi32>
    %417 = arith.cmpi eq, %398, %416 : vector<8x128xi32>
    %c27 = arith.constant 27 : index
    %418 = memref.load %arg1[%c27] : memref<32xi32, #tpu.memory_space<smem>>
    %419 = vector.broadcast %418 : i32 to vector<8x128xi32>
    %420 = arith.select %417, %419, %415 : vector<8x128xi1>, vector<8x128xi32>
    %421 = arith.cmpi eq, %399, %420 : vector<8x128xi32>
    %422 = arith.extui %421 : vector<8x128xi1> to vector<8x128xi32>
    %423 = arith.sitofp %422 : vector<8x128xi32> to vector<8x128xf32>
    %424 = arith.truncf %423 : vector<8x128xf32> to vector<8x128xbf16>
    %c0_164 = arith.constant 0 : index
    %c0_165 = arith.constant 0 : index
    %425 = vector.load %arg4[%c0_164, %c0_165] : memref<128x128xbf16, #tpu.memory_space<vmem>>, vector<128x128xbf16>
    %cst_166 = arith.constant dense<0.000000e+00> : vector<8x128xf32>
    %426 = tpu.matmul %424, %425, %cst_166 {dimension_numbers = #tpu.dot_dimension_numbers<[1], [0], [0], [1], [0, 0, 1, 1], [], []>} : vector<8x128xbf16>, vector<128x128xbf16>, vector<8x128xf32> -> vector<8x128xf32>
    %c0_167 = arith.constant 0 : index
    %c0_168 = arith.constant 0 : index
    %427 = vector.load %arg13[%c0_167, %c0_168] : memref<8x256xf32, #tpu.memory_space<vmem>>, vector<8x128xf32>
    tpu.vector_store %arg13[%c0_167, %c0_168], %426 {strides = array<i32>} : memref<8x256xf32, #tpu.memory_space<vmem>>, vector<8x128xf32>,
    %c0_169 = arith.constant 0 : index
    %c0_170 = arith.constant 0 : index
    %428 = vector.load %arg13[%c0_169, %c0_170] : memref<8x256xf32, #tpu.memory_space<vmem>>, vector<8x256xf32>
    %429 = arith.truncf %428 : vector<8x256xf32> to vector<8x256xbf16>
    %c0_171 = arith.constant 0 : index
    %c0_172 = arith.constant 0 : index
    %430 = vector.load %arg5[%c0_171, %c0_172] : memref<256x512xbf16, #tpu.memory_space<vmem>>, vector<256x512xbf16>
    %cst_173 = arith.constant dense<0.000000e+00> : vector<8x512xf32>
    %431 = tpu.matmul %429, %430, %cst_173 {dimension_numbers = #tpu.dot_dimension_numbers<[1], [0], [0], [1], [0, 0, 1, 1], [], []>} : vector<8x256xbf16>, vector<256x512xbf16>, vector<8x512xf32> -> vector<8x512xf32>
    %c0_174 = arith.constant 0 : index
    %c0_175 = arith.constant 0 : index
    %432 = vector.load %arg6[%c0_174, %c0_175] : memref<1x512xf32, #tpu.memory_space<vmem>>, vector<1x512xf32>
    %433 = vector.broadcast %432 : vector<1x512xf32> to vector<8x512xf32>
    %434 = arith.addf %431, %433 : vector<8x512xf32>
    %435 = vector.extract_strided_slice %434 {offsets = [0, 0], sizes = [8, 128], strides = [1, 1]} : vector<8x512xf32> to vector<8x128xf32>
    %436 = arith.negf %435 : vector<8x128xf32>
    %437 = math.exp %436 : vector<8x128xf32>
    %cst_176 = arith.constant 1.000000e+00 : f32
    %438 = vector.broadcast %cst_176 : f32 to vector<8x128xf32>
    %439 = arith.addf %438, %437 : vector<8x128xf32>
    %440 = arith.divf %438, %439 : vector<8x128xf32>
    %441 = vector.extract_strided_slice %434 {offsets = [0, 128], sizes = [8, 128], strides = [1, 1]} : vector<8x512xf32> to vector<8x128xf32>
    %442 = arith.negf %441 : vector<8x128xf32>
    %443 = math.exp %442 : vector<8x128xf32>
    %cst_177 = arith.constant 1.000000e+00 : f32
    %444 = vector.broadcast %cst_177 : f32 to vector<8x128xf32>
    %445 = arith.addf %444, %443 : vector<8x128xf32>
    %446 = arith.divf %444, %445 : vector<8x128xf32>
    %447 = vector.extract_strided_slice %434 {offsets = [0, 256], sizes = [8, 128], strides = [1, 1]} : vector<8x512xf32> to vector<8x128xf32>
    %448 = math.tanh %447 : vector<8x128xf32>
    %449 = vector.extract_strided_slice %434 {offsets = [0, 384], sizes = [8, 128], strides = [1, 1]} : vector<8x512xf32> to vector<8x128xf32>
    %450 = arith.negf %449 : vector<8x128xf32>
    %451 = math.exp %450 : vector<8x128xf32>
    %cst_178 = arith.constant 1.000000e+00 : f32
    %452 = vector.broadcast %cst_178 : f32 to vector<8x128xf32>
    %453 = arith.addf %452, %451 : vector<8x128xf32>
    %454 = arith.divf %452, %453 : vector<8x128xf32>
    %c0_179 = arith.constant 0 : index
    %c0_180 = arith.constant 0 : index
    %455 = vector.load %arg14[%c0_179, %c0_180] : memref<8x128xf32, #tpu.memory_space<vmem>>, vector<8x128xf32>
    %456 = arith.mulf %446, %455 : vector<8x128xf32>
    %457 = arith.mulf %440, %448 : vector<8x128xf32>
    %458 = arith.addf %456, %457 : vector<8x128xf32>
    %459 = math.tanh %458 : vector<8x128xf32>
    %460 = arith.mulf %454, %459 : vector<8x128xf32>
    %c0_181 = arith.constant 0 : index
    %c0_182 = arith.constant 0 : index
    %461 = vector.load %arg14[%c0_181, %c0_182] : memref<8x128xf32, #tpu.memory_space<vmem>>, vector<8x128xf32>
    tpu.vector_store %arg14[%c0_181, %c0_182], %458 {strides = array<i32>} : memref<8x128xf32, #tpu.memory_space<vmem>>, vector<8x128xf32>,
    %c0_183 = arith.constant 0 : index
    %c128_184 = arith.constant 128 : index
    %462 = vector.load %arg13[%c0_183, %c128_184] : memref<8x256xf32, #tpu.memory_space<vmem>>, vector<8x128xf32>
    tpu.vector_store %arg13[%c0_183, %c128_184], %460 {strides = array<i32>} : memref<8x256xf32, #tpu.memory_space<vmem>>, vector<8x128xf32>,
    %463 = tpu.iota {dimensions = array<i32: 0>} : vector<8x128xi32>
    %464 = tpu.iota {dimensions = array<i32: 1>} : vector<8x128xi32>
    %c-1_i32_185 = arith.constant -1 : i32
    %465 = vector.broadcast %c-1_i32_185 : i32 to vector<8x128xi32>
    %c0_i32_186 = arith.constant 0 : i32
    %466 = vector.broadcast %c0_i32_186 : i32 to vector<8x128xi32>
    %467 = arith.cmpi eq, %463, %466 : vector<8x128xi32>
    %c28 = arith.constant 28 : index
    %468 = memref.load %arg1[%c28] : memref<32xi32, #tpu.memory_space<smem>>
    %469 = vector.broadcast %468 : i32 to vector<8x128xi32>
    %470 = arith.select %467, %469, %465 : vector<8x128xi1>, vector<8x128xi32>
    %c1_i32_187 = arith.constant 1 : i32
    %471 = vector.broadcast %c1_i32_187 : i32 to vector<8x128xi32>
    %472 = arith.cmpi eq, %463, %471 : vector<8x128xi32>
    %c29 = arith.constant 29 : index
    %473 = memref.load %arg1[%c29] : memref<32xi32, #tpu.memory_space<smem>>
    %474 = vector.broadcast %473 : i32 to vector<8x128xi32>
    %475 = arith.select %472, %474, %470 : vector<8x128xi1>, vector<8x128xi32>
    %c2_i32_188 = arith.constant 2 : i32
    %476 = vector.broadcast %c2_i32_188 : i32 to vector<8x128xi32>
    %477 = arith.cmpi eq, %463, %476 : vector<8x128xi32>
    %c30 = arith.constant 30 : index
    %478 = memref.load %arg1[%c30] : memref<32xi32, #tpu.memory_space<smem>>
    %479 = vector.broadcast %478 : i32 to vector<8x128xi32>
    %480 = arith.select %477, %479, %475 : vector<8x128xi1>, vector<8x128xi32>
    %c3_i32_189 = arith.constant 3 : i32
    %481 = vector.broadcast %c3_i32_189 : i32 to vector<8x128xi32>
    %482 = arith.cmpi eq, %463, %481 : vector<8x128xi32>
    %c31 = arith.constant 31 : index
    %483 = memref.load %arg1[%c31] : memref<32xi32, #tpu.memory_space<smem>>
    %484 = vector.broadcast %483 : i32 to vector<8x128xi32>
    %485 = arith.select %482, %484, %480 : vector<8x128xi1>, vector<8x128xi32>
    %486 = arith.cmpi eq, %464, %485 : vector<8x128xi32>
    %487 = arith.extui %486 : vector<8x128xi1> to vector<8x128xi32>
    %488 = arith.sitofp %487 : vector<8x128xi32> to vector<8x128xf32>
    %489 = arith.truncf %488 : vector<8x128xf32> to vector<8x128xbf16>
    %c0_190 = arith.constant 0 : index
    %c0_191 = arith.constant 0 : index
    %490 = vector.load %arg4[%c0_190, %c0_191] : memref<128x128xbf16, #tpu.memory_space<vmem>>, vector<128x128xbf16>
    %cst_192 = arith.constant dense<0.000000e+00> : vector<8x128xf32>
    %491 = tpu.matmul %489, %490, %cst_192 {dimension_numbers = #tpu.dot_dimension_numbers<[1], [0], [0], [1], [0, 0, 1, 1], [], []>} : vector<8x128xbf16>, vector<128x128xbf16>, vector<8x128xf32> -> vector<8x128xf32>
    %c0_193 = arith.constant 0 : index
    %c0_194 = arith.constant 0 : index
    %492 = vector.load %arg13[%c0_193, %c0_194] : memref<8x256xf32, #tpu.memory_space<vmem>>, vector<8x128xf32>
    tpu.vector_store %arg13[%c0_193, %c0_194], %491 {strides = array<i32>} : memref<8x256xf32, #tpu.memory_space<vmem>>, vector<8x128xf32>,
    %c0_195 = arith.constant 0 : index
    %c0_196 = arith.constant 0 : index
    %493 = vector.load %arg13[%c0_195, %c0_196] : memref<8x256xf32, #tpu.memory_space<vmem>>, vector<8x256xf32>
    %494 = arith.truncf %493 : vector<8x256xf32> to vector<8x256xbf16>
    %c0_197 = arith.constant 0 : index
    %c0_198 = arith.constant 0 : index
    %495 = vector.load %arg5[%c0_197, %c0_198] : memref<256x512xbf16, #tpu.memory_space<vmem>>, vector<256x512xbf16>
    %cst_199 = arith.constant dense<0.000000e+00> : vector<8x512xf32>
    %496 = tpu.matmul %494, %495, %cst_199 {dimension_numbers = #tpu.dot_dimension_numbers<[1], [0], [0], [1], [0, 0, 1, 1], [], []>} : vector<8x256xbf16>, vector<256x512xbf16>, vector<8x512xf32> -> vector<8x512xf32>
    %c0_200 = arith.constant 0 : index
    %c0_201 = arith.constant 0 : index
    %497 = vector.load %arg6[%c0_200, %c0_201] : memref<1x512xf32, #tpu.memory_space<vmem>>, vector<1x512xf32>
    %498 = vector.broadcast %497 : vector<1x512xf32> to vector<8x512xf32>
    %499 = arith.addf %496, %498 : vector<8x512xf32>
    %500 = vector.extract_strided_slice %499 {offsets = [0, 0], sizes = [8, 128], strides = [1, 1]} : vector<8x512xf32> to vector<8x128xf32>
    %501 = arith.negf %500 : vector<8x128xf32>
    %502 = math.exp %501 : vector<8x128xf32>
    %cst_202 = arith.constant 1.000000e+00 : f32
    %503 = vector.broadcast %cst_202 : f32 to vector<8x128xf32>
    %504 = arith.addf %503, %502 : vector<8x128xf32>
    %505 = arith.divf %503, %504 : vector<8x128xf32>
    %506 = vector.extract_strided_slice %499 {offsets = [0, 128], sizes = [8, 128], strides = [1, 1]} : vector<8x512xf32> to vector<8x128xf32>
    %507 = arith.negf %506 : vector<8x128xf32>
    %508 = math.exp %507 : vector<8x128xf32>
    %cst_203 = arith.constant 1.000000e+00 : f32
    %509 = vector.broadcast %cst_203 : f32 to vector<8x128xf32>
    %510 = arith.addf %509, %508 : vector<8x128xf32>
    %511 = arith.divf %509, %510 : vector<8x128xf32>
    %512 = vector.extract_strided_slice %499 {offsets = [0, 256], sizes = [8, 128], strides = [1, 1]} : vector<8x512xf32> to vector<8x128xf32>
    %513 = math.tanh %512 : vector<8x128xf32>
    %514 = vector.extract_strided_slice %499 {offsets = [0, 384], sizes = [8, 128], strides = [1, 1]} : vector<8x512xf32> to vector<8x128xf32>
    %515 = arith.negf %514 : vector<8x128xf32>
    %516 = math.exp %515 : vector<8x128xf32>
    %cst_204 = arith.constant 1.000000e+00 : f32
    %517 = vector.broadcast %cst_204 : f32 to vector<8x128xf32>
    %518 = arith.addf %517, %516 : vector<8x128xf32>
    %519 = arith.divf %517, %518 : vector<8x128xf32>
    %c0_205 = arith.constant 0 : index
    %c0_206 = arith.constant 0 : index
    %520 = vector.load %arg14[%c0_205, %c0_206] : memref<8x128xf32, #tpu.memory_space<vmem>>, vector<8x128xf32>
    %521 = arith.mulf %511, %520 : vector<8x128xf32>
    %522 = arith.mulf %505, %513 : vector<8x128xf32>
    %523 = arith.addf %521, %522 : vector<8x128xf32>
    %524 = math.tanh %523 : vector<8x128xf32>
    %525 = arith.mulf %519, %524 : vector<8x128xf32>
    %c0_207 = arith.constant 0 : index
    %c0_208 = arith.constant 0 : index
    %526 = vector.load %arg14[%c0_207, %c0_208] : memref<8x128xf32, #tpu.memory_space<vmem>>, vector<8x128xf32>
    tpu.vector_store %arg14[%c0_207, %c0_208], %523 {strides = array<i32>} : memref<8x128xf32, #tpu.memory_space<vmem>>, vector<8x128xf32>,
    %c0_209 = arith.constant 0 : index
    %c128_210 = arith.constant 128 : index
    %527 = vector.load %arg13[%c0_209, %c128_210] : memref<8x256xf32, #tpu.memory_space<vmem>>, vector<8x128xf32>
    tpu.vector_store %arg13[%c0_209, %c128_210], %525 {strides = array<i32>} : memref<8x256xf32, #tpu.memory_space<vmem>>, vector<8x128xf32>,
    %528 = tpu.iota {dimensions = array<i32: 0>} : vector<8x128xi32>
    %529 = tpu.iota {dimensions = array<i32: 1>} : vector<8x128xi32>
    %c-1_i32_211 = arith.constant -1 : i32
    %530 = vector.broadcast %c-1_i32_211 : i32 to vector<8x128xi32>
    %c0_i32_212 = arith.constant 0 : i32
    %531 = vector.broadcast %c0_i32_212 : i32 to vector<8x128xi32>
    %532 = arith.cmpi eq, %528, %531 : vector<8x128xi32>
    %c0_213 = arith.constant 0 : index
    %533 = memref.load %arg2[%c0_213] : memref<28xi32, #tpu.memory_space<smem>>
    %534 = vector.broadcast %533 : i32 to vector<8x128xi32>
    %535 = arith.select %532, %534, %530 : vector<8x128xi1>, vector<8x128xi32>
    %c1_i32_214 = arith.constant 1 : i32
    %536 = vector.broadcast %c1_i32_214 : i32 to vector<8x128xi32>
    %537 = arith.cmpi eq, %528, %536 : vector<8x128xi32>
    %c1_215 = arith.constant 1 : index
    %538 = memref.load %arg2[%c1_215] : memref<28xi32, #tpu.memory_space<smem>>
    %539 = vector.broadcast %538 : i32 to vector<8x128xi32>
    %540 = arith.select %537, %539, %535 : vector<8x128xi1>, vector<8x128xi32>
    %c2_i32_216 = arith.constant 2 : i32
    %541 = vector.broadcast %c2_i32_216 : i32 to vector<8x128xi32>
    %542 = arith.cmpi eq, %528, %541 : vector<8x128xi32>
    %c2_217 = arith.constant 2 : index
    %543 = memref.load %arg2[%c2_217] : memref<28xi32, #tpu.memory_space<smem>>
    %544 = vector.broadcast %543 : i32 to vector<8x128xi32>
    %545 = arith.select %542, %544, %540 : vector<8x128xi1>, vector<8x128xi32>
    %c3_i32_218 = arith.constant 3 : i32
    %546 = vector.broadcast %c3_i32_218 : i32 to vector<8x128xi32>
    %547 = arith.cmpi eq, %528, %546 : vector<8x128xi32>
    %c3_219 = arith.constant 3 : index
    %548 = memref.load %arg2[%c3_219] : memref<28xi32, #tpu.memory_space<smem>>
    %549 = vector.broadcast %548 : i32 to vector<8x128xi32>
    %550 = arith.select %547, %549, %545 : vector<8x128xi1>, vector<8x128xi32>
    %551 = arith.cmpi eq, %529, %550 : vector<8x128xi32>
    %552 = arith.extui %551 : vector<8x128xi1> to vector<8x128xi32>
    %553 = arith.sitofp %552 : vector<8x128xi32> to vector<8x128xf32>
    %554 = arith.truncf %553 : vector<8x128xf32> to vector<8x128xbf16>
    %c0_220 = arith.constant 0 : index
    %c0_221 = arith.constant 0 : index
    %555 = vector.load %arg7[%c0_220, %c0_221] : memref<128x128xbf16, #tpu.memory_space<vmem>>, vector<128x128xbf16>
    %cst_222 = arith.constant dense<0.000000e+00> : vector<8x128xf32>
    %556 = tpu.matmul %554, %555, %cst_222 {dimension_numbers = #tpu.dot_dimension_numbers<[1], [0], [0], [1], [0, 0, 1, 1], [], []>} : vector<8x128xbf16>, vector<128x128xbf16>, vector<8x128xf32> -> vector<8x128xf32>
    %c0_223 = arith.constant 0 : index
    %c0_224 = arith.constant 0 : index
    %557 = vector.load %arg13[%c0_223, %c0_224] : memref<8x256xf32, #tpu.memory_space<vmem>>, vector<8x128xf32>
    tpu.vector_store %arg13[%c0_223, %c0_224], %556 {strides = array<i32>} : memref<8x256xf32, #tpu.memory_space<vmem>>, vector<8x128xf32>,
    %c0_225 = arith.constant 0 : index
    %c0_226 = arith.constant 0 : index
    %558 = vector.load %arg13[%c0_225, %c0_226] : memref<8x256xf32, #tpu.memory_space<vmem>>, vector<8x256xf32>
    %559 = arith.truncf %558 : vector<8x256xf32> to vector<8x256xbf16>
    %c0_227 = arith.constant 0 : index
    %c0_228 = arith.constant 0 : index
    %560 = vector.load %arg8[%c0_227, %c0_228] : memref<256x512xbf16, #tpu.memory_space<vmem>>, vector<256x512xbf16>
    %cst_229 = arith.constant dense<0.000000e+00> : vector<8x512xf32>
    %561 = tpu.matmul %559, %560, %cst_229 {dimension_numbers = #tpu.dot_dimension_numbers<[1], [0], [0], [1], [0, 0, 1, 1], [], []>} : vector<8x256xbf16>, vector<256x512xbf16>, vector<8x512xf32> -> vector<8x512xf32>
    %c0_230 = arith.constant 0 : index
    %c0_231 = arith.constant 0 : index
    %562 = vector.load %arg9[%c0_230, %c0_231] : memref<1x512xf32, #tpu.memory_space<vmem>>, vector<1x512xf32>
    %563 = vector.broadcast %562 : vector<1x512xf32> to vector<8x512xf32>
    %564 = arith.addf %561, %563 : vector<8x512xf32>
    %565 = vector.extract_strided_slice %564 {offsets = [0, 0], sizes = [8, 128], strides = [1, 1]} : vector<8x512xf32> to vector<8x128xf32>
    %566 = arith.negf %565 : vector<8x128xf32>
    %567 = math.exp %566 : vector<8x128xf32>
    %cst_232 = arith.constant 1.000000e+00 : f32
    %568 = vector.broadcast %cst_232 : f32 to vector<8x128xf32>
    %569 = arith.addf %568, %567 : vector<8x128xf32>
    %570 = arith.divf %568, %569 : vector<8x128xf32>
    %571 = vector.extract_strided_slice %564 {offsets = [0, 128], sizes = [8, 128], strides = [1, 1]} : vector<8x512xf32> to vector<8x128xf32>
    %572 = arith.negf %571 : vector<8x128xf32>
    %573 = math.exp %572 : vector<8x128xf32>
    %cst_233 = arith.constant 1.000000e+00 : f32
    %574 = vector.broadcast %cst_233 : f32 to vector<8x128xf32>
    %575 = arith.addf %574, %573 : vector<8x128xf32>
    %576 = arith.divf %574, %575 : vector<8x128xf32>
    %577 = vector.extract_strided_slice %564 {offsets = [0, 256], sizes = [8, 128], strides = [1, 1]} : vector<8x512xf32> to vector<8x128xf32>
    %578 = math.tanh %577 : vector<8x128xf32>
    %579 = vector.extract_strided_slice %564 {offsets = [0, 384], sizes = [8, 128], strides = [1, 1]} : vector<8x512xf32> to vector<8x128xf32>
    %580 = arith.negf %579 : vector<8x128xf32>
    %581 = math.exp %580 : vector<8x128xf32>
    %cst_234 = arith.constant 1.000000e+00 : f32
    %582 = vector.broadcast %cst_234 : f32 to vector<8x128xf32>
    %583 = arith.addf %582, %581 : vector<8x128xf32>
    %584 = arith.divf %582, %583 : vector<8x128xf32>
    %c0_235 = arith.constant 0 : index
    %c0_236 = arith.constant 0 : index
    %585 = vector.load %arg14[%c0_235, %c0_236] : memref<8x128xf32, #tpu.memory_space<vmem>>, vector<8x128xf32>
    %586 = arith.mulf %576, %585 : vector<8x128xf32>
    %587 = arith.mulf %570, %578 : vector<8x128xf32>
    %588 = arith.addf %586, %587 : vector<8x128xf32>
    %589 = math.tanh %588 : vector<8x128xf32>
    %590 = arith.mulf %584, %589 : vector<8x128xf32>
    %c0_237 = arith.constant 0 : index
    %c0_238 = arith.constant 0 : index
    %591 = vector.load %arg14[%c0_237, %c0_238] : memref<8x128xf32, #tpu.memory_space<vmem>>, vector<8x128xf32>
    tpu.vector_store %arg14[%c0_237, %c0_238], %588 {strides = array<i32>} : memref<8x128xf32, #tpu.memory_space<vmem>>, vector<8x128xf32>,
    %c0_239 = arith.constant 0 : index
    %c128_240 = arith.constant 128 : index
    %592 = vector.load %arg13[%c0_239, %c128_240] : memref<8x256xf32, #tpu.memory_space<vmem>>, vector<8x128xf32>
    tpu.vector_store %arg13[%c0_239, %c128_240], %590 {strides = array<i32>} : memref<8x256xf32, #tpu.memory_space<vmem>>, vector<8x128xf32>,
    %593 = arith.truncf %590 : vector<8x128xf32> to vector<8x128xbf16>
    %c0_241 = arith.constant 0 : index
    %c0_242 = arith.constant 0 : index
    %594 = vector.load %arg10[%c0_241, %c0_242] : memref<128x128xbf16, #tpu.memory_space<vmem>>, vector<128x128xbf16>
    %cst_243 = arith.constant dense<0.000000e+00> : vector<8x128xf32>
    %595 = tpu.matmul %593, %594, %cst_243 {dimension_numbers = #tpu.dot_dimension_numbers<[1], [0], [0], [1], [0, 0, 1, 1], [], []>} : vector<8x128xbf16>, vector<128x128xbf16>, vector<8x128xf32> -> vector<8x128xf32>
    %c0_244 = arith.constant 0 : index
    %c0_245 = arith.constant 0 : index
    %596 = vector.load %arg11[%c0_244, %c0_245] : memref<1x128xf32, #tpu.memory_space<vmem>>, vector<1x128xf32>
    %597 = vector.broadcast %596 : vector<1x128xf32> to vector<8x128xf32>
    %598 = arith.addf %595, %597 : vector<8x128xf32>
    %c1_246 = arith.constant 1 : index
    %c0_247 = arith.constant 0 : index
    %c0_248 = arith.constant 0 : index
    %599 = vector.load %arg12[%c1_246, %c0_247, %c0_248] : memref<8x8x128xf32, #tpu.memory_space<vmem>>, vector<1x8x128xf32>
    %600 = vector.shape_cast %599 : vector<1x8x128xf32> to vector<8x128xf32>
    %601 = vector.shape_cast %598 : vector<8x128xf32> to vector<1x8x128xf32>
    tpu.vector_store %arg12[%c1_246, %c0_247, %c0_248], %601 {strides = array<i32>} : memref<8x8x128xf32, #tpu.memory_space<vmem>>, vector<1x8x128xf32>,
    %cst_249 = arith.constant dense<0xFF800000> : vector<8xf32>
    %602 = vector.multi_reduction <maximumf>, %598, %cst_249 [1] : vector<8x128xf32> to vector<8xf32>
    %603 = vector.shape_cast %602 : vector<8xf32> to vector<8x1xf32>
    %604 = tpu.iota {dimensions = array<i32: 1>} : vector<8x128xi32>
    %605 = vector.broadcast %603 : vector<8x1xf32> to vector<8x128xf32>
    %606 = arith.cmpf oeq, %598, %605 : vector<8x128xf32>
    %c128_i32 = arith.constant 128 : i32
    %607 = vector.broadcast %c128_i32 : i32 to vector<8x128xi32>
    %608 = arith.select %606, %604, %607 : vector<8x128xi1>, vector<8x128xi32>
    %cst_250 = arith.constant dense<2147483647> : vector<8xi32>
    %609 = vector.multi_reduction <minsi>, %608, %cst_250 [1] : vector<8x128xi32> to vector<8xi32>
    %610 = vector.shape_cast %609 : vector<8xi32> to vector<8x1xi32>
    %611 = vector.broadcast %610 : vector<8x1xi32> to vector<8x128xi32>
    %612 = arith.cmpi eq, %604, %611 : vector<8x128xi32>
    %613 = arith.extui %612 : vector<8x128xi1> to vector<8x128xi32>
    %614 = arith.sitofp %613 : vector<8x128xi32> to vector<8x128xf32>
    %615 = tpu.iota {dimensions = array<i32: 0>} : vector<8x128xi32>
    %616 = tpu.iota {dimensions = array<i32: 1>} : vector<8x128xi32>
    %c-1_i32_251 = arith.constant -1 : i32
    %617 = vector.broadcast %c-1_i32_251 : i32 to vector<8x128xi32>
    %c0_i32_252 = arith.constant 0 : i32
    %618 = vector.broadcast %c0_i32_252 : i32 to vector<8x128xi32>
    %619 = arith.cmpi eq, %615, %618 : vector<8x128xi32>
    %c4_253 = arith.constant 4 : index
    %620 = memref.load %arg2[%c4_253] : memref<28xi32, #tpu.memory_space<smem>>
    %621 = vector.broadcast %620 : i32 to vector<8x128xi32>
    %622 = arith.select %619, %621, %617 : vector<8x128xi1>, vector<8x128xi32>
    %c1_i32_254 = arith.constant 1 : i32
    %623 = vector.broadcast %c1_i32_254 : i32 to vector<8x128xi32>
    %624 = arith.cmpi eq, %615, %623 : vector<8x128xi32>
    %c5_255 = arith.constant 5 : index
    %625 = memref.load %arg2[%c5_255] : memref<28xi32, #tpu.memory_space<smem>>
    %626 = vector.broadcast %625 : i32 to vector<8x128xi32>
    %627 = arith.select %624, %626, %622 : vector<8x128xi1>, vector<8x128xi32>
    %c2_i32_256 = arith.constant 2 : i32
    %628 = vector.broadcast %c2_i32_256 : i32 to vector<8x128xi32>
    %629 = arith.cmpi eq, %615, %628 : vector<8x128xi32>
    %c6_257 = arith.constant 6 : index
    %630 = memref.load %arg2[%c6_257] : memref<28xi32, #tpu.memory_space<smem>>
    %631 = vector.broadcast %630 : i32 to vector<8x128xi32>
    %632 = arith.select %629, %631, %627 : vector<8x128xi1>, vector<8x128xi32>
    %c3_i32_258 = arith.constant 3 : i32
    %633 = vector.broadcast %c3_i32_258 : i32 to vector<8x128xi32>
    %634 = arith.cmpi eq, %615, %633 : vector<8x128xi32>
    %c7_259 = arith.constant 7 : index
    %635 = memref.load %arg2[%c7_259] : memref<28xi32, #tpu.memory_space<smem>>
    %636 = vector.broadcast %635 : i32 to vector<8x128xi32>
    %637 = arith.select %634, %636, %632 : vector<8x128xi1>, vector<8x128xi32>
    %638 = arith.cmpi eq, %616, %637 : vector<8x128xi32>
    %639 = arith.extui %638 : vector<8x128xi1> to vector<8x128xi32>
    %640 = arith.sitofp %639 : vector<8x128xi32> to vector<8x128xf32>
    %c0_260 = arith.constant 0 : index
    %641 = memref.load %arg3[%c0_260] : memref<7xi32, #tpu.memory_space<smem>>
    %c0_i32_261 = arith.constant 0 : i32
    %642 = arith.cmpi ne, %641, %c0_i32_261 : i32
    %643 = arith.extui %642 : i1 to i32
    %644 = arith.sitofp %643 : i32 to f32
    %645 = vector.broadcast %644 : f32 to vector<8x128xf32>
    %646 = arith.mulf %645, %640 : vector<8x128xf32>
    %cst_262 = arith.constant 1.000000e+00 : f32
    %647 = arith.subf %cst_262, %644 : f32
    %648 = vector.broadcast %647 : f32 to vector<8x128xf32>
    %649 = arith.mulf %648, %614 : vector<8x128xf32>
    %650 = arith.addf %646, %649 : vector<8x128xf32>
    %651 = arith.truncf %650 : vector<8x128xf32> to vector<8x128xbf16>
    %c0_263 = arith.constant 0 : index
    %c0_264 = arith.constant 0 : index
    %652 = vector.load %arg7[%c0_263, %c0_264] : memref<128x128xbf16, #tpu.memory_space<vmem>>, vector<128x128xbf16>
    %cst_265 = arith.constant dense<0.000000e+00> : vector<8x128xf32>
    %653 = tpu.matmul %651, %652, %cst_265 {dimension_numbers = #tpu.dot_dimension_numbers<[1], [0], [0], [1], [0, 0, 1, 1], [], []>} : vector<8x128xbf16>, vector<128x128xbf16>, vector<8x128xf32> -> vector<8x128xf32>
    %c0_266 = arith.constant 0 : index
    %c0_267 = arith.constant 0 : index
    %654 = vector.load %arg13[%c0_266, %c0_267] : memref<8x256xf32, #tpu.memory_space<vmem>>, vector<8x128xf32>
    tpu.vector_store %arg13[%c0_266, %c0_267], %653 {strides = array<i32>} : memref<8x256xf32, #tpu.memory_space<vmem>>, vector<8x128xf32>,
    %c0_268 = arith.constant 0 : index
    %c0_269 = arith.constant 0 : index
    %655 = vector.load %arg13[%c0_268, %c0_269] : memref<8x256xf32, #tpu.memory_space<vmem>>, vector<8x256xf32>
    %656 = arith.truncf %655 : vector<8x256xf32> to vector<8x256xbf16>
    %c0_270 = arith.constant 0 : index
    %c0_271 = arith.constant 0 : index
    %657 = vector.load %arg8[%c0_270, %c0_271] : memref<256x512xbf16, #tpu.memory_space<vmem>>, vector<256x512xbf16>
    %cst_272 = arith.constant dense<0.000000e+00> : vector<8x512xf32>
    %658 = tpu.matmul %656, %657, %cst_272 {dimension_numbers = #tpu.dot_dimension_numbers<[1], [0], [0], [1], [0, 0, 1, 1], [], []>} : vector<8x256xbf16>, vector<256x512xbf16>, vector<8x512xf32> -> vector<8x512xf32>
    %c0_273 = arith.constant 0 : index
    %c0_274 = arith.constant 0 : index
    %659 = vector.load %arg9[%c0_273, %c0_274] : memref<1x512xf32, #tpu.memory_space<vmem>>, vector<1x512xf32>
    %660 = vector.broadcast %659 : vector<1x512xf32> to vector<8x512xf32>
    %661 = arith.addf %658, %660 : vector<8x512xf32>
    %662 = vector.extract_strided_slice %661 {offsets = [0, 0], sizes = [8, 128], strides = [1, 1]} : vector<8x512xf32> to vector<8x128xf32>
    %663 = arith.negf %662 : vector<8x128xf32>
    %664 = math.exp %663 : vector<8x128xf32>
    %cst_275 = arith.constant 1.000000e+00 : f32
    %665 = vector.broadcast %cst_275 : f32 to vector<8x128xf32>
    %666 = arith.addf %665, %664 : vector<8x128xf32>
    %667 = arith.divf %665, %666 : vector<8x128xf32>
    %668 = vector.extract_strided_slice %661 {offsets = [0, 128], sizes = [8, 128], strides = [1, 1]} : vector<8x512xf32> to vector<8x128xf32>
    %669 = arith.negf %668 : vector<8x128xf32>
    %670 = math.exp %669 : vector<8x128xf32>
    %cst_276 = arith.constant 1.000000e+00 : f32
    %671 = vector.broadcast %cst_276 : f32 to vector<8x128xf32>
    %672 = arith.addf %671, %670 : vector<8x128xf32>
    %673 = arith.divf %671, %672 : vector<8x128xf32>
    %674 = vector.extract_strided_slice %661 {offsets = [0, 256], sizes = [8, 128], strides = [1, 1]} : vector<8x512xf32> to vector<8x128xf32>
    %675 = math.tanh %674 : vector<8x128xf32>
    %676 = vector.extract_strided_slice %661 {offsets = [0, 384], sizes = [8, 128], strides = [1, 1]} : vector<8x512xf32> to vector<8x128xf32>
    %677 = arith.negf %676 : vector<8x128xf32>
    %678 = math.exp %677 : vector<8x128xf32>
    %cst_277 = arith.constant 1.000000e+00 : f32
    %679 = vector.broadcast %cst_277 : f32 to vector<8x128xf32>
    %680 = arith.addf %679, %678 : vector<8x128xf32>
    %681 = arith.divf %679, %680 : vector<8x128xf32>
    %c0_278 = arith.constant 0 : index
    %c0_279 = arith.constant 0 : index
    %682 = vector.load %arg14[%c0_278, %c0_279] : memref<8x128xf32, #tpu.memory_space<vmem>>, vector<8x128xf32>
    %683 = arith.mulf %673, %682 : vector<8x128xf32>
    %684 = arith.mulf %667, %675 : vector<8x128xf32>
    %685 = arith.addf %683, %684 : vector<8x128xf32>
    %686 = math.tanh %685 : vector<8x128xf32>
    %687 = arith.mulf %681, %686 : vector<8x128xf32>
    %c0_280 = arith.constant 0 : index
    %c0_281 = arith.constant 0 : index
    %688 = vector.load %arg14[%c0_280, %c0_281] : memref<8x128xf32, #tpu.memory_space<vmem>>, vector<8x128xf32>
    tpu.vector_store %arg14[%c0_280, %c0_281], %685 {strides = array<i32>} : memref<8x128xf32, #tpu.memory_space<vmem>>, vector<8x128xf32>,
    %c0_282 = arith.constant 0 : index
    %c128_283 = arith.constant 128 : index
    %689 = vector.load %arg13[%c0_282, %c128_283] : memref<8x256xf32, #tpu.memory_space<vmem>>, vector<8x128xf32>
    tpu.vector_store %arg13[%c0_282, %c128_283], %687 {strides = array<i32>} : memref<8x256xf32, #tpu.memory_space<vmem>>, vector<8x128xf32>,
    %690 = arith.truncf %687 : vector<8x128xf32> to vector<8x128xbf16>
    %c0_284 = arith.constant 0 : index
    %c0_285 = arith.constant 0 : index
    %691 = vector.load %arg10[%c0_284, %c0_285] : memref<128x128xbf16, #tpu.memory_space<vmem>>, vector<128x128xbf16>
    %cst_286 = arith.constant dense<0.000000e+00> : vector<8x128xf32>
    %692 = tpu.matmul %690, %691, %cst_286 {dimension_numbers = #tpu.dot_dimension_numbers<[1], [0], [0], [1], [0, 0, 1, 1], [], []>} : vector<8x128xbf16>, vector<128x128xbf16>, vector<8x128xf32> -> vector<8x128xf32>
    %c0_287 = arith.constant 0 : index
    %c0_288 = arith.constant 0 : index
    %693 = vector.load %arg11[%c0_287, %c0_288] : memref<1x128xf32, #tpu.memory_space<vmem>>, vector<1x128xf32>
    %694 = vector.broadcast %693 : vector<1x128xf32> to vector<8x128xf32>
    %695 = arith.addf %692, %694 : vector<8x128xf32>
    %c2_289 = arith.constant 2 : index
    %c0_290 = arith.constant 0 : index
    %c0_291 = arith.constant 0 : index
    %696 = vector.load %arg12[%c2_289, %c0_290, %c0_291] : memref<8x8x128xf32, #tpu.memory_space<vmem>>, vector<1x8x128xf32>
    %697 = vector.shape_cast %696 : vector<1x8x128xf32> to vector<8x128xf32>
    %698 = vector.shape_cast %695 : vector<8x128xf32> to vector<1x8x128xf32>
    tpu.vector_store %arg12[%c2_289, %c0_290, %c0_291], %698 {strides = array<i32>} : memref<8x8x128xf32, #tpu.memory_space<vmem>>, vector<1x8x128xf32>,
    %cst_292 = arith.constant dense<0xFF800000> : vector<8xf32>
    %699 = vector.multi_reduction <maximumf>, %695, %cst_292 [1] : vector<8x128xf32> to vector<8xf32>
    %700 = vector.shape_cast %699 : vector<8xf32> to vector<8x1xf32>
    %701 = tpu.iota {dimensions = array<i32: 1>} : vector<8x128xi32>
    %702 = vector.broadcast %700 : vector<8x1xf32> to vector<8x128xf32>
    %703 = arith.cmpf oeq, %695, %702 : vector<8x128xf32>
    %c128_i32_293 = arith.constant 128 : i32
    %704 = vector.broadcast %c128_i32_293 : i32 to vector<8x128xi32>
    %705 = arith.select %703, %701, %704 : vector<8x128xi1>, vector<8x128xi32>
    %cst_294 = arith.constant dense<2147483647> : vector<8xi32>
    %706 = vector.multi_reduction <minsi>, %705, %cst_294 [1] : vector<8x128xi32> to vector<8xi32>
    %707 = vector.shape_cast %706 : vector<8xi32> to vector<8x1xi32>
    %708 = vector.broadcast %707 : vector<8x1xi32> to vector<8x128xi32>
    %709 = arith.cmpi eq, %701, %708 : vector<8x128xi32>
    %710 = arith.extui %709 : vector<8x128xi1> to vector<8x128xi32>
    %711 = arith.sitofp %710 : vector<8x128xi32> to vector<8x128xf32>
    %712 = tpu.iota {dimensions = array<i32: 0>} : vector<8x128xi32>
    %713 = tpu.iota {dimensions = array<i32: 1>} : vector<8x128xi32>
    %c-1_i32_295 = arith.constant -1 : i32
    %714 = vector.broadcast %c-1_i32_295 : i32 to vector<8x128xi32>
    %c0_i32_296 = arith.constant 0 : i32
    %715 = vector.broadcast %c0_i32_296 : i32 to vector<8x128xi32>
    %716 = arith.cmpi eq, %712, %715 : vector<8x128xi32>
    %c8_297 = arith.constant 8 : index
    %717 = memref.load %arg2[%c8_297] : memref<28xi32, #tpu.memory_space<smem>>
    %718 = vector.broadcast %717 : i32 to vector<8x128xi32>
    %719 = arith.select %716, %718, %714 : vector<8x128xi1>, vector<8x128xi32>
    %c1_i32_298 = arith.constant 1 : i32
    %720 = vector.broadcast %c1_i32_298 : i32 to vector<8x128xi32>
    %721 = arith.cmpi eq, %712, %720 : vector<8x128xi32>
    %c9_299 = arith.constant 9 : index
    %722 = memref.load %arg2[%c9_299] : memref<28xi32, #tpu.memory_space<smem>>
    %723 = vector.broadcast %722 : i32 to vector<8x128xi32>
    %724 = arith.select %721, %723, %719 : vector<8x128xi1>, vector<8x128xi32>
    %c2_i32_300 = arith.constant 2 : i32
    %725 = vector.broadcast %c2_i32_300 : i32 to vector<8x128xi32>
    %726 = arith.cmpi eq, %712, %725 : vector<8x128xi32>
    %c10_301 = arith.constant 10 : index
    %727 = memref.load %arg2[%c10_301] : memref<28xi32, #tpu.memory_space<smem>>
    %728 = vector.broadcast %727 : i32 to vector<8x128xi32>
    %729 = arith.select %726, %728, %724 : vector<8x128xi1>, vector<8x128xi32>
    %c3_i32_302 = arith.constant 3 : i32
    %730 = vector.broadcast %c3_i32_302 : i32 to vector<8x128xi32>
    %731 = arith.cmpi eq, %712, %730 : vector<8x128xi32>
    %c11_303 = arith.constant 11 : index
    %732 = memref.load %arg2[%c11_303] : memref<28xi32, #tpu.memory_space<smem>>
    %733 = vector.broadcast %732 : i32 to vector<8x128xi32>
    %734 = arith.select %731, %733, %729 : vector<8x128xi1>, vector<8x128xi32>
    %735 = arith.cmpi eq, %713, %734 : vector<8x128xi32>
    %736 = arith.extui %735 : vector<8x128xi1> to vector<8x128xi32>
    %737 = arith.sitofp %736 : vector<8x128xi32> to vector<8x128xf32>
    %c1_304 = arith.constant 1 : index
    %738 = memref.load %arg3[%c1_304] : memref<7xi32, #tpu.memory_space<smem>>
    %c0_i32_305 = arith.constant 0 : i32
    %739 = arith.cmpi ne, %738, %c0_i32_305 : i32
    %740 = arith.extui %739 : i1 to i32
    %741 = arith.sitofp %740 : i32 to f32
    %742 = vector.broadcast %741 : f32 to vector<8x128xf32>
    %743 = arith.mulf %742, %737 : vector<8x128xf32>
    %cst_306 = arith.constant 1.000000e+00 : f32
    %744 = arith.subf %cst_306, %741 : f32
    %745 = vector.broadcast %744 : f32 to vector<8x128xf32>
    %746 = arith.mulf %745, %711 : vector<8x128xf32>
    %747 = arith.addf %743, %746 : vector<8x128xf32>
    %748 = arith.truncf %747 : vector<8x128xf32> to vector<8x128xbf16>
    %c0_307 = arith.constant 0 : index
    %c0_308 = arith.constant 0 : index
    %749 = vector.load %arg7[%c0_307, %c0_308] : memref<128x128xbf16, #tpu.memory_space<vmem>>, vector<128x128xbf16>
    %cst_309 = arith.constant dense<0.000000e+00> : vector<8x128xf32>
    %750 = tpu.matmul %748, %749, %cst_309 {dimension_numbers = #tpu.dot_dimension_numbers<[1], [0], [0], [1], [0, 0, 1, 1], [], []>} : vector<8x128xbf16>, vector<128x128xbf16>, vector<8x128xf32> -> vector<8x128xf32>
    %c0_310 = arith.constant 0 : index
    %c0_311 = arith.constant 0 : index
    %751 = vector.load %arg13[%c0_310, %c0_311] : memref<8x256xf32, #tpu.memory_space<vmem>>, vector<8x128xf32>
    tpu.vector_store %arg13[%c0_310, %c0_311], %750 {strides = array<i32>} : memref<8x256xf32, #tpu.memory_space<vmem>>, vector<8x128xf32>,
    %c0_312 = arith.constant 0 : index
    %c0_313 = arith.constant 0 : index
    %752 = vector.load %arg13[%c0_312, %c0_313] : memref<8x256xf32, #tpu.memory_space<vmem>>, vector<8x256xf32>
    %753 = arith.truncf %752 : vector<8x256xf32> to vector<8x256xbf16>
    %c0_314 = arith.constant 0 : index
    %c0_315 = arith.constant 0 : index
    %754 = vector.load %arg8[%c0_314, %c0_315] : memref<256x512xbf16, #tpu.memory_space<vmem>>, vector<256x512xbf16>
    %cst_316 = arith.constant dense<0.000000e+00> : vector<8x512xf32>
    %755 = tpu.matmul %753, %754, %cst_316 {dimension_numbers = #tpu.dot_dimension_numbers<[1], [0], [0], [1], [0, 0, 1, 1], [], []>} : vector<8x256xbf16>, vector<256x512xbf16>, vector<8x512xf32> -> vector<8x512xf32>
    %c0_317 = arith.constant 0 : index
    %c0_318 = arith.constant 0 : index
    %756 = vector.load %arg9[%c0_317, %c0_318] : memref<1x512xf32, #tpu.memory_space<vmem>>, vector<1x512xf32>
    %757 = vector.broadcast %756 : vector<1x512xf32> to vector<8x512xf32>
    %758 = arith.addf %755, %757 : vector<8x512xf32>
    %759 = vector.extract_strided_slice %758 {offsets = [0, 0], sizes = [8, 128], strides = [1, 1]} : vector<8x512xf32> to vector<8x128xf32>
    %760 = arith.negf %759 : vector<8x128xf32>
    %761 = math.exp %760 : vector<8x128xf32>
    %cst_319 = arith.constant 1.000000e+00 : f32
    %762 = vector.broadcast %cst_319 : f32 to vector<8x128xf32>
    %763 = arith.addf %762, %761 : vector<8x128xf32>
    %764 = arith.divf %762, %763 : vector<8x128xf32>
    %765 = vector.extract_strided_slice %758 {offsets = [0, 128], sizes = [8, 128], strides = [1, 1]} : vector<8x512xf32> to vector<8x128xf32>
    %766 = arith.negf %765 : vector<8x128xf32>
    %767 = math.exp %766 : vector<8x128xf32>
    %cst_320 = arith.constant 1.000000e+00 : f32
    %768 = vector.broadcast %cst_320 : f32 to vector<8x128xf32>
    %769 = arith.addf %768, %767 : vector<8x128xf32>
    %770 = arith.divf %768, %769 : vector<8x128xf32>
    %771 = vector.extract_strided_slice %758 {offsets = [0, 256], sizes = [8, 128], strides = [1, 1]} : vector<8x512xf32> to vector<8x128xf32>
    %772 = math.tanh %771 : vector<8x128xf32>
    %773 = vector.extract_strided_slice %758 {offsets = [0, 384], sizes = [8, 128], strides = [1, 1]} : vector<8x512xf32> to vector<8x128xf32>
    %774 = arith.negf %773 : vector<8x128xf32>
    %775 = math.exp %774 : vector<8x128xf32>
    %cst_321 = arith.constant 1.000000e+00 : f32
    %776 = vector.broadcast %cst_321 : f32 to vector<8x128xf32>
    %777 = arith.addf %776, %775 : vector<8x128xf32>
    %778 = arith.divf %776, %777 : vector<8x128xf32>
    %c0_322 = arith.constant 0 : index
    %c0_323 = arith.constant 0 : index
    %779 = vector.load %arg14[%c0_322, %c0_323] : memref<8x128xf32, #tpu.memory_space<vmem>>, vector<8x128xf32>
    %780 = arith.mulf %770, %779 : vector<8x128xf32>
    %781 = arith.mulf %764, %772 : vector<8x128xf32>
    %782 = arith.addf %780, %781 : vector<8x128xf32>
    %783 = math.tanh %782 : vector<8x128xf32>
    %784 = arith.mulf %778, %783 : vector<8x128xf32>
    %c0_324 = arith.constant 0 : index
    %c0_325 = arith.constant 0 : index
    %785 = vector.load %arg14[%c0_324, %c0_325] : memref<8x128xf32, #tpu.memory_space<vmem>>, vector<8x128xf32>
    tpu.vector_store %arg14[%c0_324, %c0_325], %782 {strides = array<i32>} : memref<8x128xf32, #tpu.memory_space<vmem>>, vector<8x128xf32>,
    %c0_326 = arith.constant 0 : index
    %c128_327 = arith.constant 128 : index
    %786 = vector.load %arg13[%c0_326, %c128_327] : memref<8x256xf32, #tpu.memory_space<vmem>>, vector<8x128xf32>
    tpu.vector_store %arg13[%c0_326, %c128_327], %784 {strides = array<i32>} : memref<8x256xf32, #tpu.memory_space<vmem>>, vector<8x128xf32>,
    %787 = arith.truncf %784 : vector<8x128xf32> to vector<8x128xbf16>
    %c0_328 = arith.constant 0 : index
    %c0_329 = arith.constant 0 : index
    %788 = vector.load %arg10[%c0_328, %c0_329] : memref<128x128xbf16, #tpu.memory_space<vmem>>, vector<128x128xbf16>
    %cst_330 = arith.constant dense<0.000000e+00> : vector<8x128xf32>
    %789 = tpu.matmul %787, %788, %cst_330 {dimension_numbers = #tpu.dot_dimension_numbers<[1], [0], [0], [1], [0, 0, 1, 1], [], []>} : vector<8x128xbf16>, vector<128x128xbf16>, vector<8x128xf32> -> vector<8x128xf32>
    %c0_331 = arith.constant 0 : index
    %c0_332 = arith.constant 0 : index
    %790 = vector.load %arg11[%c0_331, %c0_332] : memref<1x128xf32, #tpu.memory_space<vmem>>, vector<1x128xf32>
    %791 = vector.broadcast %790 : vector<1x128xf32> to vector<8x128xf32>
    %792 = arith.addf %789, %791 : vector<8x128xf32>
    %c3_333 = arith.constant 3 : index
    %c0_334 = arith.constant 0 : index
    %c0_335 = arith.constant 0 : index
    %793 = vector.load %arg12[%c3_333, %c0_334, %c0_335] : memref<8x8x128xf32, #tpu.memory_space<vmem>>, vector<1x8x128xf32>
    %794 = vector.shape_cast %793 : vector<1x8x128xf32> to vector<8x128xf32>
    %795 = vector.shape_cast %792 : vector<8x128xf32> to vector<1x8x128xf32>
    tpu.vector_store %arg12[%c3_333, %c0_334, %c0_335], %795 {strides = array<i32>} : memref<8x8x128xf32, #tpu.memory_space<vmem>>, vector<1x8x128xf32>,
    %cst_336 = arith.constant dense<0xFF800000> : vector<8xf32>
    %796 = vector.multi_reduction <maximumf>, %792, %cst_336 [1] : vector<8x128xf32> to vector<8xf32>
    %797 = vector.shape_cast %796 : vector<8xf32> to vector<8x1xf32>
    %798 = tpu.iota {dimensions = array<i32: 1>} : vector<8x128xi32>
    %799 = vector.broadcast %797 : vector<8x1xf32> to vector<8x128xf32>
    %800 = arith.cmpf oeq, %792, %799 : vector<8x128xf32>
    %c128_i32_337 = arith.constant 128 : i32
    %801 = vector.broadcast %c128_i32_337 : i32 to vector<8x128xi32>
    %802 = arith.select %800, %798, %801 : vector<8x128xi1>, vector<8x128xi32>
    %cst_338 = arith.constant dense<2147483647> : vector<8xi32>
    %803 = vector.multi_reduction <minsi>, %802, %cst_338 [1] : vector<8x128xi32> to vector<8xi32>
    %804 = vector.shape_cast %803 : vector<8xi32> to vector<8x1xi32>
    %805 = vector.broadcast %804 : vector<8x1xi32> to vector<8x128xi32>
    %806 = arith.cmpi eq, %798, %805 : vector<8x128xi32>
    %807 = arith.extui %806 : vector<8x128xi1> to vector<8x128xi32>
    %808 = arith.sitofp %807 : vector<8x128xi32> to vector<8x128xf32>
    %809 = tpu.iota {dimensions = array<i32: 0>} : vector<8x128xi32>
    %810 = tpu.iota {dimensions = array<i32: 1>} : vector<8x128xi32>
    %c-1_i32_339 = arith.constant -1 : i32
    %811 = vector.broadcast %c-1_i32_339 : i32 to vector<8x128xi32>
    %c0_i32_340 = arith.constant 0 : i32
    %812 = vector.broadcast %c0_i32_340 : i32 to vector<8x128xi32>
    %813 = arith.cmpi eq, %809, %812 : vector<8x128xi32>
    %c12_341 = arith.constant 12 : index
    %814 = memref.load %arg2[%c12_341] : memref<28xi32, #tpu.memory_space<smem>>
    %815 = vector.broadcast %814 : i32 to vector<8x128xi32>
    %816 = arith.select %813, %815, %811 : vector<8x128xi1>, vector<8x128xi32>
    %c1_i32_342 = arith.constant 1 : i32
    %817 = vector.broadcast %c1_i32_342 : i32 to vector<8x128xi32>
    %818 = arith.cmpi eq, %809, %817 : vector<8x128xi32>
    %c13_343 = arith.constant 13 : index
    %819 = memref.load %arg2[%c13_343] : memref<28xi32, #tpu.memory_space<smem>>
    %820 = vector.broadcast %819 : i32 to vector<8x128xi32>
    %821 = arith.select %818, %820, %816 : vector<8x128xi1>, vector<8x128xi32>
    %c2_i32_344 = arith.constant 2 : i32
    %822 = vector.broadcast %c2_i32_344 : i32 to vector<8x128xi32>
    %823 = arith.cmpi eq, %809, %822 : vector<8x128xi32>
    %c14_345 = arith.constant 14 : index
    %824 = memref.load %arg2[%c14_345] : memref<28xi32, #tpu.memory_space<smem>>
    %825 = vector.broadcast %824 : i32 to vector<8x128xi32>
    %826 = arith.select %823, %825, %821 : vector<8x128xi1>, vector<8x128xi32>
    %c3_i32_346 = arith.constant 3 : i32
    %827 = vector.broadcast %c3_i32_346 : i32 to vector<8x128xi32>
    %828 = arith.cmpi eq, %809, %827 : vector<8x128xi32>
    %c15_347 = arith.constant 15 : index
    %829 = memref.load %arg2[%c15_347] : memref<28xi32, #tpu.memory_space<smem>>
    %830 = vector.broadcast %829 : i32 to vector<8x128xi32>
    %831 = arith.select %828, %830, %826 : vector<8x128xi1>, vector<8x128xi32>
    %832 = arith.cmpi eq, %810, %831 : vector<8x128xi32>
    %833 = arith.extui %832 : vector<8x128xi1> to vector<8x128xi32>
    %834 = arith.sitofp %833 : vector<8x128xi32> to vector<8x128xf32>
    %c2_348 = arith.constant 2 : index
    %835 = memref.load %arg3[%c2_348] : memref<7xi32, #tpu.memory_space<smem>>
    %c0_i32_349 = arith.constant 0 : i32
    %836 = arith.cmpi ne, %835, %c0_i32_349 : i32
    %837 = arith.extui %836 : i1 to i32
    %838 = arith.sitofp %837 : i32 to f32
    %839 = vector.broadcast %838 : f32 to vector<8x128xf32>
    %840 = arith.mulf %839, %834 : vector<8x128xf32>
    %cst_350 = arith.constant 1.000000e+00 : f32
    %841 = arith.subf %cst_350, %838 : f32
    %842 = vector.broadcast %841 : f32 to vector<8x128xf32>
    %843 = arith.mulf %842, %808 : vector<8x128xf32>
    %844 = arith.addf %840, %843 : vector<8x128xf32>
    %845 = arith.truncf %844 : vector<8x128xf32> to vector<8x128xbf16>
    %c0_351 = arith.constant 0 : index
    %c0_352 = arith.constant 0 : index
    %846 = vector.load %arg7[%c0_351, %c0_352] : memref<128x128xbf16, #tpu.memory_space<vmem>>, vector<128x128xbf16>
    %cst_353 = arith.constant dense<0.000000e+00> : vector<8x128xf32>
    %847 = tpu.matmul %845, %846, %cst_353 {dimension_numbers = #tpu.dot_dimension_numbers<[1], [0], [0], [1], [0, 0, 1, 1], [], []>} : vector<8x128xbf16>, vector<128x128xbf16>, vector<8x128xf32> -> vector<8x128xf32>
    %c0_354 = arith.constant 0 : index
    %c0_355 = arith.constant 0 : index
    %848 = vector.load %arg13[%c0_354, %c0_355] : memref<8x256xf32, #tpu.memory_space<vmem>>, vector<8x128xf32>
    tpu.vector_store %arg13[%c0_354, %c0_355], %847 {strides = array<i32>} : memref<8x256xf32, #tpu.memory_space<vmem>>, vector<8x128xf32>,
    %c0_356 = arith.constant 0 : index
    %c0_357 = arith.constant 0 : index
    %849 = vector.load %arg13[%c0_356, %c0_357] : memref<8x256xf32, #tpu.memory_space<vmem>>, vector<8x256xf32>
    %850 = arith.truncf %849 : vector<8x256xf32> to vector<8x256xbf16>
    %c0_358 = arith.constant 0 : index
    %c0_359 = arith.constant 0 : index
    %851 = vector.load %arg8[%c0_358, %c0_359] : memref<256x512xbf16, #tpu.memory_space<vmem>>, vector<256x512xbf16>
    %cst_360 = arith.constant dense<0.000000e+00> : vector<8x512xf32>
    %852 = tpu.matmul %850, %851, %cst_360 {dimension_numbers = #tpu.dot_dimension_numbers<[1], [0], [0], [1], [0, 0, 1, 1], [], []>} : vector<8x256xbf16>, vector<256x512xbf16>, vector<8x512xf32> -> vector<8x512xf32>
    %c0_361 = arith.constant 0 : index
    %c0_362 = arith.constant 0 : index
    %853 = vector.load %arg9[%c0_361, %c0_362] : memref<1x512xf32, #tpu.memory_space<vmem>>, vector<1x512xf32>
    %854 = vector.broadcast %853 : vector<1x512xf32> to vector<8x512xf32>
    %855 = arith.addf %852, %854 : vector<8x512xf32>
    %856 = vector.extract_strided_slice %855 {offsets = [0, 0], sizes = [8, 128], strides = [1, 1]} : vector<8x512xf32> to vector<8x128xf32>
    %857 = arith.negf %856 : vector<8x128xf32>
    %858 = math.exp %857 : vector<8x128xf32>
    %cst_363 = arith.constant 1.000000e+00 : f32
    %859 = vector.broadcast %cst_363 : f32 to vector<8x128xf32>
    %860 = arith.addf %859, %858 : vector<8x128xf32>
    %861 = arith.divf %859, %860 : vector<8x128xf32>
    %862 = vector.extract_strided_slice %855 {offsets = [0, 128], sizes = [8, 128], strides = [1, 1]} : vector<8x512xf32> to vector<8x128xf32>
    %863 = arith.negf %862 : vector<8x128xf32>
    %864 = math.exp %863 : vector<8x128xf32>
    %cst_364 = arith.constant 1.000000e+00 : f32
    %865 = vector.broadcast %cst_364 : f32 to vector<8x128xf32>
    %866 = arith.addf %865, %864 : vector<8x128xf32>
    %867 = arith.divf %865, %866 : vector<8x128xf32>
    %868 = vector.extract_strided_slice %855 {offsets = [0, 256], sizes = [8, 128], strides = [1, 1]} : vector<8x512xf32> to vector<8x128xf32>
    %869 = math.tanh %868 : vector<8x128xf32>
    %870 = vector.extract_strided_slice %855 {offsets = [0, 384], sizes = [8, 128], strides = [1, 1]} : vector<8x512xf32> to vector<8x128xf32>
    %871 = arith.negf %870 : vector<8x128xf32>
    %872 = math.exp %871 : vector<8x128xf32>
    %cst_365 = arith.constant 1.000000e+00 : f32
    %873 = vector.broadcast %cst_365 : f32 to vector<8x128xf32>
    %874 = arith.addf %873, %872 : vector<8x128xf32>
    %875 = arith.divf %873, %874 : vector<8x128xf32>
    %c0_366 = arith.constant 0 : index
    %c0_367 = arith.constant 0 : index
    %876 = vector.load %arg14[%c0_366, %c0_367] : memref<8x128xf32, #tpu.memory_space<vmem>>, vector<8x128xf32>
    %877 = arith.mulf %867, %876 : vector<8x128xf32>
    %878 = arith.mulf %861, %869 : vector<8x128xf32>
    %879 = arith.addf %877, %878 : vector<8x128xf32>
    %880 = math.tanh %879 : vector<8x128xf32>
    %881 = arith.mulf %875, %880 : vector<8x128xf32>
    %c0_368 = arith.constant 0 : index
    %c0_369 = arith.constant 0 : index
    %882 = vector.load %arg14[%c0_368, %c0_369] : memref<8x128xf32, #tpu.memory_space<vmem>>, vector<8x128xf32>
    tpu.vector_store %arg14[%c0_368, %c0_369], %879 {strides = array<i32>} : memref<8x128xf32, #tpu.memory_space<vmem>>, vector<8x128xf32>,
    %c0_370 = arith.constant 0 : index
    %c128_371 = arith.constant 128 : index
    %883 = vector.load %arg13[%c0_370, %c128_371] : memref<8x256xf32, #tpu.memory_space<vmem>>, vector<8x128xf32>
    tpu.vector_store %arg13[%c0_370, %c128_371], %881 {strides = array<i32>} : memref<8x256xf32, #tpu.memory_space<vmem>>, vector<8x128xf32>,
    %884 = arith.truncf %881 : vector<8x128xf32> to vector<8x128xbf16>
    %c0_372 = arith.constant 0 : index
    %c0_373 = arith.constant 0 : index
    %885 = vector.load %arg10[%c0_372, %c0_373] : memref<128x128xbf16, #tpu.memory_space<vmem>>, vector<128x128xbf16>
    %cst_374 = arith.constant dense<0.000000e+00> : vector<8x128xf32>
    %886 = tpu.matmul %884, %885, %cst_374 {dimension_numbers = #tpu.dot_dimension_numbers<[1], [0], [0], [1], [0, 0, 1, 1], [], []>} : vector<8x128xbf16>, vector<128x128xbf16>, vector<8x128xf32> -> vector<8x128xf32>
    %c0_375 = arith.constant 0 : index
    %c0_376 = arith.constant 0 : index
    %887 = vector.load %arg11[%c0_375, %c0_376] : memref<1x128xf32, #tpu.memory_space<vmem>>, vector<1x128xf32>
    %888 = vector.broadcast %887 : vector<1x128xf32> to vector<8x128xf32>
    %889 = arith.addf %886, %888 : vector<8x128xf32>
    %c4_377 = arith.constant 4 : index
    %c0_378 = arith.constant 0 : index
    %c0_379 = arith.constant 0 : index
    %890 = vector.load %arg12[%c4_377, %c0_378, %c0_379] : memref<8x8x128xf32, #tpu.memory_space<vmem>>, vector<1x8x128xf32>
    %891 = vector.shape_cast %890 : vector<1x8x128xf32> to vector<8x128xf32>
    %892 = vector.shape_cast %889 : vector<8x128xf32> to vector<1x8x128xf32>
    tpu.vector_store %arg12[%c4_377, %c0_378, %c0_379], %892 {strides = array<i32>} : memref<8x8x128xf32, #tpu.memory_space<vmem>>, vector<1x8x128xf32>,
    %cst_380 = arith.constant dense<0xFF800000> : vector<8xf32>
    %893 = vector.multi_reduction <maximumf>, %889, %cst_380 [1] : vector<8x128xf32> to vector<8xf32>
    %894 = vector.shape_cast %893 : vector<8xf32> to vector<8x1xf32>
    %895 = tpu.iota {dimensions = array<i32: 1>} : vector<8x128xi32>
    %896 = vector.broadcast %894 : vector<8x1xf32> to vector<8x128xf32>
    %897 = arith.cmpf oeq, %889, %896 : vector<8x128xf32>
    %c128_i32_381 = arith.constant 128 : i32
    %898 = vector.broadcast %c128_i32_381 : i32 to vector<8x128xi32>
    %899 = arith.select %897, %895, %898 : vector<8x128xi1>, vector<8x128xi32>
    %cst_382 = arith.constant dense<2147483647> : vector<8xi32>
    %900 = vector.multi_reduction <minsi>, %899, %cst_382 [1] : vector<8x128xi32> to vector<8xi32>
    %901 = vector.shape_cast %900 : vector<8xi32> to vector<8x1xi32>
    %902 = vector.broadcast %901 : vector<8x1xi32> to vector<8x128xi32>
    %903 = arith.cmpi eq, %895, %902 : vector<8x128xi32>
    %904 = arith.extui %903 : vector<8x128xi1> to vector<8x128xi32>
    %905 = arith.sitofp %904 : vector<8x128xi32> to vector<8x128xf32>
    %906 = tpu.iota {dimensions = array<i32: 0>} : vector<8x128xi32>
    %907 = tpu.iota {dimensions = array<i32: 1>} : vector<8x128xi32>
    %c-1_i32_383 = arith.constant -1 : i32
    %908 = vector.broadcast %c-1_i32_383 : i32 to vector<8x128xi32>
    %c0_i32_384 = arith.constant 0 : i32
    %909 = vector.broadcast %c0_i32_384 : i32 to vector<8x128xi32>
    %910 = arith.cmpi eq, %906, %909 : vector<8x128xi32>
    %c16_385 = arith.constant 16 : index
    %911 = memref.load %arg2[%c16_385] : memref<28xi32, #tpu.memory_space<smem>>
    %912 = vector.broadcast %911 : i32 to vector<8x128xi32>
    %913 = arith.select %910, %912, %908 : vector<8x128xi1>, vector<8x128xi32>
    %c1_i32_386 = arith.constant 1 : i32
    %914 = vector.broadcast %c1_i32_386 : i32 to vector<8x128xi32>
    %915 = arith.cmpi eq, %906, %914 : vector<8x128xi32>
    %c17_387 = arith.constant 17 : index
    %916 = memref.load %arg2[%c17_387] : memref<28xi32, #tpu.memory_space<smem>>
    %917 = vector.broadcast %916 : i32 to vector<8x128xi32>
    %918 = arith.select %915, %917, %913 : vector<8x128xi1>, vector<8x128xi32>
    %c2_i32_388 = arith.constant 2 : i32
    %919 = vector.broadcast %c2_i32_388 : i32 to vector<8x128xi32>
    %920 = arith.cmpi eq, %906, %919 : vector<8x128xi32>
    %c18_389 = arith.constant 18 : index
    %921 = memref.load %arg2[%c18_389] : memref<28xi32, #tpu.memory_space<smem>>
    %922 = vector.broadcast %921 : i32 to vector<8x128xi32>
    %923 = arith.select %920, %922, %918 : vector<8x128xi1>, vector<8x128xi32>
    %c3_i32_390 = arith.constant 3 : i32
    %924 = vector.broadcast %c3_i32_390 : i32 to vector<8x128xi32>
    %925 = arith.cmpi eq, %906, %924 : vector<8x128xi32>
    %c19_391 = arith.constant 19 : index
    %926 = memref.load %arg2[%c19_391] : memref<28xi32, #tpu.memory_space<smem>>
    %927 = vector.broadcast %926 : i32 to vector<8x128xi32>
    %928 = arith.select %925, %927, %923 : vector<8x128xi1>, vector<8x128xi32>
    %929 = arith.cmpi eq, %907, %928 : vector<8x128xi32>
    %930 = arith.extui %929 : vector<8x128xi1> to vector<8x128xi32>
    %931 = arith.sitofp %930 : vector<8x128xi32> to vector<8x128xf32>
    %c3_392 = arith.constant 3 : index
    %932 = memref.load %arg3[%c3_392] : memref<7xi32, #tpu.memory_space<smem>>
    %c0_i32_393 = arith.constant 0 : i32
    %933 = arith.cmpi ne, %932, %c0_i32_393 : i32
    %934 = arith.extui %933 : i1 to i32
    %935 = arith.sitofp %934 : i32 to f32
    %936 = vector.broadcast %935 : f32 to vector<8x128xf32>
    %937 = arith.mulf %936, %931 : vector<8x128xf32>
    %cst_394 = arith.constant 1.000000e+00 : f32
    %938 = arith.subf %cst_394, %935 : f32
    %939 = vector.broadcast %938 : f32 to vector<8x128xf32>
    %940 = arith.mulf %939, %905 : vector<8x128xf32>
    %941 = arith.addf %937, %940 : vector<8x128xf32>
    %942 = arith.truncf %941 : vector<8x128xf32> to vector<8x128xbf16>
    %c0_395 = arith.constant 0 : index
    %c0_396 = arith.constant 0 : index
    %943 = vector.load %arg7[%c0_395, %c0_396] : memref<128x128xbf16, #tpu.memory_space<vmem>>, vector<128x128xbf16>
    %cst_397 = arith.constant dense<0.000000e+00> : vector<8x128xf32>
    %944 = tpu.matmul %942, %943, %cst_397 {dimension_numbers = #tpu.dot_dimension_numbers<[1], [0], [0], [1], [0, 0, 1, 1], [], []>} : vector<8x128xbf16>, vector<128x128xbf16>, vector<8x128xf32> -> vector<8x128xf32>
    %c0_398 = arith.constant 0 : index
    %c0_399 = arith.constant 0 : index
    %945 = vector.load %arg13[%c0_398, %c0_399] : memref<8x256xf32, #tpu.memory_space<vmem>>, vector<8x128xf32>
    tpu.vector_store %arg13[%c0_398, %c0_399], %944 {strides = array<i32>} : memref<8x256xf32, #tpu.memory_space<vmem>>, vector<8x128xf32>,
    %c0_400 = arith.constant 0 : index
    %c0_401 = arith.constant 0 : index
    %946 = vector.load %arg13[%c0_400, %c0_401] : memref<8x256xf32, #tpu.memory_space<vmem>>, vector<8x256xf32>
    %947 = arith.truncf %946 : vector<8x256xf32> to vector<8x256xbf16>
    %c0_402 = arith.constant 0 : index
    %c0_403 = arith.constant 0 : index
    %948 = vector.load %arg8[%c0_402, %c0_403] : memref<256x512xbf16, #tpu.memory_space<vmem>>, vector<256x512xbf16>
    %cst_404 = arith.constant dense<0.000000e+00> : vector<8x512xf32>
    %949 = tpu.matmul %947, %948, %cst_404 {dimension_numbers = #tpu.dot_dimension_numbers<[1], [0], [0], [1], [0, 0, 1, 1], [], []>} : vector<8x256xbf16>, vector<256x512xbf16>, vector<8x512xf32> -> vector<8x512xf32>
    %c0_405 = arith.constant 0 : index
    %c0_406 = arith.constant 0 : index
    %950 = vector.load %arg9[%c0_405, %c0_406] : memref<1x512xf32, #tpu.memory_space<vmem>>, vector<1x512xf32>
    %951 = vector.broadcast %950 : vector<1x512xf32> to vector<8x512xf32>
    %952 = arith.addf %949, %951 : vector<8x512xf32>
    %953 = vector.extract_strided_slice %952 {offsets = [0, 0], sizes = [8, 128], strides = [1, 1]} : vector<8x512xf32> to vector<8x128xf32>
    %954 = arith.negf %953 : vector<8x128xf32>
    %955 = math.exp %954 : vector<8x128xf32>
    %cst_407 = arith.constant 1.000000e+00 : f32
    %956 = vector.broadcast %cst_407 : f32 to vector<8x128xf32>
    %957 = arith.addf %956, %955 : vector<8x128xf32>
    %958 = arith.divf %956, %957 : vector<8x128xf32>
    %959 = vector.extract_strided_slice %952 {offsets = [0, 128], sizes = [8, 128], strides = [1, 1]} : vector<8x512xf32> to vector<8x128xf32>
    %960 = arith.negf %959 : vector<8x128xf32>
    %961 = math.exp %960 : vector<8x128xf32>
    %cst_408 = arith.constant 1.000000e+00 : f32
    %962 = vector.broadcast %cst_408 : f32 to vector<8x128xf32>
    %963 = arith.addf %962, %961 : vector<8x128xf32>
    %964 = arith.divf %962, %963 : vector<8x128xf32>
    %965 = vector.extract_strided_slice %952 {offsets = [0, 256], sizes = [8, 128], strides = [1, 1]} : vector<8x512xf32> to vector<8x128xf32>
    %966 = math.tanh %965 : vector<8x128xf32>
    %967 = vector.extract_strided_slice %952 {offsets = [0, 384], sizes = [8, 128], strides = [1, 1]} : vector<8x512xf32> to vector<8x128xf32>
    %968 = arith.negf %967 : vector<8x128xf32>
    %969 = math.exp %968 : vector<8x128xf32>
    %cst_409 = arith.constant 1.000000e+00 : f32
    %970 = vector.broadcast %cst_409 : f32 to vector<8x128xf32>
    %971 = arith.addf %970, %969 : vector<8x128xf32>
    %972 = arith.divf %970, %971 : vector<8x128xf32>
    %c0_410 = arith.constant 0 : index
    %c0_411 = arith.constant 0 : index
    %973 = vector.load %arg14[%c0_410, %c0_411] : memref<8x128xf32, #tpu.memory_space<vmem>>, vector<8x128xf32>
    %974 = arith.mulf %964, %973 : vector<8x128xf32>
    %975 = arith.mulf %958, %966 : vector<8x128xf32>
    %976 = arith.addf %974, %975 : vector<8x128xf32>
    %977 = math.tanh %976 : vector<8x128xf32>
    %978 = arith.mulf %972, %977 : vector<8x128xf32>
    %c0_412 = arith.constant 0 : index
    %c0_413 = arith.constant 0 : index
    %979 = vector.load %arg14[%c0_412, %c0_413] : memref<8x128xf32, #tpu.memory_space<vmem>>, vector<8x128xf32>
    tpu.vector_store %arg14[%c0_412, %c0_413], %976 {strides = array<i32>} : memref<8x128xf32, #tpu.memory_space<vmem>>, vector<8x128xf32>,
    %c0_414 = arith.constant 0 : index
    %c128_415 = arith.constant 128 : index
    %980 = vector.load %arg13[%c0_414, %c128_415] : memref<8x256xf32, #tpu.memory_space<vmem>>, vector<8x128xf32>
    tpu.vector_store %arg13[%c0_414, %c128_415], %978 {strides = array<i32>} : memref<8x256xf32, #tpu.memory_space<vmem>>, vector<8x128xf32>,
    %981 = arith.truncf %978 : vector<8x128xf32> to vector<8x128xbf16>
    %c0_416 = arith.constant 0 : index
    %c0_417 = arith.constant 0 : index
    %982 = vector.load %arg10[%c0_416, %c0_417] : memref<128x128xbf16, #tpu.memory_space<vmem>>, vector<128x128xbf16>
    %cst_418 = arith.constant dense<0.000000e+00> : vector<8x128xf32>
    %983 = tpu.matmul %981, %982, %cst_418 {dimension_numbers = #tpu.dot_dimension_numbers<[1], [0], [0], [1], [0, 0, 1, 1], [], []>} : vector<8x128xbf16>, vector<128x128xbf16>, vector<8x128xf32> -> vector<8x128xf32>
    %c0_419 = arith.constant 0 : index
    %c0_420 = arith.constant 0 : index
    %984 = vector.load %arg11[%c0_419, %c0_420] : memref<1x128xf32, #tpu.memory_space<vmem>>, vector<1x128xf32>
    %985 = vector.broadcast %984 : vector<1x128xf32> to vector<8x128xf32>
    %986 = arith.addf %983, %985 : vector<8x128xf32>
    %c5_421 = arith.constant 5 : index
    %c0_422 = arith.constant 0 : index
    %c0_423 = arith.constant 0 : index
    %987 = vector.load %arg12[%c5_421, %c0_422, %c0_423] : memref<8x8x128xf32, #tpu.memory_space<vmem>>, vector<1x8x128xf32>
    %988 = vector.shape_cast %987 : vector<1x8x128xf32> to vector<8x128xf32>
    %989 = vector.shape_cast %986 : vector<8x128xf32> to vector<1x8x128xf32>
    tpu.vector_store %arg12[%c5_421, %c0_422, %c0_423], %989 {strides = array<i32>} : memref<8x8x128xf32, #tpu.memory_space<vmem>>, vector<1x8x128xf32>,
    %cst_424 = arith.constant dense<0xFF800000> : vector<8xf32>
    %990 = vector.multi_reduction <maximumf>, %986, %cst_424 [1] : vector<8x128xf32> to vector<8xf32>
    %991 = vector.shape_cast %990 : vector<8xf32> to vector<8x1xf32>
    %992 = tpu.iota {dimensions = array<i32: 1>} : vector<8x128xi32>
    %993 = vector.broadcast %991 : vector<8x1xf32> to vector<8x128xf32>
    %994 = arith.cmpf oeq, %986, %993 : vector<8x128xf32>
    %c128_i32_425 = arith.constant 128 : i32
    %995 = vector.broadcast %c128_i32_425 : i32 to vector<8x128xi32>
    %996 = arith.select %994, %992, %995 : vector<8x128xi1>, vector<8x128xi32>
    %cst_426 = arith.constant dense<2147483647> : vector<8xi32>
    %997 = vector.multi_reduction <minsi>, %996, %cst_426 [1] : vector<8x128xi32> to vector<8xi32>
    %998 = vector.shape_cast %997 : vector<8xi32> to vector<8x1xi32>
    %999 = vector.broadcast %998 : vector<8x1xi32> to vector<8x128xi32>
    %1000 = arith.cmpi eq, %992, %999 : vector<8x128xi32>
    %1001 = arith.extui %1000 : vector<8x128xi1> to vector<8x128xi32>
    %1002 = arith.sitofp %1001 : vector<8x128xi32> to vector<8x128xf32>
    %1003 = tpu.iota {dimensions = array<i32: 0>} : vector<8x128xi32>
    %1004 = tpu.iota {dimensions = array<i32: 1>} : vector<8x128xi32>
    %c-1_i32_427 = arith.constant -1 : i32
    %1005 = vector.broadcast %c-1_i32_427 : i32 to vector<8x128xi32>
    %c0_i32_428 = arith.constant 0 : i32
    %1006 = vector.broadcast %c0_i32_428 : i32 to vector<8x128xi32>
    %1007 = arith.cmpi eq, %1003, %1006 : vector<8x128xi32>
    %c20_429 = arith.constant 20 : index
    %1008 = memref.load %arg2[%c20_429] : memref<28xi32, #tpu.memory_space<smem>>
    %1009 = vector.broadcast %1008 : i32 to vector<8x128xi32>
    %1010 = arith.select %1007, %1009, %1005 : vector<8x128xi1>, vector<8x128xi32>
    %c1_i32_430 = arith.constant 1 : i32
    %1011 = vector.broadcast %c1_i32_430 : i32 to vector<8x128xi32>
    %1012 = arith.cmpi eq, %1003, %1011 : vector<8x128xi32>
    %c21_431 = arith.constant 21 : index
    %1013 = memref.load %arg2[%c21_431] : memref<28xi32, #tpu.memory_space<smem>>
    %1014 = vector.broadcast %1013 : i32 to vector<8x128xi32>
    %1015 = arith.select %1012, %1014, %1010 : vector<8x128xi1>, vector<8x128xi32>
    %c2_i32_432 = arith.constant 2 : i32
    %1016 = vector.broadcast %c2_i32_432 : i32 to vector<8x128xi32>
    %1017 = arith.cmpi eq, %1003, %1016 : vector<8x128xi32>
    %c22_433 = arith.constant 22 : index
    %1018 = memref.load %arg2[%c22_433] : memref<28xi32, #tpu.memory_space<smem>>
    %1019 = vector.broadcast %1018 : i32 to vector<8x128xi32>
    %1020 = arith.select %1017, %1019, %1015 : vector<8x128xi1>, vector<8x128xi32>
    %c3_i32_434 = arith.constant 3 : i32
    %1021 = vector.broadcast %c3_i32_434 : i32 to vector<8x128xi32>
    %1022 = arith.cmpi eq, %1003, %1021 : vector<8x128xi32>
    %c23_435 = arith.constant 23 : index
    %1023 = memref.load %arg2[%c23_435] : memref<28xi32, #tpu.memory_space<smem>>
    %1024 = vector.broadcast %1023 : i32 to vector<8x128xi32>
    %1025 = arith.select %1022, %1024, %1020 : vector<8x128xi1>, vector<8x128xi32>
    %1026 = arith.cmpi eq, %1004, %1025 : vector<8x128xi32>
    %1027 = arith.extui %1026 : vector<8x128xi1> to vector<8x128xi32>
    %1028 = arith.sitofp %1027 : vector<8x128xi32> to vector<8x128xf32>
    %c4_436 = arith.constant 4 : index
    %1029 = memref.load %arg3[%c4_436] : memref<7xi32, #tpu.memory_space<smem>>
    %c0_i32_437 = arith.constant 0 : i32
    %1030 = arith.cmpi ne, %1029, %c0_i32_437 : i32
    %1031 = arith.extui %1030 : i1 to i32
    %1032 = arith.sitofp %1031 : i32 to f32
    %1033 = vector.broadcast %1032 : f32 to vector<8x128xf32>
    %1034 = arith.mulf %1033, %1028 : vector<8x128xf32>
    %cst_438 = arith.constant 1.000000e+00 : f32
    %1035 = arith.subf %cst_438, %1032 : f32
    %1036 = vector.broadcast %1035 : f32 to vector<8x128xf32>
    %1037 = arith.mulf %1036, %1002 : vector<8x128xf32>
    %1038 = arith.addf %1034, %1037 : vector<8x128xf32>
    %1039 = arith.truncf %1038 : vector<8x128xf32> to vector<8x128xbf16>
    %c0_439 = arith.constant 0 : index
    %c0_440 = arith.constant 0 : index
    %1040 = vector.load %arg7[%c0_439, %c0_440] : memref<128x128xbf16, #tpu.memory_space<vmem>>, vector<128x128xbf16>
    %cst_441 = arith.constant dense<0.000000e+00> : vector<8x128xf32>
    %1041 = tpu.matmul %1039, %1040, %cst_441 {dimension_numbers = #tpu.dot_dimension_numbers<[1], [0], [0], [1], [0, 0, 1, 1], [], []>} : vector<8x128xbf16>, vector<128x128xbf16>, vector<8x128xf32> -> vector<8x128xf32>
    %c0_442 = arith.constant 0 : index
    %c0_443 = arith.constant 0 : index
    %1042 = vector.load %arg13[%c0_442, %c0_443] : memref<8x256xf32, #tpu.memory_space<vmem>>, vector<8x128xf32>
    tpu.vector_store %arg13[%c0_442, %c0_443], %1041 {strides = array<i32>} : memref<8x256xf32, #tpu.memory_space<vmem>>, vector<8x128xf32>,
    %c0_444 = arith.constant 0 : index
    %c0_445 = arith.constant 0 : index
    %1043 = vector.load %arg13[%c0_444, %c0_445] : memref<8x256xf32, #tpu.memory_space<vmem>>, vector<8x256xf32>
    %1044 = arith.truncf %1043 : vector<8x256xf32> to vector<8x256xbf16>
    %c0_446 = arith.constant 0 : index
    %c0_447 = arith.constant 0 : index
    %1045 = vector.load %arg8[%c0_446, %c0_447] : memref<256x512xbf16, #tpu.memory_space<vmem>>, vector<256x512xbf16>
    %cst_448 = arith.constant dense<0.000000e+00> : vector<8x512xf32>
    %1046 = tpu.matmul %1044, %1045, %cst_448 {dimension_numbers = #tpu.dot_dimension_numbers<[1], [0], [0], [1], [0, 0, 1, 1], [], []>} : vector<8x256xbf16>, vector<256x512xbf16>, vector<8x512xf32> -> vector<8x512xf32>
    %c0_449 = arith.constant 0 : index
    %c0_450 = arith.constant 0 : index
    %1047 = vector.load %arg9[%c0_449, %c0_450] : memref<1x512xf32, #tpu.memory_space<vmem>>, vector<1x512xf32>
    %1048 = vector.broadcast %1047 : vector<1x512xf32> to vector<8x512xf32>
    %1049 = arith.addf %1046, %1048 : vector<8x512xf32>
    %1050 = vector.extract_strided_slice %1049 {offsets = [0, 0], sizes = [8, 128], strides = [1, 1]} : vector<8x512xf32> to vector<8x128xf32>
    %1051 = arith.negf %1050 : vector<8x128xf32>
    %1052 = math.exp %1051 : vector<8x128xf32>
    %cst_451 = arith.constant 1.000000e+00 : f32
    %1053 = vector.broadcast %cst_451 : f32 to vector<8x128xf32>
    %1054 = arith.addf %1053, %1052 : vector<8x128xf32>
    %1055 = arith.divf %1053, %1054 : vector<8x128xf32>
    %1056 = vector.extract_strided_slice %1049 {offsets = [0, 128], sizes = [8, 128], strides = [1, 1]} : vector<8x512xf32> to vector<8x128xf32>
    %1057 = arith.negf %1056 : vector<8x128xf32>
    %1058 = math.exp %1057 : vector<8x128xf32>
    %cst_452 = arith.constant 1.000000e+00 : f32
    %1059 = vector.broadcast %cst_452 : f32 to vector<8x128xf32>
    %1060 = arith.addf %1059, %1058 : vector<8x128xf32>
    %1061 = arith.divf %1059, %1060 : vector<8x128xf32>
    %1062 = vector.extract_strided_slice %1049 {offsets = [0, 256], sizes = [8, 128], strides = [1, 1]} : vector<8x512xf32> to vector<8x128xf32>
    %1063 = math.tanh %1062 : vector<8x128xf32>
    %1064 = vector.extract_strided_slice %1049 {offsets = [0, 384], sizes = [8, 128], strides = [1, 1]} : vector<8x512xf32> to vector<8x128xf32>
    %1065 = arith.negf %1064 : vector<8x128xf32>
    %1066 = math.exp %1065 : vector<8x128xf32>
    %cst_453 = arith.constant 1.000000e+00 : f32
    %1067 = vector.broadcast %cst_453 : f32 to vector<8x128xf32>
    %1068 = arith.addf %1067, %1066 : vector<8x128xf32>
    %1069 = arith.divf %1067, %1068 : vector<8x128xf32>
    %c0_454 = arith.constant 0 : index
    %c0_455 = arith.constant 0 : index
    %1070 = vector.load %arg14[%c0_454, %c0_455] : memref<8x128xf32, #tpu.memory_space<vmem>>, vector<8x128xf32>
    %1071 = arith.mulf %1061, %1070 : vector<8x128xf32>
    %1072 = arith.mulf %1055, %1063 : vector<8x128xf32>
    %1073 = arith.addf %1071, %1072 : vector<8x128xf32>
    %1074 = math.tanh %1073 : vector<8x128xf32>
    %1075 = arith.mulf %1069, %1074 : vector<8x128xf32>
    %c0_456 = arith.constant 0 : index
    %c0_457 = arith.constant 0 : index
    %1076 = vector.load %arg14[%c0_456, %c0_457] : memref<8x128xf32, #tpu.memory_space<vmem>>, vector<8x128xf32>
    tpu.vector_store %arg14[%c0_456, %c0_457], %1073 {strides = array<i32>} : memref<8x128xf32, #tpu.memory_space<vmem>>, vector<8x128xf32>,
    %c0_458 = arith.constant 0 : index
    %c128_459 = arith.constant 128 : index
    %1077 = vector.load %arg13[%c0_458, %c128_459] : memref<8x256xf32, #tpu.memory_space<vmem>>, vector<8x128xf32>
    tpu.vector_store %arg13[%c0_458, %c128_459], %1075 {strides = array<i32>} : memref<8x256xf32, #tpu.memory_space<vmem>>, vector<8x128xf32>,
    %1078 = arith.truncf %1075 : vector<8x128xf32> to vector<8x128xbf16>
    %c0_460 = arith.constant 0 : index
    %c0_461 = arith.constant 0 : index
    %1079 = vector.load %arg10[%c0_460, %c0_461] : memref<128x128xbf16, #tpu.memory_space<vmem>>, vector<128x128xbf16>
    %cst_462 = arith.constant dense<0.000000e+00> : vector<8x128xf32>
    %1080 = tpu.matmul %1078, %1079, %cst_462 {dimension_numbers = #tpu.dot_dimension_numbers<[1], [0], [0], [1], [0, 0, 1, 1], [], []>} : vector<8x128xbf16>, vector<128x128xbf16>, vector<8x128xf32> -> vector<8x128xf32>
    %c0_463 = arith.constant 0 : index
    %c0_464 = arith.constant 0 : index
    %1081 = vector.load %arg11[%c0_463, %c0_464] : memref<1x128xf32, #tpu.memory_space<vmem>>, vector<1x128xf32>
    %1082 = vector.broadcast %1081 : vector<1x128xf32> to vector<8x128xf32>
    %1083 = arith.addf %1080, %1082 : vector<8x128xf32>
    %c6_465 = arith.constant 6 : index
    %c0_466 = arith.constant 0 : index
    %c0_467 = arith.constant 0 : index
    %1084 = vector.load %arg12[%c6_465, %c0_466, %c0_467] : memref<8x8x128xf32, #tpu.memory_space<vmem>>, vector<1x8x128xf32>
    %1085 = vector.shape_cast %1084 : vector<1x8x128xf32> to vector<8x128xf32>
    %1086 = vector.shape_cast %1083 : vector<8x128xf32> to vector<1x8x128xf32>
    tpu.vector_store %arg12[%c6_465, %c0_466, %c0_467], %1086 {strides = array<i32>} : memref<8x8x128xf32, #tpu.memory_space<vmem>>, vector<1x8x128xf32>,
    %cst_468 = arith.constant dense<0xFF800000> : vector<8xf32>
    %1087 = vector.multi_reduction <maximumf>, %1083, %cst_468 [1] : vector<8x128xf32> to vector<8xf32>
    %1088 = vector.shape_cast %1087 : vector<8xf32> to vector<8x1xf32>
    %1089 = tpu.iota {dimensions = array<i32: 1>} : vector<8x128xi32>
    %1090 = vector.broadcast %1088 : vector<8x1xf32> to vector<8x128xf32>
    %1091 = arith.cmpf oeq, %1083, %1090 : vector<8x128xf32>
    %c128_i32_469 = arith.constant 128 : i32
    %1092 = vector.broadcast %c128_i32_469 : i32 to vector<8x128xi32>
    %1093 = arith.select %1091, %1089, %1092 : vector<8x128xi1>, vector<8x128xi32>
    %cst_470 = arith.constant dense<2147483647> : vector<8xi32>
    %1094 = vector.multi_reduction <minsi>, %1093, %cst_470 [1] : vector<8x128xi32> to vector<8xi32>
    %1095 = vector.shape_cast %1094 : vector<8xi32> to vector<8x1xi32>
    %1096 = vector.broadcast %1095 : vector<8x1xi32> to vector<8x128xi32>
    %1097 = arith.cmpi eq, %1089, %1096 : vector<8x128xi32>
    %1098 = arith.extui %1097 : vector<8x128xi1> to vector<8x128xi32>
    %1099 = arith.sitofp %1098 : vector<8x128xi32> to vector<8x128xf32>
    %1100 = tpu.iota {dimensions = array<i32: 0>} : vector<8x128xi32>
    %1101 = tpu.iota {dimensions = array<i32: 1>} : vector<8x128xi32>
    %c-1_i32_471 = arith.constant -1 : i32
    %1102 = vector.broadcast %c-1_i32_471 : i32 to vector<8x128xi32>
    %c0_i32_472 = arith.constant 0 : i32
    %1103 = vector.broadcast %c0_i32_472 : i32 to vector<8x128xi32>
    %1104 = arith.cmpi eq, %1100, %1103 : vector<8x128xi32>
    %c24_473 = arith.constant 24 : index
    %1105 = memref.load %arg2[%c24_473] : memref<28xi32, #tpu.memory_space<smem>>
    %1106 = vector.broadcast %1105 : i32 to vector<8x128xi32>
    %1107 = arith.select %1104, %1106, %1102 : vector<8x128xi1>, vector<8x128xi32>
    %c1_i32_474 = arith.constant 1 : i32
    %1108 = vector.broadcast %c1_i32_474 : i32 to vector<8x128xi32>
    %1109 = arith.cmpi eq, %1100, %1108 : vector<8x128xi32>
    %c25_475 = arith.constant 25 : index
    %1110 = memref.load %arg2[%c25_475] : memref<28xi32, #tpu.memory_space<smem>>
    %1111 = vector.broadcast %1110 : i32 to vector<8x128xi32>
    %1112 = arith.select %1109, %1111, %1107 : vector<8x128xi1>, vector<8x128xi32>
    %c2_i32_476 = arith.constant 2 : i32
    %1113 = vector.broadcast %c2_i32_476 : i32 to vector<8x128xi32>
    %1114 = arith.cmpi eq, %1100, %1113 : vector<8x128xi32>
    %c26_477 = arith.constant 26 : index
    %1115 = memref.load %arg2[%c26_477] : memref<28xi32, #tpu.memory_space<smem>>
    %1116 = vector.broadcast %1115 : i32 to vector<8x128xi32>
    %1117 = arith.select %1114, %1116, %1112 : vector<8x128xi1>, vector<8x128xi32>
    %c3_i32_478 = arith.constant 3 : i32
    %1118 = vector.broadcast %c3_i32_478 : i32 to vector<8x128xi32>
    %1119 = arith.cmpi eq, %1100, %1118 : vector<8x128xi32>
    %c27_479 = arith.constant 27 : index
    %1120 = memref.load %arg2[%c27_479] : memref<28xi32, #tpu.memory_space<smem>>
    %1121 = vector.broadcast %1120 : i32 to vector<8x128xi32>
    %1122 = arith.select %1119, %1121, %1117 : vector<8x128xi1>, vector<8x128xi32>
    %1123 = arith.cmpi eq, %1101, %1122 : vector<8x128xi32>
    %1124 = arith.extui %1123 : vector<8x128xi1> to vector<8x128xi32>
    %1125 = arith.sitofp %1124 : vector<8x128xi32> to vector<8x128xf32>
    %c5_480 = arith.constant 5 : index
    %1126 = memref.load %arg3[%c5_480] : memref<7xi32, #tpu.memory_space<smem>>
    %c0_i32_481 = arith.constant 0 : i32
    %1127 = arith.cmpi ne, %1126, %c0_i32_481 : i32
    %1128 = arith.extui %1127 : i1 to i32
    %1129 = arith.sitofp %1128 : i32 to f32
    %1130 = vector.broadcast %1129 : f32 to vector<8x128xf32>
    %1131 = arith.mulf %1130, %1125 : vector<8x128xf32>
    %cst_482 = arith.constant 1.000000e+00 : f32
    %1132 = arith.subf %cst_482, %1129 : f32
    %1133 = vector.broadcast %1132 : f32 to vector<8x128xf32>
    %1134 = arith.mulf %1133, %1099 : vector<8x128xf32>
    %1135 = arith.addf %1131, %1134 : vector<8x128xf32>
    %1136 = arith.truncf %1135 : vector<8x128xf32> to vector<8x128xbf16>
    %c0_483 = arith.constant 0 : index
    %c0_484 = arith.constant 0 : index
    %1137 = vector.load %arg7[%c0_483, %c0_484] : memref<128x128xbf16, #tpu.memory_space<vmem>>, vector<128x128xbf16>
    %cst_485 = arith.constant dense<0.000000e+00> : vector<8x128xf32>
    %1138 = tpu.matmul %1136, %1137, %cst_485 {dimension_numbers = #tpu.dot_dimension_numbers<[1], [0], [0], [1], [0, 0, 1, 1], [], []>} : vector<8x128xbf16>, vector<128x128xbf16>, vector<8x128xf32> -> vector<8x128xf32>
    %c0_486 = arith.constant 0 : index
    %c0_487 = arith.constant 0 : index
    %1139 = vector.load %arg13[%c0_486, %c0_487] : memref<8x256xf32, #tpu.memory_space<vmem>>, vector<8x128xf32>
    tpu.vector_store %arg13[%c0_486, %c0_487], %1138 {strides = array<i32>} : memref<8x256xf32, #tpu.memory_space<vmem>>, vector<8x128xf32>,
    %c0_488 = arith.constant 0 : index
    %c0_489 = arith.constant 0 : index
    %1140 = vector.load %arg13[%c0_488, %c0_489] : memref<8x256xf32, #tpu.memory_space<vmem>>, vector<8x256xf32>
    %1141 = arith.truncf %1140 : vector<8x256xf32> to vector<8x256xbf16>
    %c0_490 = arith.constant 0 : index
    %c0_491 = arith.constant 0 : index
    %1142 = vector.load %arg8[%c0_490, %c0_491] : memref<256x512xbf16, #tpu.memory_space<vmem>>, vector<256x512xbf16>
    %cst_492 = arith.constant dense<0.000000e+00> : vector<8x512xf32>
    %1143 = tpu.matmul %1141, %1142, %cst_492 {dimension_numbers = #tpu.dot_dimension_numbers<[1], [0], [0], [1], [0, 0, 1, 1], [], []>} : vector<8x256xbf16>, vector<256x512xbf16>, vector<8x512xf32> -> vector<8x512xf32>
    %c0_493 = arith.constant 0 : index
    %c0_494 = arith.constant 0 : index
    %1144 = vector.load %arg9[%c0_493, %c0_494] : memref<1x512xf32, #tpu.memory_space<vmem>>, vector<1x512xf32>
    %1145 = vector.broadcast %1144 : vector<1x512xf32> to vector<8x512xf32>
    %1146 = arith.addf %1143, %1145 : vector<8x512xf32>
    %1147 = vector.extract_strided_slice %1146 {offsets = [0, 0], sizes = [8, 128], strides = [1, 1]} : vector<8x512xf32> to vector<8x128xf32>
    %1148 = arith.negf %1147 : vector<8x128xf32>
    %1149 = math.exp %1148 : vector<8x128xf32>
    %cst_495 = arith.constant 1.000000e+00 : f32
    %1150 = vector.broadcast %cst_495 : f32 to vector<8x128xf32>
    %1151 = arith.addf %1150, %1149 : vector<8x128xf32>
    %1152 = arith.divf %1150, %1151 : vector<8x128xf32>
    %1153 = vector.extract_strided_slice %1146 {offsets = [0, 128], sizes = [8, 128], strides = [1, 1]} : vector<8x512xf32> to vector<8x128xf32>
    %1154 = arith.negf %1153 : vector<8x128xf32>
    %1155 = math.exp %1154 : vector<8x128xf32>
    %cst_496 = arith.constant 1.000000e+00 : f32
    %1156 = vector.broadcast %cst_496 : f32 to vector<8x128xf32>
    %1157 = arith.addf %1156, %1155 : vector<8x128xf32>
    %1158 = arith.divf %1156, %1157 : vector<8x128xf32>
    %1159 = vector.extract_strided_slice %1146 {offsets = [0, 256], sizes = [8, 128], strides = [1, 1]} : vector<8x512xf32> to vector<8x128xf32>
    %1160 = math.tanh %1159 : vector<8x128xf32>
    %1161 = vector.extract_strided_slice %1146 {offsets = [0, 384], sizes = [8, 128], strides = [1, 1]} : vector<8x512xf32> to vector<8x128xf32>
    %1162 = arith.negf %1161 : vector<8x128xf32>
    %1163 = math.exp %1162 : vector<8x128xf32>
    %cst_497 = arith.constant 1.000000e+00 : f32
    %1164 = vector.broadcast %cst_497 : f32 to vector<8x128xf32>
    %1165 = arith.addf %1164, %1163 : vector<8x128xf32>
    %1166 = arith.divf %1164, %1165 : vector<8x128xf32>
    %c0_498 = arith.constant 0 : index
    %c0_499 = arith.constant 0 : index
    %1167 = vector.load %arg14[%c0_498, %c0_499] : memref<8x128xf32, #tpu.memory_space<vmem>>, vector<8x128xf32>
    %1168 = arith.mulf %1158, %1167 : vector<8x128xf32>
    %1169 = arith.mulf %1152, %1160 : vector<8x128xf32>
    %1170 = arith.addf %1168, %1169 : vector<8x128xf32>
    %1171 = math.tanh %1170 : vector<8x128xf32>
    %1172 = arith.mulf %1166, %1171 : vector<8x128xf32>
    %c0_500 = arith.constant 0 : index
    %c0_501 = arith.constant 0 : index
    %1173 = vector.load %arg14[%c0_500, %c0_501] : memref<8x128xf32, #tpu.memory_space<vmem>>, vector<8x128xf32>
    tpu.vector_store %arg14[%c0_500, %c0_501], %1170 {strides = array<i32>} : memref<8x128xf32, #tpu.memory_space<vmem>>, vector<8x128xf32>,
    %c0_502 = arith.constant 0 : index
    %c128_503 = arith.constant 128 : index
    %1174 = vector.load %arg13[%c0_502, %c128_503] : memref<8x256xf32, #tpu.memory_space<vmem>>, vector<8x128xf32>
    tpu.vector_store %arg13[%c0_502, %c128_503], %1172 {strides = array<i32>} : memref<8x256xf32, #tpu.memory_space<vmem>>, vector<8x128xf32>,
    %1175 = arith.truncf %1172 : vector<8x128xf32> to vector<8x128xbf16>
    %c0_504 = arith.constant 0 : index
    %c0_505 = arith.constant 0 : index
    %1176 = vector.load %arg10[%c0_504, %c0_505] : memref<128x128xbf16, #tpu.memory_space<vmem>>, vector<128x128xbf16>
    %cst_506 = arith.constant dense<0.000000e+00> : vector<8x128xf32>
    %1177 = tpu.matmul %1175, %1176, %cst_506 {dimension_numbers = #tpu.dot_dimension_numbers<[1], [0], [0], [1], [0, 0, 1, 1], [], []>} : vector<8x128xbf16>, vector<128x128xbf16>, vector<8x128xf32> -> vector<8x128xf32>
    %c0_507 = arith.constant 0 : index
    %c0_508 = arith.constant 0 : index
    %1178 = vector.load %arg11[%c0_507, %c0_508] : memref<1x128xf32, #tpu.memory_space<vmem>>, vector<1x128xf32>
    %1179 = vector.broadcast %1178 : vector<1x128xf32> to vector<8x128xf32>
    %1180 = arith.addf %1177, %1179 : vector<8x128xf32>
    %c7_509 = arith.constant 7 : index
    %c0_510 = arith.constant 0 : index
    %c0_511 = arith.constant 0 : index
    %1181 = vector.load %arg12[%c7_509, %c0_510, %c0_511] : memref<8x8x128xf32, #tpu.memory_space<vmem>>, vector<1x8x128xf32>
    %1182 = vector.shape_cast %1181 : vector<1x8x128xf32> to vector<8x128xf32>
    %1183 = vector.shape_cast %1180 : vector<8x128xf32> to vector<1x8x128xf32>
    tpu.vector_store %arg12[%c7_509, %c0_510, %c0_511], %1183 {strides = array<i32>} : memref<8x8x128xf32, #tpu.memory_space<vmem>>, vector<1x8x128xf32>,
    return
  }
  func.func @transform_0(%arg0: i32, %arg1: memref<32xi32, #tpu.memory_space<smem>>, %arg2: memref<28xi32, #tpu.memory_space<smem>>, %arg3: memref<7xi32, #tpu.memory_space<smem>>) -> (i32, i32) {
    %c0_i32 = arith.constant 0 : i32
    %c0_i32_0 = arith.constant 0 : i32
    %c0_i32_1 = arith.constant 0 : i32
    return %c0_i32, %c0_i32_0 : i32, i32
  }
  func.func @transform_1(%arg0: i32, %arg1: memref<32xi32, #tpu.memory_space<smem>>, %arg2: memref<28xi32, #tpu.memory_space<smem>>, %arg3: memref<7xi32, #tpu.memory_space<smem>>) -> (i32, i32) {
    %c0_i32 = arith.constant 0 : i32
    %c0_i32_0 = arith.constant 0 : i32
    %c0_i32_1 = arith.constant 0 : i32
    return %c0_i32, %c0_i32_0 : i32, i32
  }
  func.func @transform_2(%arg0: i32, %arg1: memref<32xi32, #tpu.memory_space<smem>>, %arg2: memref<28xi32, #tpu.memory_space<smem>>, %arg3: memref<7xi32, #tpu.memory_space<smem>>) -> (i32, i32) {
    %c0_i32 = arith.constant 0 : i32
    %c0_i32_0 = arith.constant 0 : i32
    %c0_i32_1 = arith.constant 0 : i32
    return %c0_i32, %c0_i32_0 : i32, i32
  }
  func.func @transform_3(%arg0: i32, %arg1: memref<32xi32, #tpu.memory_space<smem>>, %arg2: memref<28xi32, #tpu.memory_space<smem>>, %arg3: memref<7xi32, #tpu.memory_space<smem>>) -> (i32, i32) {
    %c0_i32 = arith.constant 0 : i32
    %c0_i32_0 = arith.constant 0 : i32
    %c0_i32_1 = arith.constant 0 : i32
    return %c0_i32, %c0_i32_0 : i32, i32
  }
  func.func @transform_4(%arg0: i32, %arg1: memref<32xi32, #tpu.memory_space<smem>>, %arg2: memref<28xi32, #tpu.memory_space<smem>>, %arg3: memref<7xi32, #tpu.memory_space<smem>>) -> (i32, i32) {
    %c0_i32 = arith.constant 0 : i32
    %c0_i32_0 = arith.constant 0 : i32
    %c0_i32_1 = arith.constant 0 : i32
    return %c0_i32, %c0_i32_0 : i32, i32
  }
  func.func @transform_5(%arg0: i32, %arg1: memref<32xi32, #tpu.memory_space<smem>>, %arg2: memref<28xi32, #tpu.memory_space<smem>>, %arg3: memref<7xi32, #tpu.memory_space<smem>>) -> (i32, i32) {
    %c0_i32 = arith.constant 0 : i32
    %c0_i32_0 = arith.constant 0 : i32
    %c0_i32_1 = arith.constant 0 : i32
    return %c0_i32, %c0_i32_0 : i32, i32
  }
  func.func @transform_6(%arg0: i32, %arg1: memref<32xi32, #tpu.memory_space<smem>>, %arg2: memref<28xi32, #tpu.memory_space<smem>>, %arg3: memref<7xi32, #tpu.memory_space<smem>>) -> (i32, i32) {
    %c0_i32 = arith.constant 0 : i32
    %c0_i32_0 = arith.constant 0 : i32
    %c0_i32_1 = arith.constant 0 : i32
    return %c0_i32, %c0_i32_0 : i32, i32
  }
  func.func @transform_7(%arg0: i32, %arg1: memref<32xi32, #tpu.memory_space<smem>>, %arg2: memref<28xi32, #tpu.memory_space<smem>>, %arg3: memref<7xi32, #tpu.memory_space<smem>>) -> (i32, i32) {
    %c0_i32 = arith.constant 0 : i32
    %c0_i32_0 = arith.constant 0 : i32
    %c0_i32_1 = arith.constant 0 : i32
    return %c0_i32, %c0_i32_0 : i32, i32
  }
  func.func @transform_8(%arg0: i32, %arg1: memref<32xi32, #tpu.memory_space<smem>>, %arg2: memref<28xi32, #tpu.memory_space<smem>>, %arg3: memref<7xi32, #tpu.memory_space<smem>>) -> (i32, i32, i32) {
    %c0_i32 = arith.constant 0 : i32
    %c0_i32_0 = arith.constant 0 : i32
    %c0_i32_1 = arith.constant 0 : i32
    %c0_i32_2 = arith.constant 0 : i32
    return %c0_i32, %c0_i32_0, %c0_i32_1 : i32, i32, i32
  }
}

</mosaic_0001>

<llo_original>
// kernel: _seq2seq_jit.1
$region0: #{_seq2seq_jit.1}
  #allocation0 [shape = 'u32[]', space=smem, size = 0x4, offset = 0x4, fixed_abs, tag = 'smem constant byte address 0x4 - core index']
  #allocation1 [shape = 'u32[144,128]{1,0:T(1,128)}', space=vmem, size = 0x12000, scoped, tag = 'internal scratch']
  #allocation2 [shape = 'f32[8,256]{1,0:T(8,128)}', space=vmem, size = 0x2000, scoped, tag = 'scratch operand']
  #allocation3 [shape = 'f32[8,128]{1,0:T(8,128)}', space=vmem, size = 0x1000, scoped, tag = 'scratch operand']
  #allocation4 [shape = 's32[1]{0}', space=sflag, size = 0x4, scoped, tag = 'scoped memory for _seq2seq_jit.1']
  #allocation5 [shape = 'u8[512]{0}', space=smem, size = 0x200, scoped, tag = 'prefetched SMEM operand 0']
  #allocation6 [shape = 'u8[512]{0}', space=smem, size = 0x200, scoped, tag = 'prefetched SMEM operand 1']
  #allocation7 [shape = 'u8[512]{0}', space=smem, size = 0x200, scoped, tag = 'prefetched SMEM operand 2']
  %s0 = inlined_call_operand.vmem [shape: s32[32], index: 0, kind: input, shape index: {}]
  %s1 = inlined_call_operand.vmem [shape: s32[28], index: 1, kind: input, shape index: {}]
  %s2 = inlined_call_operand.vmem [shape: s32[7], index: 2, kind: input, shape index: {}]
  %s3 = inlined_call_operand.hbm [shape: bf16[128,128], index: 3, kind: input, shape index: {}]
  %s4 = inlined_call_operand.hbm [shape: bf16[256,512], index: 4, kind: input, shape index: {}]
  %s5 = inlined_call_operand.vmem [shape: f32[1,512], index: 5, kind: input, shape index: {}]
  %s6 = inlined_call_operand.hbm [shape: bf16[128,128], index: 6, kind: input, shape index: {}]
  %s7 = inlined_call_operand.hbm [shape: bf16[256,512], index: 7, kind: input, shape index: {}]
  %s8 = inlined_call_operand.vmem [shape: f32[1,512], index: 8, kind: input, shape index: {}]
  %s9 = inlined_call_operand.hbm [shape: bf16[128,128], index: 9, kind: input, shape index: {}]
  %s10 = inlined_call_operand.vmem [shape: f32[1,128], index: 10, kind: input, shape index: {}]
  %s11 = inlined_call_operand.vmem [shape: f32[8,8,128], index: 11, kind: output, shape index: {}]
  %s12 = sld [smem:[#allocation0]]
  $region62: #{_seq2seq_jit.1} parent=0
    _
  %s14 = ssub.s32 1, %s12
  %s15 = scalar_select 0, %s14, %s12
  %s16 = sshll.u32 %s0, 4
  %s17 = int_to_ptr.vmem [resolvable:$true] %s16
  %19 = dma.vmem_to_smem %s17, 16, [#allocation5], [#allocation4]
  %s20 = sshll.u32 %s1, 4
  %s21 = int_to_ptr.vmem [resolvable:$true] %s20
  %23 = dma.vmem_to_smem %s21, 16, [#allocation6], [#allocation4]
  %s24 = sshll.u32 %s2, 4
  %s25 = int_to_ptr.vmem [resolvable:$true] %s24
  %27 = dma.vmem_to_smem %s25, 16, [#allocation7], [#allocation4]
  %28 = dma.done [#allocation4], 48
  %29 = sfence
  $region1: #{_seq2seq_jit.1} parent=0
    #allocation8 [shape = 'u8[32768]{0}', space=vmem, size = 0x8000, scoped, tag = 'input window, operand 3, single buffered']
    #allocation9 [shape = 's32[1]{0}', space=sflag, size = 0x4, scoped, tag = 'scoped memory for _seq2seq_jit.1']
    #allocation10 [shape = 'u8[262144]{0}', space=vmem, size = 0x40000, scoped, tag = 'input window, operand 4, single buffered']
    #allocation11 [shape = 's32[1]{0}', space=sflag, size = 0x4, scoped, tag = 'scoped memory for _seq2seq_jit.1']
    #allocation12 [shape = 'u8[32768]{0}', space=vmem, size = 0x8000, scoped, tag = 'input window, operand 6, single buffered']
    #allocation13 [shape = 'u8[262144]{0}', space=vmem, size = 0x40000, scoped, tag = 'input window, operand 7, single buffered']
    #allocation14 [shape = 's32[1]{0}', space=sflag, size = 0x4, scoped, tag = 'scoped memory for _seq2seq_jit.1']
    #allocation15 [shape = 'u8[32768]{0}', space=vmem, size = 0x8000, scoped, tag = 'input window, operand 9, single buffered']
    %30 = vsyncpa [#allocation9], 0
    %31 = vsyncpa [#allocation11], 0
    %32 = vsyncpa [#allocation14], 0
    // Predicated region
    $region2: #{_seq2seq_jit.1} parent=1 // pred_check
      _
    $region3: #{_seq2seq_jit.1} parent=1 // pred_check_branch
      %34 = sbr.rel (0) target = $region5
    $region4: #{_seq2seq_jit.1} parent=1 // pred_region
      %s36 = ssub.s32 1024, 1024
      %37 = vsyncadd [#allocation9], %s36
      %s38 = sshll.u32 [#allocation8], 4
      %s39 = int_to_ptr.vmem [resolvable:$true] %s38
      %44 = dma.hbm_to_vmem [thread:$0]  %s3, 1024, %s39, [#allocation9], 64, 64, 4
    $region5: #{_seq2seq_jit.1} parent=1 // pred_fallthru
      _
    // Predicated region
    $region6: #{_seq2seq_jit.1} parent=1 // pred_check
      _
    $region7: #{_seq2seq_jit.1} parent=1 // pred_check_branch
      %46 = sbr.rel (0) target = $region9
    $region8: #{_seq2seq_jit.1} parent=1 // pred_region
      %s48 = ssub.s32 8192, 8192
      %49 = vsyncadd [#allocation11], %s48
      %s50 = sshll.u32 [#allocation10], 4
      %s51 = int_to_ptr.vmem [resolvable:$true] %s50
      %56 = dma.hbm_to_vmem [thread:$0]  %s4, 8192, %s51, [#allocation11], 256, 256, 16
    $region9: #{_seq2seq_jit.1} parent=1 // pred_fallthru
      _
    // Predicated region
    $region10: #{_seq2seq_jit.1} parent=1 // pred_check
      _
    $region11: #{_seq2seq_jit.1} parent=1 // pred_check_branch
      %58 = sbr.rel (0) target = $region13
    $region12: #{_seq2seq_jit.1} parent=1 // pred_region
      _
    $region13: #{_seq2seq_jit.1} parent=1 // pred_fallthru
      _
    // Predicated region
    $region14: #{_seq2seq_jit.1} parent=1 // pred_check
      _
    $region15: #{_seq2seq_jit.1} parent=1 // pred_check_branch
      %60 = sbr.rel (0) target = $region17
    $region16: #{_seq2seq_jit.1} parent=1 // pred_region
      %s62 = ssub.s32 1024, 1024
      %63 = vsyncadd [#allocation11], %s62
      %s64 = sshll.u32 [#allocation12], 4
      %s65 = int_to_ptr.vmem [resolvable:$true] %s64
      %70 = dma.hbm_to_vmem [thread:$0]  %s6, 1024, %s65, [#allocation11], 64, 64, 4
    $region17: #{_seq2seq_jit.1} parent=1 // pred_fallthru
      _
    // Predicated region
    $region18: #{_seq2seq_jit.1} parent=1 // pred_check
      _
    $region19: #{_seq2seq_jit.1} parent=1 // pred_check_branch
      %72 = sbr.rel (0) target = $region21
    $region20: #{_seq2seq_jit.1} parent=1 // pred_region
      %s74 = ssub.s32 8192, 8192
      %75 = vsyncadd [#allocation14], %s74
      %s76 = sshll.u32 [#allocation13], 4
      %s77 = int_to_ptr.vmem [resolvable:$true] %s76
      %82 = dma.hbm_to_vmem [thread:$0]  %s7, 8192, %s77, [#allocation14], 256, 256, 16
    $region21: #{_seq2seq_jit.1} parent=1 // pred_fallthru
      _
    // Predicated region
    $region22: #{_seq2seq_jit.1} parent=1 // pred_check
      _
    $region23: #{_seq2seq_jit.1} parent=1 // pred_check_branch
      %84 = sbr.rel (0) target = $region25
    $region24: #{_seq2seq_jit.1} parent=1 // pred_region
      _
    $region25: #{_seq2seq_jit.1} parent=1 // pred_fallthru
      _
    // Predicated region
    $region26: #{_seq2seq_jit.1} parent=1 // pred_check
      _
    $region27: #{_seq2seq_jit.1} parent=1 // pred_check_branch
      %86 = sbr.rel (0) target = $region29
    $region28: #{_seq2seq_jit.1} parent=1 // pred_region
      %s88 = ssub.s32 1024, 1024
      %89 = vsyncadd [#allocation14], %s88
      %s90 = sshll.u32 [#allocation15], 4
      %s91 = int_to_ptr.vmem [resolvable:$true] %s90
      %96 = dma.hbm_to_vmem [thread:$0]  %s9, 1024, %s91, [#allocation14], 64, 64, 4
    $region29: #{_seq2seq_jit.1} parent=1 // pred_fallthru
      _
    // Predicated region
    $region30: #{_seq2seq_jit.1} parent=1 // pred_check
      _
    $region31: #{_seq2seq_jit.1} parent=1 // pred_check_branch
      %98 = sbr.rel (0) target = $region33
    $region32: #{_seq2seq_jit.1} parent=1 // pred_region
      _
    $region33: #{_seq2seq_jit.1} parent=1 // pred_fallthru
      _
    // Predicated region
    $region34: #{_seq2seq_jit.1} parent=1 // pred_check
      _
    $region35: #{_seq2seq_jit.1} parent=1 // pred_check_branch
      %100 = sbr.rel (0) target = $region37
    $region36: #{_seq2seq_jit.1} parent=1 // pred_region
      %101 = dma.done [#allocation9], 1024
    $region37: #{_seq2seq_jit.1} parent=1 // pred_fallthru
      _
    // Predicated region
    $region38: #{_seq2seq_jit.1} parent=1 // pred_check
      _
    $region39: #{_seq2seq_jit.1} parent=1 // pred_check_branch
      %103 = sbr.rel (0) target = $region41
    $region40: #{_seq2seq_jit.1} parent=1 // pred_region
      %104 = dma.done [#allocation11], 8192
    $region41: #{_seq2seq_jit.1} parent=1 // pred_fallthru
      _
    // Predicated region
    $region42: #{_seq2seq_jit.1} parent=1 // pred_check
      _
    $region43: #{_seq2seq_jit.1} parent=1 // pred_check_branch
      %106 = sbr.rel (0) target = $region45
    $region44: #{_seq2seq_jit.1} parent=1 // pred_region
      %107 = dma.done [#allocation11], 1024
    $region45: #{_seq2seq_jit.1} parent=1 // pred_fallthru
      _
    // Predicated region
    $region46: #{_seq2seq_jit.1} parent=1 // pred_check
      _
    $region47: #{_seq2seq_jit.1} parent=1 // pred_check_branch
      %109 = sbr.rel (0) target = $region49
    $region48: #{_seq2seq_jit.1} parent=1 // pred_region
      %110 = dma.done [#allocation14], 8192
    $region49: #{_seq2seq_jit.1} parent=1 // pred_fallthru
      _
    // Predicated region
    $region50: #{_seq2seq_jit.1} parent=1 // pred_check
      _
    $region51: #{_seq2seq_jit.1} parent=1 // pred_check_branch
      %112 = sbr.rel (0) target = $region53
    $region52: #{_seq2seq_jit.1} parent=1 // pred_region
      %113 = dma.done [#allocation14], 1024
    $region53: #{_seq2seq_jit.1} parent=1 // pred_fallthru
      _
    %115 = vst [vmem:[#allocation2 + $0x8] sm:$0xff] 0.0
    %116 = vst [vmem:[#allocation3] sm:$0xff] 0.0
    %117 = vst [vmem:[%s11] sm:$0xff] 0.0
    %v118 = vlaneseq
    %v119 = vshrl.u32 %v118, 7
    %v120 = vlaneseq
    %v121 = vand.u32 %v120, 127
    %vm122 = vcmp.eq.s32.totalorder %v119, 0
    %s123 = sld [smem:[#allocation5]]
    %v124 = vstv %s123
    %v125 = vsel %vm122, %v124, 4294967295
    %vm126 = vcmp.eq.s32.totalorder %v119, 1
    %s127 = sld [smem:[#allocation5 + $0x1]]
    %v128 = vstv %s127
    %v129 = vsel %vm126, %v128, %v125
    %vm130 = vcmp.eq.s32.totalorder %v119, 2
    %s131 = sld [smem:[#allocation5 + $0x2]]
    %v132 = vstv %s131
    %v133 = vsel %vm130, %v132, %v129
    %vm134 = vcmp.eq.s32.totalorder %v119, 3
    %s135 = sld [smem:[#allocation5 + $0x3]]
    %v136 = vstv %s135
    %v137 = vsel %vm134, %v136, %v133
    %vm138 = vcmp.eq.s32.totalorder %v121, %v137
    %v139 = vsel %vm138, 1, 0
    %v140 = vcvt.s32.f32 %v139
    %v141 = vpack.c.bf16 %v140, %v140
    %v142 = vld [vmem:[#allocation8] sm:$0xf]
    %v143 = vld [vmem:[#allocation8 + $0x4] sm:$0xf]
    %v144 = vld [vmem:[#allocation8 + $0x8] sm:$0xf]
    %v145 = vld [vmem:[#allocation8 + $0xc] sm:$0xf]
    %v146 = vld [vmem:[#allocation8 + $0x10] sm:$0xf]
    %v147 = vld [vmem:[#allocation8 + $0x14] sm:$0xf]
    %v148 = vld [vmem:[#allocation8 + $0x18] sm:$0xf]
    %v149 = vld [vmem:[#allocation8 + $0x1c] sm:$0xf]
    %v150 = vld [vmem:[#allocation8 + $0x20] sm:$0xf]
    %v151 = vld [vmem:[#allocation8 + $0x24] sm:$0xf]
    %v152 = vld [vmem:[#allocation8 + $0x28] sm:$0xf]
    %v153 = vld [vmem:[#allocation8 + $0x2c] sm:$0xf]
    %v154 = vld [vmem:[#allocation8 + $0x30] sm:$0xf]
    %v155 = vld [vmem:[#allocation8 + $0x34] sm:$0xf]
    %v156 = vld [vmem:[#allocation8 + $0x38] sm:$0xf]
    %v157 = vld [vmem:[#allocation8 + $0x3c] sm:$0xf]
    %v174 = vunpack.c.l.b16 %v142
    %v175 = vunpack.c.l.b16 %v143
    %v176 = vunpack.c.l.b16 %v144
    %v177 = vunpack.c.l.b16 %v145
    %v178 = vunpack.c.l.b16 %v146
    %v179 = vunpack.c.l.b16 %v147
    %v180 = vunpack.c.l.b16 %v148
    %v181 = vunpack.c.l.b16 %v149
    %v182 = vunpack.c.l.b16 %v150
    %v183 = vunpack.c.l.b16 %v151
    %v184 = vunpack.c.l.b16 %v152
    %v185 = vunpack.c.l.b16 %v153
    %v186 = vunpack.c.l.b16 %v154
    %v187 = vunpack.c.l.b16 %v155
    %v188 = vunpack.c.l.b16 %v156
    %v189 = vunpack.c.l.b16 %v157
    %v190 = vpack.c.b16 %v175, %v174
    %v191 = vpack.c.b16 %v177, %v176
    %v192 = vpack.c.b16 %v179, %v178
    %v193 = vpack.c.b16 %v181, %v180
    %v194 = vpack.c.b16 %v183, %v182
    %v195 = vpack.c.b16 %v185, %v184
    %v196 = vpack.c.b16 %v187, %v186
    %v197 = vpack.c.b16 %v189, %v188
    %206 = vmatprep.subr.bf16.mxu0 0
    %207 = vmatpush1.bf16.msra.mxu0 %v197
    %208 = vmatprep.subr.bf16.mxu0 0
    %209 = vmatpush1.bf16.msra.mxu0 %v196
    %210 = vmatprep.subr.bf16.mxu0 0
    %211 = vmatpush1.bf16.msra.mxu0 %v195
    %212 = vmatprep.subr.bf16.mxu0 0
    %213 = vmatpush1.bf16.msra.mxu0 %v194
    %214 = vmatprep.subr.bf16.mxu0 0
    %215 = vmatpush1.bf16.msra.mxu0 %v193
    %216 = vmatprep.subr.bf16.mxu0 0
    %217 = vmatpush1.bf16.msra.mxu0 %v192
    %218 = vmatprep.subr.bf16.mxu0 0
    %219 = vmatpush1.bf16.msra.mxu0 %v191
    %220 = vmatprep.subr.bf16.mxu0 0
    %221 = vmatpush1.bf16.msra.mxu0 %v190
    %222 = vmatprep.subr.bf16.mxu0 0
    %223 = vmatpush2.bf16.msra.mxu0 0
    %224 = vmatprep.subr.bf16.mxu0 0
    %225 = vmatpush2.bf16.msra.mxu0 0
    %226 = vmatprep.subr.bf16.mxu0 0
    %227 = vmatpush2.bf16.msra.mxu0 0
    %228 = vmatprep.subr.bf16.mxu0 0
    %229 = vmatpush2.bf16.msra.mxu0 0
    %230 = vmatprep.subr.bf16.mxu0 0
    %231 = vmatpush2.bf16.msra.mxu0 0
    %232 = vmatprep.subr.bf16.mxu0 0
    %233 = vmatpush2.bf16.msra.mxu0 0
    %234 = vmatprep.subr.bf16.mxu0 0
    %235 = vmatpush2.bf16.msra.mxu0 0
    %236 = vmatprep.subr.bf16.mxu0 0
    %237 = vmatpush2.bf16.msra.mxu0 0
    %238 = vmatprep.mubr.bf16.mxu0 0
    %239 = vmatmul.mubr.bf16.gmra.mxu0 %v141
    %v240 = vpop.f32.mrf.mxu0
    %v241 = vadd.f32 0.0, %v240
    %v242 = vpop.f32.mrf.mxu0
    %v243 = vpop.f32.mrf.mxu0
    %v244 = vpop.f32.mrf.mxu0
    %245 = vdwg.mxu0
    %246 = vst [vmem:[#allocation2] sm:$0xff] %v241
    %v247 = vld [vmem:[#allocation2] sm:$0xff]
    %v248 = vld [vmem:[#allocation2 + $0x8] sm:$0xff]
    %v249 = vpack.c.bf16 %v247, %v247
    %v250 = vpack.c.bf16 %v248, %v248
    %v251 = vld [vmem:[#allocation10] sm:$0xff]
    %v252 = vld [vmem:[#allocation10 + $0x8] sm:$0xff]
    %v253 = vld [vmem:[#allocation10 + $0x10] sm:$0xff]
    %v254 = vld [vmem:[#allocation10 + $0x18] sm:$0xff]
    %v255 = vld [vmem:[#allocation10 + $0x20] sm:$0xff]
    %v256 = vld [vmem:[#allocation10 + $0x28] sm:$0xff]
    %v257 = vld [vmem:[#allocation10 + $0x30] sm:$0xff]
    %v258 = vld [vmem:[#allocation10 + $0x38] sm:$0xff]
    %v259 = vld [vmem:[#allocation10 + $0x40] sm:$0xff]
    %v260 = vld [vmem:[#allocation10 + $0x48] sm:$0xff]
    %v261 = vld [vmem:[#allocation10 + $0x50] sm:$0xff]
    %v262 = vld [vmem:[#allocation10 + $0x58] sm:$0xff]
    %v263 = vld [vmem:[#allocation10 + $0x60] sm:$0xff]
    %v264 = vld [vmem:[#allocation10 + $0x68] sm:$0xff]
    %v265 = vld [vmem:[#allocation10 + $0x70] sm:$0xff]
    %v266 = vld [vmem:[#allocation10 + $0x78] sm:$0xff]
    %v267 = vld [vmem:[#allocation10 + $0x80] sm:$0xff]
    %v268 = vld [vmem:[#allocation10 + $0x88] sm:$0xff]
    %v269 = vld [vmem:[#allocation10 + $0x90] sm:$0xff]
    %v270 = vld [vmem:[#allocation10 + $0x98] sm:$0xff]
    %v271 = vld [vmem:[#allocation10 + $0xa0] sm:$0xff]
    %v272 = vld [vmem:[#allocation10 + $0xa8] sm:$0xff]
    %v273 = vld [vmem:[#allocation10 + $0xb0] sm:$0xff]
    %v274 = vld [vmem:[#allocation10 + $0xb8] sm:$0xff]
    %v275 = vld [vmem:[#allocation10 + $0xc0] sm:$0xff]
    %v276 = vld [vmem:[#allocation10 + $0xc8] sm:$0xff]
    %v277 = vld [vmem:[#allocation10 + $0xd0] sm:$0xff]
    %v278 = vld [vmem:[#allocation10 + $0xd8] sm:$0xff]
    %v279 = vld [vmem:[#allocation10 + $0xe0] sm:$0xff]
    %v280 = vld [vmem:[#allocation10 + $0xe8] sm:$0xff]
    %v281 = vld [vmem:[#allocation10 + $0xf0] sm:$0xff]
    %v282 = vld [vmem:[#allocation10 + $0xf8] sm:$0xff]
    %v283 = vld [vmem:[#allocation10 + $0x100] sm:$0xff]
    %v284 = vld [vmem:[#allocation10 + $0x108] sm:$0xff]
    %v285 = vld [vmem:[#allocation10 + $0x110] sm:$0xff]
    %v286 = vld [vmem:[#allocation10 + $0x118] sm:$0xff]
    %v287 = vld [vmem:[#allocation10 + $0x120] sm:$0xff]
    %v288 = vld [vmem:[#allocation10 + $0x128] sm:$0xff]
    %v289 = vld [vmem:[#allocation10 + $0x130] sm:$0xff]
    %v290 = vld [vmem:[#allocation10 + $0x138] sm:$0xff]
    %v291 = vld [vmem:[#allocation10 + $0x140] sm:$0xff]
    %v292 = vld [vmem:[#allocation10 + $0x148] sm:$0xff]
    %v293 = vld [vmem:[#allocation10 + $0x150] sm:$0xff]
    %v294 = vld [vmem:[#allocation10 + $0x158] sm:$0xff]
    %v295 = vld [vmem:[#allocation10 + $0x160] sm:$0xff]
    %v296 = vld [vmem:[#allocation10 + $0x168] sm:$0xff]
    %v297 = vld [vmem:[#allocation10 + $0x170] sm:$0xff]
    %v298 = vld [vmem:[#allocation10 + $0x178] sm:$0xff]
    %v299 = vld [vmem:[#allocation10 + $0x180] sm:$0xff]
    %v300 = vld [vmem:[#allocation10 + $0x188] sm:$0xff]
    %v301 = vld [vmem:[#allocation10 + $0x190] sm:$0xff]
    %v302 = vld [vmem:[#allocation10 + $0x198] sm:$0xff]
    %v303 = vld [vmem:[#allocation10 + $0x1a0] sm:$0xff]
    %v304 = vld [vmem:[#allocation10 + $0x1a8] sm:$0xff]
    %v305 = vld [vmem:[#allocation10 + $0x1b0] sm:$0xff]
    %v306 = vld [vmem:[#allocation10 + $0x1b8] sm:$0xff]
    %v307 = vld [vmem:[#allocation10 + $0x1c0] sm:$0xff]
    %v308 = vld [vmem:[#allocation10 + $0x1c8] sm:$0xff]
    %v309 = vld [vmem:[#allocation10 + $0x1d0] sm:$0xff]
    %v310 = vld [vmem:[#allocation10 + $0x1d8] sm:$0xff]
    %v311 = vld [vmem:[#allocation10 + $0x1e0] sm:$0xff]
    %v312 = vld [vmem:[#allocation10 + $0x1e8] sm:$0xff]
    %v313 = vld [vmem:[#allocation10 + $0x1f0] sm:$0xff]
    %v314 = vld [vmem:[#allocation10 + $0x1f8] sm:$0xff]
    %v315 = vld [vmem:[%s5] sm:$0xf]
    %v317 = vlaneseq
    %v318 = vshrl.u32 %v317, 7
    %v319 = vsub.s32 0, %v318
    %v320 = vrot.slane %v315, %v319
    %v321 = vlaneseq
    %v322 = vshrl.u32 %v321, 7
    %v323 = vsub.s32 1, %v322
    %v324 = vrot.slane %v315, %v323
    %v325 = vlaneseq
    %v326 = vshrl.u32 %v325, 7
    %v327 = vsub.s32 2, %v326
    %v328 = vrot.slane %v315, %v327
    %v329 = vlaneseq
    %v330 = vshrl.u32 %v329, 7
    %v331 = vsub.s32 3, %v330
    %v332 = vrot.slane %v315, %v331
    %v401 = vunpack.c.l.b16 %v251
    %v402 = vunpack.c.h.b16 %v251
    %v403 = vunpack.c.l.b16 %v252
    %v404 = vunpack.c.h.b16 %v252
    %v405 = vunpack.c.l.b16 %v253
    %v406 = vunpack.c.h.b16 %v253
    %v407 = vunpack.c.l.b16 %v254
    %v408 = vunpack.c.h.b16 %v254
    %v409 = vunpack.c.l.b16 %v255
    %v410 = vunpack.c.h.b16 %v255
    %v411 = vunpack.c.l.b16 %v256
    %v412 = vunpack.c.h.b16 %v256
    %v413 = vunpack.c.l.b16 %v257
    %v414 = vunpack.c.h.b16 %v257
    %v415 = vunpack.c.l.b16 %v258
    %v416 = vunpack.c.h.b16 %v258
    %v417 = vunpack.c.l.b16 %v259
    %v418 = vunpack.c.h.b16 %v259
    %v419 = vunpack.c.l.b16 %v260
    %v420 = vunpack.c.h.b16 %v260
    %v421 = vunpack.c.l.b16 %v261
    %v422 = vunpack.c.h.b16 %v261
    %v423 = vunpack.c.l.b16 %v262
    %v424 = vunpack.c.h.b16 %v262
    %v425 = vunpack.c.l.b16 %v263
    %v426 = vunpack.c.h.b16 %v263
    %v427 = vunpack.c.l.b16 %v264
    %v428 = vunpack.c.h.b16 %v264
    %v429 = vunpack.c.l.b16 %v265
    %v430 = vunpack.c.h.b16 %v265
    %v431 = vunpack.c.l.b16 %v266
    %v432 = vunpack.c.h.b16 %v266
    %v433 = vunpack.c.l.b16 %v267
    %v434 = vunpack.c.h.b16 %v267
    %v435 = vunpack.c.l.b16 %v268
    %v436 = vunpack.c.h.b16 %v268
    %v437 = vunpack.c.l.b16 %v269
    %v438 = vunpack.c.h.b16 %v269
    %v439 = vunpack.c.l.b16 %v270
    %v440 = vunpack.c.h.b16 %v270
    %v441 = vunpack.c.l.b16 %v271
    %v442 = vunpack.c.h.b16 %v271
    %v443 = vunpack.c.l.b16 %v272
    %v444 = vunpack.c.h.b16 %v272
    %v445 = vunpack.c.l.b16 %v273
    %v446 = vunpack.c.h.b16 %v273
    %v447 = vunpack.c.l.b16 %v274
    %v448 = vunpack.c.h.b16 %v274
    %v449 = vunpack.c.l.b16 %v275
    %v450 = vunpack.c.h.b16 %v275
    %v451 = vunpack.c.l.b16 %v276
    %v452 = vunpack.c.h.b16 %v276
    %v453 = vunpack.c.l.b16 %v277
    %v454 = vunpack.c.h.b16 %v277
    %v455 = vunpack.c.l.b16 %v278
    %v456 = vunpack.c.h.b16 %v278
    %v457 = vunpack.c.l.b16 %v279
    %v458 = vunpack.c.h.b16 %v279
    %v459 = vunpack.c.l.b16 %v280
    %v460 = vunpack.c.h.b16 %v280
    %v461 = vunpack.c.l.b16 %v281
    %v462 = vunpack.c.h.b16 %v281
    %v463 = vunpack.c.l.b16 %v282
    %v464 = vunpack.c.h.b16 %v282
    %v465 = vunpack.c.l.b16 %v283
    %v466 = vunpack.c.h.b16 %v283
    %v467 = vunpack.c.l.b16 %v284
    %v468 = vunpack.c.h.b16 %v284
    %v469 = vunpack.c.l.b16 %v285
    %v470 = vunpack.c.h.b16 %v285
    %v471 = vunpack.c.l.b16 %v286
    %v472 = vunpack.c.h.b16 %v286
    %v473 = vunpack.c.l.b16 %v287
    %v474 = vunpack.c.h.b16 %v287
    %v475 = vunpack.c.l.b16 %v288
    %v476 = vunpack.c.h.b16 %v288
    %v477 = vunpack.c.l.b16 %v289
    %v478 = vunpack.c.h.b16 %v289
    %v479 = vunpack.c.l.b16 %v290
    %v480 = vunpack.c.h.b16 %v290
    %v481 = vunpack.c.l.b16 %v291
    %v482 = vunpack.c.h.b16 %v291
    %v483 = vunpack.c.l.b16 %v292
    %v484 = vunpack.c.h.b16 %v292
    %v485 = vunpack.c.l.b16 %v293
    %v486 = vunpack.c.h.b16 %v293
    %v487 = vunpack.c.l.b16 %v294
    %v488 = vunpack.c.h.b16 %v294
    %v489 = vunpack.c.l.b16 %v295
    %v490 = vunpack.c.h.b16 %v295
    %v491 = vunpack.c.l.b16 %v296
    %v492 = vunpack.c.h.b16 %v296
    %v493 = vunpack.c.l.b16 %v297
    %v494 = vunpack.c.h.b16 %v297
    %v495 = vunpack.c.l.b16 %v298
    %v496 = vunpack.c.h.b16 %v298
    %v497 = vunpack.c.l.b16 %v299
    %v498 = vunpack.c.h.b16 %v299
    %v499 = vunpack.c.l.b16 %v300
    %v500 = vunpack.c.h.b16 %v300
    %v501 = vunpack.c.l.b16 %v301
    %v502 = vunpack.c.h.b16 %v301
    %v503 = vunpack.c.l.b16 %v302
    %v504 = vunpack.c.h.b16 %v302
    %v505 = vunpack.c.l.b16 %v303
    %v506 = vunpack.c.h.b16 %v303
    %v507 = vunpack.c.l.b16 %v304
    %v508 = vunpack.c.h.b16 %v304
    %v509 = vunpack.c.l.b16 %v305
    %v510 = vunpack.c.h.b16 %v305
    %v511 = vunpack.c.l.b16 %v306
    %v512 = vunpack.c.h.b16 %v306
    %v513 = vunpack.c.l.b16 %v307
    %v514 = vunpack.c.h.b16 %v307
    %v515 = vunpack.c.l.b16 %v308
    %v516 = vunpack.c.h.b16 %v308
    %v517 = vunpack.c.l.b16 %v309
    %v518 = vunpack.c.h.b16 %v309
    %v519 = vunpack.c.l.b16 %v310
    %v520 = vunpack.c.h.b16 %v310
    %v521 = vunpack.c.l.b16 %v311
    %v522 = vunpack.c.h.b16 %v311
    %v523 = vunpack.c.l.b16 %v312
    %v524 = vunpack.c.h.b16 %v312
    %v525 = vunpack.c.l.b16 %v313
    %v526 = vunpack.c.h.b16 %v313
    %v527 = vunpack.c.l.b16 %v314
    %v528 = vunpack.c.h.b16 %v314
    %v529 = vpack.c.b16 %v405, %v401
    %v530 = vpack.c.b16 %v406, %v402
    %v531 = vpack.c.b16 %v407, %v403
    %v532 = vpack.c.b16 %v408, %v404
    %v533 = vpack.c.b16 %v413, %v409
    %v534 = vpack.c.b16 %v414, %v410
    %v535 = vpack.c.b16 %v415, %v411
    %v536 = vpack.c.b16 %v416, %v412
    %v537 = vpack.c.b16 %v421, %v417
    %v538 = vpack.c.b16 %v422, %v418
    %v539 = vpack.c.b16 %v423, %v419
    %v540 = vpack.c.b16 %v424, %v420
    %v541 = vpack.c.b16 %v429, %v425
    %v542 = vpack.c.b16 %v430, %v426
    %v543 = vpack.c.b16 %v431, %v427
    %v544 = vpack.c.b16 %v432, %v428
    %v545 = vpack.c.b16 %v437, %v433
    %v546 = vpack.c.b16 %v438, %v434
    %v547 = vpack.c.b16 %v439, %v435
    %v548 = vpack.c.b16 %v440, %v436
    %v549 = vpack.c.b16 %v445, %v441
    %v550 = vpack.c.b16 %v446, %v442
    %v551 = vpack.c.b16 %v447, %v443
    %v552 = vpack.c.b16 %v448, %v444
    %v553 = vpack.c.b16 %v453, %v449
    %v554 = vpack.c.b16 %v454, %v450
    %v555 = vpack.c.b16 %v455, %v451
    %v556 = vpack.c.b16 %v456, %v452
    %v557 = vpack.c.b16 %v461, %v457
    %v558 = vpack.c.b16 %v462, %v458
    %v559 = vpack.c.b16 %v463, %v459
    %v560 = vpack.c.b16 %v464, %v460
    %v561 = vpack.c.b16 %v469, %v465
    %v562 = vpack.c.b16 %v470, %v466
    %v563 = vpack.c.b16 %v471, %v467
    %v564 = vpack.c.b16 %v472, %v468
    %v565 = vpack.c.b16 %v477, %v473
    %v566 = vpack.c.b16 %v478, %v474
    %v567 = vpack.c.b16 %v479, %v475
    %v568 = vpack.c.b16 %v480, %v476
    %v569 = vpack.c.b16 %v485, %v481
    %v570 = vpack.c.b16 %v486, %v482
    %v571 = vpack.c.b16 %v487, %v483
    %v572 = vpack.c.b16 %v488, %v484
    %v573 = vpack.c.b16 %v493, %v489
    %v574 = vpack.c.b16 %v494, %v490
    %v575 = vpack.c.b16 %v495, %v491
    %v576 = vpack.c.b16 %v496, %v492
    %v577 = vpack.c.b16 %v501, %v497
    %v578 = vpack.c.b16 %v502, %v498
    %v579 = vpack.c.b16 %v503, %v499
    %v580 = vpack.c.b16 %v504, %v500
    %v581 = vpack.c.b16 %v509, %v505
    %v582 = vpack.c.b16 %v510, %v506
    %v583 = vpack.c.b16 %v511, %v507
    %v584 = vpack.c.b16 %v512, %v508
    %v585 = vpack.c.b16 %v517, %v513
    %v586 = vpack.c.b16 %v518, %v514
    %v587 = vpack.c.b16 %v519, %v515
    %v588 = vpack.c.b16 %v520, %v516
    %v589 = vpack.c.b16 %v525, %v521
    %v590 = vpack.c.b16 %v526, %v522
    %v591 = vpack.c.b16 %v527, %v523
    %v592 = vpack.c.b16 %v528, %v524
    %657 = vmatprep.subr.bf16.mxu0 %v558
    %658 = vmatpush1.bf16.msra.mxu0 %v557
    %659 = vmatprep.subr.bf16.mxu0 %v554
    %660 = vmatpush1.bf16.msra.mxu0 %v553
    %661 = vmatprep.subr.bf16.mxu0 %v550
    %662 = vmatpush1.bf16.msra.mxu0 %v549
    %663 = vmatprep.subr.bf16.mxu0 %v546
    %664 = vmatpush1.bf16.msra.mxu0 %v545
    %665 = vmatprep.subr.bf16.mxu0 %v542
    %666 = vmatpush1.bf16.msra.mxu0 %v541
    %667 = vmatprep.subr.bf16.mxu0 %v538
    %668 = vmatpush1.bf16.msra.mxu0 %v537
    %669 = vmatprep.subr.bf16.mxu0 %v534
    %670 = vmatpush1.bf16.msra.mxu0 %v533
    %671 = vmatprep.subr.bf16.mxu0 %v530
    %672 = vmatpush1.bf16.msra.mxu0 %v529
    %673 = vmatprep.subr.bf16.mxu0 %v590
    %674 = vmatpush2.bf16.msra.mxu0 %v589
    %675 = vmatprep.subr.bf16.mxu0 %v586
    %676 = vmatpush2.bf16.msra.mxu0 %v585
    %677 = vmatprep.subr.bf16.mxu0 %v582
    %678 = vmatpush2.bf16.msra.mxu0 %v581
    %679 = vmatprep.subr.bf16.mxu0 %v578
    %680 = vmatpush2.bf16.msra.mxu0 %v577
    %681 = vmatprep.subr.bf16.mxu0 %v574
    %682 = vmatpush2.bf16.msra.mxu0 %v573
    %683 = vmatprep.subr.bf16.mxu0 %v570
    %684 = vmatpush2.bf16.msra.mxu0 %v569
    %685 = vmatprep.subr.bf16.mxu0 %v566
    %686 = vmatpush2.bf16.msra.mxu0 %v565
    %687 = vmatprep.subr.bf16.mxu0 %v562
    %688 = vmatpush2.bf16.msra.mxu0 %v561
    %689 = vmatprep.mubr.bf16.mxu0 %v250
    %690 = vmatmul.mubr.bf16.gmra.mxu0 %v249
    %v691 = vpop.f32.mrf.mxu0
    %v692 = vadd.f32 %v320, %v691
    %v693 = vpop.f32.mrf.mxu0
    %v694 = vadd.f32 %v324, %v693
    %v695 = vpop.f32.mrf.mxu0
    %v696 = vpop.f32.mrf.mxu0
    %697 = vdwg.mxu0
    %698 = vmatprep.subr.bf16.mxu0 %v560
    %699 = vmatpush1.bf16.msra.mxu0 %v559
    %700 = vmatprep.subr.bf16.mxu0 %v556
    %701 = vmatpush1.bf16.msra.mxu0 %v555
    %702 = vmatprep.subr.bf16.mxu0 %v552
    %703 = vmatpush1.bf16.msra.mxu0 %v551
    %704 = vmatprep.subr.bf16.mxu0 %v548
    %705 = vmatpush1.bf16.msra.mxu0 %v547
    %706 = vmatprep.subr.bf16.mxu0 %v544
    %707 = vmatpush1.bf16.msra.mxu0 %v543
    %708 = vmatprep.subr.bf16.mxu0 %v540
    %709 = vmatpush1.bf16.msra.mxu0 %v539
    %710 = vmatprep.subr.bf16.mxu0 %v536
    %711 = vmatpush1.bf16.msra.mxu0 %v535
    %712 = vmatprep.subr.bf16.mxu0 %v532
    %713 = vmatpush1.bf16.msra.mxu0 %v531
    %714 = vmatprep.subr.bf16.mxu0 %v592
    %715 = vmatpush2.bf16.msra.mxu0 %v591
    %716 = vmatprep.subr.bf16.mxu0 %v588
    %717 = vmatpush2.bf16.msra.mxu0 %v587
    %718 = vmatprep.subr.bf16.mxu0 %v584
    %719 = vmatpush2.bf16.msra.mxu0 %v583
    %720 = vmatprep.subr.bf16.mxu0 %v580
    %721 = vmatpush2.bf16.msra.mxu0 %v579
    %722 = vmatprep.subr.bf16.mxu0 %v576
    %723 = vmatpush2.bf16.msra.mxu0 %v575
    %724 = vmatprep.subr.bf16.mxu0 %v572
    %725 = vmatpush2.bf16.msra.mxu0 %v571
    %726 = vmatprep.subr.bf16.mxu0 %v568
    %727 = vmatpush2.bf16.msra.mxu0 %v567
    %728 = vmatprep.subr.bf16.mxu0 %v564
    %729 = vmatpush2.bf16.msra.mxu0 %v563
    %730 = vmatprep.mubr.bf16.mxu0 %v250
    %731 = vmatmul.mubr.bf16.gmra.mxu0 %v249
    %v732 = vpop.f32.mrf.mxu0
    %v733 = vadd.f32 %v328, %v732
    %v734 = vpop.f32.mrf.mxu0
    %v735 = vadd.f32 %v332, %v734
    %v736 = vpop.f32.mrf.mxu0
    %v737 = vpop.f32.mrf.mxu0
    %738 = vdwg.mxu0
    %v739 = vxor.u32 %v692, 2147483648
    %v740 = vmul.f32 %v739, 1.442695
    %v741 = vpow.pop %v740
    %v742 = vadd.f32 %v741, 1.0
    %v743 = vrcp.pop %v742
    %v744 = vmul.f32 1.0, %v743
    %v745 = vxor.u32 %v694, 2147483648
    %v746 = vmul.f32 %v745, 1.442695
    %v747 = vpow.pop %v746
    %v748 = vadd.f32 %v747, 1.0
    %v749 = vrcp.pop %v748
    %v750 = vmul.f32 1.0, %v749
    %v751 = vtanh.pop %v733
    %v752 = vxor.u32 %v735, 2147483648
    %v753 = vmul.f32 %v752, 1.442695
    %v754 = vpow.pop %v753
    %v755 = vadd.f32 %v754, 1.0
    %v756 = vrcp.pop %v755
    %v757 = vmul.f32 1.0, %v756
    %v758 = vld [vmem:[#allocation3] sm:$0xff]
    %v759 = vmul.f32 %v750, %v758
    %v760 = vmul.f32 %v744, %v751
    %v761 = vadd.f32 %v759, %v760
    %v762 = vtanh.pop %v761
    %v763 = vmul.f32 %v757, %v762
    %764 = vst [vmem:[#allocation3] sm:$0xff] %v761
    %765 = vst [vmem:[#allocation2 + $0x8] sm:$0xff] %v763
    %s766 = sld [smem:[#allocation5 + $0x4]]
    %v767 = vstv %s766
    %v768 = vsel %vm122, %v767, 4294967295
    %s769 = sld [smem:[#allocation5 + $0x5]]
    %v770 = vstv %s769
    %v771 = vsel %vm126, %v770, %v768
    %s772 = sld [smem:[#allocation5 + $0x6]]
    %v773 = vstv %s772
    %v774 = vsel %vm130, %v773, %v771
    %s775 = sld [smem:[#allocation5 + $0x7]]
    %v776 = vstv %s775
    %v777 = vsel %vm134, %v776, %v774
    %vm778 = vcmp.eq.s32.totalorder %v121, %v777
    %v779 = vsel %vm778, 1, 0
    %v780 = vcvt.s32.f32 %v779
    %v781 = vpack.c.bf16 %v780, %v780
    %v782 = vld [vmem:[#allocation8] sm:$0xf]
    %v783 = vld [vmem:[#allocation8 + $0x4] sm:$0xf]
    %v784 = vld [vmem:[#allocation8 + $0x8] sm:$0xf]
    %v785 = vld [vmem:[#allocation8 + $0xc] sm:$0xf]
    %v786 = vld [vmem:[#allocation8 + $0x10] sm:$0xf]
    %v787 = vld [vmem:[#allocation8 + $0x14] sm:$0xf]
    %v788 = vld [vmem:[#allocation8 + $0x18] sm:$0xf]
    %v789 = vld [vmem:[#allocation8 + $0x1c] sm:$0xf]
    %v790 = vld [vmem:[#allocation8 + $0x20] sm:$0xf]
    %v791 = vld [vmem:[#allocation8 + $0x24] sm:$0xf]
    %v792 = vld [vmem:[#allocation8 + $0x28] sm:$0xf]
    %v793 = vld [vmem:[#allocation8 + $0x2c] sm:$0xf]
    %v794 = vld [vmem:[#allocation8 + $0x30] sm:$0xf]
    %v795 = vld [vmem:[#allocation8 + $0x34] sm:$0xf]
    %v796 = vld [vmem:[#allocation8 + $0x38] sm:$0xf]
    %v797 = vld [vmem:[#allocation8 + $0x3c] sm:$0xf]
    %v814 = vunpack.c.l.b16 %v782
    %v815 = vunpack.c.l.b16 %v783
    %v816 = vunpack.c.l.b16 %v784
    %v817 = vunpack.c.l.b16 %v785
    %v818 = vunpack.c.l.b16 %v786
    %v819 = vunpack.c.l.b16 %v787
    %v820 = vunpack.c.l.b16 %v788
    %v821 = vunpack.c.l.b16 %v789
    %v822 = vunpack.c.l.b16 %v790
    %v823 = vunpack.c.l.b16 %v791
    %v824 = vunpack.c.l.b16 %v792
    %v825 = vunpack.c.l.b16 %v793
    %v826 = vunpack.c.l.b16 %v794
    %v827 = vunpack.c.l.b16 %v795
    %v828 = vunpack.c.l.b16 %v796
    %v829 = vunpack.c.l.b16 %v797
    %v830 = vpack.c.b16 %v815, %v814
    %v831 = vpack.c.b16 %v817, %v816
    %v832 = vpack.c.b16 %v819, %v818
    %v833 = vpack.c.b16 %v821, %v820
    %v834 = vpack.c.b16 %v823, %v822
    %v835 = vpack.c.b16 %v825, %v824
    %v836 = vpack.c.b16 %v827, %v826
    %v837 = vpack.c.b16 %v829, %v828
    %846 = vmatprep.subr.bf16.mxu0 0
    %847 = vmatpush1.bf16.msra.mxu0 %v837
    %848 = vmatprep.subr.bf16.mxu0 0
    %849 = vmatpush1.bf16.msra.mxu0 %v836
    %850 = vmatprep.subr.bf16.mxu0 0
    %851 = vmatpush1.bf16.msra.mxu0 %v835
    %852 = vmatprep.subr.bf16.mxu0 0
    %853 = vmatpush1.bf16.msra.mxu0 %v834
    %854 = vmatprep.subr.bf16.mxu0 0
    %855 = vmatpush1.bf16.msra.mxu0 %v833
    %856 = vmatprep.subr.bf16.mxu0 0
    %857 = vmatpush1.bf16.msra.mxu0 %v832
    %858 = vmatprep.subr.bf16.mxu0 0
    %859 = vmatpush1.bf16.msra.mxu0 %v831
    %860 = vmatprep.subr.bf16.mxu0 0
    %861 = vmatpush1.bf16.msra.mxu0 %v830
    %862 = vmatprep.subr.bf16.mxu0 0
    %863 = vmatpush2.bf16.msra.mxu0 0
    %864 = vmatprep.subr.bf16.mxu0 0
    %865 = vmatpush2.bf16.msra.mxu0 0
    %866 = vmatprep.subr.bf16.mxu0 0
    %867 = vmatpush2.bf16.msra.mxu0 0
    %868 = vmatprep.subr.bf16.mxu0 0
    %869 = vmatpush2.bf16.msra.mxu0 0
    %870 = vmatprep.subr.bf16.mxu0 0
    %871 = vmatpush2.bf16.msra.mxu0 0
    %872 = vmatprep.subr.bf16.mxu0 0
    %873 = vmatpush2.bf16.msra.mxu0 0
    %874 = vmatprep.subr.bf16.mxu0 0
    %875 = vmatpush2.bf16.msra.mxu0 0
    %876 = vmatprep.subr.bf16.mxu0 0
    %877 = vmatpush2.bf16.msra.mxu0 0
    %878 = vmatprep.mubr.bf16.mxu0 0
    %879 = vmatmul.mubr.bf16.gmra.mxu0 %v781
    %v880 = vpop.f32.mrf.mxu0
    %v881 = vadd.f32 0.0, %v880
    %v882 = vpop.f32.mrf.mxu0
    %v883 = vpop.f32.mrf.mxu0
    %v884 = vpop.f32.mrf.mxu0
    %885 = vdwg.mxu0
    %886 = vst [vmem:[#allocation2] sm:$0xff] %v881
    %v887 = vld [vmem:[#allocation2] sm:$0xff]
    %v888 = vld [vmem:[#allocation2 + $0x8] sm:$0xff]
    %v889 = vpack.c.bf16 %v887, %v887
    %v890 = vpack.c.bf16 %v888, %v888
    %v891 = vld [vmem:[#allocation10] sm:$0xff]
    %v892 = vld [vmem:[#allocation10 + $0x8] sm:$0xff]
    %v893 = vld [vmem:[#allocation10 + $0x10] sm:$0xff]
    %v894 = vld [vmem:[#allocation10 + $0x18] sm:$0xff]
    %v895 = vld [vmem:[#allocation10 + $0x20] sm:$0xff]
    %v896 = vld [vmem:[#allocation10 + $0x28] sm:$0xff]
    %v897 = vld [vmem:[#allocation10 + $0x30] sm:$0xff]
    %v898 = vld [vmem:[#allocation10 + $0x38] sm:$0xff]
    %v899 = vld [vmem:[#allocation10 + $0x40] sm:$0xff]
    %v900 = vld [vmem:[#allocation10 + $0x48] sm:$0xff]
    %v901 = vld [vmem:[#allocation10 + $0x50] sm:$0xff]
    %v902 = vld [vmem:[#allocation10 + $0x58] sm:$0xff]
    %v903 = vld [vmem:[#allocation10 + $0x60] sm:$0xff]
    %v904 = vld [vmem:[#allocation10 + $0x68] sm:$0xff]
    %v905 = vld [vmem:[#allocation10 + $0x70] sm:$0xff]
    %v906 = vld [vmem:[#allocation10 + $0x78] sm:$0xff]
    %v907 = vld [vmem:[#allocation10 + $0x80] sm:$0xff]
    %v908 = vld [vmem:[#allocation10 + $0x88] sm:$0xff]
    %v909 = vld [vmem:[#allocation10 + $0x90] sm:$0xff]
    %v910 = vld [vmem:[#allocation10 + $0x98] sm:$0xff]
    %v911 = vld [vmem:[#allocation10 + $0xa0] sm:$0xff]
    %v912 = vld [vmem:[#allocation10 + $0xa8] sm:$0xff]
    %v913 = vld [vmem:[#allocation10 + $0xb0] sm:$0xff]
    %v914 = vld [vmem:[#allocation10 + $0xb8] sm:$0xff]
    %v915 = vld [vmem:[#allocation10 + $0xc0] sm:$0xff]
    %v916 = vld [vmem:[#allocation10 + $0xc8] sm:$0xff]
    %v917 = vld [vmem:[#allocation10 + $0xd0] sm:$0xff]
    %v918 = vld [vmem:[#allocation10 + $0xd8] sm:$0xff]
    %v919 = vld [vmem:[#allocation10 + $0xe0] sm:$0xff]
    %v920 = vld [vmem:[#allocation10 + $0xe8] sm:$0xff]
    %v921 = vld [vmem:[#allocation10 + $0xf0] sm:$0xff]
    %v922 = vld [vmem:[#allocation10 + $0xf8] sm:$0xff]
    %v923 = vld [vmem:[#allocation10 + $0x100] sm:$0xff]
    %v924 = vld [vmem:[#allocation10 + $0x108] sm:$0xff]
    %v925 = vld [vmem:[#allocation10 + $0x110] sm:$0xff]
    %v926 = vld [vmem:[#allocation10 + $0x118] sm:$0xff]
    %v927 = vld [vmem:[#allocation10 + $0x120] sm:$0xff]
    %v928 = vld [vmem:[#allocation10 + $0x128] sm:$0xff]
    %v929 = vld [vmem:[#allocation10 + $0x130] sm:$0xff]
    %v930 = vld [vmem:[#allocation10 + $0x138] sm:$0xff]
    %v931 = vld [vmem:[#allocation10 + $0x140] sm:$0xff]
    %v932 = vld [vmem:[#allocation10 + $0x148] sm:$0xff]
    %v933 = vld [vmem:[#allocation10 + $0x150] sm:$0xff]
    %v934 = vld [vmem:[#allocation10 + $0x158] sm:$0xff]
    %v935 = vld [vmem:[#allocation10 + $0x160] sm:$0xff]
    %v936 = vld [vmem:[#allocation10 + $0x168] sm:$0xff]
    %v937 = vld [vmem:[#allocation10 + $0x170] sm:$0xff]
    %v938 = vld [vmem:[#allocation10 + $0x178] sm:$0xff]
    %v939 = vld [vmem:[#allocation10 + $0x180] sm:$0xff]
    %v940 = vld [vmem:[#allocation10 + $0x188] sm:$0xff]
    %v941 = vld [vmem:[#allocation10 + $0x190] sm:$0xff]
    %v942 = vld [vmem:[#allocation10 + $0x198] sm:$0xff]
    %v943 = vld [vmem:[#allocation10 + $0x1a0] sm:$0xff]
    %v944 = vld [vmem:[#allocation10 + $0x1a8] sm:$0xff]
    %v945 = vld [vmem:[#allocation10 + $0x1b0] sm:$0xff]
    %v946 = vld [vmem:[#allocation10 + $0x1b8] sm:$0xff]
    %v947 = vld [vmem:[#allocation10 + $0x1c0] sm:$0xff]
    %v948 = vld [vmem:[#allocation10 + $0x1c8] sm:$0xff]
    %v949 = vld [vmem:[#allocation10 + $0x1d0] sm:$0xff]
    %v950 = vld [vmem:[#allocation10 + $0x1d8] sm:$0xff]
    %v951 = vld [vmem:[#allocation10 + $0x1e0] sm:$0xff]
    %v952 = vld [vmem:[#allocation10 + $0x1e8] sm:$0xff]
    %v953 = vld [vmem:[#allocation10 + $0x1f0] sm:$0xff]
    %v954 = vld [vmem:[#allocation10 + $0x1f8] sm:$0xff]
    %v955 = vld [vmem:[%s5] sm:$0xf]
    %v957 = vlaneseq
    %v958 = vshrl.u32 %v957, 7
    %v959 = vsub.s32 0, %v958
    %v960 = vrot.slane %v955, %v959
    %v961 = vlaneseq
    %v962 = vshrl.u32 %v961, 7
    %v963 = vsub.s32 1, %v962
    %v964 = vrot.slane %v955, %v963
    %v965 = vlaneseq
    %v966 = vshrl.u32 %v965, 7
    %v967 = vsub.s32 2, %v966
    %v968 = vrot.slane %v955, %v967
    %v969 = vlaneseq
    %v970 = vshrl.u32 %v969, 7
    %v971 = vsub.s32 3, %v970
    %v972 = vrot.slane %v955, %v971
    %v1041 = vunpack.c.l.b16 %v891
    %v1042 = vunpack.c.h.b16 %v891
    %v1043 = vunpack.c.l.b16 %v892
    %v1044 = vunpack.c.h.b16 %v892
    %v1045 = vunpack.c.l.b16 %v893
    %v1046 = vunpack.c.h.b16 %v893
    %v1047 = vunpack.c.l.b16 %v894
    %v1048 = vunpack.c.h.b16 %v894
    %v1049 = vunpack.c.l.b16 %v895
    %v1050 = vunpack.c.h.b16 %v895
    %v1051 = vunpack.c.l.b16 %v896
    %v1052 = vunpack.c.h.b16 %v896
    %v1053 = vunpack.c.l.b16 %v897
    %v1054 = vunpack.c.h.b16 %v897
    %v1055 = vunpack.c.l.b16 %v898
    %v1056 = vunpack.c.h.b16 %v898
    %v1057 = vunpack.c.l.b16 %v899
    %v1058 = vunpack.c.h.b16 %v899
    %v1059 = vunpack.c.l.b16 %v900
    %v1060 = vunpack.c.h.b16 %v900
    %v1061 = vunpack.c.l.b16 %v901
    %v1062 = vunpack.c.h.b16 %v901
    %v1063 = vunpack.c.l.b16 %v902
    %v1064 = vunpack.c.h.b16 %v902
    %v1065 = vunpack.c.l.b16 %v903
    %v1066 = vunpack.c.h.b16 %v903
    %v1067 = vunpack.c.l.b16 %v904
    %v1068 = vunpack.c.h.b16 %v904
    %v1069 = vunpack.c.l.b16 %v905
    %v1070 = vunpack.c.h.b16 %v905
    %v1071 = vunpack.c.l.b16 %v906
    %v1072 = vunpack.c.h.b16 %v906
    %v1073 = vunpack.c.l.b16 %v907
    %v1074 = vunpack.c.h.b16 %v907
    %v1075 = vunpack.c.l.b16 %v908
    %v1076 = vunpack.c.h.b16 %v908
    %v1077 = vunpack.c.l.b16 %v909
    %v1078 = vunpack.c.h.b16 %v909
    %v1079 = vunpack.c.l.b16 %v910
    %v1080 = vunpack.c.h.b16 %v910
    %v1081 = vunpack.c.l.b16 %v911
    %v1082 = vunpack.c.h.b16 %v911
    %v1083 = vunpack.c.l.b16 %v912
    %v1084 = vunpack.c.h.b16 %v912
    %v1085 = vunpack.c.l.b16 %v913
    %v1086 = vunpack.c.h.b16 %v913
    %v1087 = vunpack.c.l.b16 %v914
    %v1088 = vunpack.c.h.b16 %v914
    %v1089 = vunpack.c.l.b16 %v915
    %v1090 = vunpack.c.h.b16 %v915
    %v1091 = vunpack.c.l.b16 %v916
    %v1092 = vunpack.c.h.b16 %v916
    %v1093 = vunpack.c.l.b16 %v917
    %v1094 = vunpack.c.h.b16 %v917
    %v1095 = vunpack.c.l.b16 %v918
    %v1096 = vunpack.c.h.b16 %v918
    %v1097 = vunpack.c.l.b16 %v919
    %v1098 = vunpack.c.h.b16 %v919
    %v1099 = vunpack.c.l.b16 %v920
    %v1100 = vunpack.c.h.b16 %v920
    %v1101 = vunpack.c.l.b16 %v921
    %v1102 = vunpack.c.h.b16 %v921
    %v1103 = vunpack.c.l.b16 %v922
    %v1104 = vunpack.c.h.b16 %v922
    %v1105 = vunpack.c.l.b16 %v923
    %v1106 = vunpack.c.h.b16 %v923
    %v1107 = vunpack.c.l.b16 %v924
    %v1108 = vunpack.c.h.b16 %v924
    %v1109 = vunpack.c.l.b16 %v925
    %v1110 = vunpack.c.h.b16 %v925
    %v1111 = vunpack.c.l.b16 %v926
    %v1112 = vunpack.c.h.b16 %v926
    %v1113 = vunpack.c.l.b16 %v927
    %v1114 = vunpack.c.h.b16 %v927
    %v1115 = vunpack.c.l.b16 %v928
    %v1116 = vunpack.c.h.b16 %v928
    %v1117 = vunpack.c.l.b16 %v929
    %v1118 = vunpack.c.h.b16 %v929
    %v1119 = vunpack.c.l.b16 %v930
    %v1120 = vunpack.c.h.b16 %v930
    %v1121 = vunpack.c.l.b16 %v931
    %v1122 = vunpack.c.h.b16 %v931
    %v1123 = vunpack.c.l.b16 %v932
    %v1124 = vunpack.c.h.b16 %v932
    %v1125 = vunpack.c.l.b16 %v933
    %v1126 = vunpack.c.h.b16 %v933
    %v1127 = vunpack.c.l.b16 %v934
    %v1128 = vunpack.c.h.b16 %v934
    %v1129 = vunpack.c.l.b16 %v935
    %v1130 = vunpack.c.h.b16 %v935
    %v1131 = vunpack.c.l.b16 %v936
    %v1132 = vunpack.c.h.b16 %v936
    %v1133 = vunpack.c.l.b16 %v937
    %v1134 = vunpack.c.h.b16 %v937
    %v1135 = vunpack.c.l.b16 %v938
    %v1136 = vunpack.c.h.b16 %v938
    %v1137 = vunpack.c.l.b16 %v939
    %v1138 = vunpack.c.h.b16 %v939
    %v1139 = vunpack.c.l.b16 %v940
    %v1140 = vunpack.c.h.b16 %v940
    %v1141 = vunpack.c.l.b16 %v941
    %v1142 = vunpack.c.h.b16 %v941
    %v1143 = vunpack.c.l.b16 %v942
    %v1144 = vunpack.c.h.b16 %v942
    %v1145 = vunpack.c.l.b16 %v943
    %v1146 = vunpack.c.h.b16 %v943
    %v1147 = vunpack.c.l.b16 %v944
    %v1148 = vunpack.c.h.b16 %v944
    %v1149 = vunpack.c.l.b16 %v945
    %v1150 = vunpack.c.h.b16 %v945
    %v1151 = vunpack.c.l.b16 %v946
    %v1152 = vunpack.c.h.b16 %v946
    %v1153 = vunpack.c.l.b16 %v947
    %v1154 = vunpack.c.h.b16 %v947
    %v1155 = vunpack.c.l.b16 %v948
    %v1156 = vunpack.c.h.b16 %v948
    %v1157 = vunpack.c.l.b16 %v949
    %v1158 = vunpack.c.h.b16 %v949
    %v1159 = vunpack.c.l.b16 %v950
    %v1160 = vunpack.c.h.b16 %v950
    %v1161 = vunpack.c.l.b16 %v951
    %v1162 = vunpack.c.h.b16 %v951
    %v1163 = vunpack.c.l.b16 %v952
    %v1164 = vunpack.c.h.b16 %v952
    %v1165 = vunpack.c.l.b16 %v953
    %v1166 = vunpack.c.h.b16 %v953
    %v1167 = vunpack.c.l.b16 %v954
    %v1168 = vunpack.c.h.b16 %v954
    %v1169 = vpack.c.b16 %v1045, %v1041
    %v1170 = vpack.c.b16 %v1046, %v1042
    %v1171 = vpack.c.b16 %v1047, %v1043
    %v1172 = vpack.c.b16 %v1048, %v1044
    %v1173 = vpack.c.b16 %v1053, %v1049
    %v1174 = vpack.c.b16 %v1054, %v1050
    %v1175 = vpack.c.b16 %v1055, %v1051
    %v1176 = vpack.c.b16 %v1056, %v1052
    %v1177 = vpack.c.b16 %v1061, %v1057
    %v1178 = vpack.c.b16 %v1062, %v1058
    %v1179 = vpack.c.b16 %v1063, %v1059
    %v1180 = vpack.c.b16 %v1064, %v1060
    %v1181 = vpack.c.b16 %v1069, %v1065
    %v1182 = vpack.c.b16 %v1070, %v1066
    %v1183 = vpack.c.b16 %v1071, %v1067
    %v1184 = vpack.c.b16 %v1072, %v1068
    %v1185 = vpack.c.b16 %v1077, %v1073
    %v1186 = vpack.c.b16 %v1078, %v1074
    %v1187 = vpack.c.b16 %v1079, %v1075
    %v1188 = vpack.c.b16 %v1080, %v1076
    %v1189 = vpack.c.b16 %v1085, %v1081
    %v1190 = vpack.c.b16 %v1086, %v1082
    %v1191 = vpack.c.b16 %v1087, %v1083
    %v1192 = vpack.c.b16 %v1088, %v1084
    %v1193 = vpack.c.b16 %v1093, %v1089
    %v1194 = vpack.c.b16 %v1094, %v1090
    %v1195 = vpack.c.b16 %v1095, %v1091
    %v1196 = vpack.c.b16 %v1096, %v1092
    %v1197 = vpack.c.b16 %v1101, %v1097
    %v1198 = vpack.c.b16 %v1102, %v1098
    %v1199 = vpack.c.b16 %v1103, %v1099
    %v1200 = vpack.c.b16 %v1104, %v1100
    %v1201 = vpack.c.b16 %v1109, %v1105
    %v1202 = vpack.c.b16 %v1110, %v1106
    %v1203 = vpack.c.b16 %v1111, %v1107
    %v1204 = vpack.c.b16 %v1112, %v1108
    %v1205 = vpack.c.b16 %v1117, %v1113
    %v1206 = vpack.c.b16 %v1118, %v1114
    %v1207 = vpack.c.b16 %v1119, %v1115
    %v1208 = vpack.c.b16 %v1120, %v1116
    %v1209 = vpack.c.b16 %v1125, %v1121
    %v1210 = vpack.c.b16 %v1126, %v1122
    %v1211 = vpack.c.b16 %v1127, %v1123
    %v1212 = vpack.c.b16 %v1128, %v1124
    %v1213 = vpack.c.b16 %v1133, %v1129
    %v1214 = vpack.c.b16 %v1134, %v1130
    %v1215 = vpack.c.b16 %v1135, %v1131
    %v1216 = vpack.c.b16 %v1136, %v1132
    %v1217 = vpack.c.b16 %v1141, %v1137
    %v1218 = vpack.c.b16 %v1142, %v1138
    %v1219 = vpack.c.b16 %v1143, %v1139
    %v1220 = vpack.c.b16 %v1144, %v1140
    %v1221 = vpack.c.b16 %v1149, %v1145
    %v1222 = vpack.c.b16 %v1150, %v1146
    %v1223 = vpack.c.b16 %v1151, %v1147
    %v1224 = vpack.c.b16 %v1152, %v1148
    %v1225 = vpack.c.b16 %v1157, %v1153
    %v1226 = vpack.c.b16 %v1158, %v1154
    %v1227 = vpack.c.b16 %v1159, %v1155
    %v1228 = vpack.c.b16 %v1160, %v1156
    %v1229 = vpack.c.b16 %v1165, %v1161
    %v1230 = vpack.c.b16 %v1166, %v1162
    %v1231 = vpack.c.b16 %v1167, %v1163
    %v1232 = vpack.c.b16 %v1168, %v1164
    %1297 = vmatprep.subr.bf16.mxu0 %v1198
    %1298 = vmatpush1.bf16.msra.mxu0 %v1197
    %1299 = vmatprep.subr.bf16.mxu0 %v1194
    %1300 = vmatpush1.bf16.msra.mxu0 %v1193
    %1301 = vmatprep.subr.bf16.mxu0 %v1190
    %1302 = vmatpush1.bf16.msra.mxu0 %v1189
    %1303 = vmatprep.subr.bf16.mxu0 %v1186
    %1304 = vmatpush1.bf16.msra.mxu0 %v1185
    %1305 = vmatprep.subr.bf16.mxu0 %v1182
    %1306 = vmatpush1.bf16.msra.mxu0 %v1181
    %1307 = vmatprep.subr.bf16.mxu0 %v1178
    %1308 = vmatpush1.bf16.msra.mxu0 %v1177
    %1309 = vmatprep.subr.bf16.mxu0 %v1174
    %1310 = vmatpush1.bf16.msra.mxu0 %v1173
    %1311 = vmatprep.subr.bf16.mxu0 %v1170
    %1312 = vmatpush1.bf16.msra.mxu0 %v1169
    %1313 = vmatprep.subr.bf16.mxu0 %v1230
    %1314 = vmatpush2.bf16.msra.mxu0 %v1229
    %1315 = vmatprep.subr.bf16.mxu0 %v1226
    %1316 = vmatpush2.bf16.msra.mxu0 %v1225
    %1317 = vmatprep.subr.bf16.mxu0 %v1222
    %1318 = vmatpush2.bf16.msra.mxu0 %v1221
    %1319 = vmatprep.subr.bf16.mxu0 %v1218
    %1320 = vmatpush2.bf16.msra.mxu0 %v1217
    %1321 = vmatprep.subr.bf16.mxu0 %v1214
    %1322 = vmatpush2.bf16.msra.mxu0 %v1213
    %1323 = vmatprep.subr.bf16.mxu0 %v1210
    %1324 = vmatpush2.bf16.msra.mxu0 %v1209
    %1325 = vmatprep.subr.bf16.mxu0 %v1206
    %1326 = vmatpush2.bf16.msra.mxu0 %v1205
    %1327 = vmatprep.subr.bf16.mxu0 %v1202
    %1328 = vmatpush2.bf16.msra.mxu0 %v1201
    %1329 = vmatprep.mubr.bf16.mxu0 %v890
    %1330 = vmatmul.mubr.bf16.gmra.mxu0 %v889
    %v1331 = vpop.f32.mrf.mxu0
    %v1332 = vadd.f32 %v960, %v1331
    %v1333 = vpop.f32.mrf.mxu0
    %v1334 = vadd.f32 %v964, %v1333
    %v1335 = vpop.f32.mrf.mxu0
    %v1336 = vpop.f32.mrf.mxu0
    %1337 = vdwg.mxu0
    %1338 = vmatprep.subr.bf16.mxu0 %v1200
    %1339 = vmatpush1.bf16.msra.mxu0 %v1199
    %1340 = vmatprep.subr.bf16.mxu0 %v1196
    %1341 = vmatpush1.bf16.msra.mxu0 %v1195
    %1342 = vmatprep.subr.bf16.mxu0 %v1192
    %1343 = vmatpush1.bf16.msra.mxu0 %v1191
    %1344 = vmatprep.subr.bf16.mxu0 %v1188
    %1345 = vmatpush1.bf16.msra.mxu0 %v1187
    %1346 = vmatprep.subr.bf16.mxu0 %v1184
    %1347 = vmatpush1.bf16.msra.mxu0 %v1183
    %1348 = vmatprep.subr.bf16.mxu0 %v1180
    %1349 = vmatpush1.bf16.msra.mxu0 %v1179
    %1350 = vmatprep.subr.bf16.mxu0 %v1176
    %1351 = vmatpush1.bf16.msra.mxu0 %v1175
    %1352 = vmatprep.subr.bf16.mxu0 %v1172
    %1353 = vmatpush1.bf16.msra.mxu0 %v1171
    %1354 = vmatprep.subr.bf16.mxu0 %v1232
    %1355 = vmatpush2.bf16.msra.mxu0 %v1231
    %1356 = vmatprep.subr.bf16.mxu0 %v1228
    %1357 = vmatpush2.bf16.msra.mxu0 %v1227
    %1358 = vmatprep.subr.bf16.mxu0 %v1224
    %1359 = vmatpush2.bf16.msra.mxu0 %v1223
    %1360 = vmatprep.subr.bf16.mxu0 %v1220
    %1361 = vmatpush2.bf16.msra.mxu0 %v1219
    %1362 = vmatprep.subr.bf16.mxu0 %v1216
    %1363 = vmatpush2.bf16.msra.mxu0 %v1215
    %1364 = vmatprep.subr.bf16.mxu0 %v1212
    %1365 = vmatpush2.bf16.msra.mxu0 %v1211
    %1366 = vmatprep.subr.bf16.mxu0 %v1208
    %1367 = vmatpush2.bf16.msra.mxu0 %v1207
    %1368 = vmatprep.subr.bf16.mxu0 %v1204
    %1369 = vmatpush2.bf16.msra.mxu0 %v1203
    %1370 = vmatprep.mubr.bf16.mxu0 %v890
    %1371 = vmatmul.mubr.bf16.gmra.mxu0 %v889
    %v1372 = vpop.f32.mrf.mxu0
    %v1373 = vadd.f32 %v968, %v1372
    %v1374 = vpop.f32.mrf.mxu0
    %v1375 = vadd.f32 %v972, %v1374
    %v1376 = vpop.f32.mrf.mxu0
    %v1377 = vpop.f32.mrf.mxu0
    %1378 = vdwg.mxu0
    %v1379 = vxor.u32 %v1332, 2147483648
    %v1380 = vmul.f32 %v1379, 1.442695
    %v1381 = vpow.pop %v1380
    %v1382 = vadd.f32 %v1381, 1.0
    %v1383 = vrcp.pop %v1382
    %v1384 = vmul.f32 1.0, %v1383
    %v1385 = vxor.u32 %v1334, 2147483648
    %v1386 = vmul.f32 %v1385, 1.442695
    %v1387 = vpow.pop %v1386
    %v1388 = vadd.f32 %v1387, 1.0
    %v1389 = vrcp.pop %v1388
    %v1390 = vmul.f32 1.0, %v1389
    %v1391 = vtanh.pop %v1373
    %v1392 = vxor.u32 %v1375, 2147483648
    %v1393 = vmul.f32 %v1392, 1.442695
    %v1394 = vpow.pop %v1393
    %v1395 = vadd.f32 %v1394, 1.0
    %v1396 = vrcp.pop %v1395
    %v1397 = vmul.f32 1.0, %v1396
    %v1398 = vld [vmem:[#allocation3] sm:$0xff]
    %v1399 = vmul.f32 %v1390, %v1398
    %v1400 = vmul.f32 %v1384, %v1391
    %v1401 = vadd.f32 %v1399, %v1400
    %v1402 = vtanh.pop %v1401
    %v1403 = vmul.f32 %v1397, %v1402
    %1404 = vst [vmem:[#allocation3] sm:$0xff] %v1401
    %1405 = vst [vmem:[#allocation2 + $0x8] sm:$0xff] %v1403
    %s1406 = sld [smem:[#allocation5 + $0x8]]
    %v1407 = vstv %s1406
    %v1408 = vsel %vm122, %v1407, 4294967295
    %s1409 = sld [smem:[#allocation5 + $0x9]]
    %v1410 = vstv %s1409
    %v1411 = vsel %vm126, %v1410, %v1408
    %s1412 = sld [smem:[#allocation5 + $0xa]]
    %v1413 = vstv %s1412
    %v1414 = vsel %vm130, %v1413, %v1411
    %s1415 = sld [smem:[#allocation5 + $0xb]]
    %v1416 = vstv %s1415
    %v1417 = vsel %vm134, %v1416, %v1414
    %vm1418 = vcmp.eq.s32.totalorder %v121, %v1417
    %v1419 = vsel %vm1418, 1, 0
    %v1420 = vcvt.s32.f32 %v1419
    %v1421 = vpack.c.bf16 %v1420, %v1420
    %v1422 = vld [vmem:[#allocation8] sm:$0xf]
    %v1423 = vld [vmem:[#allocation8 + $0x4] sm:$0xf]
    %v1424 = vld [vmem:[#allocation8 + $0x8] sm:$0xf]
    %v1425 = vld [vmem:[#allocation8 + $0xc] sm:$0xf]
    %v1426 = vld [vmem:[#allocation8 + $0x10] sm:$0xf]
    %v1427 = vld [vmem:[#allocation8 + $0x14] sm:$0xf]
    %v1428 = vld [vmem:[#allocation8 + $0x18] sm:$0xf]
    %v1429 = vld [vmem:[#allocation8 + $0x1c] sm:$0xf]
    %v1430 = vld [vmem:[#allocation8 + $0x20] sm:$0xf]
    %v1431 = vld [vmem:[#allocation8 + $0x24] sm:$0xf]
    %v1432 = vld [vmem:[#allocation8 + $0x28] sm:$0xf]
    %v1433 = vld [vmem:[#allocation8 + $0x2c] sm:$0xf]
    %v1434 = vld [vmem:[#allocation8 + $0x30] sm:$0xf]
    %v1435 = vld [vmem:[#allocation8 + $0x34] sm:$0xf]
    %v1436 = vld [vmem:[#allocation8 + $0x38] sm:$0xf]
    %v1437 = vld [vmem:[#allocation8 + $0x3c] sm:$0xf]
    %v1454 = vunpack.c.l.b16 %v1422
    %v1455 = vunpack.c.l.b16 %v1423
    %v1456 = vunpack.c.l.b16 %v1424
    %v1457 = vunpack.c.l.b16 %v1425
    %v1458 = vunpack.c.l.b16 %v1426
    %v1459 = vunpack.c.l.b16 %v1427
    %v1460 = vunpack.c.l.b16 %v1428
    %v1461 = vunpack.c.l.b16 %v1429
    %v1462 = vunpack.c.l.b16 %v1430
    %v1463 = vunpack.c.l.b16 %v1431
    %v1464 = vunpack.c.l.b16 %v1432
    %v1465 = vunpack.c.l.b16 %v1433
    %v1466 = vunpack.c.l.b16 %v1434
    %v1467 = vunpack.c.l.b16 %v1435
    %v1468 = vunpack.c.l.b16 %v1436
    %v1469 = vunpack.c.l.b16 %v1437
    %v1470 = vpack.c.b16 %v1455, %v1454
    %v1471 = vpack.c.b16 %v1457, %v1456
    %v1472 = vpack.c.b16 %v1459, %v1458
    %v1473 = vpack.c.b16 %v1461, %v1460
    %v1474 = vpack.c.b16 %v1463, %v1462
    %v1475 = vpack.c.b16 %v1465, %v1464
    %v1476 = vpack.c.b16 %v1467, %v1466
    %v1477 = vpack.c.b16 %v1469, %v1468
    %1486 = vmatprep.subr.bf16.mxu0 0
    %1487 = vmatpush1.bf16.msra.mxu0 %v1477
    %1488 = vmatprep.subr.bf16.mxu0 0
    %1489 = vmatpush1.bf16.msra.mxu0 %v1476
    %1490 = vmatprep.subr.bf16.mxu0 0
    %1491 = vmatpush1.bf16.msra.mxu0 %v1475
    %1492 = vmatprep.subr.bf16.mxu0 0
    %1493 = vmatpush1.bf16.msra.mxu0 %v1474
    %1494 = vmatprep.subr.bf16.mxu0 0
    %1495 = vmatpush1.bf16.msra.mxu0 %v1473
    %1496 = vmatprep.subr.bf16.mxu0 0
    %1497 = vmatpush1.bf16.msra.mxu0 %v1472
    %1498 = vmatprep.subr.bf16.mxu0 0
    %1499 = vmatpush1.bf16.msra.mxu0 %v1471
    %1500 = vmatprep.subr.bf16.mxu0 0
    %1501 = vmatpush1.bf16.msra.mxu0 %v1470
    %1502 = vmatprep.subr.bf16.mxu0 0
    %1503 = vmatpush2.bf16.msra.mxu0 0
    %1504 = vmatprep.subr.bf16.mxu0 0
    %1505 = vmatpush2.bf16.msra.mxu0 0
    %1506 = vmatprep.subr.bf16.mxu0 0
    %1507 = vmatpush2.bf16.msra.mxu0 0
    %1508 = vmatprep.subr.bf16.mxu0 0
    %1509 = vmatpush2.bf16.msra.mxu0 0
    %1510 = vmatprep.subr.bf16.mxu0 0
    %1511 = vmatpush2.bf16.msra.mxu0 0
    %1512 = vmatprep.subr.bf16.mxu0 0
    %1513 = vmatpush2.bf16.msra.mxu0 0
    %1514 = vmatprep.subr.bf16.mxu0 0
    %1515 = vmatpush2.bf16.msra.mxu0 0
    %1516 = vmatprep.subr.bf16.mxu0 0
    %1517 = vmatpush2.bf16.msra.mxu0 0
    %1518 = vmatprep.mubr.bf16.mxu0 0
    %1519 = vmatmul.mubr.bf16.gmra.mxu0 %v1421
    %v1520 = vpop.f32.mrf.mxu0
    %v1521 = vadd.f32 0.0, %v1520
    %v1522 = vpop.f32.mrf.mxu0
    %v1523 = vpop.f32.mrf.mxu0
    %v1524 = vpop.f32.mrf.mxu0
    %1525 = vdwg.mxu0
    %1526 = vst [vmem:[#allocation2] sm:$0xff] %v1521
    %v1527 = vld [vmem:[#allocation2] sm:$0xff]
    %v1528 = vld [vmem:[#allocation2 + $0x8] sm:$0xff]
    %v1529 = vpack.c.bf16 %v1527, %v1527
    %v1530 = vpack.c.bf16 %v1528, %v1528
    %v1531 = vld [vmem:[#allocation10] sm:$0xff]
    %v1532 = vld [vmem:[#allocation10 + $0x8] sm:$0xff]
    %v1533 = vld [vmem:[#allocation10 + $0x10] sm:$0xff]
    %v1534 = vld [vmem:[#allocation10 + $0x18] sm:$0xff]
    %v1535 = vld [vmem:[#allocation10 + $0x20] sm:$0xff]
    %v1536 = vld [vmem:[#allocation10 + $0x28] sm:$0xff]
    %v1537 = vld [vmem:[#allocation10 + $0x30] sm:$0xff]
    %v1538 = vld [vmem:[#allocation10 + $0x38] sm:$0xff]
    %v1539 = vld [vmem:[#allocation10 + $0x40] sm:$0xff]
    %v1540 = vld [vmem:[#allocation10 + $0x48] sm:$0xff]
    %v1541 = vld [vmem:[#allocation10 + $0x50] sm:$0xff]
    %v1542 = vld [vmem:[#allocation10 + $0x58] sm:$0xff]
    %v1543 = vld [vmem:[#allocation10 + $0x60] sm:$0xff]
    %v1544 = vld [vmem:[#allocation10 + $0x68] sm:$0xff]
    %v1545 = vld [vmem:[#allocation10 + $0x70] sm:$0xff]
    %v1546 = vld [vmem:[#allocation10 + $0x78] sm:$0xff]
    %v1547 = vld [vmem:[#allocation10 + $0x80] sm:$0xff]
    %v1548 = vld [vmem:[#allocation10 + $0x88] sm:$0xff]
    %v1549 = vld [vmem:[#allocation10 + $0x90] sm:$0xff]
    %v1550 = vld [vmem:[#allocation10 + $0x98] sm:$0xff]
    %v1551 = vld [vmem:[#allocation10 + $0xa0] sm:$0xff]
    %v1552 = vld [vmem:[#allocation10 + $0xa8] sm:$0xff]
    %v1553 = vld [vmem:[#allocation10 + $0xb0] sm:$0xff]
    %v1554 = vld [vmem:[#allocation10 + $0xb8] sm:$0xff]
    %v1555 = vld [vmem:[#allocation10 + $0xc0] sm:$0xff]
    %v1556 = vld [vmem:[#allocation10 + $0xc8] sm:$0xff]
    %v1557 = vld [vmem:[#allocation10 + $0xd0] sm:$0xff]
    %v1558 = vld [vmem:[#allocation10 + $0xd8] sm:$0xff]
    %v1559 = vld [vmem:[#allocation10 + $0xe0] sm:$0xff]
    %v1560 = vld [vmem:[#allocation10 + $0xe8] sm:$0xff]
    %v1561 = vld [vmem:[#allocation10 + $0xf0] sm:$0xff]
    %v1562 = vld [vmem:[#allocation10 + $0xf8] sm:$0xff]
    %v1563 = vld [vmem:[#allocation10 + $0x100] sm:$0xff]
    %v1564 = vld [vmem:[#allocation10 + $0x108] sm:$0xff]
    %v1565 = vld [vmem:[#allocation10 + $0x110] sm:$0xff]
    %v1566 = vld [vmem:[#allocation10 + $0x118] sm:$0xff]
    %v1567 = vld [vmem:[#allocation10 + $0x120] sm:$0xff]
    %v1568 = vld [vmem:[#allocation10 + $0x128] sm:$0xff]
    %v1569 = vld [vmem:[#allocation10 + $0x130] sm:$0xff]
    %v1570 = vld [vmem:[#allocation10 + $0x138] sm:$0xff]
    %v1571 = vld [vmem:[#allocation10 + $0x140] sm:$0xff]
    %v1572 = vld [vmem:[#allocation10 + $0x148] sm:$0xff]
    %v1573 = vld [vmem:[#allocation10 + $0x150] sm:$0xff]
    %v1574 = vld [vmem:[#allocation10 + $0x158] sm:$0xff]
    %v1575 = vld [vmem:[#allocation10 + $0x160] sm:$0xff]
    %v1576 = vld [vmem:[#allocation10 + $0x168] sm:$0xff]
    %v1577 = vld [vmem:[#allocation10 + $0x170] sm:$0xff]
    %v1578 = vld [vmem:[#allocation10 + $0x178] sm:$0xff]
    %v1579 = vld [vmem:[#allocation10 + $0x180] sm:$0xff]
    %v1580 = vld [vmem:[#allocation10 + $0x188] sm:$0xff]
    %v1581 = vld [vmem:[#allocation10 + $0x190] sm:$0xff]
    %v1582 = vld [vmem:[#allocation10 + $0x198] sm:$0xff]
    %v1583 = vld [vmem:[#allocation10 + $0x1a0] sm:$0xff]
    %v1584 = vld [vmem:[#allocation10 + $0x1a8] sm:$0xff]
    %v1585 = vld [vmem:[#allocation10 + $0x1b0] sm:$0xff]
    %v1586 = vld [vmem:[#allocation10 + $0x1b8] sm:$0xff]
    %v1587 = vld [vmem:[#allocation10 + $0x1c0] sm:$0xff]
    %v1588 = vld [vmem:[#allocation10 + $0x1c8] sm:$0xff]
    %v1589 = vld [vmem:[#allocation10 + $0x1d0] sm:$0xff]
    %v1590 = vld [vmem:[#allocation10 + $0x1d8] sm:$0xff]
    %v1591 = vld [vmem:[#allocation10 + $0x1e0] sm:$0xff]
    %v1592 = vld [vmem:[#allocation10 + $0x1e8] sm:$0xff]
    %v1593 = vld [vmem:[#allocation10 + $0x1f0] sm:$0xff]
    %v1594 = vld [vmem:[#allocation10 + $0x1f8] sm:$0xff]
    %v1595 = vld [vmem:[%s5] sm:$0xf]
    %v1597 = vlaneseq
    %v1598 = vshrl.u32 %v1597, 7
    %v1599 = vsub.s32 0, %v1598
    %v1600 = vrot.slane %v1595, %v1599
    %v1601 = vlaneseq
    %v1602 = vshrl.u32 %v1601, 7
    %v1603 = vsub.s32 1, %v1602
    %v1604 = vrot.slane %v1595, %v1603
    %v1605 = vlaneseq
    %v1606 = vshrl.u32 %v1605, 7
    %v1607 = vsub.s32 2, %v1606
    %v1608 = vrot.slane %v1595, %v1607
    %v1609 = vlaneseq
    %v1610 = vshrl.u32 %v1609, 7
    %v1611 = vsub.s32 3, %v1610
    %v1612 = vrot.slane %v1595, %v1611
    %v1681 = vunpack.c.l.b16 %v1531
    %v1682 = vunpack.c.h.b16 %v1531
    %v1683 = vunpack.c.l.b16 %v1532
    %v1684 = vunpack.c.h.b16 %v1532
    %v1685 = vunpack.c.l.b16 %v1533
    %v1686 = vunpack.c.h.b16 %v1533
    %v1687 = vunpack.c.l.b16 %v1534
    %v1688 = vunpack.c.h.b16 %v1534
    %v1689 = vunpack.c.l.b16 %v1535
    %v1690 = vunpack.c.h.b16 %v1535
    %v1691 = vunpack.c.l.b16 %v1536
    %v1692 = vunpack.c.h.b16 %v1536
    %v1693 = vunpack.c.l.b16 %v1537
    %v1694 = vunpack.c.h.b16 %v1537
    %v1695 = vunpack.c.l.b16 %v1538
    %v1696 = vunpack.c.h.b16 %v1538
    %v1697 = vunpack.c.l.b16 %v1539
    %v1698 = vunpack.c.h.b16 %v1539
    %v1699 = vunpack.c.l.b16 %v1540
    %v1700 = vunpack.c.h.b16 %v1540
    %v1701 = vunpack.c.l.b16 %v1541
    %v1702 = vunpack.c.h.b16 %v1541
    %v1703 = vunpack.c.l.b16 %v1542
    %v1704 = vunpack.c.h.b16 %v1542
    %v1705 = vunpack.c.l.b16 %v1543
    %v1706 = vunpack.c.h.b16 %v1543
    %v1707 = vunpack.c.l.b16 %v1544
    %v1708 = vunpack.c.h.b16 %v1544
    %v1709 = vunpack.c.l.b16 %v1545
    %v1710 = vunpack.c.h.b16 %v1545
    %v1711 = vunpack.c.l.b16 %v1546
    %v1712 = vunpack.c.h.b16 %v1546
    %v1713 = vunpack.c.l.b16 %v1547
    %v1714 = vunpack.c.h.b16 %v1547
    %v1715 = vunpack.c.l.b16 %v1548
    %v1716 = vunpack.c.h.b16 %v1548
    %v1717 = vunpack.c.l.b16 %v1549
    %v1718 = vunpack.c.h.b16 %v1549
    %v1719 = vunpack.c.l.b16 %v1550
    %v1720 = vunpack.c.h.b16 %v1550
    %v1721 = vunpack.c.l.b16 %v1551
    %v1722 = vunpack.c.h.b16 %v1551
    %v1723 = vunpack.c.l.b16 %v1552
    %v1724 = vunpack.c.h.b16 %v1552
    %v1725 = vunpack.c.l.b16 %v1553
    %v1726 = vunpack.c.h.b16 %v1553
    %v1727 = vunpack.c.l.b16 %v1554
    %v1728 = vunpack.c.h.b16 %v1554
    %v1729 = vunpack.c.l.b16 %v1555
    %v1730 = vunpack.c.h.b16 %v1555
    %v1731 = vunpack.c.l.b16 %v1556
    %v1732 = vunpack.c.h.b16 %v1556
    %v1733 = vunpack.c.l.b16 %v1557
    %v1734 = vunpack.c.h.b16 %v1557
    %v1735 = vunpack.c.l.b16 %v1558
    %v1736 = vunpack.c.h.b16 %v1558
    %v1737 = vunpack.c.l.b16 %v1559
    %v1738 = vunpack.c.h.b16 %v1559
    %v1739 = vunpack.c.l.b16 %v1560
    %v1740 = vunpack.c.h.b16 %v1560
    %v1741 = vunpack.c.l.b16 %v1561
    %v1742 = vunpack.c.h.b16 %v1561
    %v1743 = vunpack.c.l.b16 %v1562
    %v1744 = vunpack.c.h.b16 %v1562
    %v1745 = vunpack.c.l.b16 %v1563
    %v1746 = vunpack.c.h.b16 %v1563
    %v1747 = vunpack.c.l.b16 %v1564
    %v1748 = vunpack.c.h.b16 %v1564
    %v1749 = vunpack.c.l.b16 %v1565
    %v1750 = vunpack.c.h.b16 %v1565
    %v1751 = vunpack.c.l.b16 %v1566
    %v1752 = vunpack.c.h.b16 %v1566
    %v1753 = vunpack.c.l.b16 %v1567
    %v1754 = vunpack.c.h.b16 %v1567
    %v1755 = vunpack.c.l.b16 %v1568
    %v1756 = vunpack.c.h.b16 %v1568
    %v1757 = vunpack.c.l.b16 %v1569
    %v1758 = vunpack.c.h.b16 %v1569
    %v1759 = vunpack.c.l.b16 %v1570
    %v1760 = vunpack.c.h.b16 %v1570
    %v1761 = vunpack.c.l.b16 %v1571
    %v1762 = vunpack.c.h.b16 %v1571
    %v1763 = vunpack.c.l.b16 %v1572
    %v1764 = vunpack.c.h.b16 %v1572
    %v1765 = vunpack.c.l.b16 %v1573
    %v1766 = vunpack.c.h.b16 %v1573
    %v1767 = vunpack.c.l.b16 %v1574
    %v1768 = vunpack.c.h.b16 %v1574
    %v1769 = vunpack.c.l.b16 %v1575
    %v1770 = vunpack.c.h.b16 %v1575
    %v1771 = vunpack.c.l.b16 %v1576
    %v1772 = vunpack.c.h.b16 %v1576
    %v1773 = vunpack.c.l.b16 %v1577
    %v1774 = vunpack.c.h.b16 %v1577
    %v1775 = vunpack.c.l.b16 %v1578
    %v1776 = vunpack.c.h.b16 %v1578
    %v1777 = vunpack.c.l.b16 %v1579
    %v1778 = vunpack.c.h.b16 %v1579
    %v1779 = vunpack.c.l.b16 %v1580
    %v1780 = vunpack.c.h.b16 %v1580
    %v1781 = vunpack.c.l.b16 %v1581
    %v1782 = vunpack.c.h.b16 %v1581
    %v1783 = vunpack.c.l.b16 %v1582
    %v1784 = vunpack.c.h.b16 %v1582
    %v1785 = vunpack.c.l.b16 %v1583
    %v1786 = vunpack.c.h.b16 %v1583
    %v1787 = vunpack.c.l.b16 %v1584
    %v1788 = vunpack.c.h.b16 %v1584
    %v1789 = vunpack.c.l.b16 %v1585
    %v1790 = vunpack.c.h.b16 %v1585
    %v1791 = vunpack.c.l.b16 %v1586
    %v1792 = vunpack.c.h.b16 %v1586
    %v1793 = vunpack.c.l.b16 %v1587
    %v1794 = vunpack.c.h.b16 %v1587
    %v1795 = vunpack.c.l.b16 %v1588
    %v1796 = vunpack.c.h.b16 %v1588
    %v1797 = vunpack.c.l.b16 %v1589
    %v1798 = vunpack.c.h.b16 %v1589
    %v1799 = vunpack.c.l.b16 %v1590
    %v1800 = vunpack.c.h.b16 %v1590
    %v1801 = vunpack.c.l.b16 %v1591
    %v1802 = vunpack.c.h.b16 %v1591
    %v1803 = vunpack.c.l.b16 %v1592
    %v1804 = vunpack.c.h.b16 %v1592
    %v1805 = vunpack.c.l.b16 %v1593
    %v1806 = vunpack.c.h.b16 %v1593
    %v1807 = vunpack.c.l.b16 %v1594
    %v1808 = vunpack.c.h.b16 %v1594
    %v1809 = vpack.c.b16 %v1685, %v1681
    %v1810 = vpack.c.b16 %v1686, %v1682
    %v1811 = vpack.c.b16 %v1687, %v1683
    %v1812 = vpack.c.b16 %v1688, %v1684
    %v1813 = vpack.c.b16 %v1693, %v1689
    %v1814 = vpack.c.b16 %v1694, %v1690
    %v1815 = vpack.c.b16 %v1695, %v1691
    %v1816 = vpack.c.b16 %v1696, %v1692
    %v1817 = vpack.c.b16 %v1701, %v1697
    %v1818 = vpack.c.b16 %v1702, %v1698
    %v1819 = vpack.c.b16 %v1703, %v1699
    %v1820 = vpack.c.b16 %v1704, %v1700
    %v1821 = vpack.c.b16 %v1709, %v1705
    %v1822 = vpack.c.b16 %v1710, %v1706
    %v1823 = vpack.c.b16 %v1711, %v1707
    %v1824 = vpack.c.b16 %v1712, %v1708
    %v1825 = vpack.c.b16 %v1717, %v1713
    %v1826 = vpack.c.b16 %v1718, %v1714
    %v1827 = vpack.c.b16 %v1719, %v1715
    %v1828 = vpack.c.b16 %v1720, %v1716
    %v1829 = vpack.c.b16 %v1725, %v1721
    %v1830 = vpack.c.b16 %v1726, %v1722
    %v1831 = vpack.c.b16 %v1727, %v1723
    %v1832 = vpack.c.b16 %v1728, %v1724
    %v1833 = vpack.c.b16 %v1733, %v1729
    %v1834 = vpack.c.b16 %v1734, %v1730
    %v1835 = vpack.c.b16 %v1735, %v1731
    %v1836 = vpack.c.b16 %v1736, %v1732
    %v1837 = vpack.c.b16 %v1741, %v1737
    %v1838 = vpack.c.b16 %v1742, %v1738
    %v1839 = vpack.c.b16 %v1743, %v1739
    %v1840 = vpack.c.b16 %v1744, %v1740
    %v1841 = vpack.c.b16 %v1749, %v1745
    %v1842 = vpack.c.b16 %v1750, %v1746
    %v1843 = vpack.c.b16 %v1751, %v1747
    %v1844 = vpack.c.b16 %v1752, %v1748
    %v1845 = vpack.c.b16 %v1757, %v1753
    %v1846 = vpack.c.b16 %v1758, %v1754
    %v1847 = vpack.c.b16 %v1759, %v1755
    %v1848 = vpack.c.b16 %v1760, %v1756
    %v1849 = vpack.c.b16 %v1765, %v1761
    %v1850 = vpack.c.b16 %v1766, %v1762
    %v1851 = vpack.c.b16 %v1767, %v1763
    %v1852 = vpack.c.b16 %v1768, %v1764
    %v1853 = vpack.c.b16 %v1773, %v1769
    %v1854 = vpack.c.b16 %v1774, %v1770
    %v1855 = vpack.c.b16 %v1775, %v1771
    %v1856 = vpack.c.b16 %v1776, %v1772
    %v1857 = vpack.c.b16 %v1781, %v1777
    %v1858 = vpack.c.b16 %v1782, %v1778
    %v1859 = vpack.c.b16 %v1783, %v1779
    %v1860 = vpack.c.b16 %v1784, %v1780
    %v1861 = vpack.c.b16 %v1789, %v1785
    %v1862 = vpack.c.b16 %v1790, %v1786
    %v1863 = vpack.c.b16 %v1791, %v1787
    %v1864 = vpack.c.b16 %v1792, %v1788
    %v1865 = vpack.c.b16 %v1797, %v1793
    %v1866 = vpack.c.b16 %v1798, %v1794
    %v1867 = vpack.c.b16 %v1799, %v1795
    %v1868 = vpack.c.b16 %v1800, %v1796
    %v1869 = vpack.c.b16 %v1805, %v1801
    %v1870 = vpack.c.b16 %v1806, %v1802
    %v1871 = vpack.c.b16 %v1807, %v1803
    %v1872 = vpack.c.b16 %v1808, %v1804
    %1937 = vmatprep.subr.bf16.mxu0 %v1838
    %1938 = vmatpush1.bf16.msra.mxu0 %v1837
    %1939 = vmatprep.subr.bf16.mxu0 %v1834
    %1940 = vmatpush1.bf16.msra.mxu0 %v1833
    %1941 = vmatprep.subr.bf16.mxu0 %v1830
    %1942 = vmatpush1.bf16.msra.mxu0 %v1829
    %1943 = vmatprep.subr.bf16.mxu0 %v1826
    %1944 = vmatpush1.bf16.msra.mxu0 %v1825
    %1945 = vmatprep.subr.bf16.mxu0 %v1822
    %1946 = vmatpush1.bf16.msra.mxu0 %v1821
    %1947 = vmatprep.subr.bf16.mxu0 %v1818
    %1948 = vmatpush1.bf16.msra.mxu0 %v1817
    %1949 = vmatprep.subr.bf16.mxu0 %v1814
    %1950 = vmatpush1.bf16.msra.mxu0 %v1813
    %1951 = vmatprep.subr.bf16.mxu0 %v1810
    %1952 = vmatpush1.bf16.msra.mxu0 %v1809
    %1953 = vmatprep.subr.bf16.mxu0 %v1870
    %1954 = vmatpush2.bf16.msra.mxu0 %v1869
    %1955 = vmatprep.subr.bf16.mxu0 %v1866
    %1956 = vmatpush2.bf16.msra.mxu0 %v1865
    %1957 = vmatprep.subr.bf16.mxu0 %v1862
    %1958 = vmatpush2.bf16.msra.mxu0 %v1861
    %1959 = vmatprep.subr.bf16.mxu0 %v1858
    %1960 = vmatpush2.bf16.msra.mxu0 %v1857
    %1961 = vmatprep.subr.bf16.mxu0 %v1854
    %1962 = vmatpush2.bf16.msra.mxu0 %v1853
    %1963 = vmatprep.subr.bf16.mxu0 %v1850
    %1964 = vmatpush2.bf16.msra.mxu0 %v1849
    %1965 = vmatprep.subr.bf16.mxu0 %v1846
    %1966 = vmatpush2.bf16.msra.mxu0 %v1845
    %1967 = vmatprep.subr.bf16.mxu0 %v1842
    %1968 = vmatpush2.bf16.msra.mxu0 %v1841
    %1969 = vmatprep.mubr.bf16.mxu0 %v1530
    %1970 = vmatmul.mubr.bf16.gmra.mxu0 %v1529
    %v1971 = vpop.f32.mrf.mxu0
    %v1972 = vadd.f32 %v1600, %v1971
    %v1973 = vpop.f32.mrf.mxu0
    %v1974 = vadd.f32 %v1604, %v1973
    %v1975 = vpop.f32.mrf.mxu0
    %v1976 = vpop.f32.mrf.mxu0
    %1977 = vdwg.mxu0
    %1978 = vmatprep.subr.bf16.mxu0 %v1840
    %1979 = vmatpush1.bf16.msra.mxu0 %v1839
    %1980 = vmatprep.subr.bf16.mxu0 %v1836
    %1981 = vmatpush1.bf16.msra.mxu0 %v1835
    %1982 = vmatprep.subr.bf16.mxu0 %v1832
    %1983 = vmatpush1.bf16.msra.mxu0 %v1831
    %1984 = vmatprep.subr.bf16.mxu0 %v1828
    %1985 = vmatpush1.bf16.msra.mxu0 %v1827
    %1986 = vmatprep.subr.bf16.mxu0 %v1824
    %1987 = vmatpush1.bf16.msra.mxu0 %v1823
    %1988 = vmatprep.subr.bf16.mxu0 %v1820
    %1989 = vmatpush1.bf16.msra.mxu0 %v1819
    %1990 = vmatprep.subr.bf16.mxu0 %v1816
    %1991 = vmatpush1.bf16.msra.mxu0 %v1815
    %1992 = vmatprep.subr.bf16.mxu0 %v1812
    %1993 = vmatpush1.bf16.msra.mxu0 %v1811
    %1994 = vmatprep.subr.bf16.mxu0 %v1872
    %1995 = vmatpush2.bf16.msra.mxu0 %v1871
    %1996 = vmatprep.subr.bf16.mxu0 %v1868
    %1997 = vmatpush2.bf16.msra.mxu0 %v1867
    %1998 = vmatprep.subr.bf16.mxu0 %v1864
    %1999 = vmatpush2.bf16.msra.mxu0 %v1863
    %2000 = vmatprep.subr.bf16.mxu0 %v1860
    %2001 = vmatpush2.bf16.msra.mxu0 %v1859
    %2002 = vmatprep.subr.bf16.mxu0 %v1856
    %2003 = vmatpush2.bf16.msra.mxu0 %v1855
    %2004 = vmatprep.subr.bf16.mxu0 %v1852
    %2005 = vmatpush2.bf16.msra.mxu0 %v1851
    %2006 = vmatprep.subr.bf16.mxu0 %v1848
    %2007 = vmatpush2.bf16.msra.mxu0 %v1847
    %2008 = vmatprep.subr.bf16.mxu0 %v1844
    %2009 = vmatpush2.bf16.msra.mxu0 %v1843
    %2010 = vmatprep.mubr.bf16.mxu0 %v1530
    %2011 = vmatmul.mubr.bf16.gmra.mxu0 %v1529
    %v2012 = vpop.f32.mrf.mxu0
    %v2013 = vadd.f32 %v1608, %v2012
    %v2014 = vpop.f32.mrf.mxu0
    %v2015 = vadd.f32 %v1612, %v2014
    %v2016 = vpop.f32.mrf.mxu0
    %v2017 = vpop.f32.mrf.mxu0
    %2018 = vdwg.mxu0
    %v2019 = vxor.u32 %v1972, 2147483648
    %v2020 = vmul.f32 %v2019, 1.442695
    %v2021 = vpow.pop %v2020
    %v2022 = vadd.f32 %v2021, 1.0
    %v2023 = vrcp.pop %v2022
    %v2024 = vmul.f32 1.0, %v2023
    %v2025 = vxor.u32 %v1974, 2147483648
    %v2026 = vmul.f32 %v2025, 1.442695
    %v2027 = vpow.pop %v2026
    %v2028 = vadd.f32 %v2027, 1.0
    %v2029 = vrcp.pop %v2028
    %v2030 = vmul.f32 1.0, %v2029
    %v2031 = vtanh.pop %v2013
    %v2032 = vxor.u32 %v2015, 2147483648
    %v2033 = vmul.f32 %v2032, 1.442695
    %v2034 = vpow.pop %v2033
    %v2035 = vadd.f32 %v2034, 1.0
    %v2036 = vrcp.pop %v2035
    %v2037 = vmul.f32 1.0, %v2036
    %v2038 = vld [vmem:[#allocation3] sm:$0xff]
    %v2039 = vmul.f32 %v2030, %v2038
    %v2040 = vmul.f32 %v2024, %v2031
    %v2041 = vadd.f32 %v2039, %v2040
    %v2042 = vtanh.pop %v2041
    %v2043 = vmul.f32 %v2037, %v2042
    %2044 = vst [vmem:[#allocation3] sm:$0xff] %v2041
    %2045 = vst [vmem:[#allocation2 + $0x8] sm:$0xff] %v2043
    %s2046 = sld [smem:[#allocation5 + $0xc]]
    %v2047 = vstv %s2046
    %v2048 = vsel %vm122, %v2047, 4294967295
    %s2049 = sld [smem:[#allocation5 + $0xd]]
    %v2050 = vstv %s2049
    %v2051 = vsel %vm126, %v2050, %v2048
    %s2052 = sld [smem:[#allocation5 + $0xe]]
    %v2053 = vstv %s2052
    %v2054 = vsel %vm130, %v2053, %v2051
    %s2055 = sld [smem:[#allocation5 + $0xf]]
    %v2056 = vstv %s2055
    %v2057 = vsel %vm134, %v2056, %v2054
    %vm2058 = vcmp.eq.s32.totalorder %v121, %v2057
    %v2059 = vsel %vm2058, 1, 0
    %v2060 = vcvt.s32.f32 %v2059
    %v2061 = vpack.c.bf16 %v2060, %v2060
    %v2062 = vld [vmem:[#allocation8] sm:$0xf]
    %v2063 = vld [vmem:[#allocation8 + $0x4] sm:$0xf]
    %v2064 = vld [vmem:[#allocation8 + $0x8] sm:$0xf]
    %v2065 = vld [vmem:[#allocation8 + $0xc] sm:$0xf]
    %v2066 = vld [vmem:[#allocation8 + $0x10] sm:$0xf]
    %v2067 = vld [vmem:[#allocation8 + $0x14] sm:$0xf]
    %v2068 = vld [vmem:[#allocation8 + $0x18] sm:$0xf]
    %v2069 = vld [vmem:[#allocation8 + $0x1c] sm:$0xf]
    %v2070 = vld [vmem:[#allocation8 + $0x20] sm:$0xf]
    %v2071 = vld [vmem:[#allocation8 + $0x24] sm:$0xf]
    %v2072 = vld [vmem:[#allocation8 + $0x28] sm:$0xf]
    %v2073 = vld [vmem:[#allocation8 + $0x2c] sm:$0xf]
    %v2074 = vld [vmem:[#allocation8 + $0x30] sm:$0xf]
    %v2075 = vld [vmem:[#allocation8 + $0x34] sm:$0xf]
    %v2076 = vld [vmem:[#allocation8 + $0x38] sm:$0xf]
    %v2077 = vld [vmem:[#allocation8 + $0x3c] sm:$0xf]
    %v2094 = vunpack.c.l.b16 %v2062
    %v2095 = vunpack.c.l.b16 %v2063
    %v2096 = vunpack.c.l.b16 %v2064
    %v2097 = vunpack.c.l.b16 %v2065
    %v2098 = vunpack.c.l.b16 %v2066
    %v2099 = vunpack.c.l.b16 %v2067
    %v2100 = vunpack.c.l.b16 %v2068
    %v2101 = vunpack.c.l.b16 %v2069
    %v2102 = vunpack.c.l.b16 %v2070
    %v2103 = vunpack.c.l.b16 %v2071
    %v2104 = vunpack.c.l.b16 %v2072
    %v2105 = vunpack.c.l.b16 %v2073
    %v2106 = vunpack.c.l.b16 %v2074
    %v2107 = vunpack.c.l.b16 %v2075
    %v2108 = vunpack.c.l.b16 %v2076
    %v2109 = vunpack.c.l.b16 %v2077
    %v2110 = vpack.c.b16 %v2095, %v2094
    %v2111 = vpack.c.b16 %v2097, %v2096
    %v2112 = vpack.c.b16 %v2099, %v2098
    %v2113 = vpack.c.b16 %v2101, %v2100
    %v2114 = vpack.c.b16 %v2103, %v2102
    %v2115 = vpack.c.b16 %v2105, %v2104
    %v2116 = vpack.c.b16 %v2107, %v2106
    %v2117 = vpack.c.b16 %v2109, %v2108
    %2126 = vmatprep.subr.bf16.mxu0 0
    %2127 = vmatpush1.bf16.msra.mxu0 %v2117
    %2128 = vmatprep.subr.bf16.mxu0 0
    %2129 = vmatpush1.bf16.msra.mxu0 %v2116
    %2130 = vmatprep.subr.bf16.mxu0 0
    %2131 = vmatpush1.bf16.msra.mxu0 %v2115
    %2132 = vmatprep.subr.bf16.mxu0 0
    %2133 = vmatpush1.bf16.msra.mxu0 %v2114
    %2134 = vmatprep.subr.bf16.mxu0 0
    %2135 = vmatpush1.bf16.msra.mxu0 %v2113
    %2136 = vmatprep.subr.bf16.mxu0 0
    %2137 = vmatpush1.bf16.msra.mxu0 %v2112
    %2138 = vmatprep.subr.bf16.mxu0 0
    %2139 = vmatpush1.bf16.msra.mxu0 %v2111
    %2140 = vmatprep.subr.bf16.mxu0 0
    %2141 = vmatpush1.bf16.msra.mxu0 %v2110
    %2142 = vmatprep.subr.bf16.mxu0 0
    %2143 = vmatpush2.bf16.msra.mxu0 0
    %2144 = vmatprep.subr.bf16.mxu0 0
    %2145 = vmatpush2.bf16.msra.mxu0 0
    %2146 = vmatprep.subr.bf16.mxu0 0
    %2147 = vmatpush2.bf16.msra.mxu0 0
    %2148 = vmatprep.subr.bf16.mxu0 0
    %2149 = vmatpush2.bf16.msra.mxu0 0
    %2150 = vmatprep.subr.bf16.mxu0 0
    %2151 = vmatpush2.bf16.msra.mxu0 0
    %2152 = vmatprep.subr.bf16.mxu0 0
    %2153 = vmatpush2.bf16.msra.mxu0 0
    %2154 = vmatprep.subr.bf16.mxu0 0
    %2155 = vmatpush2.bf16.msra.mxu0 0
    %2156 = vmatprep.subr.bf16.mxu0 0
    %2157 = vmatpush2.bf16.msra.mxu0 0
    %2158 = vmatprep.mubr.bf16.mxu0 0
    %2159 = vmatmul.mubr.bf16.gmra.mxu0 %v2061
    %v2160 = vpop.f32.mrf.mxu0
    %v2161 = vadd.f32 0.0, %v2160
    %v2162 = vpop.f32.mrf.mxu0
    %v2163 = vpop.f32.mrf.mxu0
    %v2164 = vpop.f32.mrf.mxu0
    %2165 = vdwg.mxu0
    %2166 = vst [vmem:[#allocation2] sm:$0xff] %v2161
    %v2167 = vld [vmem:[#allocation2] sm:$0xff]
    %v2168 = vld [vmem:[#allocation2 + $0x8] sm:$0xff]
    %v2169 = vpack.c.bf16 %v2167, %v2167
    %v2170 = vpack.c.bf16 %v2168, %v2168
    %v2171 = vld [vmem:[#allocation10] sm:$0xff]
    %v2172 = vld [vmem:[#allocation10 + $0x8] sm:$0xff]
    %v2173 = vld [vmem:[#allocation10 + $0x10] sm:$0xff]
    %v2174 = vld [vmem:[#allocation10 + $0x18] sm:$0xff]
    %v2175 = vld [vmem:[#allocation10 + $0x20] sm:$0xff]
    %v2176 = vld [vmem:[#allocation10 + $0x28] sm:$0xff]
    %v2177 = vld [vmem:[#allocation10 + $0x30] sm:$0xff]
    %v2178 = vld [vmem:[#allocation10 + $0x38] sm:$0xff]
    %v2179 = vld [vmem:[#allocation10 + $0x40] sm:$0xff]
    %v2180 = vld [vmem:[#allocation10 + $0x48] sm:$0xff]
    %v2181 = vld [vmem:[#allocation10 + $0x50] sm:$0xff]
    %v2182 = vld [vmem:[#allocation10 + $0x58] sm:$0xff]
    %v2183 = vld [vmem:[#allocation10 + $0x60] sm:$0xff]
    %v2184 = vld [vmem:[#allocation10 + $0x68] sm:$0xff]
    %v2185 = vld [vmem:[#allocation10 + $0x70] sm:$0xff]
    %v2186 = vld [vmem:[#allocation10 + $0x78] sm:$0xff]
    %v2187 = vld [vmem:[#allocation10 + $0x80] sm:$0xff]
    %v2188 = vld [vmem:[#allocation10 + $0x88] sm:$0xff]
    %v2189 = vld [vmem:[#allocation10 + $0x90] sm:$0xff]
    %v2190 = vld [vmem:[#allocation10 + $0x98] sm:$0xff]
    %v2191 = vld [vmem:[#allocation10 + $0xa0] sm:$0xff]
    %v2192 = vld [vmem:[#allocation10 + $0xa8] sm:$0xff]
    %v2193 = vld [vmem:[#allocation10 + $0xb0] sm:$0xff]
    %v2194 = vld [vmem:[#allocation10 + $0xb8] sm:$0xff]
    %v2195 = vld [vmem:[#allocation10 + $0xc0] sm:$0xff]
    %v2196 = vld [vmem:[#allocation10 + $0xc8] sm:$0xff]
    %v2197 = vld [vmem:[#allocation10 + $0xd0] sm:$0xff]
    %v2198 = vld [vmem:[#allocation10 + $0xd8] sm:$0xff]
    %v2199 = vld [vmem:[#allocation10 + $0xe0] sm:$0xff]
    %v2200 = vld [vmem:[#allocation10 + $0xe8] sm:$0xff]
    %v2201 = vld [vmem:[#allocation10 + $0xf0] sm:$0xff]
    %v2202 = vld [vmem:[#allocation10 + $0xf8] sm:$0xff]
    %v2203 = vld [vmem:[#allocation10 + $0x100] sm:$0xff]
    %v2204 = vld [vmem:[#allocation10 + $0x108] sm:$0xff]
    %v2205 = vld [vmem:[#allocation10 + $0x110] sm:$0xff]
    %v2206 = vld [vmem:[#allocation10 + $0x118] sm:$0xff]
    %v2207 = vld [vmem:[#allocation10 + $0x120] sm:$0xff]
    %v2208 = vld [vmem:[#allocation10 + $0x128] sm:$0xff]
    %v2209 = vld [vmem:[#allocation10 + $0x130] sm:$0xff]
    %v2210 = vld [vmem:[#allocation10 + $0x138] sm:$0xff]
    %v2211 = vld [vmem:[#allocation10 + $0x140] sm:$0xff]
    %v2212 = vld [vmem:[#allocation10 + $0x148] sm:$0xff]
    %v2213 = vld [vmem:[#allocation10 + $0x150] sm:$0xff]
    %v2214 = vld [vmem:[#allocation10 + $0x158] sm:$0xff]
    %v2215 = vld [vmem:[#allocation10 + $0x160] sm:$0xff]
    %v2216 = vld [vmem:[#allocation10 + $0x168] sm:$0xff]
    %v2217 = vld [vmem:[#allocation10 + $0x170] sm:$0xff]
    %v2218 = vld [vmem:[#allocation10 + $0x178] sm:$0xff]
    %v2219 = vld [vmem:[#allocation10 + $0x180] sm:$0xff]
    %v2220 = vld [vmem:[#allocation10 + $0x188] sm:$0xff]
    %v2221 = vld [vmem:[#allocation10 + $0x190] sm:$0xff]
    %v2222 = vld [vmem:[#allocation10 + $0x198] sm:$0xff]
    %v2223 = vld [vmem:[#allocation10 + $0x1a0] sm:$0xff]
    %v2224 = vld [vmem:[#allocation10 + $0x1a8] sm:$0xff]
    %v2225 = vld [vmem:[#allocation10 + $0x1b0] sm:$0xff]
    %v2226 = vld [vmem:[#allocation10 + $0x1b8] sm:$0xff]
    %v2227 = vld [vmem:[#allocation10 + $0x1c0] sm:$0xff]
    %v2228 = vld [vmem:[#allocation10 + $0x1c8] sm:$0xff]
    %v2229 = vld [vmem:[#allocation10 + $0x1d0] sm:$0xff]
    %v2230 = vld [vmem:[#allocation10 + $0x1d8] sm:$0xff]
    %v2231 = vld [vmem:[#allocation10 + $0x1e0] sm:$0xff]
    %v2232 = vld [vmem:[#allocation10 + $0x1e8] sm:$0xff]
    %v2233 = vld [vmem:[#allocation10 + $0x1f0] sm:$0xff]
    %v2234 = vld [vmem:[#allocation10 + $0x1f8] sm:$0xff]
    %v2235 = vld [vmem:[%s5] sm:$0xf]
    %v2237 = vlaneseq
    %v2238 = vshrl.u32 %v2237, 7
    %v2239 = vsub.s32 0, %v2238
    %v2240 = vrot.slane %v2235, %v2239
    %v2241 = vlaneseq
    %v2242 = vshrl.u32 %v2241, 7
    %v2243 = vsub.s32 1, %v2242
    %v2244 = vrot.slane %v2235, %v2243
    %v2245 = vlaneseq
    %v2246 = vshrl.u32 %v2245, 7
    %v2247 = vsub.s32 2, %v2246
    %v2248 = vrot.slane %v2235, %v2247
    %v2249 = vlaneseq
    %v2250 = vshrl.u32 %v2249, 7
    %v2251 = vsub.s32 3, %v2250
    %v2252 = vrot.slane %v2235, %v2251
    %v2321 = vunpack.c.l.b16 %v2171
    %v2322 = vunpack.c.h.b16 %v2171
    %v2323 = vunpack.c.l.b16 %v2172
    %v2324 = vunpack.c.h.b16 %v2172
    %v2325 = vunpack.c.l.b16 %v2173
    %v2326 = vunpack.c.h.b16 %v2173
    %v2327 = vunpack.c.l.b16 %v2174
    %v2328 = vunpack.c.h.b16 %v2174
    %v2329 = vunpack.c.l.b16 %v2175
    %v2330 = vunpack.c.h.b16 %v2175
    %v2331 = vunpack.c.l.b16 %v2176
    %v2332 = vunpack.c.h.b16 %v2176
    %v2333 = vunpack.c.l.b16 %v2177
    %v2334 = vunpack.c.h.b16 %v2177
    %v2335 = vunpack.c.l.b16 %v2178
    %v2336 = vunpack.c.h.b16 %v2178
    %v2337 = vunpack.c.l.b16 %v2179
    %v2338 = vunpack.c.h.b16 %v2179
    %v2339 = vunpack.c.l.b16 %v2180
    %v2340 = vunpack.c.h.b16 %v2180
    %v2341 = vunpack.c.l.b16 %v2181
    %v2342 = vunpack.c.h.b16 %v2181
    %v2343 = vunpack.c.l.b16 %v2182
    %v2344 = vunpack.c.h.b16 %v2182
    %v2345 = vunpack.c.l.b16 %v2183
    %v2346 = vunpack.c.h.b16 %v2183
    %v2347 = vunpack.c.l.b16 %v2184
    %v2348 = vunpack.c.h.b16 %v2184
    %v2349 = vunpack.c.l.b16 %v2185
    %v2350 = vunpack.c.h.b16 %v2185
    %v2351 = vunpack.c.l.b16 %v2186
    %v2352 = vunpack.c.h.b16 %v2186
    %v2353 = vunpack.c.l.b16 %v2187
    %v2354 = vunpack.c.h.b16 %v2187
    %v2355 = vunpack.c.l.b16 %v2188
    %v2356 = vunpack.c.h.b16 %v2188
    %v2357 = vunpack.c.l.b16 %v2189
    %v2358 = vunpack.c.h.b16 %v2189
    %v2359 = vunpack.c.l.b16 %v2190
    %v2360 = vunpack.c.h.b16 %v2190
    %v2361 = vunpack.c.l.b16 %v2191
    %v2362 = vunpack.c.h.b16 %v2191
    %v2363 = vunpack.c.l.b16 %v2192
    %v2364 = vunpack.c.h.b16 %v2192
    %v2365 = vunpack.c.l.b16 %v2193
    %v2366 = vunpack.c.h.b16 %v2193
    %v2367 = vunpack.c.l.b16 %v2194
    %v2368 = vunpack.c.h.b16 %v2194
    %v2369 = vunpack.c.l.b16 %v2195
    %v2370 = vunpack.c.h.b16 %v2195
    %v2371 = vunpack.c.l.b16 %v2196
    %v2372 = vunpack.c.h.b16 %v2196
    %v2373 = vunpack.c.l.b16 %v2197
    %v2374 = vunpack.c.h.b16 %v2197
    %v2375 = vunpack.c.l.b16 %v2198
    %v2376 = vunpack.c.h.b16 %v2198
    %v2377 = vunpack.c.l.b16 %v2199
    %v2378 = vunpack.c.h.b16 %v2199
    %v2379 = vunpack.c.l.b16 %v2200
    %v2380 = vunpack.c.h.b16 %v2200
    %v2381 = vunpack.c.l.b16 %v2201
    %v2382 = vunpack.c.h.b16 %v2201
    %v2383 = vunpack.c.l.b16 %v2202
    %v2384 = vunpack.c.h.b16 %v2202
    %v2385 = vunpack.c.l.b16 %v2203
    %v2386 = vunpack.c.h.b16 %v2203
    %v2387 = vunpack.c.l.b16 %v2204
    %v2388 = vunpack.c.h.b16 %v2204
    %v2389 = vunpack.c.l.b16 %v2205
    %v2390 = vunpack.c.h.b16 %v2205
    %v2391 = vunpack.c.l.b16 %v2206
    %v2392 = vunpack.c.h.b16 %v2206
    %v2393 = vunpack.c.l.b16 %v2207
    %v2394 = vunpack.c.h.b16 %v2207
    %v2395 = vunpack.c.l.b16 %v2208
    %v2396 = vunpack.c.h.b16 %v2208
    %v2397 = vunpack.c.l.b16 %v2209
    %v2398 = vunpack.c.h.b16 %v2209
    %v2399 = vunpack.c.l.b16 %v2210
    %v2400 = vunpack.c.h.b16 %v2210
    %v2401 = vunpack.c.l.b16 %v2211
    %v2402 = vunpack.c.h.b16 %v2211
    %v2403 = vunpack.c.l.b16 %v2212
    %v2404 = vunpack.c.h.b16 %v2212
    %v2405 = vunpack.c.l.b16 %v2213
    %v2406 = vunpack.c.h.b16 %v2213
    %v2407 = vunpack.c.l.b16 %v2214
    %v2408 = vunpack.c.h.b16 %v2214
    %v2409 = vunpack.c.l.b16 %v2215
    %v2410 = vunpack.c.h.b16 %v2215
    %v2411 = vunpack.c.l.b16 %v2216
    %v2412 = vunpack.c.h.b16 %v2216
    %v2413 = vunpack.c.l.b16 %v2217
    %v2414 = vunpack.c.h.b16 %v2217
    %v2415 = vunpack.c.l.b16 %v2218
    %v2416 = vunpack.c.h.b16 %v2218
    %v2417 = vunpack.c.l.b16 %v2219
    %v2418 = vunpack.c.h.b16 %v2219
    %v2419 = vunpack.c.l.b16 %v2220
    %v2420 = vunpack.c.h.b16 %v2220
    %v2421 = vunpack.c.l.b16 %v2221
    %v2422 = vunpack.c.h.b16 %v2221
    %v2423 = vunpack.c.l.b16 %v2222
    %v2424 = vunpack.c.h.b16 %v2222
    %v2425 = vunpack.c.l.b16 %v2223
    %v2426 = vunpack.c.h.b16 %v2223
    %v2427 = vunpack.c.l.b16 %v2224
    %v2428 = vunpack.c.h.b16 %v2224
    %v2429 = vunpack.c.l.b16 %v2225
    %v2430 = vunpack.c.h.b16 %v2225
    %v2431 = vunpack.c.l.b16 %v2226
    %v2432 = vunpack.c.h.b16 %v2226
    %v2433 = vunpack.c.l.b16 %v2227
    %v2434 = vunpack.c.h.b16 %v2227
    %v2435 = vunpack.c.l.b16 %v2228
    %v2436 = vunpack.c.h.b16 %v2228
    %v2437 = vunpack.c.l.b16 %v2229
    %v2438 = vunpack.c.h.b16 %v2229
    %v2439 = vunpack.c.l.b16 %v2230
    %v2440 = vunpack.c.h.b16 %v2230
    %v2441 = vunpack.c.l.b16 %v2231
    %v2442 = vunpack.c.h.b16 %v2231
    %v2443 = vunpack.c.l.b16 %v2232
    %v2444 = vunpack.c.h.b16 %v2232
    %v2445 = vunpack.c.l.b16 %v2233
    %v2446 = vunpack.c.h.b16 %v2233
    %v2447 = vunpack.c.l.b16 %v2234
    %v2448 = vunpack.c.h.b16 %v2234
    %v2449 = vpack.c.b16 %v2325, %v2321
    %v2450 = vpack.c.b16 %v2326, %v2322
    %v2451 = vpack.c.b16 %v2327, %v2323
    %v2452 = vpack.c.b16 %v2328, %v2324
    %v2453 = vpack.c.b16 %v2333, %v2329
    %v2454 = vpack.c.b16 %v2334, %v2330
    %v2455 = vpack.c.b16 %v2335, %v2331
    %v2456 = vpack.c.b16 %v2336, %v2332
    %v2457 = vpack.c.b16 %v2341, %v2337
    %v2458 = vpack.c.b16 %v2342, %v2338
    %v2459 = vpack.c.b16 %v2343, %v2339
    %v2460 = vpack.c.b16 %v2344, %v2340
    %v2461 = vpack.c.b16 %v2349, %v2345
    %v2462 = vpack.c.b16 %v2350, %v2346
    %v2463 = vpack.c.b16 %v2351, %v2347
    %v2464 = vpack.c.b16 %v2352, %v2348
    %v2465 = vpack.c.b16 %v2357, %v2353
    %v2466 = vpack.c.b16 %v2358, %v2354
    %v2467 = vpack.c.b16 %v2359, %v2355
    %v2468 = vpack.c.b16 %v2360, %v2356
    %v2469 = vpack.c.b16 %v2365, %v2361
    %v2470 = vpack.c.b16 %v2366, %v2362
    %v2471 = vpack.c.b16 %v2367, %v2363
    %v2472 = vpack.c.b16 %v2368, %v2364
    %v2473 = vpack.c.b16 %v2373, %v2369
    %v2474 = vpack.c.b16 %v2374, %v2370
    %v2475 = vpack.c.b16 %v2375, %v2371
    %v2476 = vpack.c.b16 %v2376, %v2372
    %v2477 = vpack.c.b16 %v2381, %v2377
    %v2478 = vpack.c.b16 %v2382, %v2378
    %v2479 = vpack.c.b16 %v2383, %v2379
    %v2480 = vpack.c.b16 %v2384, %v2380
    %v2481 = vpack.c.b16 %v2389, %v2385
    %v2482 = vpack.c.b16 %v2390, %v2386
    %v2483 = vpack.c.b16 %v2391, %v2387
    %v2484 = vpack.c.b16 %v2392, %v2388
    %v2485 = vpack.c.b16 %v2397, %v2393
    %v2486 = vpack.c.b16 %v2398, %v2394
    %v2487 = vpack.c.b16 %v2399, %v2395
    %v2488 = vpack.c.b16 %v2400, %v2396
    %v2489 = vpack.c.b16 %v2405, %v2401
    %v2490 = vpack.c.b16 %v2406, %v2402
    %v2491 = vpack.c.b16 %v2407, %v2403
    %v2492 = vpack.c.b16 %v2408, %v2404
    %v2493 = vpack.c.b16 %v2413, %v2409
    %v2494 = vpack.c.b16 %v2414, %v2410
    %v2495 = vpack.c.b16 %v2415, %v2411
    %v2496 = vpack.c.b16 %v2416, %v2412
    %v2497 = vpack.c.b16 %v2421, %v2417
    %v2498 = vpack.c.b16 %v2422, %v2418
    %v2499 = vpack.c.b16 %v2423, %v2419
    %v2500 = vpack.c.b16 %v2424, %v2420
    %v2501 = vpack.c.b16 %v2429, %v2425
    %v2502 = vpack.c.b16 %v2430, %v2426
    %v2503 = vpack.c.b16 %v2431, %v2427
    %v2504 = vpack.c.b16 %v2432, %v2428
    %v2505 = vpack.c.b16 %v2437, %v2433
    %v2506 = vpack.c.b16 %v2438, %v2434
    %v2507 = vpack.c.b16 %v2439, %v2435
    %v2508 = vpack.c.b16 %v2440, %v2436
    %v2509 = vpack.c.b16 %v2445, %v2441
    %v2510 = vpack.c.b16 %v2446, %v2442
    %v2511 = vpack.c.b16 %v2447, %v2443
    %v2512 = vpack.c.b16 %v2448, %v2444
    %2577 = vmatprep.subr.bf16.mxu0 %v2478
    %2578 = vmatpush1.bf16.msra.mxu0 %v2477
    %2579 = vmatprep.subr.bf16.mxu0 %v2474
    %2580 = vmatpush1.bf16.msra.mxu0 %v2473
    %2581 = vmatprep.subr.bf16.mxu0 %v2470
    %2582 = vmatpush1.bf16.msra.mxu0 %v2469
    %2583 = vmatprep.subr.bf16.mxu0 %v2466
    %2584 = vmatpush1.bf16.msra.mxu0 %v2465
    %2585 = vmatprep.subr.bf16.mxu0 %v2462
    %2586 = vmatpush1.bf16.msra.mxu0 %v2461
    %2587 = vmatprep.subr.bf16.mxu0 %v2458
    %2588 = vmatpush1.bf16.msra.mxu0 %v2457
    %2589 = vmatprep.subr.bf16.mxu0 %v2454
    %2590 = vmatpush1.bf16.msra.mxu0 %v2453
    %2591 = vmatprep.subr.bf16.mxu0 %v2450
    %2592 = vmatpush1.bf16.msra.mxu0 %v2449
    %2593 = vmatprep.subr.bf16.mxu0 %v2510
    %2594 = vmatpush2.bf16.msra.mxu0 %v2509
    %2595 = vmatprep.subr.bf16.mxu0 %v2506
    %2596 = vmatpush2.bf16.msra.mxu0 %v2505
    %2597 = vmatprep.subr.bf16.mxu0 %v2502
    %2598 = vmatpush2.bf16.msra.mxu0 %v2501
    %2599 = vmatprep.subr.bf16.mxu0 %v2498
    %2600 = vmatpush2.bf16.msra.mxu0 %v2497
    %2601 = vmatprep.subr.bf16.mxu0 %v2494
    %2602 = vmatpush2.bf16.msra.mxu0 %v2493
    %2603 = vmatprep.subr.bf16.mxu0 %v2490
    %2604 = vmatpush2.bf16.msra.mxu0 %v2489
    %2605 = vmatprep.subr.bf16.mxu0 %v2486
    %2606 = vmatpush2.bf16.msra.mxu0 %v2485
    %2607 = vmatprep.subr.bf16.mxu0 %v2482
    %2608 = vmatpush2.bf16.msra.mxu0 %v2481
    %2609 = vmatprep.mubr.bf16.mxu0 %v2170
    %2610 = vmatmul.mubr.bf16.gmra.mxu0 %v2169
    %v2611 = vpop.f32.mrf.mxu0
    %v2612 = vadd.f32 %v2240, %v2611
    %v2613 = vpop.f32.mrf.mxu0
    %v2614 = vadd.f32 %v2244, %v2613
    %v2615 = vpop.f32.mrf.mxu0
    %v2616 = vpop.f32.mrf.mxu0
    %2617 = vdwg.mxu0
    %2618 = vmatprep.subr.bf16.mxu0 %v2480
    %2619 = vmatpush1.bf16.msra.mxu0 %v2479
    %2620 = vmatprep.subr.bf16.mxu0 %v2476
    %2621 = vmatpush1.bf16.msra.mxu0 %v2475
    %2622 = vmatprep.subr.bf16.mxu0 %v2472
    %2623 = vmatpush1.bf16.msra.mxu0 %v2471
    %2624 = vmatprep.subr.bf16.mxu0 %v2468
    %2625 = vmatpush1.bf16.msra.mxu0 %v2467
    %2626 = vmatprep.subr.bf16.mxu0 %v2464
    %2627 = vmatpush1.bf16.msra.mxu0 %v2463
    %2628 = vmatprep.subr.bf16.mxu0 %v2460
    %2629 = vmatpush1.bf16.msra.mxu0 %v2459
    %2630 = vmatprep.subr.bf16.mxu0 %v2456
    %2631 = vmatpush1.bf16.msra.mxu0 %v2455
    %2632 = vmatprep.subr.bf16.mxu0 %v2452
    %2633 = vmatpush1.bf16.msra.mxu0 %v2451
    %2634 = vmatprep.subr.bf16.mxu0 %v2512
    %2635 = vmatpush2.bf16.msra.mxu0 %v2511
    %2636 = vmatprep.subr.bf16.mxu0 %v2508
    %2637 = vmatpush2.bf16.msra.mxu0 %v2507
    %2638 = vmatprep.subr.bf16.mxu0 %v2504
    %2639 = vmatpush2.bf16.msra.mxu0 %v2503
    %2640 = vmatprep.subr.bf16.mxu0 %v2500
    %2641 = vmatpush2.bf16.msra.mxu0 %v2499
    %2642 = vmatprep.subr.bf16.mxu0 %v2496
    %2643 = vmatpush2.bf16.msra.mxu0 %v2495
    %2644 = vmatprep.subr.bf16.mxu0 %v2492
    %2645 = vmatpush2.bf16.msra.mxu0 %v2491
    %2646 = vmatprep.subr.bf16.mxu0 %v2488
    %2647 = vmatpush2.bf16.msra.mxu0 %v2487
    %2648 = vmatprep.subr.bf16.mxu0 %v2484
    %2649 = vmatpush2.bf16.msra.mxu0 %v2483
    %2650 = vmatprep.mubr.bf16.mxu0 %v2170
    %2651 = vmatmul.mubr.bf16.gmra.mxu0 %v2169
    %v2652 = vpop.f32.mrf.mxu0
    %v2653 = vadd.f32 %v2248, %v2652
    %v2654 = vpop.f32.mrf.mxu0
    %v2655 = vadd.f32 %v2252, %v2654
    %v2656 = vpop.f32.mrf.mxu0
    %v2657 = vpop.f32.mrf.mxu0
    %2658 = vdwg.mxu0
    %v2659 = vxor.u32 %v2612, 2147483648
    %v2660 = vmul.f32 %v2659, 1.442695
    %v2661 = vpow.pop %v2660
    %v2662 = vadd.f32 %v2661, 1.0
    %v2663 = vrcp.pop %v2662
    %v2664 = vmul.f32 1.0, %v2663
    %v2665 = vxor.u32 %v2614, 2147483648
    %v2666 = vmul.f32 %v2665, 1.442695
    %v2667 = vpow.pop %v2666
    %v2668 = vadd.f32 %v2667, 1.0
    %v2669 = vrcp.pop %v2668
    %v2670 = vmul.f32 1.0, %v2669
    %v2671 = vtanh.pop %v2653
    %v2672 = vxor.u32 %v2655, 2147483648
    %v2673 = vmul.f32 %v2672, 1.442695
    %v2674 = vpow.pop %v2673
    %v2675 = vadd.f32 %v2674, 1.0
    %v2676 = vrcp.pop %v2675
    %v2677 = vmul.f32 1.0, %v2676
    %v2678 = vld [vmem:[#allocation3] sm:$0xff]
    %v2679 = vmul.f32 %v2670, %v2678
    %v2680 = vmul.f32 %v2664, %v2671
    %v2681 = vadd.f32 %v2679, %v2680
    %v2682 = vtanh.pop %v2681
    %v2683 = vmul.f32 %v2677, %v2682
    %2684 = vst [vmem:[#allocation3] sm:$0xff] %v2681
    %2685 = vst [vmem:[#allocation2 + $0x8] sm:$0xff] %v2683
    %s2686 = sld [smem:[#allocation5 + $0x10]]
    %v2687 = vstv %s2686
    %v2688 = vsel %vm122, %v2687, 4294967295
    %s2689 = sld [smem:[#allocation5 + $0x11]]
    %v2690 = vstv %s2689
    %v2691 = vsel %vm126, %v2690, %v2688
    %s2692 = sld [smem:[#allocation5 + $0x12]]
    %v2693 = vstv %s2692
    %v2694 = vsel %vm130, %v2693, %v2691
    %s2695 = sld [smem:[#allocation5 + $0x13]]
    %v2696 = vstv %s2695
    %v2697 = vsel %vm134, %v2696, %v2694
    %vm2698 = vcmp.eq.s32.totalorder %v121, %v2697
    %v2699 = vsel %vm2698, 1, 0
    %v2700 = vcvt.s32.f32 %v2699
    %v2701 = vpack.c.bf16 %v2700, %v2700
    %v2702 = vld [vmem:[#allocation8] sm:$0xf]
    %v2703 = vld [vmem:[#allocation8 + $0x4] sm:$0xf]
    %v2704 = vld [vmem:[#allocation8 + $0x8] sm:$0xf]
    %v2705 = vld [vmem:[#allocation8 + $0xc] sm:$0xf]
    %v2706 = vld [vmem:[#allocation8 + $0x10] sm:$0xf]
    %v2707 = vld [vmem:[#allocation8 + $0x14] sm:$0xf]
    %v2708 = vld [vmem:[#allocation8 + $0x18] sm:$0xf]
    %v2709 = vld [vmem:[#allocation8 + $0x1c] sm:$0xf]
    %v2710 = vld [vmem:[#allocation8 + $0x20] sm:$0xf]
    %v2711 = vld [vmem:[#allocation8 + $0x24] sm:$0xf]
    %v2712 = vld [vmem:[#allocation8 + $0x28] sm:$0xf]
    %v2713 = vld [vmem:[#allocation8 + $0x2c] sm:$0xf]
    %v2714 = vld [vmem:[#allocation8 + $0x30] sm:$0xf]
    %v2715 = vld [vmem:[#allocation8 + $0x34] sm:$0xf]
    %v2716 = vld [vmem:[#allocation8 + $0x38] sm:$0xf]
    %v2717 = vld [vmem:[#allocation8 + $0x3c] sm:$0xf]
    %v2734 = vunpack.c.l.b16 %v2702
    %v2735 = vunpack.c.l.b16 %v2703
    %v2736 = vunpack.c.l.b16 %v2704
    %v2737 = vunpack.c.l.b16 %v2705
    %v2738 = vunpack.c.l.b16 %v2706
    %v2739 = vunpack.c.l.b16 %v2707
    %v2740 = vunpack.c.l.b16 %v2708
    %v2741 = vunpack.c.l.b16 %v2709
    %v2742 = vunpack.c.l.b16 %v2710
    %v2743 = vunpack.c.l.b16 %v2711
    %v2744 = vunpack.c.l.b16 %v2712
    %v2745 = vunpack.c.l.b16 %v2713
    %v2746 = vunpack.c.l.b16 %v2714
    %v2747 = vunpack.c.l.b16 %v2715
    %v2748 = vunpack.c.l.b16 %v2716
    %v2749 = vunpack.c.l.b16 %v2717
    %v2750 = vpack.c.b16 %v2735, %v2734
    %v2751 = vpack.c.b16 %v2737, %v2736
    %v2752 = vpack.c.b16 %v2739, %v2738
    %v2753 = vpack.c.b16 %v2741, %v2740
    %v2754 = vpack.c.b16 %v2743, %v2742
    %v2755 = vpack.c.b16 %v2745, %v2744
    %v2756 = vpack.c.b16 %v2747, %v2746
    %v2757 = vpack.c.b16 %v2749, %v2748
    %2766 = vmatprep.subr.bf16.mxu0 0
    %2767 = vmatpush1.bf16.msra.mxu0 %v2757
    %2768 = vmatprep.subr.bf16.mxu0 0
    %2769 = vmatpush1.bf16.msra.mxu0 %v2756
    %2770 = vmatprep.subr.bf16.mxu0 0
    %2771 = vmatpush1.bf16.msra.mxu0 %v2755
    %2772 = vmatprep.subr.bf16.mxu0 0
    %2773 = vmatpush1.bf16.msra.mxu0 %v2754
    %2774 = vmatprep.subr.bf16.mxu0 0
    %2775 = vmatpush1.bf16.msra.mxu0 %v2753
    %2776 = vmatprep.subr.bf16.mxu0 0
    %2777 = vmatpush1.bf16.msra.mxu0 %v2752
    %2778 = vmatprep.subr.bf16.mxu0 0
    %2779 = vmatpush1.bf16.msra.mxu0 %v2751
    %2780 = vmatprep.subr.bf16.mxu0 0
    %2781 = vmatpush1.bf16.msra.mxu0 %v2750
    %2782 = vmatprep.subr.bf16.mxu0 0
    %2783 = vmatpush2.bf16.msra.mxu0 0
    %2784 = vmatprep.subr.bf16.mxu0 0
    %2785 = vmatpush2.bf16.msra.mxu0 0
    %2786 = vmatprep.subr.bf16.mxu0 0
    %2787 = vmatpush2.bf16.msra.mxu0 0
    %2788 = vmatprep.subr.bf16.mxu0 0
    %2789 = vmatpush2.bf16.msra.mxu0 0
    %2790 = vmatprep.subr.bf16.mxu0 0
    %2791 = vmatpush2.bf16.msra.mxu0 0
    %2792 = vmatprep.subr.bf16.mxu0 0
    %2793 = vmatpush2.bf16.msra.mxu0 0
    %2794 = vmatprep.subr.bf16.mxu0 0
    %2795 = vmatpush2.bf16.msra.mxu0 0
    %2796 = vmatprep.subr.bf16.mxu0 0
    %2797 = vmatpush2.bf16.msra.mxu0 0
    %2798 = vmatprep.mubr.bf16.mxu0 0
    %2799 = vmatmul.mubr.bf16.gmra.mxu0 %v2701
    %v2800 = vpop.f32.mrf.mxu0
    %v2801 = vadd.f32 0.0, %v2800
    %v2802 = vpop.f32.mrf.mxu0
    %v2803 = vpop.f32.mrf.mxu0
    %v2804 = vpop.f32.mrf.mxu0
    %2805 = vdwg.mxu0
    %2806 = vst [vmem:[#allocation2] sm:$0xff] %v2801
    %v2807 = vld [vmem:[#allocation2] sm:$0xff]
    %v2808 = vld [vmem:[#allocation2 + $0x8] sm:$0xff]
    %v2809 = vpack.c.bf16 %v2807, %v2807
    %v2810 = vpack.c.bf16 %v2808, %v2808
    %v2811 = vld [vmem:[#allocation10] sm:$0xff]
    %v2812 = vld [vmem:[#allocation10 + $0x8] sm:$0xff]
    %v2813 = vld [vmem:[#allocation10 + $0x10] sm:$0xff]
    %v2814 = vld [vmem:[#allocation10 + $0x18] sm:$0xff]
    %v2815 = vld [vmem:[#allocation10 + $0x20] sm:$0xff]
    %v2816 = vld [vmem:[#allocation10 + $0x28] sm:$0xff]
    %v2817 = vld [vmem:[#allocation10 + $0x30] sm:$0xff]
    %v2818 = vld [vmem:[#allocation10 + $0x38] sm:$0xff]
    %v2819 = vld [vmem:[#allocation10 + $0x40] sm:$0xff]
    %v2820 = vld [vmem:[#allocation10 + $0x48] sm:$0xff]
    %v2821 = vld [vmem:[#allocation10 + $0x50] sm:$0xff]
    %v2822 = vld [vmem:[#allocation10 + $0x58] sm:$0xff]
    %v2823 = vld [vmem:[#allocation10 + $0x60] sm:$0xff]
    %v2824 = vld [vmem:[#allocation10 + $0x68] sm:$0xff]
    %v2825 = vld [vmem:[#allocation10 + $0x70] sm:$0xff]
    %v2826 = vld [vmem:[#allocation10 + $0x78] sm:$0xff]
    %v2827 = vld [vmem:[#allocation10 + $0x80] sm:$0xff]
    %v2828 = vld [vmem:[#allocation10 + $0x88] sm:$0xff]
    %v2829 = vld [vmem:[#allocation10 + $0x90] sm:$0xff]
    %v2830 = vld [vmem:[#allocation10 + $0x98] sm:$0xff]
    %v2831 = vld [vmem:[#allocation10 + $0xa0] sm:$0xff]
    %v2832 = vld [vmem:[#allocation10 + $0xa8] sm:$0xff]
    %v2833 = vld [vmem:[#allocation10 + $0xb0] sm:$0xff]
    %v2834 = vld [vmem:[#allocation10 + $0xb8] sm:$0xff]
    %v2835 = vld [vmem:[#allocation10 + $0xc0] sm:$0xff]
    %v2836 = vld [vmem:[#allocation10 + $0xc8] sm:$0xff]
    %v2837 = vld [vmem:[#allocation10 + $0xd0] sm:$0xff]
    %v2838 = vld [vmem:[#allocation10 + $0xd8] sm:$0xff]
    %v2839 = vld [vmem:[#allocation10 + $0xe0] sm:$0xff]
    %v2840 = vld [vmem:[#allocation10 + $0xe8] sm:$0xff]
    %v2841 = vld [vmem:[#allocation10 + $0xf0] sm:$0xff]
    %v2842 = vld [vmem:[#allocation10 + $0xf8] sm:$0xff]
    %v2843 = vld [vmem:[#allocation10 + $0x100] sm:$0xff]
    %v2844 = vld [vmem:[#allocation10 + $0x108] sm:$0xff]
    %v2845 = vld [vmem:[#allocation10 + $0x110] sm:$0xff]
    %v2846 = vld [vmem:[#allocation10 + $0x118] sm:$0xff]
    %v2847 = vld [vmem:[#allocation10 + $0x120] sm:$0xff]
    %v2848 = vld [vmem:[#allocation10 + $0x128] sm:$0xff]
    %v2849 = vld [vmem:[#allocation10 + $0x130] sm:$0xff]
    %v2850 = vld [vmem:[#allocation10 + $0x138] sm:$0xff]
    %v2851 = vld [vmem:[#allocation10 + $0x140] sm:$0xff]
    %v2852 = vld [vmem:[#allocation10 + $0x148] sm:$0xff]
    %v2853 = vld [vmem:[#allocation10 + $0x150] sm:$0xff]
    %v2854 = vld [vmem:[#allocation10 + $0x158] sm:$0xff]
    %v2855 = vld [vmem:[#allocation10 + $0x160] sm:$0xff]
    %v2856 = vld [vmem:[#allocation10 + $0x168] sm:$0xff]
    %v2857 = vld [vmem:[#allocation10 + $0x170] sm:$0xff]
    %v2858 = vld [vmem:[#allocation10 + $0x178] sm:$0xff]
    %v2859 = vld [vmem:[#allocation10 + $0x180] sm:$0xff]
    %v2860 = vld [vmem:[#allocation10 + $0x188] sm:$0xff]
    %v2861 = vld [vmem:[#allocation10 + $0x190] sm:$0xff]
    %v2862 = vld [vmem:[#allocation10 + $0x198] sm:$0xff]
    %v2863 = vld [vmem:[#allocation10 + $0x1a0] sm:$0xff]
    %v2864 = vld [vmem:[#allocation10 + $0x1a8] sm:$0xff]
    %v2865 = vld [vmem:[#allocation10 + $0x1b0] sm:$0xff]
    %v2866 = vld [vmem:[#allocation10 + $0x1b8] sm:$0xff]
    %v2867 = vld [vmem:[#allocation10 + $0x1c0] sm:$0xff]
    %v2868 = vld [vmem:[#allocation10 + $0x1c8] sm:$0xff]
    %v2869 = vld [vmem:[#allocation10 + $0x1d0] sm:$0xff]
    %v2870 = vld [vmem:[#allocation10 + $0x1d8] sm:$0xff]
    %v2871 = vld [vmem:[#allocation10 + $0x1e0] sm:$0xff]
    %v2872 = vld [vmem:[#allocation10 + $0x1e8] sm:$0xff]
    %v2873 = vld [vmem:[#allocation10 + $0x1f0] sm:$0xff]
    %v2874 = vld [vmem:[#allocation10 + $0x1f8] sm:$0xff]
    %v2875 = vld [vmem:[%s5] sm:$0xf]
    %v2877 = vlaneseq
    %v2878 = vshrl.u32 %v2877, 7
    %v2879 = vsub.s32 0, %v2878
    %v2880 = vrot.slane %v2875, %v2879
    %v2881 = vlaneseq
    %v2882 = vshrl.u32 %v2881, 7
    %v2883 = vsub.s32 1, %v2882
    %v2884 = vrot.slane %v2875, %v2883
    %v2885 = vlaneseq
    %v2886 = vshrl.u32 %v2885, 7
    %v2887 = vsub.s32 2, %v2886
    %v2888 = vrot.slane %v2875, %v2887
    %v2889 = vlaneseq
    %v2890 = vshrl.u32 %v2889, 7
    %v2891 = vsub.s32 3, %v2890
    %v2892 = vrot.slane %v2875, %v2891
    %v2961 = vunpack.c.l.b16 %v2811
    %v2962 = vunpack.c.h.b16 %v2811
    %v2963 = vunpack.c.l.b16 %v2812
    %v2964 = vunpack.c.h.b16 %v2812
    %v2965 = vunpack.c.l.b16 %v2813
    %v2966 = vunpack.c.h.b16 %v2813
    %v2967 = vunpack.c.l.b16 %v2814
    %v2968 = vunpack.c.h.b16 %v2814
    %v2969 = vunpack.c.l.b16 %v2815
    %v2970 = vunpack.c.h.b16 %v2815
    %v2971 = vunpack.c.l.b16 %v2816
    %v2972 = vunpack.c.h.b16 %v2816
    %v2973 = vunpack.c.l.b16 %v2817
    %v2974 = vunpack.c.h.b16 %v2817
    %v2975 = vunpack.c.l.b16 %v2818
    %v2976 = vunpack.c.h.b16 %v2818
    %v2977 = vunpack.c.l.b16 %v2819
    %v2978 = vunpack.c.h.b16 %v2819
    %v2979 = vunpack.c.l.b16 %v2820
    %v2980 = vunpack.c.h.b16 %v2820
    %v2981 = vunpack.c.l.b16 %v2821
    %v2982 = vunpack.c.h.b16 %v2821
    %v2983 = vunpack.c.l.b16 %v2822
    %v2984 = vunpack.c.h.b16 %v2822
    %v2985 = vunpack.c.l.b16 %v2823
    %v2986 = vunpack.c.h.b16 %v2823
    %v2987 = vunpack.c.l.b16 %v2824
    %v2988 = vunpack.c.h.b16 %v2824
    %v2989 = vunpack.c.l.b16 %v2825
    %v2990 = vunpack.c.h.b16 %v2825
    %v2991 = vunpack.c.l.b16 %v2826
    %v2992 = vunpack.c.h.b16 %v2826
    %v2993 = vunpack.c.l.b16 %v2827
    %v2994 = vunpack.c.h.b16 %v2827
    %v2995 = vunpack.c.l.b16 %v2828
    %v2996 = vunpack.c.h.b16 %v2828
    %v2997 = vunpack.c.l.b16 %v2829
    %v2998 = vunpack.c.h.b16 %v2829
    %v2999 = vunpack.c.l.b16 %v2830
    %v3000 = vunpack.c.h.b16 %v2830
    %v3001 = vunpack.c.l.b16 %v2831
    %v3002 = vunpack.c.h.b16 %v2831
    %v3003 = vunpack.c.l.b16 %v2832
    %v3004 = vunpack.c.h.b16 %v2832
    %v3005 = vunpack.c.l.b16 %v2833
    %v3006 = vunpack.c.h.b16 %v2833
    %v3007 = vunpack.c.l.b16 %v2834
    %v3008 = vunpack.c.h.b16 %v2834
    %v3009 = vunpack.c.l.b16 %v2835
    %v3010 = vunpack.c.h.b16 %v2835
    %v3011 = vunpack.c.l.b16 %v2836
    %v3012 = vunpack.c.h.b16 %v2836
    %v3013 = vunpack.c.l.b16 %v2837
    %v3014 = vunpack.c.h.b16 %v2837
    %v3015 = vunpack.c.l.b16 %v2838
    %v3016 = vunpack.c.h.b16 %v2838
    %v3017 = vunpack.c.l.b16 %v2839
    %v3018 = vunpack.c.h.b16 %v2839
    %v3019 = vunpack.c.l.b16 %v2840
    %v3020 = vunpack.c.h.b16 %v2840
    %v3021 = vunpack.c.l.b16 %v2841
    %v3022 = vunpack.c.h.b16 %v2841
    %v3023 = vunpack.c.l.b16 %v2842
    %v3024 = vunpack.c.h.b16 %v2842
    %v3025 = vunpack.c.l.b16 %v2843
    %v3026 = vunpack.c.h.b16 %v2843
    %v3027 = vunpack.c.l.b16 %v2844
    %v3028 = vunpack.c.h.b16 %v2844
    %v3029 = vunpack.c.l.b16 %v2845
    %v3030 = vunpack.c.h.b16 %v2845
    %v3031 = vunpack.c.l.b16 %v2846
    %v3032 = vunpack.c.h.b16 %v2846
    %v3033 = vunpack.c.l.b16 %v2847
    %v3034 = vunpack.c.h.b16 %v2847
    %v3035 = vunpack.c.l.b16 %v2848
    %v3036 = vunpack.c.h.b16 %v2848
    %v3037 = vunpack.c.l.b16 %v2849
    %v3038 = vunpack.c.h.b16 %v2849
    %v3039 = vunpack.c.l.b16 %v2850
    %v3040 = vunpack.c.h.b16 %v2850
    %v3041 = vunpack.c.l.b16 %v2851
    %v3042 = vunpack.c.h.b16 %v2851
    %v3043 = vunpack.c.l.b16 %v2852
    %v3044 = vunpack.c.h.b16 %v2852
    %v3045 = vunpack.c.l.b16 %v2853
    %v3046 = vunpack.c.h.b16 %v2853
    %v3047 = vunpack.c.l.b16 %v2854
    %v3048 = vunpack.c.h.b16 %v2854
    %v3049 = vunpack.c.l.b16 %v2855
    %v3050 = vunpack.c.h.b16 %v2855
    %v3051 = vunpack.c.l.b16 %v2856
    %v3052 = vunpack.c.h.b16 %v2856
    %v3053 = vunpack.c.l.b16 %v2857
    %v3054 = vunpack.c.h.b16 %v2857
    %v3055 = vunpack.c.l.b16 %v2858
    %v3056 = vunpack.c.h.b16 %v2858
    %v3057 = vunpack.c.l.b16 %v2859
    %v3058 = vunpack.c.h.b16 %v2859
    %v3059 = vunpack.c.l.b16 %v2860
    %v3060 = vunpack.c.h.b16 %v2860
    %v3061 = vunpack.c.l.b16 %v2861
    %v3062 = vunpack.c.h.b16 %v2861
    %v3063 = vunpack.c.l.b16 %v2862
    %v3064 = vunpack.c.h.b16 %v2862
    %v3065 = vunpack.c.l.b16 %v2863
    %v3066 = vunpack.c.h.b16 %v2863
    %v3067 = vunpack.c.l.b16 %v2864
    %v3068 = vunpack.c.h.b16 %v2864
    %v3069 = vunpack.c.l.b16 %v2865
    %v3070 = vunpack.c.h.b16 %v2865
    %v3071 = vunpack.c.l.b16 %v2866
    %v3072 = vunpack.c.h.b16 %v2866
    %v3073 = vunpack.c.l.b16 %v2867
    %v3074 = vunpack.c.h.b16 %v2867
    %v3075 = vunpack.c.l.b16 %v2868
    %v3076 = vunpack.c.h.b16 %v2868
    %v3077 = vunpack.c.l.b16 %v2869
    %v3078 = vunpack.c.h.b16 %v2869
    %v3079 = vunpack.c.l.b16 %v2870
    %v3080 = vunpack.c.h.b16 %v2870
    %v3081 = vunpack.c.l.b16 %v2871
    %v3082 = vunpack.c.h.b16 %v2871
    %v3083 = vunpack.c.l.b16 %v2872
    %v3084 = vunpack.c.h.b16 %v2872
    %v3085 = vunpack.c.l.b16 %v2873
    %v3086 = vunpack.c.h.b16 %v2873
    %v3087 = vunpack.c.l.b16 %v2874
    %v3088 = vunpack.c.h.b16 %v2874
    %v3089 = vpack.c.b16 %v2965, %v2961
    %v3090 = vpack.c.b16 %v2966, %v2962
    %v3091 = vpack.c.b16 %v2967, %v2963
    %v3092 = vpack.c.b16 %v2968, %v2964
    %v3093 = vpack.c.b16 %v2973, %v2969
    %v3094 = vpack.c.b16 %v2974, %v2970
    %v3095 = vpack.c.b16 %v2975, %v2971
    %v3096 = vpack.c.b16 %v2976, %v2972
    %v3097 = vpack.c.b16 %v2981, %v2977
    %v3098 = vpack.c.b16 %v2982, %v2978
    %v3099 = vpack.c.b16 %v2983, %v2979
    %v3100 = vpack.c.b16 %v2984, %v2980
    %v3101 = vpack.c.b16 %v2989, %v2985
    %v3102 = vpack.c.b16 %v2990, %v2986
    %v3103 = vpack.c.b16 %v2991, %v2987
    %v3104 = vpack.c.b16 %v2992, %v2988
    %v3105 = vpack.c.b16 %v2997, %v2993
    %v3106 = vpack.c.b16 %v2998, %v2994
    %v3107 = vpack.c.b16 %v2999, %v2995
    %v3108 = vpack.c.b16 %v3000, %v2996
    %v3109 = vpack.c.b16 %v3005, %v3001
    %v3110 = vpack.c.b16 %v3006, %v3002
    %v3111 = vpack.c.b16 %v3007, %v3003
    %v3112 = vpack.c.b16 %v3008, %v3004
    %v3113 = vpack.c.b16 %v3013, %v3009
    %v3114 = vpack.c.b16 %v3014, %v3010
    %v3115 = vpack.c.b16 %v3015, %v3011
    %v3116 = vpack.c.b16 %v3016, %v3012
    %v3117 = vpack.c.b16 %v3021, %v3017
    %v3118 = vpack.c.b16 %v3022, %v3018
    %v3119 = vpack.c.b16 %v3023, %v3019
    %v3120 = vpack.c.b16 %v3024, %v3020
    %v3121 = vpack.c.b16 %v3029, %v3025
    %v3122 = vpack.c.b16 %v3030, %v3026
    %v3123 = vpack.c.b16 %v3031, %v3027
    %v3124 = vpack.c.b16 %v3032, %v3028
    %v3125 = vpack.c.b16 %v3037, %v3033
    %v3126 = vpack.c.b16 %v3038, %v3034
    %v3127 = vpack.c.b16 %v3039, %v3035
    %v3128 = vpack.c.b16 %v3040, %v3036
    %v3129 = vpack.c.b16 %v3045, %v3041
    %v3130 = vpack.c.b16 %v3046, %v3042
    %v3131 = vpack.c.b16 %v3047, %v3043
    %v3132 = vpack.c.b16 %v3048, %v3044
    %v3133 = vpack.c.b16 %v3053, %v3049
    %v3134 = vpack.c.b16 %v3054, %v3050
    %v3135 = vpack.c.b16 %v3055, %v3051
    %v3136 = vpack.c.b16 %v3056, %v3052
    %v3137 = vpack.c.b16 %v3061, %v3057
    %v3138 = vpack.c.b16 %v3062, %v3058
    %v3139 = vpack.c.b16 %v3063, %v3059
    %v3140 = vpack.c.b16 %v3064, %v3060
    %v3141 = vpack.c.b16 %v3069, %v3065
    %v3142 = vpack.c.b16 %v3070, %v3066
    %v3143 = vpack.c.b16 %v3071, %v3067
    %v3144 = vpack.c.b16 %v3072, %v3068
    %v3145 = vpack.c.b16 %v3077, %v3073
    %v3146 = vpack.c.b16 %v3078, %v3074
    %v3147 = vpack.c.b16 %v3079, %v3075
    %v3148 = vpack.c.b16 %v3080, %v3076
    %v3149 = vpack.c.b16 %v3085, %v3081
    %v3150 = vpack.c.b16 %v3086, %v3082
    %v3151 = vpack.c.b16 %v3087, %v3083
    %v3152 = vpack.c.b16 %v3088, %v3084
    %3217 = vmatprep.subr.bf16.mxu0 %v3118
    %3218 = vmatpush1.bf16.msra.mxu0 %v3117
    %3219 = vmatprep.subr.bf16.mxu0 %v3114
    %3220 = vmatpush1.bf16.msra.mxu0 %v3113
    %3221 = vmatprep.subr.bf16.mxu0 %v3110
    %3222 = vmatpush1.bf16.msra.mxu0 %v3109
    %3223 = vmatprep.subr.bf16.mxu0 %v3106
    %3224 = vmatpush1.bf16.msra.mxu0 %v3105
    %3225 = vmatprep.subr.bf16.mxu0 %v3102
    %3226 = vmatpush1.bf16.msra.mxu0 %v3101
    %3227 = vmatprep.subr.bf16.mxu0 %v3098
    %3228 = vmatpush1.bf16.msra.mxu0 %v3097
    %3229 = vmatprep.subr.bf16.mxu0 %v3094
    %3230 = vmatpush1.bf16.msra.mxu0 %v3093
    %3231 = vmatprep.subr.bf16.mxu0 %v3090
    %3232 = vmatpush1.bf16.msra.mxu0 %v3089
    %3233 = vmatprep.subr.bf16.mxu0 %v3150
    %3234 = vmatpush2.bf16.msra.mxu0 %v3149
    %3235 = vmatprep.subr.bf16.mxu0 %v3146
    %3236 = vmatpush2.bf16.msra.mxu0 %v3145
    %3237 = vmatprep.subr.bf16.mxu0 %v3142
    %3238 = vmatpush2.bf16.msra.mxu0 %v3141
    %3239 = vmatprep.subr.bf16.mxu0 %v3138
    %3240 = vmatpush2.bf16.msra.mxu0 %v3137
    %3241 = vmatprep.subr.bf16.mxu0 %v3134
    %3242 = vmatpush2.bf16.msra.mxu0 %v3133
    %3243 = vmatprep.subr.bf16.mxu0 %v3130
    %3244 = vmatpush2.bf16.msra.mxu0 %v3129
    %3245 = vmatprep.subr.bf16.mxu0 %v3126
    %3246 = vmatpush2.bf16.msra.mxu0 %v3125
    %3247 = vmatprep.subr.bf16.mxu0 %v3122
    %3248 = vmatpush2.bf16.msra.mxu0 %v3121
    %3249 = vmatprep.mubr.bf16.mxu0 %v2810
    %3250 = vmatmul.mubr.bf16.gmra.mxu0 %v2809
    %v3251 = vpop.f32.mrf.mxu0
    %v3252 = vadd.f32 %v2880, %v3251
    %v3253 = vpop.f32.mrf.mxu0
    %v3254 = vadd.f32 %v2884, %v3253
    %v3255 = vpop.f32.mrf.mxu0
    %v3256 = vpop.f32.mrf.mxu0
    %3257 = vdwg.mxu0
    %3258 = vmatprep.subr.bf16.mxu0 %v3120
    %3259 = vmatpush1.bf16.msra.mxu0 %v3119
    %3260 = vmatprep.subr.bf16.mxu0 %v3116
    %3261 = vmatpush1.bf16.msra.mxu0 %v3115
    %3262 = vmatprep.subr.bf16.mxu0 %v3112
    %3263 = vmatpush1.bf16.msra.mxu0 %v3111
    %3264 = vmatprep.subr.bf16.mxu0 %v3108
    %3265 = vmatpush1.bf16.msra.mxu0 %v3107
    %3266 = vmatprep.subr.bf16.mxu0 %v3104
    %3267 = vmatpush1.bf16.msra.mxu0 %v3103
    %3268 = vmatprep.subr.bf16.mxu0 %v3100
    %3269 = vmatpush1.bf16.msra.mxu0 %v3099
    %3270 = vmatprep.subr.bf16.mxu0 %v3096
    %3271 = vmatpush1.bf16.msra.mxu0 %v3095
    %3272 = vmatprep.subr.bf16.mxu0 %v3092
    %3273 = vmatpush1.bf16.msra.mxu0 %v3091
    %3274 = vmatprep.subr.bf16.mxu0 %v3152
    %3275 = vmatpush2.bf16.msra.mxu0 %v3151
    %3276 = vmatprep.subr.bf16.mxu0 %v3148
    %3277 = vmatpush2.bf16.msra.mxu0 %v3147
    %3278 = vmatprep.subr.bf16.mxu0 %v3144
    %3279 = vmatpush2.bf16.msra.mxu0 %v3143
    %3280 = vmatprep.subr.bf16.mxu0 %v3140
    %3281 = vmatpush2.bf16.msra.mxu0 %v3139
    %3282 = vmatprep.subr.bf16.mxu0 %v3136
    %3283 = vmatpush2.bf16.msra.mxu0 %v3135
    %3284 = vmatprep.subr.bf16.mxu0 %v3132
    %3285 = vmatpush2.bf16.msra.mxu0 %v3131
    %3286 = vmatprep.subr.bf16.mxu0 %v3128
    %3287 = vmatpush2.bf16.msra.mxu0 %v3127
    %3288 = vmatprep.subr.bf16.mxu0 %v3124
    %3289 = vmatpush2.bf16.msra.mxu0 %v3123
    %3290 = vmatprep.mubr.bf16.mxu0 %v2810
    %3291 = vmatmul.mubr.bf16.gmra.mxu0 %v2809
    %v3292 = vpop.f32.mrf.mxu0
    %v3293 = vadd.f32 %v2888, %v3292
    %v3294 = vpop.f32.mrf.mxu0
    %v3295 = vadd.f32 %v2892, %v3294
    %v3296 = vpop.f32.mrf.mxu0
    %v3297 = vpop.f32.mrf.mxu0
    %3298 = vdwg.mxu0
    %v3299 = vxor.u32 %v3252, 2147483648
    %v3300 = vmul.f32 %v3299, 1.442695
    %v3301 = vpow.pop %v3300
    %v3302 = vadd.f32 %v3301, 1.0
    %v3303 = vrcp.pop %v3302
    %v3304 = vmul.f32 1.0, %v3303
    %v3305 = vxor.u32 %v3254, 2147483648
    %v3306 = vmul.f32 %v3305, 1.442695
    %v3307 = vpow.pop %v3306
    %v3308 = vadd.f32 %v3307, 1.0
    %v3309 = vrcp.pop %v3308
    %v3310 = vmul.f32 1.0, %v3309
    %v3311 = vtanh.pop %v3293
    %v3312 = vxor.u32 %v3295, 2147483648
    %v3313 = vmul.f32 %v3312, 1.442695
    %v3314 = vpow.pop %v3313
    %v3315 = vadd.f32 %v3314, 1.0
    %v3316 = vrcp.pop %v3315
    %v3317 = vmul.f32 1.0, %v3316
    %v3318 = vld [vmem:[#allocation3] sm:$0xff]
    %v3319 = vmul.f32 %v3310, %v3318
    %v3320 = vmul.f32 %v3304, %v3311
    %v3321 = vadd.f32 %v3319, %v3320
    %v3322 = vtanh.pop %v3321
    %v3323 = vmul.f32 %v3317, %v3322
    %3324 = vst [vmem:[#allocation3] sm:$0xff] %v3321
    %3325 = vst [vmem:[#allocation2 + $0x8] sm:$0xff] %v3323
    %s3326 = sld [smem:[#allocation5 + $0x14]]
    %v3327 = vstv %s3326
    %v3328 = vsel %vm122, %v3327, 4294967295
    %s3329 = sld [smem:[#allocation5 + $0x15]]
    %v3330 = vstv %s3329
    %v3331 = vsel %vm126, %v3330, %v3328
    %s3332 = sld [smem:[#allocation5 + $0x16]]
    %v3333 = vstv %s3332
    %v3334 = vsel %vm130, %v3333, %v3331
    %s3335 = sld [smem:[#allocation5 + $0x17]]
    %v3336 = vstv %s3335
    %v3337 = vsel %vm134, %v3336, %v3334
    %vm3338 = vcmp.eq.s32.totalorder %v121, %v3337
    %v3339 = vsel %vm3338, 1, 0
    %v3340 = vcvt.s32.f32 %v3339
    %v3341 = vpack.c.bf16 %v3340, %v3340
    %v3342 = vld [vmem:[#allocation8] sm:$0xf]
    %v3343 = vld [vmem:[#allocation8 + $0x4] sm:$0xf]
    %v3344 = vld [vmem:[#allocation8 + $0x8] sm:$0xf]
    %v3345 = vld [vmem:[#allocation8 + $0xc] sm:$0xf]
    %v3346 = vld [vmem:[#allocation8 + $0x10] sm:$0xf]
    %v3347 = vld [vmem:[#allocation8 + $0x14] sm:$0xf]
    %v3348 = vld [vmem:[#allocation8 + $0x18] sm:$0xf]
    %v3349 = vld [vmem:[#allocation8 + $0x1c] sm:$0xf]
    %v3350 = vld [vmem:[#allocation8 + $0x20] sm:$0xf]
    %v3351 = vld [vmem:[#allocation8 + $0x24] sm:$0xf]
    %v3352 = vld [vmem:[#allocation8 + $0x28] sm:$0xf]
    %v3353 = vld [vmem:[#allocation8 + $0x2c] sm:$0xf]
    %v3354 = vld [vmem:[#allocation8 + $0x30] sm:$0xf]
    %v3355 = vld [vmem:[#allocation8 + $0x34] sm:$0xf]
    %v3356 = vld [vmem:[#allocation8 + $0x38] sm:$0xf]
    %v3357 = vld [vmem:[#allocation8 + $0x3c] sm:$0xf]
    %v3374 = vunpack.c.l.b16 %v3342
    %v3375 = vunpack.c.l.b16 %v3343
    %v3376 = vunpack.c.l.b16 %v3344
    %v3377 = vunpack.c.l.b16 %v3345
    %v3378 = vunpack.c.l.b16 %v3346
    %v3379 = vunpack.c.l.b16 %v3347
    %v3380 = vunpack.c.l.b16 %v3348
    %v3381 = vunpack.c.l.b16 %v3349
    %v3382 = vunpack.c.l.b16 %v3350
    %v3383 = vunpack.c.l.b16 %v3351
    %v3384 = vunpack.c.l.b16 %v3352
    %v3385 = vunpack.c.l.b16 %v3353
    %v3386 = vunpack.c.l.b16 %v3354
    %v3387 = vunpack.c.l.b16 %v3355
    %v3388 = vunpack.c.l.b16 %v3356
    %v3389 = vunpack.c.l.b16 %v3357
    %v3390 = vpack.c.b16 %v3375, %v3374
    %v3391 = vpack.c.b16 %v3377, %v3376
    %v3392 = vpack.c.b16 %v3379, %v3378
    %v3393 = vpack.c.b16 %v3381, %v3380
    %v3394 = vpack.c.b16 %v3383, %v3382
    %v3395 = vpack.c.b16 %v3385, %v3384
    %v3396 = vpack.c.b16 %v3387, %v3386
    %v3397 = vpack.c.b16 %v3389, %v3388
    %3406 = vmatprep.subr.bf16.mxu0 0
    %3407 = vmatpush1.bf16.msra.mxu0 %v3397
    %3408 = vmatprep.subr.bf16.mxu0 0
    %3409 = vmatpush1.bf16.msra.mxu0 %v3396
    %3410 = vmatprep.subr.bf16.mxu0 0
    %3411 = vmatpush1.bf16.msra.mxu0 %v3395
    %3412 = vmatprep.subr.bf16.mxu0 0
    %3413 = vmatpush1.bf16.msra.mxu0 %v3394
    %3414 = vmatprep.subr.bf16.mxu0 0
    %3415 = vmatpush1.bf16.msra.mxu0 %v3393
    %3416 = vmatprep.subr.bf16.mxu0 0
    %3417 = vmatpush1.bf16.msra.mxu0 %v3392
    %3418 = vmatprep.subr.bf16.mxu0 0
    %3419 = vmatpush1.bf16.msra.mxu0 %v3391
    %3420 = vmatprep.subr.bf16.mxu0 0
    %3421 = vmatpush1.bf16.msra.mxu0 %v3390
    %3422 = vmatprep.subr.bf16.mxu0 0
    %3423 = vmatpush2.bf16.msra.mxu0 0
    %3424 = vmatprep.subr.bf16.mxu0 0
    %3425 = vmatpush2.bf16.msra.mxu0 0
    %3426 = vmatprep.subr.bf16.mxu0 0
    %3427 = vmatpush2.bf16.msra.mxu0 0
    %3428 = vmatprep.subr.bf16.mxu0 0
    %3429 = vmatpush2.bf16.msra.mxu0 0
    %3430 = vmatprep.subr.bf16.mxu0 0
    %3431 = vmatpush2.bf16.msra.mxu0 0
    %3432 = vmatprep.subr.bf16.mxu0 0
    %3433 = vmatpush2.bf16.msra.mxu0 0
    %3434 = vmatprep.subr.bf16.mxu0 0
    %3435 = vmatpush2.bf16.msra.mxu0 0
    %3436 = vmatprep.subr.bf16.mxu0 0
    %3437 = vmatpush2.bf16.msra.mxu0 0
    %3438 = vmatprep.mubr.bf16.mxu0 0
    %3439 = vmatmul.mubr.bf16.gmra.mxu0 %v3341
    %v3440 = vpop.f32.mrf.mxu0
    %v3441 = vadd.f32 0.0, %v3440
    %v3442 = vpop.f32.mrf.mxu0
    %v3443 = vpop.f32.mrf.mxu0
    %v3444 = vpop.f32.mrf.mxu0
    %3445 = vdwg.mxu0
    %3446 = vst [vmem:[#allocation2] sm:$0xff] %v3441
    %v3447 = vld [vmem:[#allocation2] sm:$0xff]
    %v3448 = vld [vmem:[#allocation2 + $0x8] sm:$0xff]
    %v3449 = vpack.c.bf16 %v3447, %v3447
    %v3450 = vpack.c.bf16 %v3448, %v3448
    %v3451 = vld [vmem:[#allocation10] sm:$0xff]
    %v3452 = vld [vmem:[#allocation10 + $0x8] sm:$0xff]
    %v3453 = vld [vmem:[#allocation10 + $0x10] sm:$0xff]
    %v3454 = vld [vmem:[#allocation10 + $0x18] sm:$0xff]
    %v3455 = vld [vmem:[#allocation10 + $0x20] sm:$0xff]
    %v3456 = vld [vmem:[#allocation10 + $0x28] sm:$0xff]
    %v3457 = vld [vmem:[#allocation10 + $0x30] sm:$0xff]
    %v3458 = vld [vmem:[#allocation10 + $0x38] sm:$0xff]
    %v3459 = vld [vmem:[#allocation10 + $0x40] sm:$0xff]
    %v3460 = vld [vmem:[#allocation10 + $0x48] sm:$0xff]
    %v3461 = vld [vmem:[#allocation10 + $0x50] sm:$0xff]
    %v3462 = vld [vmem:[#allocation10 + $0x58] sm:$0xff]
    %v3463 = vld [vmem:[#allocation10 + $0x60] sm:$0xff]
    %v3464 = vld [vmem:[#allocation10 + $0x68] sm:$0xff]
    %v3465 = vld [vmem:[#allocation10 + $0x70] sm:$0xff]
    %v3466 = vld [vmem:[#allocation10 + $0x78] sm:$0xff]
    %v3467 = vld [vmem:[#allocation10 + $0x80] sm:$0xff]
    %v3468 = vld [vmem:[#allocation10 + $0x88] sm:$0xff]
    %v3469 = vld [vmem:[#allocation10 + $0x90] sm:$0xff]
    %v3470 = vld [vmem:[#allocation10 + $0x98] sm:$0xff]
    %v3471 = vld [vmem:[#allocation10 + $0xa0] sm:$0xff]
    %v3472 = vld [vmem:[#allocation10 + $0xa8] sm:$0xff]
    %v3473 = vld [vmem:[#allocation10 + $0xb0] sm:$0xff]
    %v3474 = vld [vmem:[#allocation10 + $0xb8] sm:$0xff]
    %v3475 = vld [vmem:[#allocation10 + $0xc0] sm:$0xff]
    %v3476 = vld [vmem:[#allocation10 + $0xc8] sm:$0xff]
    %v3477 = vld [vmem:[#allocation10 + $0xd0] sm:$0xff]
    %v3478 = vld [vmem:[#allocation10 + $0xd8] sm:$0xff]
    %v3479 = vld [vmem:[#allocation10 + $0xe0] sm:$0xff]
    %v3480 = vld [vmem:[#allocation10 + $0xe8] sm:$0xff]
    %v3481 = vld [vmem:[#allocation10 + $0xf0] sm:$0xff]
    %v3482 = vld [vmem:[#allocation10 + $0xf8] sm:$0xff]
    %v3483 = vld [vmem:[#allocation10 + $0x100] sm:$0xff]
    %v3484 = vld [vmem:[#allocation10 + $0x108] sm:$0xff]
    %v3485 = vld [vmem:[#allocation10 + $0x110] sm:$0xff]
    %v3486 = vld [vmem:[#allocation10 + $0x118] sm:$0xff]
    %v3487 = vld [vmem:[#allocation10 + $0x120] sm:$0xff]
    %v3488 = vld [vmem:[#allocation10 + $0x128] sm:$0xff]
    %v3489 = vld [vmem:[#allocation10 + $0x130] sm:$0xff]
    %v3490 = vld [vmem:[#allocation10 + $0x138] sm:$0xff]
    %v3491 = vld [vmem:[#allocation10 + $0x140] sm:$0xff]
    %v3492 = vld [vmem:[#allocation10 + $0x148] sm:$0xff]
    %v3493 = vld [vmem:[#allocation10 + $0x150] sm:$0xff]
    %v3494 = vld [vmem:[#allocation10 + $0x158] sm:$0xff]
    %v3495 = vld [vmem:[#allocation10 + $0x160] sm:$0xff]
    %v3496 = vld [vmem:[#allocation10 + $0x168] sm:$0xff]
    %v3497 = vld [vmem:[#allocation10 + $0x170] sm:$0xff]
    %v3498 = vld [vmem:[#allocation10 + $0x178] sm:$0xff]
    %v3499 = vld [vmem:[#allocation10 + $0x180] sm:$0xff]
    %v3500 = vld [vmem:[#allocation10 + $0x188] sm:$0xff]
    %v3501 = vld [vmem:[#allocation10 + $0x190] sm:$0xff]
    %v3502 = vld [vmem:[#allocation10 + $0x198] sm:$0xff]
    %v3503 = vld [vmem:[#allocation10 + $0x1a0] sm:$0xff]
    %v3504 = vld [vmem:[#allocation10 + $0x1a8] sm:$0xff]
    %v3505 = vld [vmem:[#allocation10 + $0x1b0] sm:$0xff]
    %v3506 = vld [vmem:[#allocation10 + $0x1b8] sm:$0xff]
    %v3507 = vld [vmem:[#allocation10 + $0x1c0] sm:$0xff]
    %v3508 = vld [vmem:[#allocation10 + $0x1c8] sm:$0xff]
    %v3509 = vld [vmem:[#allocation10 + $0x1d0] sm:$0xff]
    %v3510 = vld [vmem:[#allocation10 + $0x1d8] sm:$0xff]
    %v3511 = vld [vmem:[#allocation10 + $0x1e0] sm:$0xff]
    %v3512 = vld [vmem:[#allocation10 + $0x1e8] sm:$0xff]
    %v3513 = vld [vmem:[#allocation10 + $0x1f0] sm:$0xff]
    %v3514 = vld [vmem:[#allocation10 + $0x1f8] sm:$0xff]
    %v3515 = vld [vmem:[%s5] sm:$0xf]
    %v3517 = vlaneseq
    %v3518 = vshrl.u32 %v3517, 7
    %v3519 = vsub.s32 0, %v3518
    %v3520 = vrot.slane %v3515, %v3519
    %v3521 = vlaneseq
    %v3522 = vshrl.u32 %v3521, 7
    %v3523 = vsub.s32 1, %v3522
    %v3524 = vrot.slane %v3515, %v3523
    %v3525 = vlaneseq
    %v3526 = vshrl.u32 %v3525, 7
    %v3527 = vsub.s32 2, %v3526
    %v3528 = vrot.slane %v3515, %v3527
    %v3529 = vlaneseq
    %v3530 = vshrl.u32 %v3529, 7
    %v3531 = vsub.s32 3, %v3530
    %v3532 = vrot.slane %v3515, %v3531
    %v3601 = vunpack.c.l.b16 %v3451
    %v3602 = vunpack.c.h.b16 %v3451
    %v3603 = vunpack.c.l.b16 %v3452
    %v3604 = vunpack.c.h.b16 %v3452
    %v3605 = vunpack.c.l.b16 %v3453
    %v3606 = vunpack.c.h.b16 %v3453
    %v3607 = vunpack.c.l.b16 %v3454
    %v3608 = vunpack.c.h.b16 %v3454
    %v3609 = vunpack.c.l.b16 %v3455
    %v3610 = vunpack.c.h.b16 %v3455
    %v3611 = vunpack.c.l.b16 %v3456
    %v3612 = vunpack.c.h.b16 %v3456
    %v3613 = vunpack.c.l.b16 %v3457
    %v3614 = vunpack.c.h.b16 %v3457
    %v3615 = vunpack.c.l.b16 %v3458
    %v3616 = vunpack.c.h.b16 %v3458
    %v3617 = vunpack.c.l.b16 %v3459
    %v3618 = vunpack.c.h.b16 %v3459
    %v3619 = vunpack.c.l.b16 %v3460
    %v3620 = vunpack.c.h.b16 %v3460
    %v3621 = vunpack.c.l.b16 %v3461
    %v3622 = vunpack.c.h.b16 %v3461
    %v3623 = vunpack.c.l.b16 %v3462
    %v3624 = vunpack.c.h.b16 %v3462
    %v3625 = vunpack.c.l.b16 %v3463
    %v3626 = vunpack.c.h.b16 %v3463
    %v3627 = vunpack.c.l.b16 %v3464
    %v3628 = vunpack.c.h.b16 %v3464
    %v3629 = vunpack.c.l.b16 %v3465
    %v3630 = vunpack.c.h.b16 %v3465
    %v3631 = vunpack.c.l.b16 %v3466
    %v3632 = vunpack.c.h.b16 %v3466
    %v3633 = vunpack.c.l.b16 %v3467
    %v3634 = vunpack.c.h.b16 %v3467
    %v3635 = vunpack.c.l.b16 %v3468
    %v3636 = vunpack.c.h.b16 %v3468
    %v3637 = vunpack.c.l.b16 %v3469
    %v3638 = vunpack.c.h.b16 %v3469
    %v3639 = vunpack.c.l.b16 %v3470
    %v3640 = vunpack.c.h.b16 %v3470
    %v3641 = vunpack.c.l.b16 %v3471
    %v3642 = vunpack.c.h.b16 %v3471
    %v3643 = vunpack.c.l.b16 %v3472
    %v3644 = vunpack.c.h.b16 %v3472
    %v3645 = vunpack.c.l.b16 %v3473
    %v3646 = vunpack.c.h.b16 %v3473
    %v3647 = vunpack.c.l.b16 %v3474
    %v3648 = vunpack.c.h.b16 %v3474
    %v3649 = vunpack.c.l.b16 %v3475
    %v3650 = vunpack.c.h.b16 %v3475
    %v3651 = vunpack.c.l.b16 %v3476
    %v3652 = vunpack.c.h.b16 %v3476
    %v3653 = vunpack.c.l.b16 %v3477
    %v3654 = vunpack.c.h.b16 %v3477
    %v3655 = vunpack.c.l.b16 %v3478
    %v3656 = vunpack.c.h.b16 %v3478
    %v3657 = vunpack.c.l.b16 %v3479
    %v3658 = vunpack.c.h.b16 %v3479
    %v3659 = vunpack.c.l.b16 %v3480
    %v3660 = vunpack.c.h.b16 %v3480
    %v3661 = vunpack.c.l.b16 %v3481
    %v3662 = vunpack.c.h.b16 %v3481
    %v3663 = vunpack.c.l.b16 %v3482
    %v3664 = vunpack.c.h.b16 %v3482
    %v3665 = vunpack.c.l.b16 %v3483
    %v3666 = vunpack.c.h.b16 %v3483
    %v3667 = vunpack.c.l.b16 %v3484
    %v3668 = vunpack.c.h.b16 %v3484
    %v3669 = vunpack.c.l.b16 %v3485
    %v3670 = vunpack.c.h.b16 %v3485
    %v3671 = vunpack.c.l.b16 %v3486
    %v3672 = vunpack.c.h.b16 %v3486
    %v3673 = vunpack.c.l.b16 %v3487
    %v3674 = vunpack.c.h.b16 %v3487
    %v3675 = vunpack.c.l.b16 %v3488
    %v3676 = vunpack.c.h.b16 %v3488
    %v3677 = vunpack.c.l.b16 %v3489
    %v3678 = vunpack.c.h.b16 %v3489
    %v3679 = vunpack.c.l.b16 %v3490
    %v3680 = vunpack.c.h.b16 %v3490
    %v3681 = vunpack.c.l.b16 %v3491
    %v3682 = vunpack.c.h.b16 %v3491
    %v3683 = vunpack.c.l.b16 %v3492
    %v3684 = vunpack.c.h.b16 %v3492
    %v3685 = vunpack.c.l.b16 %v3493
    %v3686 = vunpack.c.h.b16 %v3493
    %v3687 = vunpack.c.l.b16 %v3494
    %v3688 = vunpack.c.h.b16 %v3494
    %v3689 = vunpack.c.l.b16 %v3495
    %v3690 = vunpack.c.h.b16 %v3495
    %v3691 = vunpack.c.l.b16 %v3496
    %v3692 = vunpack.c.h.b16 %v3496
    %v3693 = vunpack.c.l.b16 %v3497
    %v3694 = vunpack.c.h.b16 %v3497
    %v3695 = vunpack.c.l.b16 %v3498
    %v3696 = vunpack.c.h.b16 %v3498
    %v3697 = vunpack.c.l.b16 %v3499
    %v3698 = vunpack.c.h.b16 %v3499
    %v3699 = vunpack.c.l.b16 %v3500
    %v3700 = vunpack.c.h.b16 %v3500
    %v3701 = vunpack.c.l.b16 %v3501
    %v3702 = vunpack.c.h.b16 %v3501
    %v3703 = vunpack.c.l.b16 %v3502
    %v3704 = vunpack.c.h.b16 %v3502
    %v3705 = vunpack.c.l.b16 %v3503
    %v3706 = vunpack.c.h.b16 %v3503
    %v3707 = vunpack.c.l.b16 %v3504
    %v3708 = vunpack.c.h.b16 %v3504
    %v3709 = vunpack.c.l.b16 %v3505
    %v3710 = vunpack.c.h.b16 %v3505
    %v3711 = vunpack.c.l.b16 %v3506
    %v3712 = vunpack.c.h.b16 %v3506
    %v3713 = vunpack.c.l.b16 %v3507
    %v3714 = vunpack.c.h.b16 %v3507
    %v3715 = vunpack.c.l.b16 %v3508
    %v3716 = vunpack.c.h.b16 %v3508
    %v3717 = vunpack.c.l.b16 %v3509
    %v3718 = vunpack.c.h.b16 %v3509
    %v3719 = vunpack.c.l.b16 %v3510
    %v3720 = vunpack.c.h.b16 %v3510
    %v3721 = vunpack.c.l.b16 %v3511
    %v3722 = vunpack.c.h.b16 %v3511
    %v3723 = vunpack.c.l.b16 %v3512
    %v3724 = vunpack.c.h.b16 %v3512
    %v3725 = vunpack.c.l.b16 %v3513
    %v3726 = vunpack.c.h.b16 %v3513
    %v3727 = vunpack.c.l.b16 %v3514
    %v3728 = vunpack.c.h.b16 %v3514
    %v3729 = vpack.c.b16 %v3605, %v3601
    %v3730 = vpack.c.b16 %v3606, %v3602
    %v3731 = vpack.c.b16 %v3607, %v3603
    %v3732 = vpack.c.b16 %v3608, %v3604
    %v3733 = vpack.c.b16 %v3613, %v3609
    %v3734 = vpack.c.b16 %v3614, %v3610
    %v3735 = vpack.c.b16 %v3615, %v3611
    %v3736 = vpack.c.b16 %v3616, %v3612
    %v3737 = vpack.c.b16 %v3621, %v3617
    %v3738 = vpack.c.b16 %v3622, %v3618
    %v3739 = vpack.c.b16 %v3623, %v3619
    %v3740 = vpack.c.b16 %v3624, %v3620
    %v3741 = vpack.c.b16 %v3629, %v3625
    %v3742 = vpack.c.b16 %v3630, %v3626
    %v3743 = vpack.c.b16 %v3631, %v3627
    %v3744 = vpack.c.b16 %v3632, %v3628
    %v3745 = vpack.c.b16 %v3637, %v3633
    %v3746 = vpack.c.b16 %v3638, %v3634
    %v3747 = vpack.c.b16 %v3639, %v3635
    %v3748 = vpack.c.b16 %v3640, %v3636
    %v3749 = vpack.c.b16 %v3645, %v3641
    %v3750 = vpack.c.b16 %v3646, %v3642
    %v3751 = vpack.c.b16 %v3647, %v3643
    %v3752 = vpack.c.b16 %v3648, %v3644
    %v3753 = vpack.c.b16 %v3653, %v3649
    %v3754 = vpack.c.b16 %v3654, %v3650
    %v3755 = vpack.c.b16 %v3655, %v3651
    %v3756 = vpack.c.b16 %v3656, %v3652
    %v3757 = vpack.c.b16 %v3661, %v3657
    %v3758 = vpack.c.b16 %v3662, %v3658
    %v3759 = vpack.c.b16 %v3663, %v3659
    %v3760 = vpack.c.b16 %v3664, %v3660
    %v3761 = vpack.c.b16 %v3669, %v3665
    %v3762 = vpack.c.b16 %v3670, %v3666
    %v3763 = vpack.c.b16 %v3671, %v3667
    %v3764 = vpack.c.b16 %v3672, %v3668
    %v3765 = vpack.c.b16 %v3677, %v3673
    %v3766 = vpack.c.b16 %v3678, %v3674
    %v3767 = vpack.c.b16 %v3679, %v3675
    %v3768 = vpack.c.b16 %v3680, %v3676
    %v3769 = vpack.c.b16 %v3685, %v3681
    %v3770 = vpack.c.b16 %v3686, %v3682
    %v3771 = vpack.c.b16 %v3687, %v3683
    %v3772 = vpack.c.b16 %v3688, %v3684
    %v3773 = vpack.c.b16 %v3693, %v3689
    %v3774 = vpack.c.b16 %v3694, %v3690
    %v3775 = vpack.c.b16 %v3695, %v3691
    %v3776 = vpack.c.b16 %v3696, %v3692
    %v3777 = vpack.c.b16 %v3701, %v3697
    %v3778 = vpack.c.b16 %v3702, %v3698
    %v3779 = vpack.c.b16 %v3703, %v3699
    %v3780 = vpack.c.b16 %v3704, %v3700
    %v3781 = vpack.c.b16 %v3709, %v3705
    %v3782 = vpack.c.b16 %v3710, %v3706
    %v3783 = vpack.c.b16 %v3711, %v3707
    %v3784 = vpack.c.b16 %v3712, %v3708
    %v3785 = vpack.c.b16 %v3717, %v3713
    %v3786 = vpack.c.b16 %v3718, %v3714
    %v3787 = vpack.c.b16 %v3719, %v3715
    %v3788 = vpack.c.b16 %v3720, %v3716
    %v3789 = vpack.c.b16 %v3725, %v3721
    %v3790 = vpack.c.b16 %v3726, %v3722
    %v3791 = vpack.c.b16 %v3727, %v3723
    %v3792 = vpack.c.b16 %v3728, %v3724
    %3857 = vmatprep.subr.bf16.mxu0 %v3758
    %3858 = vmatpush1.bf16.msra.mxu0 %v3757
    %3859 = vmatprep.subr.bf16.mxu0 %v3754
    %3860 = vmatpush1.bf16.msra.mxu0 %v3753
    %3861 = vmatprep.subr.bf16.mxu0 %v3750
    %3862 = vmatpush1.bf16.msra.mxu0 %v3749
    %3863 = vmatprep.subr.bf16.mxu0 %v3746
    %3864 = vmatpush1.bf16.msra.mxu0 %v3745
    %3865 = vmatprep.subr.bf16.mxu0 %v3742
    %3866 = vmatpush1.bf16.msra.mxu0 %v3741
    %3867 = vmatprep.subr.bf16.mxu0 %v3738
    %3868 = vmatpush1.bf16.msra.mxu0 %v3737
    %3869 = vmatprep.subr.bf16.mxu0 %v3734
    %3870 = vmatpush1.bf16.msra.mxu0 %v3733
    %3871 = vmatprep.subr.bf16.mxu0 %v3730
    %3872 = vmatpush1.bf16.msra.mxu0 %v3729
    %3873 = vmatprep.subr.bf16.mxu0 %v3790
    %3874 = vmatpush2.bf16.msra.mxu0 %v3789
    %3875 = vmatprep.subr.bf16.mxu0 %v3786
    %3876 = vmatpush2.bf16.msra.mxu0 %v3785
    %3877 = vmatprep.subr.bf16.mxu0 %v3782
    %3878 = vmatpush2.bf16.msra.mxu0 %v3781
    %3879 = vmatprep.subr.bf16.mxu0 %v3778
    %3880 = vmatpush2.bf16.msra.mxu0 %v3777
    %3881 = vmatprep.subr.bf16.mxu0 %v3774
    %3882 = vmatpush2.bf16.msra.mxu0 %v3773
    %3883 = vmatprep.subr.bf16.mxu0 %v3770
    %3884 = vmatpush2.bf16.msra.mxu0 %v3769
    %3885 = vmatprep.subr.bf16.mxu0 %v3766
    %3886 = vmatpush2.bf16.msra.mxu0 %v3765
    %3887 = vmatprep.subr.bf16.mxu0 %v3762
    %3888 = vmatpush2.bf16.msra.mxu0 %v3761
    %3889 = vmatprep.mubr.bf16.mxu0 %v3450
    %3890 = vmatmul.mubr.bf16.gmra.mxu0 %v3449
    %v3891 = vpop.f32.mrf.mxu0
    %v3892 = vadd.f32 %v3520, %v3891
    %v3893 = vpop.f32.mrf.mxu0
    %v3894 = vadd.f32 %v3524, %v3893
    %v3895 = vpop.f32.mrf.mxu0
    %v3896 = vpop.f32.mrf.mxu0
    %3897 = vdwg.mxu0
    %3898 = vmatprep.subr.bf16.mxu0 %v3760
    %3899 = vmatpush1.bf16.msra.mxu0 %v3759
    %3900 = vmatprep.subr.bf16.mxu0 %v3756
    %3901 = vmatpush1.bf16.msra.mxu0 %v3755
    %3902 = vmatprep.subr.bf16.mxu0 %v3752
    %3903 = vmatpush1.bf16.msra.mxu0 %v3751
    %3904 = vmatprep.subr.bf16.mxu0 %v3748
    %3905 = vmatpush1.bf16.msra.mxu0 %v3747
    %3906 = vmatprep.subr.bf16.mxu0 %v3744
    %3907 = vmatpush1.bf16.msra.mxu0 %v3743
    %3908 = vmatprep.subr.bf16.mxu0 %v3740
    %3909 = vmatpush1.bf16.msra.mxu0 %v3739
    %3910 = vmatprep.subr.bf16.mxu0 %v3736
    %3911 = vmatpush1.bf16.msra.mxu0 %v3735
    %3912 = vmatprep.subr.bf16.mxu0 %v3732
    %3913 = vmatpush1.bf16.msra.mxu0 %v3731
    %3914 = vmatprep.subr.bf16.mxu0 %v3792
    %3915 = vmatpush2.bf16.msra.mxu0 %v3791
    %3916 = vmatprep.subr.bf16.mxu0 %v3788
    %3917 = vmatpush2.bf16.msra.mxu0 %v3787
    %3918 = vmatprep.subr.bf16.mxu0 %v3784
    %3919 = vmatpush2.bf16.msra.mxu0 %v3783
    %3920 = vmatprep.subr.bf16.mxu0 %v3780
    %3921 = vmatpush2.bf16.msra.mxu0 %v3779
    %3922 = vmatprep.subr.bf16.mxu0 %v3776
    %3923 = vmatpush2.bf16.msra.mxu0 %v3775
    %3924 = vmatprep.subr.bf16.mxu0 %v3772
    %3925 = vmatpush2.bf16.msra.mxu0 %v3771
    %3926 = vmatprep.subr.bf16.mxu0 %v3768
    %3927 = vmatpush2.bf16.msra.mxu0 %v3767
    %3928 = vmatprep.subr.bf16.mxu0 %v3764
    %3929 = vmatpush2.bf16.msra.mxu0 %v3763
    %3930 = vmatprep.mubr.bf16.mxu0 %v3450
    %3931 = vmatmul.mubr.bf16.gmra.mxu0 %v3449
    %v3932 = vpop.f32.mrf.mxu0
    %v3933 = vadd.f32 %v3528, %v3932
    %v3934 = vpop.f32.mrf.mxu0
    %v3935 = vadd.f32 %v3532, %v3934
    %v3936 = vpop.f32.mrf.mxu0
    %v3937 = vpop.f32.mrf.mxu0
    %3938 = vdwg.mxu0
    %v3939 = vxor.u32 %v3892, 2147483648
    %v3940 = vmul.f32 %v3939, 1.442695
    %v3941 = vpow.pop %v3940
    %v3942 = vadd.f32 %v3941, 1.0
    %v3943 = vrcp.pop %v3942
    %v3944 = vmul.f32 1.0, %v3943
    %v3945 = vxor.u32 %v3894, 2147483648
    %v3946 = vmul.f32 %v3945, 1.442695
    %v3947 = vpow.pop %v3946
    %v3948 = vadd.f32 %v3947, 1.0
    %v3949 = vrcp.pop %v3948
    %v3950 = vmul.f32 1.0, %v3949
    %v3951 = vtanh.pop %v3933
    %v3952 = vxor.u32 %v3935, 2147483648
    %v3953 = vmul.f32 %v3952, 1.442695
    %v3954 = vpow.pop %v3953
    %v3955 = vadd.f32 %v3954, 1.0
    %v3956 = vrcp.pop %v3955
    %v3957 = vmul.f32 1.0, %v3956
    %v3958 = vld [vmem:[#allocation3] sm:$0xff]
    %v3959 = vmul.f32 %v3950, %v3958
    %v3960 = vmul.f32 %v3944, %v3951
    %v3961 = vadd.f32 %v3959, %v3960
    %v3962 = vtanh.pop %v3961
    %v3963 = vmul.f32 %v3957, %v3962
    %3964 = vst [vmem:[#allocation3] sm:$0xff] %v3961
    %3965 = vst [vmem:[#allocation2 + $0x8] sm:$0xff] %v3963
    %s3966 = sld [smem:[#allocation5 + $0x18]]
    %v3967 = vstv %s3966
    %v3968 = vsel %vm122, %v3967, 4294967295
    %s3969 = sld [smem:[#allocation5 + $0x19]]
    %v3970 = vstv %s3969
    %v3971 = vsel %vm126, %v3970, %v3968
    %s3972 = sld [smem:[#allocation5 + $0x1a]]
    %v3973 = vstv %s3972
    %v3974 = vsel %vm130, %v3973, %v3971
    %s3975 = sld [smem:[#allocation5 + $0x1b]]
    %v3976 = vstv %s3975
    %v3977 = vsel %vm134, %v3976, %v3974
    %vm3978 = vcmp.eq.s32.totalorder %v121, %v3977
    %v3979 = vsel %vm3978, 1, 0
    %v3980 = vcvt.s32.f32 %v3979
    %v3981 = vpack.c.bf16 %v3980, %v3980
    %v3982 = vld [vmem:[#allocation8] sm:$0xf]
    %v3983 = vld [vmem:[#allocation8 + $0x4] sm:$0xf]
    %v3984 = vld [vmem:[#allocation8 + $0x8] sm:$0xf]
    %v3985 = vld [vmem:[#allocation8 + $0xc] sm:$0xf]
    %v3986 = vld [vmem:[#allocation8 + $0x10] sm:$0xf]
    %v3987 = vld [vmem:[#allocation8 + $0x14] sm:$0xf]
    %v3988 = vld [vmem:[#allocation8 + $0x18] sm:$0xf]
    %v3989 = vld [vmem:[#allocation8 + $0x1c] sm:$0xf]
    %v3990 = vld [vmem:[#allocation8 + $0x20] sm:$0xf]
    %v3991 = vld [vmem:[#allocation8 + $0x24] sm:$0xf]
    %v3992 = vld [vmem:[#allocation8 + $0x28] sm:$0xf]
    %v3993 = vld [vmem:[#allocation8 + $0x2c] sm:$0xf]
    %v3994 = vld [vmem:[#allocation8 + $0x30] sm:$0xf]
    %v3995 = vld [vmem:[#allocation8 + $0x34] sm:$0xf]
    %v3996 = vld [vmem:[#allocation8 + $0x38] sm:$0xf]
    %v3997 = vld [vmem:[#allocation8 + $0x3c] sm:$0xf]
    %v4014 = vunpack.c.l.b16 %v3982
    %v4015 = vunpack.c.l.b16 %v3983
    %v4016 = vunpack.c.l.b16 %v3984
    %v4017 = vunpack.c.l.b16 %v3985
    %v4018 = vunpack.c.l.b16 %v3986
    %v4019 = vunpack.c.l.b16 %v3987
    %v4020 = vunpack.c.l.b16 %v3988
    %v4021 = vunpack.c.l.b16 %v3989
    %v4022 = vunpack.c.l.b16 %v3990
    %v4023 = vunpack.c.l.b16 %v3991
    %v4024 = vunpack.c.l.b16 %v3992
    %v4025 = vunpack.c.l.b16 %v3993
    %v4026 = vunpack.c.l.b16 %v3994
    %v4027 = vunpack.c.l.b16 %v3995
    %v4028 = vunpack.c.l.b16 %v3996
    %v4029 = vunpack.c.l.b16 %v3997
    %v4030 = vpack.c.b16 %v4015, %v4014
    %v4031 = vpack.c.b16 %v4017, %v4016
    %v4032 = vpack.c.b16 %v4019, %v4018
    %v4033 = vpack.c.b16 %v4021, %v4020
    %v4034 = vpack.c.b16 %v4023, %v4022
    %v4035 = vpack.c.b16 %v4025, %v4024
    %v4036 = vpack.c.b16 %v4027, %v4026
    %v4037 = vpack.c.b16 %v4029, %v4028
    %4046 = vmatprep.subr.bf16.mxu0 0
    %4047 = vmatpush1.bf16.msra.mxu0 %v4037
    %4048 = vmatprep.subr.bf16.mxu0 0
    %4049 = vmatpush1.bf16.msra.mxu0 %v4036
    %4050 = vmatprep.subr.bf16.mxu0 0
    %4051 = vmatpush1.bf16.msra.mxu0 %v4035
    %4052 = vmatprep.subr.bf16.mxu0 0
    %4053 = vmatpush1.bf16.msra.mxu0 %v4034
    %4054 = vmatprep.subr.bf16.mxu0 0
    %4055 = vmatpush1.bf16.msra.mxu0 %v4033
    %4056 = vmatprep.subr.bf16.mxu0 0
    %4057 = vmatpush1.bf16.msra.mxu0 %v4032
    %4058 = vmatprep.subr.bf16.mxu0 0
    %4059 = vmatpush1.bf16.msra.mxu0 %v4031
    %4060 = vmatprep.subr.bf16.mxu0 0
    %4061 = vmatpush1.bf16.msra.mxu0 %v4030
    %4062 = vmatprep.subr.bf16.mxu0 0
    %4063 = vmatpush2.bf16.msra.mxu0 0
    %4064 = vmatprep.subr.bf16.mxu0 0
    %4065 = vmatpush2.bf16.msra.mxu0 0
    %4066 = vmatprep.subr.bf16.mxu0 0
    %4067 = vmatpush2.bf16.msra.mxu0 0
    %4068 = vmatprep.subr.bf16.mxu0 0
    %4069 = vmatpush2.bf16.msra.mxu0 0
    %4070 = vmatprep.subr.bf16.mxu0 0
    %4071 = vmatpush2.bf16.msra.mxu0 0
    %4072 = vmatprep.subr.bf16.mxu0 0
    %4073 = vmatpush2.bf16.msra.mxu0 0
    %4074 = vmatprep.subr.bf16.mxu0 0
    %4075 = vmatpush2.bf16.msra.mxu0 0
    %4076 = vmatprep.subr.bf16.mxu0 0
    %4077 = vmatpush2.bf16.msra.mxu0 0
    %4078 = vmatprep.mubr.bf16.mxu0 0
    %4079 = vmatmul.mubr.bf16.gmra.mxu0 %v3981
    %v4080 = vpop.f32.mrf.mxu0
    %v4081 = vadd.f32 0.0, %v4080
    %v4082 = vpop.f32.mrf.mxu0
    %v4083 = vpop.f32.mrf.mxu0
    %v4084 = vpop.f32.mrf.mxu0
    %4085 = vdwg.mxu0
    %4086 = vst [vmem:[#allocation2] sm:$0xff] %v4081
    %v4087 = vld [vmem:[#allocation2] sm:$0xff]
    %v4088 = vld [vmem:[#allocation2 + $0x8] sm:$0xff]
    %v4089 = vpack.c.bf16 %v4087, %v4087
    %v4090 = vpack.c.bf16 %v4088, %v4088
    %v4091 = vld [vmem:[#allocation10] sm:$0xff]
    %v4092 = vld [vmem:[#allocation10 + $0x8] sm:$0xff]
    %v4093 = vld [vmem:[#allocation10 + $0x10] sm:$0xff]
    %v4094 = vld [vmem:[#allocation10 + $0x18] sm:$0xff]
    %v4095 = vld [vmem:[#allocation10 + $0x20] sm:$0xff]
    %v4096 = vld [vmem:[#allocation10 + $0x28] sm:$0xff]
    %v4097 = vld [vmem:[#allocation10 + $0x30] sm:$0xff]
    %v4098 = vld [vmem:[#allocation10 + $0x38] sm:$0xff]
    %v4099 = vld [vmem:[#allocation10 + $0x40] sm:$0xff]
    %v4100 = vld [vmem:[#allocation10 + $0x48] sm:$0xff]
    %v4101 = vld [vmem:[#allocation10 + $0x50] sm:$0xff]
    %v4102 = vld [vmem:[#allocation10 + $0x58] sm:$0xff]
    %v4103 = vld [vmem:[#allocation10 + $0x60] sm:$0xff]
    %v4104 = vld [vmem:[#allocation10 + $0x68] sm:$0xff]
    %v4105 = vld [vmem:[#allocation10 + $0x70] sm:$0xff]
    %v4106 = vld [vmem:[#allocation10 + $0x78] sm:$0xff]
    %v4107 = vld [vmem:[#allocation10 + $0x80] sm:$0xff]
    %v4108 = vld [vmem:[#allocation10 + $0x88] sm:$0xff]
    %v4109 = vld [vmem:[#allocation10 + $0x90] sm:$0xff]
    %v4110 = vld [vmem:[#allocation10 + $0x98] sm:$0xff]
    %v4111 = vld [vmem:[#allocation10 + $0xa0] sm:$0xff]
    %v4112 = vld [vmem:[#allocation10 + $0xa8] sm:$0xff]
    %v4113 = vld [vmem:[#allocation10 + $0xb0] sm:$0xff]
    %v4114 = vld [vmem:[#allocation10 + $0xb8] sm:$0xff]
    %v4115 = vld [vmem:[#allocation10 + $0xc0] sm:$0xff]
    %v4116 = vld [vmem:[#allocation10 + $0xc8] sm:$0xff]
    %v4117 = vld [vmem:[#allocation10 + $0xd0] sm:$0xff]
    %v4118 = vld [vmem:[#allocation10 + $0xd8] sm:$0xff]
    %v4119 = vld [vmem:[#allocation10 + $0xe0] sm:$0xff]
    %v4120 = vld [vmem:[#allocation10 + $0xe8] sm:$0xff]
    %v4121 = vld [vmem:[#allocation10 + $0xf0] sm:$0xff]
    %v4122 = vld [vmem:[#allocation10 + $0xf8] sm:$0xff]
    %v4123 = vld [vmem:[#allocation10 + $0x100] sm:$0xff]
    %v4124 = vld [vmem:[#allocation10 + $0x108] sm:$0xff]
    %v4125 = vld [vmem:[#allocation10 + $0x110] sm:$0xff]
    %v4126 = vld [vmem:[#allocation10 + $0x118] sm:$0xff]
    %v4127 = vld [vmem:[#allocation10 + $0x120] sm:$0xff]
    %v4128 = vld [vmem:[#allocation10 + $0x128] sm:$0xff]
    %v4129 = vld [vmem:[#allocation10 + $0x130] sm:$0xff]
    %v4130 = vld [vmem:[#allocation10 + $0x138] sm:$0xff]
    %v4131 = vld [vmem:[#allocation10 + $0x140] sm:$0xff]
    %v4132 = vld [vmem:[#allocation10 + $0x148] sm:$0xff]
    %v4133 = vld [vmem:[#allocation10 + $0x150] sm:$0xff]
    %v4134 = vld [vmem:[#allocation10 + $0x158] sm:$0xff]
    %v4135 = vld [vmem:[#allocation10 + $0x160] sm:$0xff]
    %v4136 = vld [vmem:[#allocation10 + $0x168] sm:$0xff]
    %v4137 = vld [vmem:[#allocation10 + $0x170] sm:$0xff]
    %v4138 = vld [vmem:[#allocation10 + $0x178] sm:$0xff]
    %v4139 = vld [vmem:[#allocation10 + $0x180] sm:$0xff]
    %v4140 = vld [vmem:[#allocation10 + $0x188] sm:$0xff]
    %v4141 = vld [vmem:[#allocation10 + $0x190] sm:$0xff]
    %v4142 = vld [vmem:[#allocation10 + $0x198] sm:$0xff]
    %v4143 = vld [vmem:[#allocation10 + $0x1a0] sm:$0xff]
    %v4144 = vld [vmem:[#allocation10 + $0x1a8] sm:$0xff]
    %v4145 = vld [vmem:[#allocation10 + $0x1b0] sm:$0xff]
    %v4146 = vld [vmem:[#allocation10 + $0x1b8] sm:$0xff]
    %v4147 = vld [vmem:[#allocation10 + $0x1c0] sm:$0xff]
    %v4148 = vld [vmem:[#allocation10 + $0x1c8] sm:$0xff]
    %v4149 = vld [vmem:[#allocation10 + $0x1d0] sm:$0xff]
    %v4150 = vld [vmem:[#allocation10 + $0x1d8] sm:$0xff]
    %v4151 = vld [vmem:[#allocation10 + $0x1e0] sm:$0xff]
    %v4152 = vld [vmem:[#allocation10 + $0x1e8] sm:$0xff]
    %v4153 = vld [vmem:[#allocation10 + $0x1f0] sm:$0xff]
    %v4154 = vld [vmem:[#allocation10 + $0x1f8] sm:$0xff]
    %v4155 = vld [vmem:[%s5] sm:$0xf]
    %v4157 = vlaneseq
    %v4158 = vshrl.u32 %v4157, 7
    %v4159 = vsub.s32 0, %v4158
    %v4160 = vrot.slane %v4155, %v4159
    %v4161 = vlaneseq
    %v4162 = vshrl.u32 %v4161, 7
    %v4163 = vsub.s32 1, %v4162
    %v4164 = vrot.slane %v4155, %v4163
    %v4165 = vlaneseq
    %v4166 = vshrl.u32 %v4165, 7
    %v4167 = vsub.s32 2, %v4166
    %v4168 = vrot.slane %v4155, %v4167
    %v4169 = vlaneseq
    %v4170 = vshrl.u32 %v4169, 7
    %v4171 = vsub.s32 3, %v4170
    %v4172 = vrot.slane %v4155, %v4171
    %v4241 = vunpack.c.l.b16 %v4091
    %v4242 = vunpack.c.h.b16 %v4091
    %v4243 = vunpack.c.l.b16 %v4092
    %v4244 = vunpack.c.h.b16 %v4092
    %v4245 = vunpack.c.l.b16 %v4093
    %v4246 = vunpack.c.h.b16 %v4093
    %v4247 = vunpack.c.l.b16 %v4094
    %v4248 = vunpack.c.h.b16 %v4094
    %v4249 = vunpack.c.l.b16 %v4095
    %v4250 = vunpack.c.h.b16 %v4095
    %v4251 = vunpack.c.l.b16 %v4096
    %v4252 = vunpack.c.h.b16 %v4096
    %v4253 = vunpack.c.l.b16 %v4097
    %v4254 = vunpack.c.h.b16 %v4097
    %v4255 = vunpack.c.l.b16 %v4098
    %v4256 = vunpack.c.h.b16 %v4098
    %v4257 = vunpack.c.l.b16 %v4099
    %v4258 = vunpack.c.h.b16 %v4099
    %v4259 = vunpack.c.l.b16 %v4100
    %v4260 = vunpack.c.h.b16 %v4100
    %v4261 = vunpack.c.l.b16 %v4101
    %v4262 = vunpack.c.h.b16 %v4101
    %v4263 = vunpack.c.l.b16 %v4102
    %v4264 = vunpack.c.h.b16 %v4102
    %v4265 = vunpack.c.l.b16 %v4103
    %v4266 = vunpack.c.h.b16 %v4103
    %v4267 = vunpack.c.l.b16 %v4104
    %v4268 = vunpack.c.h.b16 %v4104
    %v4269 = vunpack.c.l.b16 %v4105
    %v4270 = vunpack.c.h.b16 %v4105
    %v4271 = vunpack.c.l.b16 %v4106
    %v4272 = vunpack.c.h.b16 %v4106
    %v4273 = vunpack.c.l.b16 %v4107
    %v4274 = vunpack.c.h.b16 %v4107
    %v4275 = vunpack.c.l.b16 %v4108
    %v4276 = vunpack.c.h.b16 %v4108
    %v4277 = vunpack.c.l.b16 %v4109
    %v4278 = vunpack.c.h.b16 %v4109
    %v4279 = vunpack.c.l.b16 %v4110
    %v4280 = vunpack.c.h.b16 %v4110
    %v4281 = vunpack.c.l.b16 %v4111
    %v4282 = vunpack.c.h.b16 %v4111
    %v4283 = vunpack.c.l.b16 %v4112
    %v4284 = vunpack.c.h.b16 %v4112
    %v4285 = vunpack.c.l.b16 %v4113
    %v4286 = vunpack.c.h.b16 %v4113
    %v4287 = vunpack.c.l.b16 %v4114
    %v4288 = vunpack.c.h.b16 %v4114
    %v4289 = vunpack.c.l.b16 %v4115
    %v4290 = vunpack.c.h.b16 %v4115
    %v4291 = vunpack.c.l.b16 %v4116
    %v4292 = vunpack.c.h.b16 %v4116
    %v4293 = vunpack.c.l.b16 %v4117
    %v4294 = vunpack.c.h.b16 %v4117
    %v4295 = vunpack.c.l.b16 %v4118
    %v4296 = vunpack.c.h.b16 %v4118
    %v4297 = vunpack.c.l.b16 %v4119
    %v4298 = vunpack.c.h.b16 %v4119
    %v4299 = vunpack.c.l.b16 %v4120
    %v4300 = vunpack.c.h.b16 %v4120
    %v4301 = vunpack.c.l.b16 %v4121
    %v4302 = vunpack.c.h.b16 %v4121
    %v4303 = vunpack.c.l.b16 %v4122
    %v4304 = vunpack.c.h.b16 %v4122
    %v4305 = vunpack.c.l.b16 %v4123
    %v4306 = vunpack.c.h.b16 %v4123
    %v4307 = vunpack.c.l.b16 %v4124
    %v4308 = vunpack.c.h.b16 %v4124
    %v4309 = vunpack.c.l.b16 %v4125
    %v4310 = vunpack.c.h.b16 %v4125
    %v4311 = vunpack.c.l.b16 %v4126
    %v4312 = vunpack.c.h.b16 %v4126
    %v4313 = vunpack.c.l.b16 %v4127
    %v4314 = vunpack.c.h.b16 %v4127
    %v4315 = vunpack.c.l.b16 %v4128
    %v4316 = vunpack.c.h.b16 %v4128
    %v4317 = vunpack.c.l.b16 %v4129
    %v4318 = vunpack.c.h.b16 %v4129
    %v4319 = vunpack.c.l.b16 %v4130
    %v4320 = vunpack.c.h.b16 %v4130
    %v4321 = vunpack.c.l.b16 %v4131
    %v4322 = vunpack.c.h.b16 %v4131
    %v4323 = vunpack.c.l.b16 %v4132
    %v4324 = vunpack.c.h.b16 %v4132
    %v4325 = vunpack.c.l.b16 %v4133
    %v4326 = vunpack.c.h.b16 %v4133
    %v4327 = vunpack.c.l.b16 %v4134
    %v4328 = vunpack.c.h.b16 %v4134
    %v4329 = vunpack.c.l.b16 %v4135
    %v4330 = vunpack.c.h.b16 %v4135
    %v4331 = vunpack.c.l.b16 %v4136
    %v4332 = vunpack.c.h.b16 %v4136
    %v4333 = vunpack.c.l.b16 %v4137
    %v4334 = vunpack.c.h.b16 %v4137
    %v4335 = vunpack.c.l.b16 %v4138
    %v4336 = vunpack.c.h.b16 %v4138
    %v4337 = vunpack.c.l.b16 %v4139
    %v4338 = vunpack.c.h.b16 %v4139
    %v4339 = vunpack.c.l.b16 %v4140
    %v4340 = vunpack.c.h.b16 %v4140
    %v4341 = vunpack.c.l.b16 %v4141
    %v4342 = vunpack.c.h.b16 %v4141
    %v4343 = vunpack.c.l.b16 %v4142
    %v4344 = vunpack.c.h.b16 %v4142
    %v4345 = vunpack.c.l.b16 %v4143
    %v4346 = vunpack.c.h.b16 %v4143
    %v4347 = vunpack.c.l.b16 %v4144
    %v4348 = vunpack.c.h.b16 %v4144
    %v4349 = vunpack.c.l.b16 %v4145
    %v4350 = vunpack.c.h.b16 %v4145
    %v4351 = vunpack.c.l.b16 %v4146
    %v4352 = vunpack.c.h.b16 %v4146
    %v4353 = vunpack.c.l.b16 %v4147
    %v4354 = vunpack.c.h.b16 %v4147
    %v4355 = vunpack.c.l.b16 %v4148
    %v4356 = vunpack.c.h.b16 %v4148
    %v4357 = vunpack.c.l.b16 %v4149
    %v4358 = vunpack.c.h.b16 %v4149
    %v4359 = vunpack.c.l.b16 %v4150
    %v4360 = vunpack.c.h.b16 %v4150
    %v4361 = vunpack.c.l.b16 %v4151
    %v4362 = vunpack.c.h.b16 %v4151
    %v4363 = vunpack.c.l.b16 %v4152
    %v4364 = vunpack.c.h.b16 %v4152
    %v4365 = vunpack.c.l.b16 %v4153
    %v4366 = vunpack.c.h.b16 %v4153
    %v4367 = vunpack.c.l.b16 %v4154
    %v4368 = vunpack.c.h.b16 %v4154
    %v4369 = vpack.c.b16 %v4245, %v4241
    %v4370 = vpack.c.b16 %v4246, %v4242
    %v4371 = vpack.c.b16 %v4247, %v4243
    %v4372 = vpack.c.b16 %v4248, %v4244
    %v4373 = vpack.c.b16 %v4253, %v4249
    %v4374 = vpack.c.b16 %v4254, %v4250
    %v4375 = vpack.c.b16 %v4255, %v4251
    %v4376 = vpack.c.b16 %v4256, %v4252
    %v4377 = vpack.c.b16 %v4261, %v4257
    %v4378 = vpack.c.b16 %v4262, %v4258
    %v4379 = vpack.c.b16 %v4263, %v4259
    %v4380 = vpack.c.b16 %v4264, %v4260
    %v4381 = vpack.c.b16 %v4269, %v4265
    %v4382 = vpack.c.b16 %v4270, %v4266
    %v4383 = vpack.c.b16 %v4271, %v4267
    %v4384 = vpack.c.b16 %v4272, %v4268
    %v4385 = vpack.c.b16 %v4277, %v4273
    %v4386 = vpack.c.b16 %v4278, %v4274
    %v4387 = vpack.c.b16 %v4279, %v4275
    %v4388 = vpack.c.b16 %v4280, %v4276
    %v4389 = vpack.c.b16 %v4285, %v4281
    %v4390 = vpack.c.b16 %v4286, %v4282
    %v4391 = vpack.c.b16 %v4287, %v4283
    %v4392 = vpack.c.b16 %v4288, %v4284
    %v4393 = vpack.c.b16 %v4293, %v4289
    %v4394 = vpack.c.b16 %v4294, %v4290
    %v4395 = vpack.c.b16 %v4295, %v4291
    %v4396 = vpack.c.b16 %v4296, %v4292
    %v4397 = vpack.c.b16 %v4301, %v4297
    %v4398 = vpack.c.b16 %v4302, %v4298
    %v4399 = vpack.c.b16 %v4303, %v4299
    %v4400 = vpack.c.b16 %v4304, %v4300
    %v4401 = vpack.c.b16 %v4309, %v4305
    %v4402 = vpack.c.b16 %v4310, %v4306
    %v4403 = vpack.c.b16 %v4311, %v4307
    %v4404 = vpack.c.b16 %v4312, %v4308
    %v4405 = vpack.c.b16 %v4317, %v4313
    %v4406 = vpack.c.b16 %v4318, %v4314
    %v4407 = vpack.c.b16 %v4319, %v4315
    %v4408 = vpack.c.b16 %v4320, %v4316
    %v4409 = vpack.c.b16 %v4325, %v4321
    %v4410 = vpack.c.b16 %v4326, %v4322
    %v4411 = vpack.c.b16 %v4327, %v4323
    %v4412 = vpack.c.b16 %v4328, %v4324
    %v4413 = vpack.c.b16 %v4333, %v4329
    %v4414 = vpack.c.b16 %v4334, %v4330
    %v4415 = vpack.c.b16 %v4335, %v4331
    %v4416 = vpack.c.b16 %v4336, %v4332
    %v4417 = vpack.c.b16 %v4341, %v4337
    %v4418 = vpack.c.b16 %v4342, %v4338
    %v4419 = vpack.c.b16 %v4343, %v4339
    %v4420 = vpack.c.b16 %v4344, %v4340
    %v4421 = vpack.c.b16 %v4349, %v4345
    %v4422 = vpack.c.b16 %v4350, %v4346
    %v4423 = vpack.c.b16 %v4351, %v4347
    %v4424 = vpack.c.b16 %v4352, %v4348
    %v4425 = vpack.c.b16 %v4357, %v4353
    %v4426 = vpack.c.b16 %v4358, %v4354
    %v4427 = vpack.c.b16 %v4359, %v4355
    %v4428 = vpack.c.b16 %v4360, %v4356
    %v4429 = vpack.c.b16 %v4365, %v4361
    %v4430 = vpack.c.b16 %v4366, %v4362
    %v4431 = vpack.c.b16 %v4367, %v4363
    %v4432 = vpack.c.b16 %v4368, %v4364
    %4497 = vmatprep.subr.bf16.mxu0 %v4398
    %4498 = vmatpush1.bf16.msra.mxu0 %v4397
    %4499 = vmatprep.subr.bf16.mxu0 %v4394
    %4500 = vmatpush1.bf16.msra.mxu0 %v4393
    %4501 = vmatprep.subr.bf16.mxu0 %v4390
    %4502 = vmatpush1.bf16.msra.mxu0 %v4389
    %4503 = vmatprep.subr.bf16.mxu0 %v4386
    %4504 = vmatpush1.bf16.msra.mxu0 %v4385
    %4505 = vmatprep.subr.bf16.mxu0 %v4382
    %4506 = vmatpush1.bf16.msra.mxu0 %v4381
    %4507 = vmatprep.subr.bf16.mxu0 %v4378
    %4508 = vmatpush1.bf16.msra.mxu0 %v4377
    %4509 = vmatprep.subr.bf16.mxu0 %v4374
    %4510 = vmatpush1.bf16.msra.mxu0 %v4373
    %4511 = vmatprep.subr.bf16.mxu0 %v4370
    %4512 = vmatpush1.bf16.msra.mxu0 %v4369
    %4513 = vmatprep.subr.bf16.mxu0 %v4430
    %4514 = vmatpush2.bf16.msra.mxu0 %v4429
    %4515 = vmatprep.subr.bf16.mxu0 %v4426
    %4516 = vmatpush2.bf16.msra.mxu0 %v4425
    %4517 = vmatprep.subr.bf16.mxu0 %v4422
    %4518 = vmatpush2.bf16.msra.mxu0 %v4421
    %4519 = vmatprep.subr.bf16.mxu0 %v4418
    %4520 = vmatpush2.bf16.msra.mxu0 %v4417
    %4521 = vmatprep.subr.bf16.mxu0 %v4414
    %4522 = vmatpush2.bf16.msra.mxu0 %v4413
    %4523 = vmatprep.subr.bf16.mxu0 %v4410
    %4524 = vmatpush2.bf16.msra.mxu0 %v4409
    %4525 = vmatprep.subr.bf16.mxu0 %v4406
    %4526 = vmatpush2.bf16.msra.mxu0 %v4405
    %4527 = vmatprep.subr.bf16.mxu0 %v4402
    %4528 = vmatpush2.bf16.msra.mxu0 %v4401
    %4529 = vmatprep.mubr.bf16.mxu0 %v4090
    %4530 = vmatmul.mubr.bf16.gmra.mxu0 %v4089
    %v4531 = vpop.f32.mrf.mxu0
    %v4532 = vadd.f32 %v4160, %v4531
    %v4533 = vpop.f32.mrf.mxu0
    %v4534 = vadd.f32 %v4164, %v4533
    %v4535 = vpop.f32.mrf.mxu0
    %v4536 = vpop.f32.mrf.mxu0
    %4537 = vdwg.mxu0
    %4538 = vmatprep.subr.bf16.mxu0 %v4400
    %4539 = vmatpush1.bf16.msra.mxu0 %v4399
    %4540 = vmatprep.subr.bf16.mxu0 %v4396
    %4541 = vmatpush1.bf16.msra.mxu0 %v4395
    %4542 = vmatprep.subr.bf16.mxu0 %v4392
    %4543 = vmatpush1.bf16.msra.mxu0 %v4391
    %4544 = vmatprep.subr.bf16.mxu0 %v4388
    %4545 = vmatpush1.bf16.msra.mxu0 %v4387
    %4546 = vmatprep.subr.bf16.mxu0 %v4384
    %4547 = vmatpush1.bf16.msra.mxu0 %v4383
    %4548 = vmatprep.subr.bf16.mxu0 %v4380
    %4549 = vmatpush1.bf16.msra.mxu0 %v4379
    %4550 = vmatprep.subr.bf16.mxu0 %v4376
    %4551 = vmatpush1.bf16.msra.mxu0 %v4375
    %4552 = vmatprep.subr.bf16.mxu0 %v4372
    %4553 = vmatpush1.bf16.msra.mxu0 %v4371
    %4554 = vmatprep.subr.bf16.mxu0 %v4432
    %4555 = vmatpush2.bf16.msra.mxu0 %v4431
    %4556 = vmatprep.subr.bf16.mxu0 %v4428
    %4557 = vmatpush2.bf16.msra.mxu0 %v4427
    %4558 = vmatprep.subr.bf16.mxu0 %v4424
    %4559 = vmatpush2.bf16.msra.mxu0 %v4423
    %4560 = vmatprep.subr.bf16.mxu0 %v4420
    %4561 = vmatpush2.bf16.msra.mxu0 %v4419
    %4562 = vmatprep.subr.bf16.mxu0 %v4416
    %4563 = vmatpush2.bf16.msra.mxu0 %v4415
    %4564 = vmatprep.subr.bf16.mxu0 %v4412
    %4565 = vmatpush2.bf16.msra.mxu0 %v4411
    %4566 = vmatprep.subr.bf16.mxu0 %v4408
    %4567 = vmatpush2.bf16.msra.mxu0 %v4407
    %4568 = vmatprep.subr.bf16.mxu0 %v4404
    %4569 = vmatpush2.bf16.msra.mxu0 %v4403
    %4570 = vmatprep.mubr.bf16.mxu0 %v4090
    %4571 = vmatmul.mubr.bf16.gmra.mxu0 %v4089
    %v4572 = vpop.f32.mrf.mxu0
    %v4573 = vadd.f32 %v4168, %v4572
    %v4574 = vpop.f32.mrf.mxu0
    %v4575 = vadd.f32 %v4172, %v4574
    %v4576 = vpop.f32.mrf.mxu0
    %v4577 = vpop.f32.mrf.mxu0
    %4578 = vdwg.mxu0
    %v4579 = vxor.u32 %v4532, 2147483648
    %v4580 = vmul.f32 %v4579, 1.442695
    %v4581 = vpow.pop %v4580
    %v4582 = vadd.f32 %v4581, 1.0
    %v4583 = vrcp.pop %v4582
    %v4584 = vmul.f32 1.0, %v4583
    %v4585 = vxor.u32 %v4534, 2147483648
    %v4586 = vmul.f32 %v4585, 1.442695
    %v4587 = vpow.pop %v4586
    %v4588 = vadd.f32 %v4587, 1.0
    %v4589 = vrcp.pop %v4588
    %v4590 = vmul.f32 1.0, %v4589
    %v4591 = vtanh.pop %v4573
    %v4592 = vxor.u32 %v4575, 2147483648
    %v4593 = vmul.f32 %v4592, 1.442695
    %v4594 = vpow.pop %v4593
    %v4595 = vadd.f32 %v4594, 1.0
    %v4596 = vrcp.pop %v4595
    %v4597 = vmul.f32 1.0, %v4596
    %v4598 = vld [vmem:[#allocation3] sm:$0xff]
    %v4599 = vmul.f32 %v4590, %v4598
    %v4600 = vmul.f32 %v4584, %v4591
    %v4601 = vadd.f32 %v4599, %v4600
    %v4602 = vtanh.pop %v4601
    %v4603 = vmul.f32 %v4597, %v4602
    %4604 = vst [vmem:[#allocation3] sm:$0xff] %v4601
    %4605 = vst [vmem:[#allocation2 + $0x8] sm:$0xff] %v4603
    %s4606 = sld [smem:[#allocation5 + $0x1c]]
    %v4607 = vstv %s4606
    %v4608 = vsel %vm122, %v4607, 4294967295
    %s4609 = sld [smem:[#allocation5 + $0x1d]]
    %v4610 = vstv %s4609
    %v4611 = vsel %vm126, %v4610, %v4608
    %s4612 = sld [smem:[#allocation5 + $0x1e]]
    %v4613 = vstv %s4612
    %v4614 = vsel %vm130, %v4613, %v4611
    %s4615 = sld [smem:[#allocation5 + $0x1f]]
    %v4616 = vstv %s4615
    %v4617 = vsel %vm134, %v4616, %v4614
    %vm4618 = vcmp.eq.s32.totalorder %v121, %v4617
    %v4619 = vsel %vm4618, 1, 0
    %v4620 = vcvt.s32.f32 %v4619
    %v4621 = vpack.c.bf16 %v4620, %v4620
    %v4622 = vld [vmem:[#allocation8] sm:$0xf]
    %v4623 = vld [vmem:[#allocation8 + $0x4] sm:$0xf]
    %v4624 = vld [vmem:[#allocation8 + $0x8] sm:$0xf]
    %v4625 = vld [vmem:[#allocation8 + $0xc] sm:$0xf]
    %v4626 = vld [vmem:[#allocation8 + $0x10] sm:$0xf]
    %v4627 = vld [vmem:[#allocation8 + $0x14] sm:$0xf]
    %v4628 = vld [vmem:[#allocation8 + $0x18] sm:$0xf]
    %v4629 = vld [vmem:[#allocation8 + $0x1c] sm:$0xf]
    %v4630 = vld [vmem:[#allocation8 + $0x20] sm:$0xf]
    %v4631 = vld [vmem:[#allocation8 + $0x24] sm:$0xf]
    %v4632 = vld [vmem:[#allocation8 + $0x28] sm:$0xf]
    %v4633 = vld [vmem:[#allocation8 + $0x2c] sm:$0xf]
    %v4634 = vld [vmem:[#allocation8 + $0x30] sm:$0xf]
    %v4635 = vld [vmem:[#allocation8 + $0x34] sm:$0xf]
    %v4636 = vld [vmem:[#allocation8 + $0x38] sm:$0xf]
    %v4637 = vld [vmem:[#allocation8 + $0x3c] sm:$0xf]
    %v4654 = vunpack.c.l.b16 %v4622
    %v4655 = vunpack.c.l.b16 %v4623
    %v4656 = vunpack.c.l.b16 %v4624
    %v4657 = vunpack.c.l.b16 %v4625
    %v4658 = vunpack.c.l.b16 %v4626
    %v4659 = vunpack.c.l.b16 %v4627
    %v4660 = vunpack.c.l.b16 %v4628
    %v4661 = vunpack.c.l.b16 %v4629
    %v4662 = vunpack.c.l.b16 %v4630
    %v4663 = vunpack.c.l.b16 %v4631
    %v4664 = vunpack.c.l.b16 %v4632
    %v4665 = vunpack.c.l.b16 %v4633
    %v4666 = vunpack.c.l.b16 %v4634
    %v4667 = vunpack.c.l.b16 %v4635
    %v4668 = vunpack.c.l.b16 %v4636
    %v4669 = vunpack.c.l.b16 %v4637
    %v4670 = vpack.c.b16 %v4655, %v4654
    %v4671 = vpack.c.b16 %v4657, %v4656
    %v4672 = vpack.c.b16 %v4659, %v4658
    %v4673 = vpack.c.b16 %v4661, %v4660
    %v4674 = vpack.c.b16 %v4663, %v4662
    %v4675 = vpack.c.b16 %v4665, %v4664
    %v4676 = vpack.c.b16 %v4667, %v4666
    %v4677 = vpack.c.b16 %v4669, %v4668
    %4686 = vmatprep.subr.bf16.mxu0 0
    %4687 = vmatpush1.bf16.msra.mxu0 %v4677
    %4688 = vmatprep.subr.bf16.mxu0 0
    %4689 = vmatpush1.bf16.msra.mxu0 %v4676
    %4690 = vmatprep.subr.bf16.mxu0 0
    %4691 = vmatpush1.bf16.msra.mxu0 %v4675
    %4692 = vmatprep.subr.bf16.mxu0 0
    %4693 = vmatpush1.bf16.msra.mxu0 %v4674
    %4694 = vmatprep.subr.bf16.mxu0 0
    %4695 = vmatpush1.bf16.msra.mxu0 %v4673
    %4696 = vmatprep.subr.bf16.mxu0 0
    %4697 = vmatpush1.bf16.msra.mxu0 %v4672
    %4698 = vmatprep.subr.bf16.mxu0 0
    %4699 = vmatpush1.bf16.msra.mxu0 %v4671
    %4700 = vmatprep.subr.bf16.mxu0 0
    %4701 = vmatpush1.bf16.msra.mxu0 %v4670
    %4702 = vmatprep.subr.bf16.mxu0 0
    %4703 = vmatpush2.bf16.msra.mxu0 0
    %4704 = vmatprep.subr.bf16.mxu0 0
    %4705 = vmatpush2.bf16.msra.mxu0 0
    %4706 = vmatprep.subr.bf16.mxu0 0
    %4707 = vmatpush2.bf16.msra.mxu0 0
    %4708 = vmatprep.subr.bf16.mxu0 0
    %4709 = vmatpush2.bf16.msra.mxu0 0
    %4710 = vmatprep.subr.bf16.mxu0 0
    %4711 = vmatpush2.bf16.msra.mxu0 0
    %4712 = vmatprep.subr.bf16.mxu0 0
    %4713 = vmatpush2.bf16.msra.mxu0 0
    %4714 = vmatprep.subr.bf16.mxu0 0
    %4715 = vmatpush2.bf16.msra.mxu0 0
    %4716 = vmatprep.subr.bf16.mxu0 0
    %4717 = vmatpush2.bf16.msra.mxu0 0
    %4718 = vmatprep.mubr.bf16.mxu0 0
    %4719 = vmatmul.mubr.bf16.gmra.mxu0 %v4621
    %v4720 = vpop.f32.mrf.mxu0
    %v4721 = vadd.f32 0.0, %v4720
    %v4722 = vpop.f32.mrf.mxu0
    %v4723 = vpop.f32.mrf.mxu0
    %v4724 = vpop.f32.mrf.mxu0
    %4725 = vdwg.mxu0
    %4726 = vst [vmem:[#allocation2] sm:$0xff] %v4721
    %v4727 = vld [vmem:[#allocation2] sm:$0xff]
    %v4728 = vld [vmem:[#allocation2 + $0x8] sm:$0xff]
    %v4729 = vpack.c.bf16 %v4727, %v4727
    %v4730 = vpack.c.bf16 %v4728, %v4728
    %v4731 = vld [vmem:[#allocation10] sm:$0xff]
    %v4732 = vld [vmem:[#allocation10 + $0x8] sm:$0xff]
    %v4733 = vld [vmem:[#allocation10 + $0x10] sm:$0xff]
    %v4734 = vld [vmem:[#allocation10 + $0x18] sm:$0xff]
    %v4735 = vld [vmem:[#allocation10 + $0x20] sm:$0xff]
    %v4736 = vld [vmem:[#allocation10 + $0x28] sm:$0xff]
    %v4737 = vld [vmem:[#allocation10 + $0x30] sm:$0xff]
    %v4738 = vld [vmem:[#allocation10 + $0x38] sm:$0xff]
    %v4739 = vld [vmem:[#allocation10 + $0x40] sm:$0xff]
    %v4740 = vld [vmem:[#allocation10 + $0x48] sm:$0xff]
    %v4741 = vld [vmem:[#allocation10 + $0x50] sm:$0xff]
    %v4742 = vld [vmem:[#allocation10 + $0x58] sm:$0xff]
    %v4743 = vld [vmem:[#allocation10 + $0x60] sm:$0xff]
    %v4744 = vld [vmem:[#allocation10 + $0x68] sm:$0xff]
    %v4745 = vld [vmem:[#allocation10 + $0x70] sm:$0xff]
    %v4746 = vld [vmem:[#allocation10 + $0x78] sm:$0xff]
    %v4747 = vld [vmem:[#allocation10 + $0x80] sm:$0xff]
    %v4748 = vld [vmem:[#allocation10 + $0x88] sm:$0xff]
    %v4749 = vld [vmem:[#allocation10 + $0x90] sm:$0xff]
    %v4750 = vld [vmem:[#allocation10 + $0x98] sm:$0xff]
    %v4751 = vld [vmem:[#allocation10 + $0xa0] sm:$0xff]
    %v4752 = vld [vmem:[#allocation10 + $0xa8] sm:$0xff]
    %v4753 = vld [vmem:[#allocation10 + $0xb0] sm:$0xff]
    %v4754 = vld [vmem:[#allocation10 + $0xb8] sm:$0xff]
    %v4755 = vld [vmem:[#allocation10 + $0xc0] sm:$0xff]
    %v4756 = vld [vmem:[#allocation10 + $0xc8] sm:$0xff]
    %v4757 = vld [vmem:[#allocation10 + $0xd0] sm:$0xff]
    %v4758 = vld [vmem:[#allocation10 + $0xd8] sm:$0xff]
    %v4759 = vld [vmem:[#allocation10 + $0xe0] sm:$0xff]
    %v4760 = vld [vmem:[#allocation10 + $0xe8] sm:$0xff]
    %v4761 = vld [vmem:[#allocation10 + $0xf0] sm:$0xff]
    %v4762 = vld [vmem:[#allocation10 + $0xf8] sm:$0xff]
    %v4763 = vld [vmem:[#allocation10 + $0x100] sm:$0xff]
    %v4764 = vld [vmem:[#allocation10 + $0x108] sm:$0xff]
    %v4765 = vld [vmem:[#allocation10 + $0x110] sm:$0xff]
    %v4766 = vld [vmem:[#allocation10 + $0x118] sm:$0xff]
    %v4767 = vld [vmem:[#allocation10 + $0x120] sm:$0xff]
    %v4768 = vld [vmem:[#allocation10 + $0x128] sm:$0xff]
    %v4769 = vld [vmem:[#allocation10 + $0x130] sm:$0xff]
    %v4770 = vld [vmem:[#allocation10 + $0x138] sm:$0xff]
    %v4771 = vld [vmem:[#allocation10 + $0x140] sm:$0xff]
    %v4772 = vld [vmem:[#allocation10 + $0x148] sm:$0xff]
    %v4773 = vld [vmem:[#allocation10 + $0x150] sm:$0xff]
    %v4774 = vld [vmem:[#allocation10 + $0x158] sm:$0xff]
    %v4775 = vld [vmem:[#allocation10 + $0x160] sm:$0xff]
    %v4776 = vld [vmem:[#allocation10 + $0x168] sm:$0xff]
    %v4777 = vld [vmem:[#allocation10 + $0x170] sm:$0xff]
    %v4778 = vld [vmem:[#allocation10 + $0x178] sm:$0xff]
    %v4779 = vld [vmem:[#allocation10 + $0x180] sm:$0xff]
    %v4780 = vld [vmem:[#allocation10 + $0x188] sm:$0xff]
    %v4781 = vld [vmem:[#allocation10 + $0x190] sm:$0xff]
    %v4782 = vld [vmem:[#allocation10 + $0x198] sm:$0xff]
    %v4783 = vld [vmem:[#allocation10 + $0x1a0] sm:$0xff]
    %v4784 = vld [vmem:[#allocation10 + $0x1a8] sm:$0xff]
    %v4785 = vld [vmem:[#allocation10 + $0x1b0] sm:$0xff]
    %v4786 = vld [vmem:[#allocation10 + $0x1b8] sm:$0xff]
    %v4787 = vld [vmem:[#allocation10 + $0x1c0] sm:$0xff]
    %v4788 = vld [vmem:[#allocation10 + $0x1c8] sm:$0xff]
    %v4789 = vld [vmem:[#allocation10 + $0x1d0] sm:$0xff]
    %v4790 = vld [vmem:[#allocation10 + $0x1d8] sm:$0xff]
    %v4791 = vld [vmem:[#allocation10 + $0x1e0] sm:$0xff]
    %v4792 = vld [vmem:[#allocation10 + $0x1e8] sm:$0xff]
    %v4793 = vld [vmem:[#allocation10 + $0x1f0] sm:$0xff]
    %v4794 = vld [vmem:[#allocation10 + $0x1f8] sm:$0xff]
    %v4795 = vld [vmem:[%s5] sm:$0xf]
    %v4797 = vlaneseq
    %v4798 = vshrl.u32 %v4797, 7
    %v4799 = vsub.s32 0, %v4798
    %v4800 = vrot.slane %v4795, %v4799
    %v4801 = vlaneseq
    %v4802 = vshrl.u32 %v4801, 7
    %v4803 = vsub.s32 1, %v4802
    %v4804 = vrot.slane %v4795, %v4803
    %v4805 = vlaneseq
    %v4806 = vshrl.u32 %v4805, 7
    %v4807 = vsub.s32 2, %v4806
    %v4808 = vrot.slane %v4795, %v4807
    %v4809 = vlaneseq
    %v4810 = vshrl.u32 %v4809, 7
    %v4811 = vsub.s32 3, %v4810
    %v4812 = vrot.slane %v4795, %v4811
    %v4881 = vunpack.c.l.b16 %v4731
    %v4882 = vunpack.c.h.b16 %v4731
    %v4883 = vunpack.c.l.b16 %v4732
    %v4884 = vunpack.c.h.b16 %v4732
    %v4885 = vunpack.c.l.b16 %v4733
    %v4886 = vunpack.c.h.b16 %v4733
    %v4887 = vunpack.c.l.b16 %v4734
    %v4888 = vunpack.c.h.b16 %v4734
    %v4889 = vunpack.c.l.b16 %v4735
    %v4890 = vunpack.c.h.b16 %v4735
    %v4891 = vunpack.c.l.b16 %v4736
    %v4892 = vunpack.c.h.b16 %v4736
    %v4893 = vunpack.c.l.b16 %v4737
    %v4894 = vunpack.c.h.b16 %v4737
    %v4895 = vunpack.c.l.b16 %v4738
    %v4896 = vunpack.c.h.b16 %v4738
    %v4897 = vunpack.c.l.b16 %v4739
    %v4898 = vunpack.c.h.b16 %v4739
    %v4899 = vunpack.c.l.b16 %v4740
    %v4900 = vunpack.c.h.b16 %v4740
    %v4901 = vunpack.c.l.b16 %v4741
    %v4902 = vunpack.c.h.b16 %v4741
    %v4903 = vunpack.c.l.b16 %v4742
    %v4904 = vunpack.c.h.b16 %v4742
    %v4905 = vunpack.c.l.b16 %v4743
    %v4906 = vunpack.c.h.b16 %v4743
    %v4907 = vunpack.c.l.b16 %v4744
    %v4908 = vunpack.c.h.b16 %v4744
    %v4909 = vunpack.c.l.b16 %v4745
    %v4910 = vunpack.c.h.b16 %v4745
    %v4911 = vunpack.c.l.b16 %v4746
    %v4912 = vunpack.c.h.b16 %v4746
    %v4913 = vunpack.c.l.b16 %v4747
    %v4914 = vunpack.c.h.b16 %v4747
    %v4915 = vunpack.c.l.b16 %v4748
    %v4916 = vunpack.c.h.b16 %v4748
    %v4917 = vunpack.c.l.b16 %v4749
    %v4918 = vunpack.c.h.b16 %v4749
    %v4919 = vunpack.c.l.b16 %v4750
    %v4920 = vunpack.c.h.b16 %v4750
    %v4921 = vunpack.c.l.b16 %v4751
    %v4922 = vunpack.c.h.b16 %v4751
    %v4923 = vunpack.c.l.b16 %v4752
    %v4924 = vunpack.c.h.b16 %v4752
    %v4925 = vunpack.c.l.b16 %v4753
    %v4926 = vunpack.c.h.b16 %v4753
    %v4927 = vunpack.c.l.b16 %v4754
    %v4928 = vunpack.c.h.b16 %v4754
    %v4929 = vunpack.c.l.b16 %v4755
    %v4930 = vunpack.c.h.b16 %v4755
    %v4931 = vunpack.c.l.b16 %v4756
    %v4932 = vunpack.c.h.b16 %v4756
    %v4933 = vunpack.c.l.b16 %v4757
    %v4934 = vunpack.c.h.b16 %v4757
    %v4935 = vunpack.c.l.b16 %v4758
    %v4936 = vunpack.c.h.b16 %v4758
    %v4937 = vunpack.c.l.b16 %v4759
    %v4938 = vunpack.c.h.b16 %v4759
    %v4939 = vunpack.c.l.b16 %v4760
    %v4940 = vunpack.c.h.b16 %v4760
    %v4941 = vunpack.c.l.b16 %v4761
    %v4942 = vunpack.c.h.b16 %v4761
    %v4943 = vunpack.c.l.b16 %v4762
    %v4944 = vunpack.c.h.b16 %v4762
    %v4945 = vunpack.c.l.b16 %v4763
    %v4946 = vunpack.c.h.b16 %v4763
    %v4947 = vunpack.c.l.b16 %v4764
    %v4948 = vunpack.c.h.b16 %v4764
    %v4949 = vunpack.c.l.b16 %v4765
    %v4950 = vunpack.c.h.b16 %v4765
    %v4951 = vunpack.c.l.b16 %v4766
    %v4952 = vunpack.c.h.b16 %v4766
    %v4953 = vunpack.c.l.b16 %v4767
    %v4954 = vunpack.c.h.b16 %v4767
    %v4955 = vunpack.c.l.b16 %v4768
    %v4956 = vunpack.c.h.b16 %v4768
    %v4957 = vunpack.c.l.b16 %v4769
    %v4958 = vunpack.c.h.b16 %v4769
    %v4959 = vunpack.c.l.b16 %v4770
    %v4960 = vunpack.c.h.b16 %v4770
    %v4961 = vunpack.c.l.b16 %v4771
    %v4962 = vunpack.c.h.b16 %v4771
    %v4963 = vunpack.c.l.b16 %v4772
    %v4964 = vunpack.c.h.b16 %v4772
    %v4965 = vunpack.c.l.b16 %v4773
    %v4966 = vunpack.c.h.b16 %v4773
    %v4967 = vunpack.c.l.b16 %v4774
    %v4968 = vunpack.c.h.b16 %v4774
    %v4969 = vunpack.c.l.b16 %v4775
    %v4970 = vunpack.c.h.b16 %v4775
    %v4971 = vunpack.c.l.b16 %v4776
    %v4972 = vunpack.c.h.b16 %v4776
    %v4973 = vunpack.c.l.b16 %v4777
    %v4974 = vunpack.c.h.b16 %v4777
    %v4975 = vunpack.c.l.b16 %v4778
    %v4976 = vunpack.c.h.b16 %v4778
    %v4977 = vunpack.c.l.b16 %v4779
    %v4978 = vunpack.c.h.b16 %v4779
    %v4979 = vunpack.c.l.b16 %v4780
    %v4980 = vunpack.c.h.b16 %v4780
    %v4981 = vunpack.c.l.b16 %v4781
    %v4982 = vunpack.c.h.b16 %v4781
    %v4983 = vunpack.c.l.b16 %v4782
    %v4984 = vunpack.c.h.b16 %v4782
    %v4985 = vunpack.c.l.b16 %v4783
    %v4986 = vunpack.c.h.b16 %v4783
    %v4987 = vunpack.c.l.b16 %v4784
    %v4988 = vunpack.c.h.b16 %v4784
    %v4989 = vunpack.c.l.b16 %v4785
    %v4990 = vunpack.c.h.b16 %v4785
    %v4991 = vunpack.c.l.b16 %v4786
    %v4992 = vunpack.c.h.b16 %v4786
    %v4993 = vunpack.c.l.b16 %v4787
    %v4994 = vunpack.c.h.b16 %v4787
    %v4995 = vunpack.c.l.b16 %v4788
    %v4996 = vunpack.c.h.b16 %v4788
    %v4997 = vunpack.c.l.b16 %v4789
    %v4998 = vunpack.c.h.b16 %v4789
    %v4999 = vunpack.c.l.b16 %v4790
    %v5000 = vunpack.c.h.b16 %v4790
    %v5001 = vunpack.c.l.b16 %v4791
    %v5002 = vunpack.c.h.b16 %v4791
    %v5003 = vunpack.c.l.b16 %v4792
    %v5004 = vunpack.c.h.b16 %v4792
    %v5005 = vunpack.c.l.b16 %v4793
    %v5006 = vunpack.c.h.b16 %v4793
    %v5007 = vunpack.c.l.b16 %v4794
    %v5008 = vunpack.c.h.b16 %v4794
    %v5009 = vpack.c.b16 %v4885, %v4881
    %v5010 = vpack.c.b16 %v4886, %v4882
    %v5011 = vpack.c.b16 %v4887, %v4883
    %v5012 = vpack.c.b16 %v4888, %v4884
    %v5013 = vpack.c.b16 %v4893, %v4889
    %v5014 = vpack.c.b16 %v4894, %v4890
    %v5015 = vpack.c.b16 %v4895, %v4891
    %v5016 = vpack.c.b16 %v4896, %v4892
    %v5017 = vpack.c.b16 %v4901, %v4897
    %v5018 = vpack.c.b16 %v4902, %v4898
    %v5019 = vpack.c.b16 %v4903, %v4899
    %v5020 = vpack.c.b16 %v4904, %v4900
    %v5021 = vpack.c.b16 %v4909, %v4905
    %v5022 = vpack.c.b16 %v4910, %v4906
    %v5023 = vpack.c.b16 %v4911, %v4907
    %v5024 = vpack.c.b16 %v4912, %v4908
    %v5025 = vpack.c.b16 %v4917, %v4913
    %v5026 = vpack.c.b16 %v4918, %v4914
    %v5027 = vpack.c.b16 %v4919, %v4915
    %v5028 = vpack.c.b16 %v4920, %v4916
    %v5029 = vpack.c.b16 %v4925, %v4921
    %v5030 = vpack.c.b16 %v4926, %v4922
    %v5031 = vpack.c.b16 %v4927, %v4923
    %v5032 = vpack.c.b16 %v4928, %v4924
    %v5033 = vpack.c.b16 %v4933, %v4929
    %v5034 = vpack.c.b16 %v4934, %v4930
    %v5035 = vpack.c.b16 %v4935, %v4931
    %v5036 = vpack.c.b16 %v4936, %v4932
    %v5037 = vpack.c.b16 %v4941, %v4937
    %v5038 = vpack.c.b16 %v4942, %v4938
    %v5039 = vpack.c.b16 %v4943, %v4939
    %v5040 = vpack.c.b16 %v4944, %v4940
    %v5041 = vpack.c.b16 %v4949, %v4945
    %v5042 = vpack.c.b16 %v4950, %v4946
    %v5043 = vpack.c.b16 %v4951, %v4947
    %v5044 = vpack.c.b16 %v4952, %v4948
    %v5045 = vpack.c.b16 %v4957, %v4953
    %v5046 = vpack.c.b16 %v4958, %v4954
    %v5047 = vpack.c.b16 %v4959, %v4955
    %v5048 = vpack.c.b16 %v4960, %v4956
    %v5049 = vpack.c.b16 %v4965, %v4961
    %v5050 = vpack.c.b16 %v4966, %v4962
    %v5051 = vpack.c.b16 %v4967, %v4963
    %v5052 = vpack.c.b16 %v4968, %v4964
    %v5053 = vpack.c.b16 %v4973, %v4969
    %v5054 = vpack.c.b16 %v4974, %v4970
    %v5055 = vpack.c.b16 %v4975, %v4971
    %v5056 = vpack.c.b16 %v4976, %v4972
    %v5057 = vpack.c.b16 %v4981, %v4977
    %v5058 = vpack.c.b16 %v4982, %v4978
    %v5059 = vpack.c.b16 %v4983, %v4979
    %v5060 = vpack.c.b16 %v4984, %v4980
    %v5061 = vpack.c.b16 %v4989, %v4985
    %v5062 = vpack.c.b16 %v4990, %v4986
    %v5063 = vpack.c.b16 %v4991, %v4987
    %v5064 = vpack.c.b16 %v4992, %v4988
    %v5065 = vpack.c.b16 %v4997, %v4993
    %v5066 = vpack.c.b16 %v4998, %v4994
    %v5067 = vpack.c.b16 %v4999, %v4995
    %v5068 = vpack.c.b16 %v5000, %v4996
    %v5069 = vpack.c.b16 %v5005, %v5001
    %v5070 = vpack.c.b16 %v5006, %v5002
    %v5071 = vpack.c.b16 %v5007, %v5003
    %v5072 = vpack.c.b16 %v5008, %v5004
    %5137 = vmatprep.subr.bf16.mxu0 %v5038
    %5138 = vmatpush1.bf16.msra.mxu0 %v5037
    %5139 = vmatprep.subr.bf16.mxu0 %v5034
    %5140 = vmatpush1.bf16.msra.mxu0 %v5033
    %5141 = vmatprep.subr.bf16.mxu0 %v5030
    %5142 = vmatpush1.bf16.msra.mxu0 %v5029
    %5143 = vmatprep.subr.bf16.mxu0 %v5026
    %5144 = vmatpush1.bf16.msra.mxu0 %v5025
    %5145 = vmatprep.subr.bf16.mxu0 %v5022
    %5146 = vmatpush1.bf16.msra.mxu0 %v5021
    %5147 = vmatprep.subr.bf16.mxu0 %v5018
    %5148 = vmatpush1.bf16.msra.mxu0 %v5017
    %5149 = vmatprep.subr.bf16.mxu0 %v5014
    %5150 = vmatpush1.bf16.msra.mxu0 %v5013
    %5151 = vmatprep.subr.bf16.mxu0 %v5010
    %5152 = vmatpush1.bf16.msra.mxu0 %v5009
    %5153 = vmatprep.subr.bf16.mxu0 %v5070
    %5154 = vmatpush2.bf16.msra.mxu0 %v5069
    %5155 = vmatprep.subr.bf16.mxu0 %v5066
    %5156 = vmatpush2.bf16.msra.mxu0 %v5065
    %5157 = vmatprep.subr.bf16.mxu0 %v5062
    %5158 = vmatpush2.bf16.msra.mxu0 %v5061
    %5159 = vmatprep.subr.bf16.mxu0 %v5058
    %5160 = vmatpush2.bf16.msra.mxu0 %v5057
    %5161 = vmatprep.subr.bf16.mxu0 %v5054
    %5162 = vmatpush2.bf16.msra.mxu0 %v5053
    %5163 = vmatprep.subr.bf16.mxu0 %v5050
    %5164 = vmatpush2.bf16.msra.mxu0 %v5049
    %5165 = vmatprep.subr.bf16.mxu0 %v5046
    %5166 = vmatpush2.bf16.msra.mxu0 %v5045
    %5167 = vmatprep.subr.bf16.mxu0 %v5042
    %5168 = vmatpush2.bf16.msra.mxu0 %v5041
    %5169 = vmatprep.mubr.bf16.mxu0 %v4730
    %5170 = vmatmul.mubr.bf16.gmra.mxu0 %v4729
    %v5171 = vpop.f32.mrf.mxu0
    %v5172 = vadd.f32 %v4800, %v5171
    %v5173 = vpop.f32.mrf.mxu0
    %v5174 = vadd.f32 %v4804, %v5173
    %v5175 = vpop.f32.mrf.mxu0
    %v5176 = vpop.f32.mrf.mxu0
    %5177 = vdwg.mxu0
    %5178 = vmatprep.subr.bf16.mxu0 %v5040
    %5179 = vmatpush1.bf16.msra.mxu0 %v5039
    %5180 = vmatprep.subr.bf16.mxu0 %v5036
    %5181 = vmatpush1.bf16.msra.mxu0 %v5035
    %5182 = vmatprep.subr.bf16.mxu0 %v5032
    %5183 = vmatpush1.bf16.msra.mxu0 %v5031
    %5184 = vmatprep.subr.bf16.mxu0 %v5028
    %5185 = vmatpush1.bf16.msra.mxu0 %v5027
    %5186 = vmatprep.subr.bf16.mxu0 %v5024
    %5187 = vmatpush1.bf16.msra.mxu0 %v5023
    %5188 = vmatprep.subr.bf16.mxu0 %v5020
    %5189 = vmatpush1.bf16.msra.mxu0 %v5019
    %5190 = vmatprep.subr.bf16.mxu0 %v5016
    %5191 = vmatpush1.bf16.msra.mxu0 %v5015
    %5192 = vmatprep.subr.bf16.mxu0 %v5012
    %5193 = vmatpush1.bf16.msra.mxu0 %v5011
    %5194 = vmatprep.subr.bf16.mxu0 %v5072
    %5195 = vmatpush2.bf16.msra.mxu0 %v5071
    %5196 = vmatprep.subr.bf16.mxu0 %v5068
    %5197 = vmatpush2.bf16.msra.mxu0 %v5067
    %5198 = vmatprep.subr.bf16.mxu0 %v5064
    %5199 = vmatpush2.bf16.msra.mxu0 %v5063
    %5200 = vmatprep.subr.bf16.mxu0 %v5060
    %5201 = vmatpush2.bf16.msra.mxu0 %v5059
    %5202 = vmatprep.subr.bf16.mxu0 %v5056
    %5203 = vmatpush2.bf16.msra.mxu0 %v5055
    %5204 = vmatprep.subr.bf16.mxu0 %v5052
    %5205 = vmatpush2.bf16.msra.mxu0 %v5051
    %5206 = vmatprep.subr.bf16.mxu0 %v5048
    %5207 = vmatpush2.bf16.msra.mxu0 %v5047
    %5208 = vmatprep.subr.bf16.mxu0 %v5044
    %5209 = vmatpush2.bf16.msra.mxu0 %v5043
    %5210 = vmatprep.mubr.bf16.mxu0 %v4730
    %5211 = vmatmul.mubr.bf16.gmra.mxu0 %v4729
    %v5212 = vpop.f32.mrf.mxu0
    %v5213 = vadd.f32 %v4808, %v5212
    %v5214 = vpop.f32.mrf.mxu0
    %v5215 = vadd.f32 %v4812, %v5214
    %v5216 = vpop.f32.mrf.mxu0
    %v5217 = vpop.f32.mrf.mxu0
    %5218 = vdwg.mxu0
    %v5219 = vxor.u32 %v5172, 2147483648
    %v5220 = vmul.f32 %v5219, 1.442695
    %v5221 = vpow.pop %v5220
    %v5222 = vadd.f32 %v5221, 1.0
    %v5223 = vrcp.pop %v5222
    %v5224 = vmul.f32 1.0, %v5223
    %v5225 = vxor.u32 %v5174, 2147483648
    %v5226 = vmul.f32 %v5225, 1.442695
    %v5227 = vpow.pop %v5226
    %v5228 = vadd.f32 %v5227, 1.0
    %v5229 = vrcp.pop %v5228
    %v5230 = vmul.f32 1.0, %v5229
    %v5231 = vtanh.pop %v5213
    %v5232 = vxor.u32 %v5215, 2147483648
    %v5233 = vmul.f32 %v5232, 1.442695
    %v5234 = vpow.pop %v5233
    %v5235 = vadd.f32 %v5234, 1.0
    %v5236 = vrcp.pop %v5235
    %v5237 = vmul.f32 1.0, %v5236
    %v5238 = vld [vmem:[#allocation3] sm:$0xff]
    %v5239 = vmul.f32 %v5230, %v5238
    %v5240 = vmul.f32 %v5224, %v5231
    %v5241 = vadd.f32 %v5239, %v5240
    %v5242 = vtanh.pop %v5241
    %v5243 = vmul.f32 %v5237, %v5242
    %5244 = vst [vmem:[#allocation3] sm:$0xff] %v5241
    %5245 = vst [vmem:[#allocation2 + $0x8] sm:$0xff] %v5243
    %s5246 = sld [smem:[#allocation6]]
    %v5247 = vstv %s5246
    %v5248 = vsel %vm122, %v5247, 4294967295
    %s5249 = sld [smem:[#allocation6 + $0x1]]
    %v5250 = vstv %s5249
    %v5251 = vsel %vm126, %v5250, %v5248
    %s5252 = sld [smem:[#allocation6 + $0x2]]
    %v5253 = vstv %s5252
    %v5254 = vsel %vm130, %v5253, %v5251
    %s5255 = sld [smem:[#allocation6 + $0x3]]
    %v5256 = vstv %s5255
    %v5257 = vsel %vm134, %v5256, %v5254
    %vm5258 = vcmp.eq.s32.totalorder %v121, %v5257
    %v5259 = vsel %vm5258, 1, 0
    %v5260 = vcvt.s32.f32 %v5259
    %v5261 = vpack.c.bf16 %v5260, %v5260
    %v5262 = vld [vmem:[#allocation12] sm:$0xf]
    %v5263 = vld [vmem:[#allocation12 + $0x4] sm:$0xf]
    %v5264 = vld [vmem:[#allocation12 + $0x8] sm:$0xf]
    %v5265 = vld [vmem:[#allocation12 + $0xc] sm:$0xf]
    %v5266 = vld [vmem:[#allocation12 + $0x10] sm:$0xf]
    %v5267 = vld [vmem:[#allocation12 + $0x14] sm:$0xf]
    %v5268 = vld [vmem:[#allocation12 + $0x18] sm:$0xf]
    %v5269 = vld [vmem:[#allocation12 + $0x1c] sm:$0xf]
    %v5270 = vld [vmem:[#allocation12 + $0x20] sm:$0xf]
    %v5271 = vld [vmem:[#allocation12 + $0x24] sm:$0xf]
    %v5272 = vld [vmem:[#allocation12 + $0x28] sm:$0xf]
    %v5273 = vld [vmem:[#allocation12 + $0x2c] sm:$0xf]
    %v5274 = vld [vmem:[#allocation12 + $0x30] sm:$0xf]
    %v5275 = vld [vmem:[#allocation12 + $0x34] sm:$0xf]
    %v5276 = vld [vmem:[#allocation12 + $0x38] sm:$0xf]
    %v5277 = vld [vmem:[#allocation12 + $0x3c] sm:$0xf]
    %v5294 = vunpack.c.l.b16 %v5262
    %v5295 = vunpack.c.l.b16 %v5263
    %v5296 = vunpack.c.l.b16 %v5264
    %v5297 = vunpack.c.l.b16 %v5265
    %v5298 = vunpack.c.l.b16 %v5266
    %v5299 = vunpack.c.l.b16 %v5267
    %v5300 = vunpack.c.l.b16 %v5268
    %v5301 = vunpack.c.l.b16 %v5269
    %v5302 = vunpack.c.l.b16 %v5270
    %v5303 = vunpack.c.l.b16 %v5271
    %v5304 = vunpack.c.l.b16 %v5272
    %v5305 = vunpack.c.l.b16 %v5273
    %v5306 = vunpack.c.l.b16 %v5274
    %v5307 = vunpack.c.l.b16 %v5275
    %v5308 = vunpack.c.l.b16 %v5276
    %v5309 = vunpack.c.l.b16 %v5277
    %v5310 = vpack.c.b16 %v5295, %v5294
    %v5311 = vpack.c.b16 %v5297, %v5296
    %v5312 = vpack.c.b16 %v5299, %v5298
    %v5313 = vpack.c.b16 %v5301, %v5300
    %v5314 = vpack.c.b16 %v5303, %v5302
    %v5315 = vpack.c.b16 %v5305, %v5304
    %v5316 = vpack.c.b16 %v5307, %v5306
    %v5317 = vpack.c.b16 %v5309, %v5308
    %5326 = vmatprep.subr.bf16.mxu0 0
    %5327 = vmatpush1.bf16.msra.mxu0 %v5317
    %5328 = vmatprep.subr.bf16.mxu0 0
    %5329 = vmatpush1.bf16.msra.mxu0 %v5316
    %5330 = vmatprep.subr.bf16.mxu0 0
    %5331 = vmatpush1.bf16.msra.mxu0 %v5315
    %5332 = vmatprep.subr.bf16.mxu0 0
    %5333 = vmatpush1.bf16.msra.mxu0 %v5314
    %5334 = vmatprep.subr.bf16.mxu0 0
    %5335 = vmatpush1.bf16.msra.mxu0 %v5313
    %5336 = vmatprep.subr.bf16.mxu0 0
    %5337 = vmatpush1.bf16.msra.mxu0 %v5312
    %5338 = vmatprep.subr.bf16.mxu0 0
    %5339 = vmatpush1.bf16.msra.mxu0 %v5311
    %5340 = vmatprep.subr.bf16.mxu0 0
    %5341 = vmatpush1.bf16.msra.mxu0 %v5310
    %5342 = vmatprep.subr.bf16.mxu0 0
    %5343 = vmatpush2.bf16.msra.mxu0 0
    %5344 = vmatprep.subr.bf16.mxu0 0
    %5345 = vmatpush2.bf16.msra.mxu0 0
    %5346 = vmatprep.subr.bf16.mxu0 0
    %5347 = vmatpush2.bf16.msra.mxu0 0
    %5348 = vmatprep.subr.bf16.mxu0 0
    %5349 = vmatpush2.bf16.msra.mxu0 0
    %5350 = vmatprep.subr.bf16.mxu0 0
    %5351 = vmatpush2.bf16.msra.mxu0 0
    %5352 = vmatprep.subr.bf16.mxu0 0
    %5353 = vmatpush2.bf16.msra.mxu0 0
    %5354 = vmatprep.subr.bf16.mxu0 0
    %5355 = vmatpush2.bf16.msra.mxu0 0
    %5356 = vmatprep.subr.bf16.mxu0 0
    %5357 = vmatpush2.bf16.msra.mxu0 0
    %5358 = vmatprep.mubr.bf16.mxu0 0
    %5359 = vmatmul.mubr.bf16.gmra.mxu0 %v5261
    %v5360 = vpop.f32.mrf.mxu0
    %v5361 = vadd.f32 0.0, %v5360
    %v5362 = vpop.f32.mrf.mxu0
    %v5363 = vpop.f32.mrf.mxu0
    %v5364 = vpop.f32.mrf.mxu0
    %5365 = vdwg.mxu0
    %5366 = vst [vmem:[#allocation2] sm:$0xff] %v5361
    %v5367 = vld [vmem:[#allocation2] sm:$0xff]
    %v5368 = vld [vmem:[#allocation2 + $0x8] sm:$0xff]
    %v5369 = vpack.c.bf16 %v5367, %v5367
    %v5370 = vpack.c.bf16 %v5368, %v5368
    %v5371 = vld [vmem:[#allocation13] sm:$0xff]
    %v5372 = vld [vmem:[#allocation13 + $0x8] sm:$0xff]
    %v5373 = vld [vmem:[#allocation13 + $0x10] sm:$0xff]
    %v5374 = vld [vmem:[#allocation13 + $0x18] sm:$0xff]
    %v5375 = vld [vmem:[#allocation13 + $0x20] sm:$0xff]
    %v5376 = vld [vmem:[#allocation13 + $0x28] sm:$0xff]
    %v5377 = vld [vmem:[#allocation13 + $0x30] sm:$0xff]
    %v5378 = vld [vmem:[#allocation13 + $0x38] sm:$0xff]
    %v5379 = vld [vmem:[#allocation13 + $0x40] sm:$0xff]
    %v5380 = vld [vmem:[#allocation13 + $0x48] sm:$0xff]
    %v5381 = vld [vmem:[#allocation13 + $0x50] sm:$0xff]
    %v5382 = vld [vmem:[#allocation13 + $0x58] sm:$0xff]
    %v5383 = vld [vmem:[#allocation13 + $0x60] sm:$0xff]
    %v5384 = vld [vmem:[#allocation13 + $0x68] sm:$0xff]
    %v5385 = vld [vmem:[#allocation13 + $0x70] sm:$0xff]
    %v5386 = vld [vmem:[#allocation13 + $0x78] sm:$0xff]
    %v5387 = vld [vmem:[#allocation13 + $0x80] sm:$0xff]
    %v5388 = vld [vmem:[#allocation13 + $0x88] sm:$0xff]
    %v5389 = vld [vmem:[#allocation13 + $0x90] sm:$0xff]
    %v5390 = vld [vmem:[#allocation13 + $0x98] sm:$0xff]
    %v5391 = vld [vmem:[#allocation13 + $0xa0] sm:$0xff]
    %v5392 = vld [vmem:[#allocation13 + $0xa8] sm:$0xff]
    %v5393 = vld [vmem:[#allocation13 + $0xb0] sm:$0xff]
    %v5394 = vld [vmem:[#allocation13 + $0xb8] sm:$0xff]
    %v5395 = vld [vmem:[#allocation13 + $0xc0] sm:$0xff]
    %v5396 = vld [vmem:[#allocation13 + $0xc8] sm:$0xff]
    %v5397 = vld [vmem:[#allocation13 + $0xd0] sm:$0xff]
    %v5398 = vld [vmem:[#allocation13 + $0xd8] sm:$0xff]
    %v5399 = vld [vmem:[#allocation13 + $0xe0] sm:$0xff]
    %v5400 = vld [vmem:[#allocation13 + $0xe8] sm:$0xff]
    %v5401 = vld [vmem:[#allocation13 + $0xf0] sm:$0xff]
    %v5402 = vld [vmem:[#allocation13 + $0xf8] sm:$0xff]
    %v5403 = vld [vmem:[#allocation13 + $0x100] sm:$0xff]
    %v5404 = vld [vmem:[#allocation13 + $0x108] sm:$0xff]
    %v5405 = vld [vmem:[#allocation13 + $0x110] sm:$0xff]
    %v5406 = vld [vmem:[#allocation13 + $0x118] sm:$0xff]
    %v5407 = vld [vmem:[#allocation13 + $0x120] sm:$0xff]
    %v5408 = vld [vmem:[#allocation13 + $0x128] sm:$0xff]
    %v5409 = vld [vmem:[#allocation13 + $0x130] sm:$0xff]
    %v5410 = vld [vmem:[#allocation13 + $0x138] sm:$0xff]
    %v5411 = vld [vmem:[#allocation13 + $0x140] sm:$0xff]
    %v5412 = vld [vmem:[#allocation13 + $0x148] sm:$0xff]
    %v5413 = vld [vmem:[#allocation13 + $0x150] sm:$0xff]
    %v5414 = vld [vmem:[#allocation13 + $0x158] sm:$0xff]
    %v5415 = vld [vmem:[#allocation13 + $0x160] sm:$0xff]
    %v5416 = vld [vmem:[#allocation13 + $0x168] sm:$0xff]
    %v5417 = vld [vmem:[#allocation13 + $0x170] sm:$0xff]
    %v5418 = vld [vmem:[#allocation13 + $0x178] sm:$0xff]
    %v5419 = vld [vmem:[#allocation13 + $0x180] sm:$0xff]
    %v5420 = vld [vmem:[#allocation13 + $0x188] sm:$0xff]
    %v5421 = vld [vmem:[#allocation13 + $0x190] sm:$0xff]
    %v5422 = vld [vmem:[#allocation13 + $0x198] sm:$0xff]
    %v5423 = vld [vmem:[#allocation13 + $0x1a0] sm:$0xff]
    %v5424 = vld [vmem:[#allocation13 + $0x1a8] sm:$0xff]
    %v5425 = vld [vmem:[#allocation13 + $0x1b0] sm:$0xff]
    %v5426 = vld [vmem:[#allocation13 + $0x1b8] sm:$0xff]
    %v5427 = vld [vmem:[#allocation13 + $0x1c0] sm:$0xff]
    %v5428 = vld [vmem:[#allocation13 + $0x1c8] sm:$0xff]
    %v5429 = vld [vmem:[#allocation13 + $0x1d0] sm:$0xff]
    %v5430 = vld [vmem:[#allocation13 + $0x1d8] sm:$0xff]
    %v5431 = vld [vmem:[#allocation13 + $0x1e0] sm:$0xff]
    %v5432 = vld [vmem:[#allocation13 + $0x1e8] sm:$0xff]
    %v5433 = vld [vmem:[#allocation13 + $0x1f0] sm:$0xff]
    %v5434 = vld [vmem:[#allocation13 + $0x1f8] sm:$0xff]
    %v5435 = vld [vmem:[%s8] sm:$0xf]
    %v5437 = vlaneseq
    %v5438 = vshrl.u32 %v5437, 7
    %v5439 = vsub.s32 0, %v5438
    %v5440 = vrot.slane %v5435, %v5439
    %v5441 = vlaneseq
    %v5442 = vshrl.u32 %v5441, 7
    %v5443 = vsub.s32 1, %v5442
    %v5444 = vrot.slane %v5435, %v5443
    %v5445 = vlaneseq
    %v5446 = vshrl.u32 %v5445, 7
    %v5447 = vsub.s32 2, %v5446
    %v5448 = vrot.slane %v5435, %v5447
    %v5449 = vlaneseq
    %v5450 = vshrl.u32 %v5449, 7
    %v5451 = vsub.s32 3, %v5450
    %v5452 = vrot.slane %v5435, %v5451
    %v5521 = vunpack.c.l.b16 %v5371
    %v5522 = vunpack.c.h.b16 %v5371
    %v5523 = vunpack.c.l.b16 %v5372
    %v5524 = vunpack.c.h.b16 %v5372
    %v5525 = vunpack.c.l.b16 %v5373
    %v5526 = vunpack.c.h.b16 %v5373
    %v5527 = vunpack.c.l.b16 %v5374
    %v5528 = vunpack.c.h.b16 %v5374
    %v5529 = vunpack.c.l.b16 %v5375
    %v5530 = vunpack.c.h.b16 %v5375
    %v5531 = vunpack.c.l.b16 %v5376
    %v5532 = vunpack.c.h.b16 %v5376
    %v5533 = vunpack.c.l.b16 %v5377
    %v5534 = vunpack.c.h.b16 %v5377
    %v5535 = vunpack.c.l.b16 %v5378
    %v5536 = vunpack.c.h.b16 %v5378
    %v5537 = vunpack.c.l.b16 %v5379
    %v5538 = vunpack.c.h.b16 %v5379
    %v5539 = vunpack.c.l.b16 %v5380
    %v5540 = vunpack.c.h.b16 %v5380
    %v5541 = vunpack.c.l.b16 %v5381
    %v5542 = vunpack.c.h.b16 %v5381
    %v5543 = vunpack.c.l.b16 %v5382
    %v5544 = vunpack.c.h.b16 %v5382
    %v5545 = vunpack.c.l.b16 %v5383
    %v5546 = vunpack.c.h.b16 %v5383
    %v5547 = vunpack.c.l.b16 %v5384
    %v5548 = vunpack.c.h.b16 %v5384
    %v5549 = vunpack.c.l.b16 %v5385
    %v5550 = vunpack.c.h.b16 %v5385
    %v5551 = vunpack.c.l.b16 %v5386
    %v5552 = vunpack.c.h.b16 %v5386
    %v5553 = vunpack.c.l.b16 %v5387
    %v5554 = vunpack.c.h.b16 %v5387
    %v5555 = vunpack.c.l.b16 %v5388
    %v5556 = vunpack.c.h.b16 %v5388
    %v5557 = vunpack.c.l.b16 %v5389
    %v5558 = vunpack.c.h.b16 %v5389
    %v5559 = vunpack.c.l.b16 %v5390
    %v5560 = vunpack.c.h.b16 %v5390
    %v5561 = vunpack.c.l.b16 %v5391
    %v5562 = vunpack.c.h.b16 %v5391
    %v5563 = vunpack.c.l.b16 %v5392
    %v5564 = vunpack.c.h.b16 %v5392
    %v5565 = vunpack.c.l.b16 %v5393
    %v5566 = vunpack.c.h.b16 %v5393
    %v5567 = vunpack.c.l.b16 %v5394
    %v5568 = vunpack.c.h.b16 %v5394
    %v5569 = vunpack.c.l.b16 %v5395
    %v5570 = vunpack.c.h.b16 %v5395
    %v5571 = vunpack.c.l.b16 %v5396
    %v5572 = vunpack.c.h.b16 %v5396
    %v5573 = vunpack.c.l.b16 %v5397
    %v5574 = vunpack.c.h.b16 %v5397
    %v5575 = vunpack.c.l.b16 %v5398
    %v5576 = vunpack.c.h.b16 %v5398
    %v5577 = vunpack.c.l.b16 %v5399
    %v5578 = vunpack.c.h.b16 %v5399
    %v5579 = vunpack.c.l.b16 %v5400
    %v5580 = vunpack.c.h.b16 %v5400
    %v5581 = vunpack.c.l.b16 %v5401
    %v5582 = vunpack.c.h.b16 %v5401
    %v5583 = vunpack.c.l.b16 %v5402
    %v5584 = vunpack.c.h.b16 %v5402
    %v5585 = vunpack.c.l.b16 %v5403
    %v5586 = vunpack.c.h.b16 %v5403
    %v5587 = vunpack.c.l.b16 %v5404
    %v5588 = vunpack.c.h.b16 %v5404
    %v5589 = vunpack.c.l.b16 %v5405
    %v5590 = vunpack.c.h.b16 %v5405
    %v5591 = vunpack.c.l.b16 %v5406
    %v5592 = vunpack.c.h.b16 %v5406
    %v5593 = vunpack.c.l.b16 %v5407
    %v5594 = vunpack.c.h.b16 %v5407
    %v5595 = vunpack.c.l.b16 %v5408
    %v5596 = vunpack.c.h.b16 %v5408
    %v5597 = vunpack.c.l.b16 %v5409
    %v5598 = vunpack.c.h.b16 %v5409
    %v5599 = vunpack.c.l.b16 %v5410
    %v5600 = vunpack.c.h.b16 %v5410
    %v5601 = vunpack.c.l.b16 %v5411
    %v5602 = vunpack.c.h.b16 %v5411
    %v5603 = vunpack.c.l.b16 %v5412
    %v5604 = vunpack.c.h.b16 %v5412
    %v5605 = vunpack.c.l.b16 %v5413
    %v5606 = vunpack.c.h.b16 %v5413
    %v5607 = vunpack.c.l.b16 %v5414
    %v5608 = vunpack.c.h.b16 %v5414
    %v5609 = vunpack.c.l.b16 %v5415
    %v5610 = vunpack.c.h.b16 %v5415
    %v5611 = vunpack.c.l.b16 %v5416
    %v5612 = vunpack.c.h.b16 %v5416
    %v5613 = vunpack.c.l.b16 %v5417
    %v5614 = vunpack.c.h.b16 %v5417
    %v5615 = vunpack.c.l.b16 %v5418
    %v5616 = vunpack.c.h.b16 %v5418
    %v5617 = vunpack.c.l.b16 %v5419
    %v5618 = vunpack.c.h.b16 %v5419
    %v5619 = vunpack.c.l.b16 %v5420
    %v5620 = vunpack.c.h.b16 %v5420
    %v5621 = vunpack.c.l.b16 %v5421
    %v5622 = vunpack.c.h.b16 %v5421
    %v5623 = vunpack.c.l.b16 %v5422
    %v5624 = vunpack.c.h.b16 %v5422
    %v5625 = vunpack.c.l.b16 %v5423
    %v5626 = vunpack.c.h.b16 %v5423
    %v5627 = vunpack.c.l.b16 %v5424
    %v5628 = vunpack.c.h.b16 %v5424
    %v5629 = vunpack.c.l.b16 %v5425
    %v5630 = vunpack.c.h.b16 %v5425
    %v5631 = vunpack.c.l.b16 %v5426
    %v5632 = vunpack.c.h.b16 %v5426
    %v5633 = vunpack.c.l.b16 %v5427
    %v5634 = vunpack.c.h.b16 %v5427
    %v5635 = vunpack.c.l.b16 %v5428
    %v5636 = vunpack.c.h.b16 %v5428
    %v5637 = vunpack.c.l.b16 %v5429
    %v5638 = vunpack.c.h.b16 %v5429
    %v5639 = vunpack.c.l.b16 %v5430
    %v5640 = vunpack.c.h.b16 %v5430
    %v5641 = vunpack.c.l.b16 %v5431
    %v5642 = vunpack.c.h.b16 %v5431
    %v5643 = vunpack.c.l.b16 %v5432
    %v5644 = vunpack.c.h.b16 %v5432
    %v5645 = vunpack.c.l.b16 %v5433
    %v5646 = vunpack.c.h.b16 %v5433
    %v5647 = vunpack.c.l.b16 %v5434
    %v5648 = vunpack.c.h.b16 %v5434
    %v5649 = vpack.c.b16 %v5525, %v5521
    %v5650 = vpack.c.b16 %v5526, %v5522
    %v5651 = vpack.c.b16 %v5527, %v5523
    %v5652 = vpack.c.b16 %v5528, %v5524
    %v5653 = vpack.c.b16 %v5533, %v5529
    %v5654 = vpack.c.b16 %v5534, %v5530
    %v5655 = vpack.c.b16 %v5535, %v5531
    %v5656 = vpack.c.b16 %v5536, %v5532
    %v5657 = vpack.c.b16 %v5541, %v5537
    %v5658 = vpack.c.b16 %v5542, %v5538
    %v5659 = vpack.c.b16 %v5543, %v5539
    %v5660 = vpack.c.b16 %v5544, %v5540
    %v5661 = vpack.c.b16 %v5549, %v5545
    %v5662 = vpack.c.b16 %v5550, %v5546
    %v5663 = vpack.c.b16 %v5551, %v5547
    %v5664 = vpack.c.b16 %v5552, %v5548
    %v5665 = vpack.c.b16 %v5557, %v5553
    %v5666 = vpack.c.b16 %v5558, %v5554
    %v5667 = vpack.c.b16 %v5559, %v5555
    %v5668 = vpack.c.b16 %v5560, %v5556
    %v5669 = vpack.c.b16 %v5565, %v5561
    %v5670 = vpack.c.b16 %v5566, %v5562
    %v5671 = vpack.c.b16 %v5567, %v5563
    %v5672 = vpack.c.b16 %v5568, %v5564
    %v5673 = vpack.c.b16 %v5573, %v5569
    %v5674 = vpack.c.b16 %v5574, %v5570
    %v5675 = vpack.c.b16 %v5575, %v5571
    %v5676 = vpack.c.b16 %v5576, %v5572
    %v5677 = vpack.c.b16 %v5581, %v5577
    %v5678 = vpack.c.b16 %v5582, %v5578
    %v5679 = vpack.c.b16 %v5583, %v5579
    %v5680 = vpack.c.b16 %v5584, %v5580
    %v5681 = vpack.c.b16 %v5589, %v5585
    %v5682 = vpack.c.b16 %v5590, %v5586
    %v5683 = vpack.c.b16 %v5591, %v5587
    %v5684 = vpack.c.b16 %v5592, %v5588
    %v5685 = vpack.c.b16 %v5597, %v5593
    %v5686 = vpack.c.b16 %v5598, %v5594
    %v5687 = vpack.c.b16 %v5599, %v5595
    %v5688 = vpack.c.b16 %v5600, %v5596
    %v5689 = vpack.c.b16 %v5605, %v5601
    %v5690 = vpack.c.b16 %v5606, %v5602
    %v5691 = vpack.c.b16 %v5607, %v5603
    %v5692 = vpack.c.b16 %v5608, %v5604
    %v5693 = vpack.c.b16 %v5613, %v5609
    %v5694 = vpack.c.b16 %v5614, %v5610
    %v5695 = vpack.c.b16 %v5615, %v5611
    %v5696 = vpack.c.b16 %v5616, %v5612
    %v5697 = vpack.c.b16 %v5621, %v5617
    %v5698 = vpack.c.b16 %v5622, %v5618
    %v5699 = vpack.c.b16 %v5623, %v5619
    %v5700 = vpack.c.b16 %v5624, %v5620
    %v5701 = vpack.c.b16 %v5629, %v5625
    %v5702 = vpack.c.b16 %v5630, %v5626
    %v5703 = vpack.c.b16 %v5631, %v5627
    %v5704 = vpack.c.b16 %v5632, %v5628
    %v5705 = vpack.c.b16 %v5637, %v5633
    %v5706 = vpack.c.b16 %v5638, %v5634
    %v5707 = vpack.c.b16 %v5639, %v5635
    %v5708 = vpack.c.b16 %v5640, %v5636
    %v5709 = vpack.c.b16 %v5645, %v5641
    %v5710 = vpack.c.b16 %v5646, %v5642
    %v5711 = vpack.c.b16 %v5647, %v5643
    %v5712 = vpack.c.b16 %v5648, %v5644
    %5777 = vmatprep.subr.bf16.mxu0 %v5678
    %5778 = vmatpush1.bf16.msra.mxu0 %v5677
    %5779 = vmatprep.subr.bf16.mxu0 %v5674
    %5780 = vmatpush1.bf16.msra.mxu0 %v5673
    %5781 = vmatprep.subr.bf16.mxu0 %v5670
    %5782 = vmatpush1.bf16.msra.mxu0 %v5669
    %5783 = vmatprep.subr.bf16.mxu0 %v5666
    %5784 = vmatpush1.bf16.msra.mxu0 %v5665
    %5785 = vmatprep.subr.bf16.mxu0 %v5662
    %5786 = vmatpush1.bf16.msra.mxu0 %v5661
    %5787 = vmatprep.subr.bf16.mxu0 %v5658
    %5788 = vmatpush1.bf16.msra.mxu0 %v5657
    %5789 = vmatprep.subr.bf16.mxu0 %v5654
    %5790 = vmatpush1.bf16.msra.mxu0 %v5653
    %5791 = vmatprep.subr.bf16.mxu0 %v5650
    %5792 = vmatpush1.bf16.msra.mxu0 %v5649
    %5793 = vmatprep.subr.bf16.mxu0 %v5710
    %5794 = vmatpush2.bf16.msra.mxu0 %v5709
    %5795 = vmatprep.subr.bf16.mxu0 %v5706
    %5796 = vmatpush2.bf16.msra.mxu0 %v5705
    %5797 = vmatprep.subr.bf16.mxu0 %v5702
    %5798 = vmatpush2.bf16.msra.mxu0 %v5701
    %5799 = vmatprep.subr.bf16.mxu0 %v5698
    %5800 = vmatpush2.bf16.msra.mxu0 %v5697
    %5801 = vmatprep.subr.bf16.mxu0 %v5694
    %5802 = vmatpush2.bf16.msra.mxu0 %v5693
    %5803 = vmatprep.subr.bf16.mxu0 %v5690
    %5804 = vmatpush2.bf16.msra.mxu0 %v5689
    %5805 = vmatprep.subr.bf16.mxu0 %v5686
    %5806 = vmatpush2.bf16.msra.mxu0 %v5685
    %5807 = vmatprep.subr.bf16.mxu0 %v5682
    %5808 = vmatpush2.bf16.msra.mxu0 %v5681
    %5809 = vmatprep.mubr.bf16.mxu0 %v5370
    %5810 = vmatmul.mubr.bf16.gmra.mxu0 %v5369
    %v5811 = vpop.f32.mrf.mxu0
    %v5812 = vadd.f32 %v5440, %v5811
    %v5813 = vpop.f32.mrf.mxu0
    %v5814 = vadd.f32 %v5444, %v5813
    %v5815 = vpop.f32.mrf.mxu0
    %v5816 = vpop.f32.mrf.mxu0
    %5817 = vdwg.mxu0
    %5818 = vmatprep.subr.bf16.mxu0 %v5680
    %5819 = vmatpush1.bf16.msra.mxu0 %v5679
    %5820 = vmatprep.subr.bf16.mxu0 %v5676
    %5821 = vmatpush1.bf16.msra.mxu0 %v5675
    %5822 = vmatprep.subr.bf16.mxu0 %v5672
    %5823 = vmatpush1.bf16.msra.mxu0 %v5671
    %5824 = vmatprep.subr.bf16.mxu0 %v5668
    %5825 = vmatpush1.bf16.msra.mxu0 %v5667
    %5826 = vmatprep.subr.bf16.mxu0 %v5664
    %5827 = vmatpush1.bf16.msra.mxu0 %v5663
    %5828 = vmatprep.subr.bf16.mxu0 %v5660
    %5829 = vmatpush1.bf16.msra.mxu0 %v5659
    %5830 = vmatprep.subr.bf16.mxu0 %v5656
    %5831 = vmatpush1.bf16.msra.mxu0 %v5655
    %5832 = vmatprep.subr.bf16.mxu0 %v5652
    %5833 = vmatpush1.bf16.msra.mxu0 %v5651
    %5834 = vmatprep.subr.bf16.mxu0 %v5712
    %5835 = vmatpush2.bf16.msra.mxu0 %v5711
    %5836 = vmatprep.subr.bf16.mxu0 %v5708
    %5837 = vmatpush2.bf16.msra.mxu0 %v5707
    %5838 = vmatprep.subr.bf16.mxu0 %v5704
    %5839 = vmatpush2.bf16.msra.mxu0 %v5703
    %5840 = vmatprep.subr.bf16.mxu0 %v5700
    %5841 = vmatpush2.bf16.msra.mxu0 %v5699
    %5842 = vmatprep.subr.bf16.mxu0 %v5696
    %5843 = vmatpush2.bf16.msra.mxu0 %v5695
    %5844 = vmatprep.subr.bf16.mxu0 %v5692
    %5845 = vmatpush2.bf16.msra.mxu0 %v5691
    %5846 = vmatprep.subr.bf16.mxu0 %v5688
    %5847 = vmatpush2.bf16.msra.mxu0 %v5687
    %5848 = vmatprep.subr.bf16.mxu0 %v5684
    %5849 = vmatpush2.bf16.msra.mxu0 %v5683
    %5850 = vmatprep.mubr.bf16.mxu0 %v5370
    %5851 = vmatmul.mubr.bf16.gmra.mxu0 %v5369
    %v5852 = vpop.f32.mrf.mxu0
    %v5853 = vadd.f32 %v5448, %v5852
    %v5854 = vpop.f32.mrf.mxu0
    %v5855 = vadd.f32 %v5452, %v5854
    %v5856 = vpop.f32.mrf.mxu0
    %v5857 = vpop.f32.mrf.mxu0
    %5858 = vdwg.mxu0
    %v5859 = vxor.u32 %v5812, 2147483648
    %v5860 = vmul.f32 %v5859, 1.442695
    %v5861 = vpow.pop %v5860
    %v5862 = vadd.f32 %v5861, 1.0
    %v5863 = vrcp.pop %v5862
    %v5864 = vmul.f32 1.0, %v5863
    %v5865 = vxor.u32 %v5814, 2147483648
    %v5866 = vmul.f32 %v5865, 1.442695
    %v5867 = vpow.pop %v5866
    %v5868 = vadd.f32 %v5867, 1.0
    %v5869 = vrcp.pop %v5868
    %v5870 = vmul.f32 1.0, %v5869
    %v5871 = vtanh.pop %v5853
    %v5872 = vxor.u32 %v5855, 2147483648
    %v5873 = vmul.f32 %v5872, 1.442695
    %v5874 = vpow.pop %v5873
    %v5875 = vadd.f32 %v5874, 1.0
    %v5876 = vrcp.pop %v5875
    %v5877 = vmul.f32 1.0, %v5876
    %v5878 = vld [vmem:[#allocation3] sm:$0xff]
    %v5879 = vmul.f32 %v5870, %v5878
    %v5880 = vmul.f32 %v5864, %v5871
    %v5881 = vadd.f32 %v5879, %v5880
    %v5882 = vtanh.pop %v5881
    %v5883 = vmul.f32 %v5877, %v5882
    %5884 = vst [vmem:[#allocation3] sm:$0xff] %v5881
    %5885 = vst [vmem:[#allocation2 + $0x8] sm:$0xff] %v5883
    %v5886 = vpack.c.bf16 %v5883, %v5883
    %v5887 = vld [vmem:[#allocation15] sm:$0xf]
    %v5888 = vld [vmem:[#allocation15 + $0x4] sm:$0xf]
    %v5889 = vld [vmem:[#allocation15 + $0x8] sm:$0xf]
    %v5890 = vld [vmem:[#allocation15 + $0xc] sm:$0xf]
    %v5891 = vld [vmem:[#allocation15 + $0x10] sm:$0xf]
    %v5892 = vld [vmem:[#allocation15 + $0x14] sm:$0xf]
    %v5893 = vld [vmem:[#allocation15 + $0x18] sm:$0xf]
    %v5894 = vld [vmem:[#allocation15 + $0x1c] sm:$0xf]
    %v5895 = vld [vmem:[#allocation15 + $0x20] sm:$0xf]
    %v5896 = vld [vmem:[#allocation15 + $0x24] sm:$0xf]
    %v5897 = vld [vmem:[#allocation15 + $0x28] sm:$0xf]
    %v5898 = vld [vmem:[#allocation15 + $0x2c] sm:$0xf]
    %v5899 = vld [vmem:[#allocation15 + $0x30] sm:$0xf]
    %v5900 = vld [vmem:[#allocation15 + $0x34] sm:$0xf]
    %v5901 = vld [vmem:[#allocation15 + $0x38] sm:$0xf]
    %v5902 = vld [vmem:[#allocation15 + $0x3c] sm:$0xf]
    %v5903 = vld [vmem:[%s10] sm:$0x1]
    %v5905 = vlaneseq
    %v5906 = vshrl.u32 %v5905, 7
    %v5907 = vsub.s32 0, %v5906
    %v5908 = vrot.slane %v5903, %v5907
    %v5926 = vunpack.c.l.b16 %v5887
    %v5927 = vunpack.c.l.b16 %v5888
    %v5928 = vunpack.c.l.b16 %v5889
    %v5929 = vunpack.c.l.b16 %v5890
    %v5930 = vunpack.c.l.b16 %v5891
    %v5931 = vunpack.c.l.b16 %v5892
    %v5932 = vunpack.c.l.b16 %v5893
    %v5933 = vunpack.c.l.b16 %v5894
    %v5934 = vunpack.c.l.b16 %v5895
    %v5935 = vunpack.c.l.b16 %v5896
    %v5936 = vunpack.c.l.b16 %v5897
    %v5937 = vunpack.c.l.b16 %v5898
    %v5938 = vunpack.c.l.b16 %v5899
    %v5939 = vunpack.c.l.b16 %v5900
    %v5940 = vunpack.c.l.b16 %v5901
    %v5941 = vunpack.c.l.b16 %v5902
    %v5942 = vpack.c.b16 %v5927, %v5926
    %v5943 = vpack.c.b16 %v5929, %v5928
    %v5944 = vpack.c.b16 %v5931, %v5930
    %v5945 = vpack.c.b16 %v5933, %v5932
    %v5946 = vpack.c.b16 %v5935, %v5934
    %v5947 = vpack.c.b16 %v5937, %v5936
    %v5948 = vpack.c.b16 %v5939, %v5938
    %v5949 = vpack.c.b16 %v5941, %v5940
    %5958 = vmatprep.subr.bf16.mxu0 0
    %5959 = vmatpush1.bf16.msra.mxu0 %v5949
    %5960 = vmatprep.subr.bf16.mxu0 0
    %5961 = vmatpush1.bf16.msra.mxu0 %v5948
    %5962 = vmatprep.subr.bf16.mxu0 0
    %5963 = vmatpush1.bf16.msra.mxu0 %v5947
    %5964 = vmatprep.subr.bf16.mxu0 0
    %5965 = vmatpush1.bf16.msra.mxu0 %v5946
    %5966 = vmatprep.subr.bf16.mxu0 0
    %5967 = vmatpush1.bf16.msra.mxu0 %v5945
    %5968 = vmatprep.subr.bf16.mxu0 0
    %5969 = vmatpush1.bf16.msra.mxu0 %v5944
    %5970 = vmatprep.subr.bf16.mxu0 0
    %5971 = vmatpush1.bf16.msra.mxu0 %v5943
    %5972 = vmatprep.subr.bf16.mxu0 0
    %5973 = vmatpush1.bf16.msra.mxu0 %v5942
    %5974 = vmatprep.subr.bf16.mxu0 0
    %5975 = vmatpush2.bf16.msra.mxu0 0
    %5976 = vmatprep.subr.bf16.mxu0 0
    %5977 = vmatpush2.bf16.msra.mxu0 0
    %5978 = vmatprep.subr.bf16.mxu0 0
    %5979 = vmatpush2.bf16.msra.mxu0 0
    %5980 = vmatprep.subr.bf16.mxu0 0
    %5981 = vmatpush2.bf16.msra.mxu0 0
    %5982 = vmatprep.subr.bf16.mxu0 0
    %5983 = vmatpush2.bf16.msra.mxu0 0
    %5984 = vmatprep.subr.bf16.mxu0 0
    %5985 = vmatpush2.bf16.msra.mxu0 0
    %5986 = vmatprep.subr.bf16.mxu0 0
    %5987 = vmatpush2.bf16.msra.mxu0 0
    %5988 = vmatprep.subr.bf16.mxu0 0
    %5989 = vmatpush2.bf16.msra.mxu0 0
    %5990 = vmatprep.mubr.bf16.mxu0 0
    %5991 = vmatmul.mubr.bf16.gmra.mxu0 %v5886
    %v5992 = vpop.f32.mrf.mxu0
    %v5993 = vadd.f32 %v5908, %v5992
    %v5994 = vpop.f32.mrf.mxu0
    %v5995 = vpop.f32.mrf.mxu0
    %v5996 = vpop.f32.mrf.mxu0
    %5997 = vdwg.mxu0
    %s5998 = scalar_lea.vmem %s11, 8
    %5999 = vst [vmem:[%s5998] sm:$0xff] %v5993
    %6000 = vmax.xlane.f32.xlu0 %v5993
    %v6001 = vpop.xlane.xlu0 %6000
    %vm6002 = vcmp.eq.f32.partialorder %v5993, %v6001
    %v6003 = vsel %vm6002, %v121, 128
    %v6004 = vand.u32 %v6003, 65535
    %v6005 = vshra.s32 %v6003, 16
    %v6006 = vcvt.s32.f32 %v6004
    %v6007 = vcvt.s32.f32 %v6005
    %6008 = vmin.xlane.f32.xlu0 %v6007
    %v6009 = vpop.xlane.xlu0 %6008
    %vm6010 = vcmp.eq.f32.partialorder %v6007, %v6009
    %v6011 = vsel %vm6010, %v6006, inf
    %6012 = vmin.xlane.f32.xlu0 %v6011
    %v6013 = vpop.xlane.xlu0 %6012
    %v6014 = vcvt.f32.s32 %v6013
    %v6015 = vcvt.f32.s32 %v6009
    %v6016 = vshll.u32 %v6015, 16
    %v6017 = vadd.s32 %v6016, %v6014
    %vm6018 = vcmp.eq.s32.totalorder %v121, %v6017
    %v6019 = vsel %vm6018, 1, 0
    %v6020 = vcvt.s32.f32 %v6019
    %s6021 = sld [smem:[#allocation6 + $0x4]]
    %v6022 = vstv %s6021
    %v6023 = vsel %vm122, %v6022, 4294967295
    %s6024 = sld [smem:[#allocation6 + $0x5]]
    %v6025 = vstv %s6024
    %v6026 = vsel %vm126, %v6025, %v6023
    %s6027 = sld [smem:[#allocation6 + $0x6]]
    %v6028 = vstv %s6027
    %v6029 = vsel %vm130, %v6028, %v6026
    %s6030 = sld [smem:[#allocation6 + $0x7]]
    %v6031 = vstv %s6030
    %v6032 = vsel %vm134, %v6031, %v6029
    %vm6033 = vcmp.eq.s32.totalorder %v121, %v6032
    %v6034 = vsel %vm6033, 1, 0
    %v6035 = vcvt.s32.f32 %v6034
    %s6036 = sld [smem:[#allocation7]]
    %p6037 = scmp.ne.s32.totalorder %s6036, 0
    %s6038 = scalar_select %p6037, 1, 0
    %s6039 = scvt.s32.f32 %s6038
    %v6040 = vstv %s6039
    %v6041 = vmul.f32 %v6040, %v6035
    %s6042 = ssub.f32 1.0, %s6039
    %v6043 = vstv %s6042
    %v6044 = vmul.f32 %v6043, %v6020
    %v6045 = vadd.f32 %v6041, %v6044
    %v6046 = vpack.c.bf16 %v6045, %v6045
    %v6047 = vld [vmem:[#allocation12] sm:$0xf]
    %v6048 = vld [vmem:[#allocation12 + $0x4] sm:$0xf]
    %v6049 = vld [vmem:[#allocation12 + $0x8] sm:$0xf]
    %v6050 = vld [vmem:[#allocation12 + $0xc] sm:$0xf]
    %v6051 = vld [vmem:[#allocation12 + $0x10] sm:$0xf]
    %v6052 = vld [vmem:[#allocation12 + $0x14] sm:$0xf]
    %v6053 = vld [vmem:[#allocation12 + $0x18] sm:$0xf]
    %v6054 = vld [vmem:[#allocation12 + $0x1c] sm:$0xf]
    %v6055 = vld [vmem:[#allocation12 + $0x20] sm:$0xf]
    %v6056 = vld [vmem:[#allocation12 + $0x24] sm:$0xf]
    %v6057 = vld [vmem:[#allocation12 + $0x28] sm:$0xf]
    %v6058 = vld [vmem:[#allocation12 + $0x2c] sm:$0xf]
    %v6059 = vld [vmem:[#allocation12 + $0x30] sm:$0xf]
    %v6060 = vld [vmem:[#allocation12 + $0x34] sm:$0xf]
    %v6061 = vld [vmem:[#allocation12 + $0x38] sm:$0xf]
    %v6062 = vld [vmem:[#allocation12 + $0x3c] sm:$0xf]
    %v6079 = vunpack.c.l.b16 %v6047
    %v6080 = vunpack.c.l.b16 %v6048
    %v6081 = vunpack.c.l.b16 %v6049
    %v6082 = vunpack.c.l.b16 %v6050
    %v6083 = vunpack.c.l.b16 %v6051
    %v6084 = vunpack.c.l.b16 %v6052
    %v6085 = vunpack.c.l.b16 %v6053
    %v6086 = vunpack.c.l.b16 %v6054
    %v6087 = vunpack.c.l.b16 %v6055
    %v6088 = vunpack.c.l.b16 %v6056
    %v6089 = vunpack.c.l.b16 %v6057
    %v6090 = vunpack.c.l.b16 %v6058
    %v6091 = vunpack.c.l.b16 %v6059
    %v6092 = vunpack.c.l.b16 %v6060
    %v6093 = vunpack.c.l.b16 %v6061
    %v6094 = vunpack.c.l.b16 %v6062
    %v6095 = vpack.c.b16 %v6080, %v6079
    %v6096 = vpack.c.b16 %v6082, %v6081
    %v6097 = vpack.c.b16 %v6084, %v6083
    %v6098 = vpack.c.b16 %v6086, %v6085
    %v6099 = vpack.c.b16 %v6088, %v6087
    %v6100 = vpack.c.b16 %v6090, %v6089
    %v6101 = vpack.c.b16 %v6092, %v6091
    %v6102 = vpack.c.b16 %v6094, %v6093
    %6111 = vmatprep.subr.bf16.mxu0 0
    %6112 = vmatpush1.bf16.msra.mxu0 %v6102
    %6113 = vmatprep.subr.bf16.mxu0 0
    %6114 = vmatpush1.bf16.msra.mxu0 %v6101
    %6115 = vmatprep.subr.bf16.mxu0 0
    %6116 = vmatpush1.bf16.msra.mxu0 %v6100
    %6117 = vmatprep.subr.bf16.mxu0 0
    %6118 = vmatpush1.bf16.msra.mxu0 %v6099
    %6119 = vmatprep.subr.bf16.mxu0 0
    %6120 = vmatpush1.bf16.msra.mxu0 %v6098
    %6121 = vmatprep.subr.bf16.mxu0 0
    %6122 = vmatpush1.bf16.msra.mxu0 %v6097
    %6123 = vmatprep.subr.bf16.mxu0 0
    %6124 = vmatpush1.bf16.msra.mxu0 %v6096
    %6125 = vmatprep.subr.bf16.mxu0 0
    %6126 = vmatpush1.bf16.msra.mxu0 %v6095
    %6127 = vmatprep.subr.bf16.mxu0 0
    %6128 = vmatpush2.bf16.msra.mxu0 0
    %6129 = vmatprep.subr.bf16.mxu0 0
    %6130 = vmatpush2.bf16.msra.mxu0 0
    %6131 = vmatprep.subr.bf16.mxu0 0
    %6132 = vmatpush2.bf16.msra.mxu0 0
    %6133 = vmatprep.subr.bf16.mxu0 0
    %6134 = vmatpush2.bf16.msra.mxu0 0
    %6135 = vmatprep.subr.bf16.mxu0 0
    %6136 = vmatpush2.bf16.msra.mxu0 0
    %6137 = vmatprep.subr.bf16.mxu0 0
    %6138 = vmatpush2.bf16.msra.mxu0 0
    %6139 = vmatprep.subr.bf16.mxu0 0
    %6140 = vmatpush2.bf16.msra.mxu0 0
    %6141 = vmatprep.subr.bf16.mxu0 0
    %6142 = vmatpush2.bf16.msra.mxu0 0
    %6143 = vmatprep.mubr.bf16.mxu0 0
    %6144 = vmatmul.mubr.bf16.gmra.mxu0 %v6046
    %v6145 = vpop.f32.mrf.mxu0
    %v6146 = vadd.f32 0.0, %v6145
    %v6147 = vpop.f32.mrf.mxu0
    %v6148 = vpop.f32.mrf.mxu0
    %v6149 = vpop.f32.mrf.mxu0
    %6150 = vdwg.mxu0
    %6151 = vst [vmem:[#allocation2] sm:$0xff] %v6146
    %v6152 = vld [vmem:[#allocation2] sm:$0xff]
    %v6153 = vld [vmem:[#allocation2 + $0x8] sm:$0xff]
    %v6154 = vpack.c.bf16 %v6152, %v6152
    %v6155 = vpack.c.bf16 %v6153, %v6153
    %v6156 = vld [vmem:[#allocation13] sm:$0xff]
    %v6157 = vld [vmem:[#allocation13 + $0x8] sm:$0xff]
    %v6158 = vld [vmem:[#allocation13 + $0x10] sm:$0xff]
    %v6159 = vld [vmem:[#allocation13 + $0x18] sm:$0xff]
    %v6160 = vld [vmem:[#allocation13 + $0x20] sm:$0xff]
    %v6161 = vld [vmem:[#allocation13 + $0x28] sm:$0xff]
    %v6162 = vld [vmem:[#allocation13 + $0x30] sm:$0xff]
    %v6163 = vld [vmem:[#allocation13 + $0x38] sm:$0xff]
    %v6164 = vld [vmem:[#allocation13 + $0x40] sm:$0xff]
    %v6165 = vld [vmem:[#allocation13 + $0x48] sm:$0xff]
    %v6166 = vld [vmem:[#allocation13 + $0x50] sm:$0xff]
    %v6167 = vld [vmem:[#allocation13 + $0x58] sm:$0xff]
    %v6168 = vld [vmem:[#allocation13 + $0x60] sm:$0xff]
    %v6169 = vld [vmem:[#allocation13 + $0x68] sm:$0xff]
    %v6170 = vld [vmem:[#allocation13 + $0x70] sm:$0xff]
    %v6171 = vld [vmem:[#allocation13 + $0x78] sm:$0xff]
    %v6172 = vld [vmem:[#allocation13 + $0x80] sm:$0xff]
    %v6173 = vld [vmem:[#allocation13 + $0x88] sm:$0xff]
    %v6174 = vld [vmem:[#allocation13 + $0x90] sm:$0xff]
    %v6175 = vld [vmem:[#allocation13 + $0x98] sm:$0xff]
    %v6176 = vld [vmem:[#allocation13 + $0xa0] sm:$0xff]
    %v6177 = vld [vmem:[#allocation13 + $0xa8] sm:$0xff]
    %v6178 = vld [vmem:[#allocation13 + $0xb0] sm:$0xff]
    %v6179 = vld [vmem:[#allocation13 + $0xb8] sm:$0xff]
    %v6180 = vld [vmem:[#allocation13 + $0xc0] sm:$0xff]
    %v6181 = vld [vmem:[#allocation13 + $0xc8] sm:$0xff]
    %v6182 = vld [vmem:[#allocation13 + $0xd0] sm:$0xff]
    %v6183 = vld [vmem:[#allocation13 + $0xd8] sm:$0xff]
    %v6184 = vld [vmem:[#allocation13 + $0xe0] sm:$0xff]
    %v6185 = vld [vmem:[#allocation13 + $0xe8] sm:$0xff]
    %v6186 = vld [vmem:[#allocation13 + $0xf0] sm:$0xff]
    %v6187 = vld [vmem:[#allocation13 + $0xf8] sm:$0xff]
    %v6188 = vld [vmem:[#allocation13 + $0x100] sm:$0xff]
    %v6189 = vld [vmem:[#allocation13 + $0x108] sm:$0xff]
    %v6190 = vld [vmem:[#allocation13 + $0x110] sm:$0xff]
    %v6191 = vld [vmem:[#allocation13 + $0x118] sm:$0xff]
    %v6192 = vld [vmem:[#allocation13 + $0x120] sm:$0xff]
    %v6193 = vld [vmem:[#allocation13 + $0x128] sm:$0xff]
    %v6194 = vld [vmem:[#allocation13 + $0x130] sm:$0xff]
    %v6195 = vld [vmem:[#allocation13 + $0x138] sm:$0xff]
    %v6196 = vld [vmem:[#allocation13 + $0x140] sm:$0xff]
    %v6197 = vld [vmem:[#allocation13 + $0x148] sm:$0xff]
    %v6198 = vld [vmem:[#allocation13 + $0x150] sm:$0xff]
    %v6199 = vld [vmem:[#allocation13 + $0x158] sm:$0xff]
    %v6200 = vld [vmem:[#allocation13 + $0x160] sm:$0xff]
    %v6201 = vld [vmem:[#allocation13 + $0x168] sm:$0xff]
    %v6202 = vld [vmem:[#allocation13 + $0x170] sm:$0xff]
    %v6203 = vld [vmem:[#allocation13 + $0x178] sm:$0xff]
    %v6204 = vld [vmem:[#allocation13 + $0x180] sm:$0xff]
    %v6205 = vld [vmem:[#allocation13 + $0x188] sm:$0xff]
    %v6206 = vld [vmem:[#allocation13 + $0x190] sm:$0xff]
    %v6207 = vld [vmem:[#allocation13 + $0x198] sm:$0xff]
    %v6208 = vld [vmem:[#allocation13 + $0x1a0] sm:$0xff]
    %v6209 = vld [vmem:[#allocation13 + $0x1a8] sm:$0xff]
    %v6210 = vld [vmem:[#allocation13 + $0x1b0] sm:$0xff]
    %v6211 = vld [vmem:[#allocation13 + $0x1b8] sm:$0xff]
    %v6212 = vld [vmem:[#allocation13 + $0x1c0] sm:$0xff]
    %v6213 = vld [vmem:[#allocation13 + $0x1c8] sm:$0xff]
    %v6214 = vld [vmem:[#allocation13 + $0x1d0] sm:$0xff]
    %v6215 = vld [vmem:[#allocation13 + $0x1d8] sm:$0xff]
    %v6216 = vld [vmem:[#allocation13 + $0x1e0] sm:$0xff]
    %v6217 = vld [vmem:[#allocation13 + $0x1e8] sm:$0xff]
    %v6218 = vld [vmem:[#allocation13 + $0x1f0] sm:$0xff]
    %v6219 = vld [vmem:[#allocation13 + $0x1f8] sm:$0xff]
    %v6220 = vld [vmem:[%s8] sm:$0xf]
    %v6222 = vlaneseq
    %v6223 = vshrl.u32 %v6222, 7
    %v6224 = vsub.s32 0, %v6223
    %v6225 = vrot.slane %v6220, %v6224
    %v6226 = vlaneseq
    %v6227 = vshrl.u32 %v6226, 7
    %v6228 = vsub.s32 1, %v6227
    %v6229 = vrot.slane %v6220, %v6228
    %v6230 = vlaneseq
    %v6231 = vshrl.u32 %v6230, 7
    %v6232 = vsub.s32 2, %v6231
    %v6233 = vrot.slane %v6220, %v6232
    %v6234 = vlaneseq
    %v6235 = vshrl.u32 %v6234, 7
    %v6236 = vsub.s32 3, %v6235
    %v6237 = vrot.slane %v6220, %v6236
    %v6306 = vunpack.c.l.b16 %v6156
    %v6307 = vunpack.c.h.b16 %v6156
    %v6308 = vunpack.c.l.b16 %v6157
    %v6309 = vunpack.c.h.b16 %v6157
    %v6310 = vunpack.c.l.b16 %v6158
    %v6311 = vunpack.c.h.b16 %v6158
    %v6312 = vunpack.c.l.b16 %v6159
    %v6313 = vunpack.c.h.b16 %v6159
    %v6314 = vunpack.c.l.b16 %v6160
    %v6315 = vunpack.c.h.b16 %v6160
    %v6316 = vunpack.c.l.b16 %v6161
    %v6317 = vunpack.c.h.b16 %v6161
    %v6318 = vunpack.c.l.b16 %v6162
    %v6319 = vunpack.c.h.b16 %v6162
    %v6320 = vunpack.c.l.b16 %v6163
    %v6321 = vunpack.c.h.b16 %v6163
    %v6322 = vunpack.c.l.b16 %v6164
    %v6323 = vunpack.c.h.b16 %v6164
    %v6324 = vunpack.c.l.b16 %v6165
    %v6325 = vunpack.c.h.b16 %v6165
    %v6326 = vunpack.c.l.b16 %v6166
    %v6327 = vunpack.c.h.b16 %v6166
    %v6328 = vunpack.c.l.b16 %v6167
    %v6329 = vunpack.c.h.b16 %v6167
    %v6330 = vunpack.c.l.b16 %v6168
    %v6331 = vunpack.c.h.b16 %v6168
    %v6332 = vunpack.c.l.b16 %v6169
    %v6333 = vunpack.c.h.b16 %v6169
    %v6334 = vunpack.c.l.b16 %v6170
    %v6335 = vunpack.c.h.b16 %v6170
    %v6336 = vunpack.c.l.b16 %v6171
    %v6337 = vunpack.c.h.b16 %v6171
    %v6338 = vunpack.c.l.b16 %v6172
    %v6339 = vunpack.c.h.b16 %v6172
    %v6340 = vunpack.c.l.b16 %v6173
    %v6341 = vunpack.c.h.b16 %v6173
    %v6342 = vunpack.c.l.b16 %v6174
    %v6343 = vunpack.c.h.b16 %v6174
    %v6344 = vunpack.c.l.b16 %v6175
    %v6345 = vunpack.c.h.b16 %v6175
    %v6346 = vunpack.c.l.b16 %v6176
    %v6347 = vunpack.c.h.b16 %v6176
    %v6348 = vunpack.c.l.b16 %v6177
    %v6349 = vunpack.c.h.b16 %v6177
    %v6350 = vunpack.c.l.b16 %v6178
    %v6351 = vunpack.c.h.b16 %v6178
    %v6352 = vunpack.c.l.b16 %v6179
    %v6353 = vunpack.c.h.b16 %v6179
    %v6354 = vunpack.c.l.b16 %v6180
    %v6355 = vunpack.c.h.b16 %v6180
    %v6356 = vunpack.c.l.b16 %v6181
    %v6357 = vunpack.c.h.b16 %v6181
    %v6358 = vunpack.c.l.b16 %v6182
    %v6359 = vunpack.c.h.b16 %v6182
    %v6360 = vunpack.c.l.b16 %v6183
    %v6361 = vunpack.c.h.b16 %v6183
    %v6362 = vunpack.c.l.b16 %v6184
    %v6363 = vunpack.c.h.b16 %v6184
    %v6364 = vunpack.c.l.b16 %v6185
    %v6365 = vunpack.c.h.b16 %v6185
    %v6366 = vunpack.c.l.b16 %v6186
    %v6367 = vunpack.c.h.b16 %v6186
    %v6368 = vunpack.c.l.b16 %v6187
    %v6369 = vunpack.c.h.b16 %v6187
    %v6370 = vunpack.c.l.b16 %v6188
    %v6371 = vunpack.c.h.b16 %v6188
    %v6372 = vunpack.c.l.b16 %v6189
    %v6373 = vunpack.c.h.b16 %v6189
    %v6374 = vunpack.c.l.b16 %v6190
    %v6375 = vunpack.c.h.b16 %v6190
    %v6376 = vunpack.c.l.b16 %v6191
    %v6377 = vunpack.c.h.b16 %v6191
    %v6378 = vunpack.c.l.b16 %v6192
    %v6379 = vunpack.c.h.b16 %v6192
    %v6380 = vunpack.c.l.b16 %v6193
    %v6381 = vunpack.c.h.b16 %v6193
    %v6382 = vunpack.c.l.b16 %v6194
    %v6383 = vunpack.c.h.b16 %v6194
    %v6384 = vunpack.c.l.b16 %v6195
    %v6385 = vunpack.c.h.b16 %v6195
    %v6386 = vunpack.c.l.b16 %v6196
    %v6387 = vunpack.c.h.b16 %v6196
    %v6388 = vunpack.c.l.b16 %v6197
    %v6389 = vunpack.c.h.b16 %v6197
    %v6390 = vunpack.c.l.b16 %v6198
    %v6391 = vunpack.c.h.b16 %v6198
    %v6392 = vunpack.c.l.b16 %v6199
    %v6393 = vunpack.c.h.b16 %v6199
    %v6394 = vunpack.c.l.b16 %v6200
    %v6395 = vunpack.c.h.b16 %v6200
    %v6396 = vunpack.c.l.b16 %v6201
    %v6397 = vunpack.c.h.b16 %v6201
    %v6398 = vunpack.c.l.b16 %v6202
    %v6399 = vunpack.c.h.b16 %v6202
    %v6400 = vunpack.c.l.b16 %v6203
    %v6401 = vunpack.c.h.b16 %v6203
    %v6402 = vunpack.c.l.b16 %v6204
    %v6403 = vunpack.c.h.b16 %v6204
    %v6404 = vunpack.c.l.b16 %v6205
    %v6405 = vunpack.c.h.b16 %v6205
    %v6406 = vunpack.c.l.b16 %v6206
    %v6407 = vunpack.c.h.b16 %v6206
    %v6408 = vunpack.c.l.b16 %v6207
    %v6409 = vunpack.c.h.b16 %v6207
    %v6410 = vunpack.c.l.b16 %v6208
    %v6411 = vunpack.c.h.b16 %v6208
    %v6412 = vunpack.c.l.b16 %v6209
    %v6413 = vunpack.c.h.b16 %v6209
    %v6414 = vunpack.c.l.b16 %v6210
    %v6415 = vunpack.c.h.b16 %v6210
    %v6416 = vunpack.c.l.b16 %v6211
    %v6417 = vunpack.c.h.b16 %v6211
    %v6418 = vunpack.c.l.b16 %v6212
    %v6419 = vunpack.c.h.b16 %v6212
    %v6420 = vunpack.c.l.b16 %v6213
    %v6421 = vunpack.c.h.b16 %v6213
    %v6422 = vunpack.c.l.b16 %v6214
    %v6423 = vunpack.c.h.b16 %v6214
    %v6424 = vunpack.c.l.b16 %v6215
    %v6425 = vunpack.c.h.b16 %v6215
    %v6426 = vunpack.c.l.b16 %v6216
    %v6427 = vunpack.c.h.b16 %v6216
    %v6428 = vunpack.c.l.b16 %v6217
    %v6429 = vunpack.c.h.b16 %v6217
    %v6430 = vunpack.c.l.b16 %v6218
    %v6431 = vunpack.c.h.b16 %v6218
    %v6432 = vunpack.c.l.b16 %v6219
    %v6433 = vunpack.c.h.b16 %v6219
    %v6434 = vpack.c.b16 %v6310, %v6306
    %v6435 = vpack.c.b16 %v6311, %v6307
    %v6436 = vpack.c.b16 %v6312, %v6308
    %v6437 = vpack.c.b16 %v6313, %v6309
    %v6438 = vpack.c.b16 %v6318, %v6314
    %v6439 = vpack.c.b16 %v6319, %v6315
    %v6440 = vpack.c.b16 %v6320, %v6316
    %v6441 = vpack.c.b16 %v6321, %v6317
    %v6442 = vpack.c.b16 %v6326, %v6322
    %v6443 = vpack.c.b16 %v6327, %v6323
    %v6444 = vpack.c.b16 %v6328, %v6324
    %v6445 = vpack.c.b16 %v6329, %v6325
    %v6446 = vpack.c.b16 %v6334, %v6330
    %v6447 = vpack.c.b16 %v6335, %v6331
    %v6448 = vpack.c.b16 %v6336, %v6332
    %v6449 = vpack.c.b16 %v6337, %v6333
    %v6450 = vpack.c.b16 %v6342, %v6338
    %v6451 = vpack.c.b16 %v6343, %v6339
    %v6452 = vpack.c.b16 %v6344, %v6340
    %v6453 = vpack.c.b16 %v6345, %v6341
    %v6454 = vpack.c.b16 %v6350, %v6346
    %v6455 = vpack.c.b16 %v6351, %v6347
    %v6456 = vpack.c.b16 %v6352, %v6348
    %v6457 = vpack.c.b16 %v6353, %v6349
    %v6458 = vpack.c.b16 %v6358, %v6354
    %v6459 = vpack.c.b16 %v6359, %v6355
    %v6460 = vpack.c.b16 %v6360, %v6356
    %v6461 = vpack.c.b16 %v6361, %v6357
    %v6462 = vpack.c.b16 %v6366, %v6362
    %v6463 = vpack.c.b16 %v6367, %v6363
    %v6464 = vpack.c.b16 %v6368, %v6364
    %v6465 = vpack.c.b16 %v6369, %v6365
    %v6466 = vpack.c.b16 %v6374, %v6370
    %v6467 = vpack.c.b16 %v6375, %v6371
    %v6468 = vpack.c.b16 %v6376, %v6372
    %v6469 = vpack.c.b16 %v6377, %v6373
    %v6470 = vpack.c.b16 %v6382, %v6378
    %v6471 = vpack.c.b16 %v6383, %v6379
    %v6472 = vpack.c.b16 %v6384, %v6380
    %v6473 = vpack.c.b16 %v6385, %v6381
    %v6474 = vpack.c.b16 %v6390, %v6386
    %v6475 = vpack.c.b16 %v6391, %v6387
    %v6476 = vpack.c.b16 %v6392, %v6388
    %v6477 = vpack.c.b16 %v6393, %v6389
    %v6478 = vpack.c.b16 %v6398, %v6394
    %v6479 = vpack.c.b16 %v6399, %v6395
    %v6480 = vpack.c.b16 %v6400, %v6396
    %v6481 = vpack.c.b16 %v6401, %v6397
    %v6482 = vpack.c.b16 %v6406, %v6402
    %v6483 = vpack.c.b16 %v6407, %v6403
    %v6484 = vpack.c.b16 %v6408, %v6404
    %v6485 = vpack.c.b16 %v6409, %v6405
    %v6486 = vpack.c.b16 %v6414, %v6410
    %v6487 = vpack.c.b16 %v6415, %v6411
    %v6488 = vpack.c.b16 %v6416, %v6412
    %v6489 = vpack.c.b16 %v6417, %v6413
    %v6490 = vpack.c.b16 %v6422, %v6418
    %v6491 = vpack.c.b16 %v6423, %v6419
    %v6492 = vpack.c.b16 %v6424, %v6420
    %v6493 = vpack.c.b16 %v6425, %v6421
    %v6494 = vpack.c.b16 %v6430, %v6426
    %v6495 = vpack.c.b16 %v6431, %v6427
    %v6496 = vpack.c.b16 %v6432, %v6428
    %v6497 = vpack.c.b16 %v6433, %v6429
    %6562 = vmatprep.subr.bf16.mxu0 %v6463
    %6563 = vmatpush1.bf16.msra.mxu0 %v6462
    %6564 = vmatprep.subr.bf16.mxu0 %v6459
    %6565 = vmatpush1.bf16.msra.mxu0 %v6458
    %6566 = vmatprep.subr.bf16.mxu0 %v6455
    %6567 = vmatpush1.bf16.msra.mxu0 %v6454
    %6568 = vmatprep.subr.bf16.mxu0 %v6451
    %6569 = vmatpush1.bf16.msra.mxu0 %v6450
    %6570 = vmatprep.subr.bf16.mxu0 %v6447
    %6571 = vmatpush1.bf16.msra.mxu0 %v6446
    %6572 = vmatprep.subr.bf16.mxu0 %v6443
    %6573 = vmatpush1.bf16.msra.mxu0 %v6442
    %6574 = vmatprep.subr.bf16.mxu0 %v6439
    %6575 = vmatpush1.bf16.msra.mxu0 %v6438
    %6576 = vmatprep.subr.bf16.mxu0 %v6435
    %6577 = vmatpush1.bf16.msra.mxu0 %v6434
    %6578 = vmatprep.subr.bf16.mxu0 %v6495
    %6579 = vmatpush2.bf16.msra.mxu0 %v6494
    %6580 = vmatprep.subr.bf16.mxu0 %v6491
    %6581 = vmatpush2.bf16.msra.mxu0 %v6490
    %6582 = vmatprep.subr.bf16.mxu0 %v6487
    %6583 = vmatpush2.bf16.msra.mxu0 %v6486
    %6584 = vmatprep.subr.bf16.mxu0 %v6483
    %6585 = vmatpush2.bf16.msra.mxu0 %v6482
    %6586 = vmatprep.subr.bf16.mxu0 %v6479
    %6587 = vmatpush2.bf16.msra.mxu0 %v6478
    %6588 = vmatprep.subr.bf16.mxu0 %v6475
    %6589 = vmatpush2.bf16.msra.mxu0 %v6474
    %6590 = vmatprep.subr.bf16.mxu0 %v6471
    %6591 = vmatpush2.bf16.msra.mxu0 %v6470
    %6592 = vmatprep.subr.bf16.mxu0 %v6467
    %6593 = vmatpush2.bf16.msra.mxu0 %v6466
    %6594 = vmatprep.mubr.bf16.mxu0 %v6155
    %6595 = vmatmul.mubr.bf16.gmra.mxu0 %v6154
    %v6596 = vpop.f32.mrf.mxu0
    %v6597 = vadd.f32 %v6225, %v6596
    %v6598 = vpop.f32.mrf.mxu0
    %v6599 = vadd.f32 %v6229, %v6598
    %v6600 = vpop.f32.mrf.mxu0
    %v6601 = vpop.f32.mrf.mxu0
    %6602 = vdwg.mxu0
    %6603 = vmatprep.subr.bf16.mxu0 %v6465
    %6604 = vmatpush1.bf16.msra.mxu0 %v6464
    %6605 = vmatprep.subr.bf16.mxu0 %v6461
    %6606 = vmatpush1.bf16.msra.mxu0 %v6460
    %6607 = vmatprep.subr.bf16.mxu0 %v6457
    %6608 = vmatpush1.bf16.msra.mxu0 %v6456
    %6609 = vmatprep.subr.bf16.mxu0 %v6453
    %6610 = vmatpush1.bf16.msra.mxu0 %v6452
    %6611 = vmatprep.subr.bf16.mxu0 %v6449
    %6612 = vmatpush1.bf16.msra.mxu0 %v6448
    %6613 = vmatprep.subr.bf16.mxu0 %v6445
    %6614 = vmatpush1.bf16.msra.mxu0 %v6444
    %6615 = vmatprep.subr.bf16.mxu0 %v6441
    %6616 = vmatpush1.bf16.msra.mxu0 %v6440
    %6617 = vmatprep.subr.bf16.mxu0 %v6437
    %6618 = vmatpush1.bf16.msra.mxu0 %v6436
    %6619 = vmatprep.subr.bf16.mxu0 %v6497
    %6620 = vmatpush2.bf16.msra.mxu0 %v6496
    %6621 = vmatprep.subr.bf16.mxu0 %v6493
    %6622 = vmatpush2.bf16.msra.mxu0 %v6492
    %6623 = vmatprep.subr.bf16.mxu0 %v6489
    %6624 = vmatpush2.bf16.msra.mxu0 %v6488
    %6625 = vmatprep.subr.bf16.mxu0 %v6485
    %6626 = vmatpush2.bf16.msra.mxu0 %v6484
    %6627 = vmatprep.subr.bf16.mxu0 %v6481
    %6628 = vmatpush2.bf16.msra.mxu0 %v6480
    %6629 = vmatprep.subr.bf16.mxu0 %v6477
    %6630 = vmatpush2.bf16.msra.mxu0 %v6476
    %6631 = vmatprep.subr.bf16.mxu0 %v6473
    %6632 = vmatpush2.bf16.msra.mxu0 %v6472
    %6633 = vmatprep.subr.bf16.mxu0 %v6469
    %6634 = vmatpush2.bf16.msra.mxu0 %v6468
    %6635 = vmatprep.mubr.bf16.mxu0 %v6155
    %6636 = vmatmul.mubr.bf16.gmra.mxu0 %v6154
    %v6637 = vpop.f32.mrf.mxu0
    %v6638 = vadd.f32 %v6233, %v6637
    %v6639 = vpop.f32.mrf.mxu0
    %v6640 = vadd.f32 %v6237, %v6639
    %v6641 = vpop.f32.mrf.mxu0
    %v6642 = vpop.f32.mrf.mxu0
    %6643 = vdwg.mxu0
    %v6644 = vxor.u32 %v6597, 2147483648
    %v6645 = vmul.f32 %v6644, 1.442695
    %v6646 = vpow.pop %v6645
    %v6647 = vadd.f32 %v6646, 1.0
    %v6648 = vrcp.pop %v6647
    %v6649 = vmul.f32 1.0, %v6648
    %v6650 = vxor.u32 %v6599, 2147483648
    %v6651 = vmul.f32 %v6650, 1.442695
    %v6652 = vpow.pop %v6651
    %v6653 = vadd.f32 %v6652, 1.0
    %v6654 = vrcp.pop %v6653
    %v6655 = vmul.f32 1.0, %v6654
    %v6656 = vtanh.pop %v6638
    %v6657 = vxor.u32 %v6640, 2147483648
    %v6658 = vmul.f32 %v6657, 1.442695
    %v6659 = vpow.pop %v6658
    %v6660 = vadd.f32 %v6659, 1.0
    %v6661 = vrcp.pop %v6660
    %v6662 = vmul.f32 1.0, %v6661
    %v6663 = vld [vmem:[#allocation3] sm:$0xff]
    %v6664 = vmul.f32 %v6655, %v6663
    %v6665 = vmul.f32 %v6649, %v6656
    %v6666 = vadd.f32 %v6664, %v6665
    %v6667 = vtanh.pop %v6666
    %v6668 = vmul.f32 %v6662, %v6667
    %6669 = vst [vmem:[#allocation3] sm:$0xff] %v6666
    %6670 = vst [vmem:[#allocation2 + $0x8] sm:$0xff] %v6668
    %v6671 = vpack.c.bf16 %v6668, %v6668
    %v6672 = vld [vmem:[#allocation15] sm:$0xf]
    %v6673 = vld [vmem:[#allocation15 + $0x4] sm:$0xf]
    %v6674 = vld [vmem:[#allocation15 + $0x8] sm:$0xf]
    %v6675 = vld [vmem:[#allocation15 + $0xc] sm:$0xf]
    %v6676 = vld [vmem:[#allocation15 + $0x10] sm:$0xf]
    %v6677 = vld [vmem:[#allocation15 + $0x14] sm:$0xf]
    %v6678 = vld [vmem:[#allocation15 + $0x18] sm:$0xf]
    %v6679 = vld [vmem:[#allocation15 + $0x1c] sm:$0xf]
    %v6680 = vld [vmem:[#allocation15 + $0x20] sm:$0xf]
    %v6681 = vld [vmem:[#allocation15 + $0x24] sm:$0xf]
    %v6682 = vld [vmem:[#allocation15 + $0x28] sm:$0xf]
    %v6683 = vld [vmem:[#allocation15 + $0x2c] sm:$0xf]
    %v6684 = vld [vmem:[#allocation15 + $0x30] sm:$0xf]
    %v6685 = vld [vmem:[#allocation15 + $0x34] sm:$0xf]
    %v6686 = vld [vmem:[#allocation15 + $0x38] sm:$0xf]
    %v6687 = vld [vmem:[#allocation15 + $0x3c] sm:$0xf]
    %v6688 = vld [vmem:[%s10] sm:$0x1]
    %v6690 = vlaneseq
    %v6691 = vshrl.u32 %v6690, 7
    %v6692 = vsub.s32 0, %v6691
    %v6693 = vrot.slane %v6688, %v6692
    %v6711 = vunpack.c.l.b16 %v6672
    %v6712 = vunpack.c.l.b16 %v6673
    %v6713 = vunpack.c.l.b16 %v6674
    %v6714 = vunpack.c.l.b16 %v6675
    %v6715 = vunpack.c.l.b16 %v6676
    %v6716 = vunpack.c.l.b16 %v6677
    %v6717 = vunpack.c.l.b16 %v6678
    %v6718 = vunpack.c.l.b16 %v6679
    %v6719 = vunpack.c.l.b16 %v6680
    %v6720 = vunpack.c.l.b16 %v6681
    %v6721 = vunpack.c.l.b16 %v6682
    %v6722 = vunpack.c.l.b16 %v6683
    %v6723 = vunpack.c.l.b16 %v6684
    %v6724 = vunpack.c.l.b16 %v6685
    %v6725 = vunpack.c.l.b16 %v6686
    %v6726 = vunpack.c.l.b16 %v6687
    %v6727 = vpack.c.b16 %v6712, %v6711
    %v6728 = vpack.c.b16 %v6714, %v6713
    %v6729 = vpack.c.b16 %v6716, %v6715
    %v6730 = vpack.c.b16 %v6718, %v6717
    %v6731 = vpack.c.b16 %v6720, %v6719
    %v6732 = vpack.c.b16 %v6722, %v6721
    %v6733 = vpack.c.b16 %v6724, %v6723
    %v6734 = vpack.c.b16 %v6726, %v6725
    %6743 = vmatprep.subr.bf16.mxu0 0
    %6744 = vmatpush1.bf16.msra.mxu0 %v6734
    %6745 = vmatprep.subr.bf16.mxu0 0
    %6746 = vmatpush1.bf16.msra.mxu0 %v6733
    %6747 = vmatprep.subr.bf16.mxu0 0
    %6748 = vmatpush1.bf16.msra.mxu0 %v6732
    %6749 = vmatprep.subr.bf16.mxu0 0
    %6750 = vmatpush1.bf16.msra.mxu0 %v6731
    %6751 = vmatprep.subr.bf16.mxu0 0
    %6752 = vmatpush1.bf16.msra.mxu0 %v6730
    %6753 = vmatprep.subr.bf16.mxu0 0
    %6754 = vmatpush1.bf16.msra.mxu0 %v6729
    %6755 = vmatprep.subr.bf16.mxu0 0
    %6756 = vmatpush1.bf16.msra.mxu0 %v6728
    %6757 = vmatprep.subr.bf16.mxu0 0
    %6758 = vmatpush1.bf16.msra.mxu0 %v6727
    %6759 = vmatprep.subr.bf16.mxu0 0
    %6760 = vmatpush2.bf16.msra.mxu0 0
    %6761 = vmatprep.subr.bf16.mxu0 0
    %6762 = vmatpush2.bf16.msra.mxu0 0
    %6763 = vmatprep.subr.bf16.mxu0 0
    %6764 = vmatpush2.bf16.msra.mxu0 0
    %6765 = vmatprep.subr.bf16.mxu0 0
    %6766 = vmatpush2.bf16.msra.mxu0 0
    %6767 = vmatprep.subr.bf16.mxu0 0
    %6768 = vmatpush2.bf16.msra.mxu0 0
    %6769 = vmatprep.subr.bf16.mxu0 0
    %6770 = vmatpush2.bf16.msra.mxu0 0
    %6771 = vmatprep.subr.bf16.mxu0 0
    %6772 = vmatpush2.bf16.msra.mxu0 0
    %6773 = vmatprep.subr.bf16.mxu0 0
    %6774 = vmatpush2.bf16.msra.mxu0 0
    %6775 = vmatprep.mubr.bf16.mxu0 0
    %6776 = vmatmul.mubr.bf16.gmra.mxu0 %v6671
    %v6777 = vpop.f32.mrf.mxu0
    %v6778 = vadd.f32 %v6693, %v6777
    %v6779 = vpop.f32.mrf.mxu0
    %v6780 = vpop.f32.mrf.mxu0
    %v6781 = vpop.f32.mrf.mxu0
    %6782 = vdwg.mxu0
    %s6783 = scalar_lea.vmem %s11, 16
    %6784 = vst [vmem:[%s6783] sm:$0xff] %v6778
    %6785 = vmax.xlane.f32.xlu0 %v6778
    %v6786 = vpop.xlane.xlu0 %6785
    %vm6787 = vcmp.eq.f32.partialorder %v6778, %v6786
    %v6788 = vsel %vm6787, %v121, 128
    %v6789 = vand.u32 %v6788, 65535
    %v6790 = vshra.s32 %v6788, 16
    %v6791 = vcvt.s32.f32 %v6789
    %v6792 = vcvt.s32.f32 %v6790
    %6793 = vmin.xlane.f32.xlu0 %v6792
    %v6794 = vpop.xlane.xlu0 %6793
    %vm6795 = vcmp.eq.f32.partialorder %v6792, %v6794
    %v6796 = vsel %vm6795, %v6791, inf
    %6797 = vmin.xlane.f32.xlu0 %v6796
    %v6798 = vpop.xlane.xlu0 %6797
    %v6799 = vcvt.f32.s32 %v6798
    %v6800 = vcvt.f32.s32 %v6794
    %v6801 = vshll.u32 %v6800, 16
    %v6802 = vadd.s32 %v6801, %v6799
    %vm6803 = vcmp.eq.s32.totalorder %v121, %v6802
    %v6804 = vsel %vm6803, 1, 0
    %v6805 = vcvt.s32.f32 %v6804
    %s6806 = sld [smem:[#allocation6 + $0x8]]
    %v6807 = vstv %s6806
    %v6808 = vsel %vm122, %v6807, 4294967295
    %s6809 = sld [smem:[#allocation6 + $0x9]]
    %v6810 = vstv %s6809
    %v6811 = vsel %vm126, %v6810, %v6808
    %s6812 = sld [smem:[#allocation6 + $0xa]]
    %v6813 = vstv %s6812
    %v6814 = vsel %vm130, %v6813, %v6811
    %s6815 = sld [smem:[#allocation6 + $0xb]]
    %v6816 = vstv %s6815
    %v6817 = vsel %vm134, %v6816, %v6814
    %vm6818 = vcmp.eq.s32.totalorder %v121, %v6817
    %v6819 = vsel %vm6818, 1, 0
    %v6820 = vcvt.s32.f32 %v6819
    %s6821 = sld [smem:[#allocation7 + $0x1]]
    %p6822 = scmp.ne.s32.totalorder %s6821, 0
    %s6823 = scalar_select %p6822, 1, 0
    %s6824 = scvt.s32.f32 %s6823
    %v6825 = vstv %s6824
    %v6826 = vmul.f32 %v6825, %v6820
    %s6827 = ssub.f32 1.0, %s6824
    %v6828 = vstv %s6827
    %v6829 = vmul.f32 %v6828, %v6805
    %v6830 = vadd.f32 %v6826, %v6829
    %v6831 = vpack.c.bf16 %v6830, %v6830
    %v6832 = vld [vmem:[#allocation12] sm:$0xf]
    %v6833 = vld [vmem:[#allocation12 + $0x4] sm:$0xf]
    %v6834 = vld [vmem:[#allocation12 + $0x8] sm:$0xf]
    %v6835 = vld [vmem:[#allocation12 + $0xc] sm:$0xf]
    %v6836 = vld [vmem:[#allocation12 + $0x10] sm:$0xf]
    %v6837 = vld [vmem:[#allocation12 + $0x14] sm:$0xf]
    %v6838 = vld [vmem:[#allocation12 + $0x18] sm:$0xf]
    %v6839 = vld [vmem:[#allocation12 + $0x1c] sm:$0xf]
    %v6840 = vld [vmem:[#allocation12 + $0x20] sm:$0xf]
    %v6841 = vld [vmem:[#allocation12 + $0x24] sm:$0xf]
    %v6842 = vld [vmem:[#allocation12 + $0x28] sm:$0xf]
    %v6843 = vld [vmem:[#allocation12 + $0x2c] sm:$0xf]
    %v6844 = vld [vmem:[#allocation12 + $0x30] sm:$0xf]
    %v6845 = vld [vmem:[#allocation12 + $0x34] sm:$0xf]
    %v6846 = vld [vmem:[#allocation12 + $0x38] sm:$0xf]
    %v6847 = vld [vmem:[#allocation12 + $0x3c] sm:$0xf]
    %v6864 = vunpack.c.l.b16 %v6832
    %v6865 = vunpack.c.l.b16 %v6833
    %v6866 = vunpack.c.l.b16 %v6834
    %v6867 = vunpack.c.l.b16 %v6835
    %v6868 = vunpack.c.l.b16 %v6836
    %v6869 = vunpack.c.l.b16 %v6837
    %v6870 = vunpack.c.l.b16 %v6838
    %v6871 = vunpack.c.l.b16 %v6839
    %v6872 = vunpack.c.l.b16 %v6840
    %v6873 = vunpack.c.l.b16 %v6841
    %v6874 = vunpack.c.l.b16 %v6842
    %v6875 = vunpack.c.l.b16 %v6843
    %v6876 = vunpack.c.l.b16 %v6844
    %v6877 = vunpack.c.l.b16 %v6845
    %v6878 = vunpack.c.l.b16 %v6846
    %v6879 = vunpack.c.l.b16 %v6847
    %v6880 = vpack.c.b16 %v6865, %v6864
    %v6881 = vpack.c.b16 %v6867, %v6866
    %v6882 = vpack.c.b16 %v6869, %v6868
    %v6883 = vpack.c.b16 %v6871, %v6870
    %v6884 = vpack.c.b16 %v6873, %v6872
    %v6885 = vpack.c.b16 %v6875, %v6874
    %v6886 = vpack.c.b16 %v6877, %v6876
    %v6887 = vpack.c.b16 %v6879, %v6878
    %6896 = vmatprep.subr.bf16.mxu0 0
    %6897 = vmatpush1.bf16.msra.mxu0 %v6887
    %6898 = vmatprep.subr.bf16.mxu0 0
    %6899 = vmatpush1.bf16.msra.mxu0 %v6886
    %6900 = vmatprep.subr.bf16.mxu0 0
    %6901 = vmatpush1.bf16.msra.mxu0 %v6885
    %6902 = vmatprep.subr.bf16.mxu0 0
    %6903 = vmatpush1.bf16.msra.mxu0 %v6884
    %6904 = vmatprep.subr.bf16.mxu0 0
    %6905 = vmatpush1.bf16.msra.mxu0 %v6883
    %6906 = vmatprep.subr.bf16.mxu0 0
    %6907 = vmatpush1.bf16.msra.mxu0 %v6882
    %6908 = vmatprep.subr.bf16.mxu0 0
    %6909 = vmatpush1.bf16.msra.mxu0 %v6881
    %6910 = vmatprep.subr.bf16.mxu0 0
    %6911 = vmatpush1.bf16.msra.mxu0 %v6880
    %6912 = vmatprep.subr.bf16.mxu0 0
    %6913 = vmatpush2.bf16.msra.mxu0 0
    %6914 = vmatprep.subr.bf16.mxu0 0
    %6915 = vmatpush2.bf16.msra.mxu0 0
    %6916 = vmatprep.subr.bf16.mxu0 0
    %6917 = vmatpush2.bf16.msra.mxu0 0
    %6918 = vmatprep.subr.bf16.mxu0 0
    %6919 = vmatpush2.bf16.msra.mxu0 0
    %6920 = vmatprep.subr.bf16.mxu0 0
    %6921 = vmatpush2.bf16.msra.mxu0 0
    %6922 = vmatprep.subr.bf16.mxu0 0
    %6923 = vmatpush2.bf16.msra.mxu0 0
    %6924 = vmatprep.subr.bf16.mxu0 0
    %6925 = vmatpush2.bf16.msra.mxu0 0
    %6926 = vmatprep.subr.bf16.mxu0 0
    %6927 = vmatpush2.bf16.msra.mxu0 0
    %6928 = vmatprep.mubr.bf16.mxu0 0
    %6929 = vmatmul.mubr.bf16.gmra.mxu0 %v6831
    %v6930 = vpop.f32.mrf.mxu0
    %v6931 = vadd.f32 0.0, %v6930
    %v6932 = vpop.f32.mrf.mxu0
    %v6933 = vpop.f32.mrf.mxu0
    %v6934 = vpop.f32.mrf.mxu0
    %6935 = vdwg.mxu0
    %6936 = vst [vmem:[#allocation2] sm:$0xff] %v6931
    %v6937 = vld [vmem:[#allocation2] sm:$0xff]
    %v6938 = vld [vmem:[#allocation2 + $0x8] sm:$0xff]
    %v6939 = vpack.c.bf16 %v6937, %v6937
    %v6940 = vpack.c.bf16 %v6938, %v6938
    %v6941 = vld [vmem:[#allocation13] sm:$0xff]
    %v6942 = vld [vmem:[#allocation13 + $0x8] sm:$0xff]
    %v6943 = vld [vmem:[#allocation13 + $0x10] sm:$0xff]
    %v6944 = vld [vmem:[#allocation13 + $0x18] sm:$0xff]
    %v6945 = vld [vmem:[#allocation13 + $0x20] sm:$0xff]
    %v6946 = vld [vmem:[#allocation13 + $0x28] sm:$0xff]
    %v6947 = vld [vmem:[#allocation13 + $0x30] sm:$0xff]
    %v6948 = vld [vmem:[#allocation13 + $0x38] sm:$0xff]
    %v6949 = vld [vmem:[#allocation13 + $0x40] sm:$0xff]
    %v6950 = vld [vmem:[#allocation13 + $0x48] sm:$0xff]
    %v6951 = vld [vmem:[#allocation13 + $0x50] sm:$0xff]
    %v6952 = vld [vmem:[#allocation13 + $0x58] sm:$0xff]
    %v6953 = vld [vmem:[#allocation13 + $0x60] sm:$0xff]
    %v6954 = vld [vmem:[#allocation13 + $0x68] sm:$0xff]
    %v6955 = vld [vmem:[#allocation13 + $0x70] sm:$0xff]
    %v6956 = vld [vmem:[#allocation13 + $0x78] sm:$0xff]
    %v6957 = vld [vmem:[#allocation13 + $0x80] sm:$0xff]
    %v6958 = vld [vmem:[#allocation13 + $0x88] sm:$0xff]
    %v6959 = vld [vmem:[#allocation13 + $0x90] sm:$0xff]
    %v6960 = vld [vmem:[#allocation13 + $0x98] sm:$0xff]
    %v6961 = vld [vmem:[#allocation13 + $0xa0] sm:$0xff]
    %v6962 = vld [vmem:[#allocation13 + $0xa8] sm:$0xff]
    %v6963 = vld [vmem:[#allocation13 + $0xb0] sm:$0xff]
    %v6964 = vld [vmem:[#allocation13 + $0xb8] sm:$0xff]
    %v6965 = vld [vmem:[#allocation13 + $0xc0] sm:$0xff]
    %v6966 = vld [vmem:[#allocation13 + $0xc8] sm:$0xff]
    %v6967 = vld [vmem:[#allocation13 + $0xd0] sm:$0xff]
    %v6968 = vld [vmem:[#allocation13 + $0xd8] sm:$0xff]
    %v6969 = vld [vmem:[#allocation13 + $0xe0] sm:$0xff]
    %v6970 = vld [vmem:[#allocation13 + $0xe8] sm:$0xff]
    %v6971 = vld [vmem:[#allocation13 + $0xf0] sm:$0xff]
    %v6972 = vld [vmem:[#allocation13 + $0xf8] sm:$0xff]
    %v6973 = vld [vmem:[#allocation13 + $0x100] sm:$0xff]
    %v6974 = vld [vmem:[#allocation13 + $0x108] sm:$0xff]
    %v6975 = vld [vmem:[#allocation13 + $0x110] sm:$0xff]
    %v6976 = vld [vmem:[#allocation13 + $0x118] sm:$0xff]
    %v6977 = vld [vmem:[#allocation13 + $0x120] sm:$0xff]
    %v6978 = vld [vmem:[#allocation13 + $0x128] sm:$0xff]
    %v6979 = vld [vmem:[#allocation13 + $0x130] sm:$0xff]
    %v6980 = vld [vmem:[#allocation13 + $0x138] sm:$0xff]
    %v6981 = vld [vmem:[#allocation13 + $0x140] sm:$0xff]
    %v6982 = vld [vmem:[#allocation13 + $0x148] sm:$0xff]
    %v6983 = vld [vmem:[#allocation13 + $0x150] sm:$0xff]
    %v6984 = vld [vmem:[#allocation13 + $0x158] sm:$0xff]
    %v6985 = vld [vmem:[#allocation13 + $0x160] sm:$0xff]
    %v6986 = vld [vmem:[#allocation13 + $0x168] sm:$0xff]
    %v6987 = vld [vmem:[#allocation13 + $0x170] sm:$0xff]
    %v6988 = vld [vmem:[#allocation13 + $0x178] sm:$0xff]
    %v6989 = vld [vmem:[#allocation13 + $0x180] sm:$0xff]
    %v6990 = vld [vmem:[#allocation13 + $0x188] sm:$0xff]
    %v6991 = vld [vmem:[#allocation13 + $0x190] sm:$0xff]
    %v6992 = vld [vmem:[#allocation13 + $0x198] sm:$0xff]
    %v6993 = vld [vmem:[#allocation13 + $0x1a0] sm:$0xff]
    %v6994 = vld [vmem:[#allocation13 + $0x1a8] sm:$0xff]
    %v6995 = vld [vmem:[#allocation13 + $0x1b0] sm:$0xff]
    %v6996 = vld [vmem:[#allocation13 + $0x1b8] sm:$0xff]
    %v6997 = vld [vmem:[#allocation13 + $0x1c0] sm:$0xff]
    %v6998 = vld [vmem:[#allocation13 + $0x1c8] sm:$0xff]
    %v6999 = vld [vmem:[#allocation13 + $0x1d0] sm:$0xff]
    %v7000 = vld [vmem:[#allocation13 + $0x1d8] sm:$0xff]
    %v7001 = vld [vmem:[#allocation13 + $0x1e0] sm:$0xff]
    %v7002 = vld [vmem:[#allocation13 + $0x1e8] sm:$0xff]
    %v7003 = vld [vmem:[#allocation13 + $0x1f0] sm:$0xff]
    %v7004 = vld [vmem:[#allocation13 + $0x1f8] sm:$0xff]
    %v7005 = vld [vmem:[%s8] sm:$0xf]
    %v7007 = vlaneseq
    %v7008 = vshrl.u32 %v7007, 7
    %v7009 = vsub.s32 0, %v7008
    %v7010 = vrot.slane %v7005, %v7009
    %v7011 = vlaneseq
    %v7012 = vshrl.u32 %v7011, 7
    %v7013 = vsub.s32 1, %v7012
    %v7014 = vrot.slane %v7005, %v7013
    %v7015 = vlaneseq
    %v7016 = vshrl.u32 %v7015, 7
    %v7017 = vsub.s32 2, %v7016
    %v7018 = vrot.slane %v7005, %v7017
    %v7019 = vlaneseq
    %v7020 = vshrl.u32 %v7019, 7
    %v7021 = vsub.s32 3, %v7020
    %v7022 = vrot.slane %v7005, %v7021
    %v7091 = vunpack.c.l.b16 %v6941
    %v7092 = vunpack.c.h.b16 %v6941
    %v7093 = vunpack.c.l.b16 %v6942
    %v7094 = vunpack.c.h.b16 %v6942
    %v7095 = vunpack.c.l.b16 %v6943
    %v7096 = vunpack.c.h.b16 %v6943
    %v7097 = vunpack.c.l.b16 %v6944
    %v7098 = vunpack.c.h.b16 %v6944
    %v7099 = vunpack.c.l.b16 %v6945
    %v7100 = vunpack.c.h.b16 %v6945
    %v7101 = vunpack.c.l.b16 %v6946
    %v7102 = vunpack.c.h.b16 %v6946
    %v7103 = vunpack.c.l.b16 %v6947
    %v7104 = vunpack.c.h.b16 %v6947
    %v7105 = vunpack.c.l.b16 %v6948
    %v7106 = vunpack.c.h.b16 %v6948
    %v7107 = vunpack.c.l.b16 %v6949
    %v7108 = vunpack.c.h.b16 %v6949
    %v7109 = vunpack.c.l.b16 %v6950
    %v7110 = vunpack.c.h.b16 %v6950
    %v7111 = vunpack.c.l.b16 %v6951
    %v7112 = vunpack.c.h.b16 %v6951
    %v7113 = vunpack.c.l.b16 %v6952
    %v7114 = vunpack.c.h.b16 %v6952
    %v7115 = vunpack.c.l.b16 %v6953
    %v7116 = vunpack.c.h.b16 %v6953
    %v7117 = vunpack.c.l.b16 %v6954
    %v7118 = vunpack.c.h.b16 %v6954
    %v7119 = vunpack.c.l.b16 %v6955
    %v7120 = vunpack.c.h.b16 %v6955
    %v7121 = vunpack.c.l.b16 %v6956
    %v7122 = vunpack.c.h.b16 %v6956
    %v7123 = vunpack.c.l.b16 %v6957
    %v7124 = vunpack.c.h.b16 %v6957
    %v7125 = vunpack.c.l.b16 %v6958
    %v7126 = vunpack.c.h.b16 %v6958
    %v7127 = vunpack.c.l.b16 %v6959
    %v7128 = vunpack.c.h.b16 %v6959
    %v7129 = vunpack.c.l.b16 %v6960
    %v7130 = vunpack.c.h.b16 %v6960
    %v7131 = vunpack.c.l.b16 %v6961
    %v7132 = vunpack.c.h.b16 %v6961
    %v7133 = vunpack.c.l.b16 %v6962
    %v7134 = vunpack.c.h.b16 %v6962
    %v7135 = vunpack.c.l.b16 %v6963
    %v7136 = vunpack.c.h.b16 %v6963
    %v7137 = vunpack.c.l.b16 %v6964
    %v7138 = vunpack.c.h.b16 %v6964
    %v7139 = vunpack.c.l.b16 %v6965
    %v7140 = vunpack.c.h.b16 %v6965
    %v7141 = vunpack.c.l.b16 %v6966
    %v7142 = vunpack.c.h.b16 %v6966
    %v7143 = vunpack.c.l.b16 %v6967
    %v7144 = vunpack.c.h.b16 %v6967
    %v7145 = vunpack.c.l.b16 %v6968
    %v7146 = vunpack.c.h.b16 %v6968
    %v7147 = vunpack.c.l.b16 %v6969
    %v7148 = vunpack.c.h.b16 %v6969
    %v7149 = vunpack.c.l.b16 %v6970
    %v7150 = vunpack.c.h.b16 %v6970
    %v7151 = vunpack.c.l.b16 %v6971
    %v7152 = vunpack.c.h.b16 %v6971
    %v7153 = vunpack.c.l.b16 %v6972
    %v7154 = vunpack.c.h.b16 %v6972
    %v7155 = vunpack.c.l.b16 %v6973
    %v7156 = vunpack.c.h.b16 %v6973
    %v7157 = vunpack.c.l.b16 %v6974
    %v7158 = vunpack.c.h.b16 %v6974
    %v7159 = vunpack.c.l.b16 %v6975
    %v7160 = vunpack.c.h.b16 %v6975
    %v7161 = vunpack.c.l.b16 %v6976
    %v7162 = vunpack.c.h.b16 %v6976
    %v7163 = vunpack.c.l.b16 %v6977
    %v7164 = vunpack.c.h.b16 %v6977
    %v7165 = vunpack.c.l.b16 %v6978
    %v7166 = vunpack.c.h.b16 %v6978
    %v7167 = vunpack.c.l.b16 %v6979
    %v7168 = vunpack.c.h.b16 %v6979
    %v7169 = vunpack.c.l.b16 %v6980
    %v7170 = vunpack.c.h.b16 %v6980
    %v7171 = vunpack.c.l.b16 %v6981
    %v7172 = vunpack.c.h.b16 %v6981
    %v7173 = vunpack.c.l.b16 %v6982
    %v7174 = vunpack.c.h.b16 %v6982
    %v7175 = vunpack.c.l.b16 %v6983
    %v7176 = vunpack.c.h.b16 %v6983
    %v7177 = vunpack.c.l.b16 %v6984
    %v7178 = vunpack.c.h.b16 %v6984
    %v7179 = vunpack.c.l.b16 %v6985
    %v7180 = vunpack.c.h.b16 %v6985
    %v7181 = vunpack.c.l.b16 %v6986
    %v7182 = vunpack.c.h.b16 %v6986
    %v7183 = vunpack.c.l.b16 %v6987
    %v7184 = vunpack.c.h.b16 %v6987
    %v7185 = vunpack.c.l.b16 %v6988
    %v7186 = vunpack.c.h.b16 %v6988
    %v7187 = vunpack.c.l.b16 %v6989
    %v7188 = vunpack.c.h.b16 %v6989
    %v7189 = vunpack.c.l.b16 %v6990
    %v7190 = vunpack.c.h.b16 %v6990
    %v7191 = vunpack.c.l.b16 %v6991
    %v7192 = vunpack.c.h.b16 %v6991
    %v7193 = vunpack.c.l.b16 %v6992
    %v7194 = vunpack.c.h.b16 %v6992
    %v7195 = vunpack.c.l.b16 %v6993
    %v7196 = vunpack.c.h.b16 %v6993
    %v7197 = vunpack.c.l.b16 %v6994
    %v7198 = vunpack.c.h.b16 %v6994
    %v7199 = vunpack.c.l.b16 %v6995
    %v7200 = vunpack.c.h.b16 %v6995
    %v7201 = vunpack.c.l.b16 %v6996
    %v7202 = vunpack.c.h.b16 %v6996
    %v7203 = vunpack.c.l.b16 %v6997
    %v7204 = vunpack.c.h.b16 %v6997
    %v7205 = vunpack.c.l.b16 %v6998
    %v7206 = vunpack.c.h.b16 %v6998
    %v7207 = vunpack.c.l.b16 %v6999
    %v7208 = vunpack.c.h.b16 %v6999
    %v7209 = vunpack.c.l.b16 %v7000
    %v7210 = vunpack.c.h.b16 %v7000
    %v7211 = vunpack.c.l.b16 %v7001
    %v7212 = vunpack.c.h.b16 %v7001
    %v7213 = vunpack.c.l.b16 %v7002
    %v7214 = vunpack.c.h.b16 %v7002
    %v7215 = vunpack.c.l.b16 %v7003
    %v7216 = vunpack.c.h.b16 %v7003
    %v7217 = vunpack.c.l.b16 %v7004
    %v7218 = vunpack.c.h.b16 %v7004
    %v7219 = vpack.c.b16 %v7095, %v7091
    %v7220 = vpack.c.b16 %v7096, %v7092
    %v7221 = vpack.c.b16 %v7097, %v7093
    %v7222 = vpack.c.b16 %v7098, %v7094
    %v7223 = vpack.c.b16 %v7103, %v7099
    %v7224 = vpack.c.b16 %v7104, %v7100
    %v7225 = vpack.c.b16 %v7105, %v7101
    %v7226 = vpack.c.b16 %v7106, %v7102
    %v7227 = vpack.c.b16 %v7111, %v7107
    %v7228 = vpack.c.b16 %v7112, %v7108
    %v7229 = vpack.c.b16 %v7113, %v7109
    %v7230 = vpack.c.b16 %v7114, %v7110
    %v7231 = vpack.c.b16 %v7119, %v7115
    %v7232 = vpack.c.b16 %v7120, %v7116
    %v7233 = vpack.c.b16 %v7121, %v7117
    %v7234 = vpack.c.b16 %v7122, %v7118
    %v7235 = vpack.c.b16 %v7127, %v7123
    %v7236 = vpack.c.b16 %v7128, %v7124
    %v7237 = vpack.c.b16 %v7129, %v7125
    %v7238 = vpack.c.b16 %v7130, %v7126
    %v7239 = vpack.c.b16 %v7135, %v7131
    %v7240 = vpack.c.b16 %v7136, %v7132
    %v7241 = vpack.c.b16 %v7137, %v7133
    %v7242 = vpack.c.b16 %v7138, %v7134
    %v7243 = vpack.c.b16 %v7143, %v7139
    %v7244 = vpack.c.b16 %v7144, %v7140
    %v7245 = vpack.c.b16 %v7145, %v7141
    %v7246 = vpack.c.b16 %v7146, %v7142
    %v7247 = vpack.c.b16 %v7151, %v7147
    %v7248 = vpack.c.b16 %v7152, %v7148
    %v7249 = vpack.c.b16 %v7153, %v7149
    %v7250 = vpack.c.b16 %v7154, %v7150
    %v7251 = vpack.c.b16 %v7159, %v7155
    %v7252 = vpack.c.b16 %v7160, %v7156
    %v7253 = vpack.c.b16 %v7161, %v7157
    %v7254 = vpack.c.b16 %v7162, %v7158
    %v7255 = vpack.c.b16 %v7167, %v7163
    %v7256 = vpack.c.b16 %v7168, %v7164
    %v7257 = vpack.c.b16 %v7169, %v7165
    %v7258 = vpack.c.b16 %v7170, %v7166
    %v7259 = vpack.c.b16 %v7175, %v7171
    %v7260 = vpack.c.b16 %v7176, %v7172
    %v7261 = vpack.c.b16 %v7177, %v7173
    %v7262 = vpack.c.b16 %v7178, %v7174
    %v7263 = vpack.c.b16 %v7183, %v7179
    %v7264 = vpack.c.b16 %v7184, %v7180
    %v7265 = vpack.c.b16 %v7185, %v7181
    %v7266 = vpack.c.b16 %v7186, %v7182
    %v7267 = vpack.c.b16 %v7191, %v7187
    %v7268 = vpack.c.b16 %v7192, %v7188
    %v7269 = vpack.c.b16 %v7193, %v7189
    %v7270 = vpack.c.b16 %v7194, %v7190
    %v7271 = vpack.c.b16 %v7199, %v7195
    %v7272 = vpack.c.b16 %v7200, %v7196
    %v7273 = vpack.c.b16 %v7201, %v7197
    %v7274 = vpack.c.b16 %v7202, %v7198
    %v7275 = vpack.c.b16 %v7207, %v7203
    %v7276 = vpack.c.b16 %v7208, %v7204
    %v7277 = vpack.c.b16 %v7209, %v7205
    %v7278 = vpack.c.b16 %v7210, %v7206
    %v7279 = vpack.c.b16 %v7215, %v7211
    %v7280 = vpack.c.b16 %v7216, %v7212
    %v7281 = vpack.c.b16 %v7217, %v7213
    %v7282 = vpack.c.b16 %v7218, %v7214
    %7347 = vmatprep.subr.bf16.mxu0 %v7248
    %7348 = vmatpush1.bf16.msra.mxu0 %v7247
    %7349 = vmatprep.subr.bf16.mxu0 %v7244
    %7350 = vmatpush1.bf16.msra.mxu0 %v7243
    %7351 = vmatprep.subr.bf16.mxu0 %v7240
    %7352 = vmatpush1.bf16.msra.mxu0 %v7239
    %7353 = vmatprep.subr.bf16.mxu0 %v7236
    %7354 = vmatpush1.bf16.msra.mxu0 %v7235
    %7355 = vmatprep.subr.bf16.mxu0 %v7232
    %7356 = vmatpush1.bf16.msra.mxu0 %v7231
    %7357 = vmatprep.subr.bf16.mxu0 %v7228
    %7358 = vmatpush1.bf16.msra.mxu0 %v7227
    %7359 = vmatprep.subr.bf16.mxu0 %v7224
    %7360 = vmatpush1.bf16.msra.mxu0 %v7223
    %7361 = vmatprep.subr.bf16.mxu0 %v7220
    %7362 = vmatpush1.bf16.msra.mxu0 %v7219
    %7363 = vmatprep.subr.bf16.mxu0 %v7280
    %7364 = vmatpush2.bf16.msra.mxu0 %v7279
    %7365 = vmatprep.subr.bf16.mxu0 %v7276
    %7366 = vmatpush2.bf16.msra.mxu0 %v7275
    %7367 = vmatprep.subr.bf16.mxu0 %v7272
    %7368 = vmatpush2.bf16.msra.mxu0 %v7271
    %7369 = vmatprep.subr.bf16.mxu0 %v7268
    %7370 = vmatpush2.bf16.msra.mxu0 %v7267
    %7371 = vmatprep.subr.bf16.mxu0 %v7264
    %7372 = vmatpush2.bf16.msra.mxu0 %v7263
    %7373 = vmatprep.subr.bf16.mxu0 %v7260
    %7374 = vmatpush2.bf16.msra.mxu0 %v7259
    %7375 = vmatprep.subr.bf16.mxu0 %v7256
    %7376 = vmatpush2.bf16.msra.mxu0 %v7255
    %7377 = vmatprep.subr.bf16.mxu0 %v7252
    %7378 = vmatpush2.bf16.msra.mxu0 %v7251
    %7379 = vmatprep.mubr.bf16.mxu0 %v6940
    %7380 = vmatmul.mubr.bf16.gmra.mxu0 %v6939
    %v7381 = vpop.f32.mrf.mxu0
    %v7382 = vadd.f32 %v7010, %v7381
    %v7383 = vpop.f32.mrf.mxu0
    %v7384 = vadd.f32 %v7014, %v7383
    %v7385 = vpop.f32.mrf.mxu0
    %v7386 = vpop.f32.mrf.mxu0
    %7387 = vdwg.mxu0
    %7388 = vmatprep.subr.bf16.mxu0 %v7250
    %7389 = vmatpush1.bf16.msra.mxu0 %v7249
    %7390 = vmatprep.subr.bf16.mxu0 %v7246
    %7391 = vmatpush1.bf16.msra.mxu0 %v7245
    %7392 = vmatprep.subr.bf16.mxu0 %v7242
    %7393 = vmatpush1.bf16.msra.mxu0 %v7241
    %7394 = vmatprep.subr.bf16.mxu0 %v7238
    %7395 = vmatpush1.bf16.msra.mxu0 %v7237
    %7396 = vmatprep.subr.bf16.mxu0 %v7234
    %7397 = vmatpush1.bf16.msra.mxu0 %v7233
    %7398 = vmatprep.subr.bf16.mxu0 %v7230
    %7399 = vmatpush1.bf16.msra.mxu0 %v7229
    %7400 = vmatprep.subr.bf16.mxu0 %v7226
    %7401 = vmatpush1.bf16.msra.mxu0 %v7225
    %7402 = vmatprep.subr.bf16.mxu0 %v7222
    %7403 = vmatpush1.bf16.msra.mxu0 %v7221
    %7404 = vmatprep.subr.bf16.mxu0 %v7282
    %7405 = vmatpush2.bf16.msra.mxu0 %v7281
    %7406 = vmatprep.subr.bf16.mxu0 %v7278
    %7407 = vmatpush2.bf16.msra.mxu0 %v7277
    %7408 = vmatprep.subr.bf16.mxu0 %v7274
    %7409 = vmatpush2.bf16.msra.mxu0 %v7273
    %7410 = vmatprep.subr.bf16.mxu0 %v7270
    %7411 = vmatpush2.bf16.msra.mxu0 %v7269
    %7412 = vmatprep.subr.bf16.mxu0 %v7266
    %7413 = vmatpush2.bf16.msra.mxu0 %v7265
    %7414 = vmatprep.subr.bf16.mxu0 %v7262
    %7415 = vmatpush2.bf16.msra.mxu0 %v7261
    %7416 = vmatprep.subr.bf16.mxu0 %v7258
    %7417 = vmatpush2.bf16.msra.mxu0 %v7257
    %7418 = vmatprep.subr.bf16.mxu0 %v7254
    %7419 = vmatpush2.bf16.msra.mxu0 %v7253
    %7420 = vmatprep.mubr.bf16.mxu0 %v6940
    %7421 = vmatmul.mubr.bf16.gmra.mxu0 %v6939
    %v7422 = vpop.f32.mrf.mxu0
    %v7423 = vadd.f32 %v7018, %v7422
    %v7424 = vpop.f32.mrf.mxu0
    %v7425 = vadd.f32 %v7022, %v7424
    %v7426 = vpop.f32.mrf.mxu0
    %v7427 = vpop.f32.mrf.mxu0
    %7428 = vdwg.mxu0
    %v7429 = vxor.u32 %v7382, 2147483648
    %v7430 = vmul.f32 %v7429, 1.442695
    %v7431 = vpow.pop %v7430
    %v7432 = vadd.f32 %v7431, 1.0
    %v7433 = vrcp.pop %v7432
    %v7434 = vmul.f32 1.0, %v7433
    %v7435 = vxor.u32 %v7384, 2147483648
    %v7436 = vmul.f32 %v7435, 1.442695
    %v7437 = vpow.pop %v7436
    %v7438 = vadd.f32 %v7437, 1.0
    %v7439 = vrcp.pop %v7438
    %v7440 = vmul.f32 1.0, %v7439
    %v7441 = vtanh.pop %v7423
    %v7442 = vxor.u32 %v7425, 2147483648
    %v7443 = vmul.f32 %v7442, 1.442695
    %v7444 = vpow.pop %v7443
    %v7445 = vadd.f32 %v7444, 1.0
    %v7446 = vrcp.pop %v7445
    %v7447 = vmul.f32 1.0, %v7446
    %v7448 = vld [vmem:[#allocation3] sm:$0xff]
    %v7449 = vmul.f32 %v7440, %v7448
    %v7450 = vmul.f32 %v7434, %v7441
    %v7451 = vadd.f32 %v7449, %v7450
    %v7452 = vtanh.pop %v7451
    %v7453 = vmul.f32 %v7447, %v7452
    %7454 = vst [vmem:[#allocation3] sm:$0xff] %v7451
    %7455 = vst [vmem:[#allocation2 + $0x8] sm:$0xff] %v7453
    %v7456 = vpack.c.bf16 %v7453, %v7453
    %v7457 = vld [vmem:[#allocation15] sm:$0xf]
    %v7458 = vld [vmem:[#allocation15 + $0x4] sm:$0xf]
    %v7459 = vld [vmem:[#allocation15 + $0x8] sm:$0xf]
    %v7460 = vld [vmem:[#allocation15 + $0xc] sm:$0xf]
    %v7461 = vld [vmem:[#allocation15 + $0x10] sm:$0xf]
    %v7462 = vld [vmem:[#allocation15 + $0x14] sm:$0xf]
    %v7463 = vld [vmem:[#allocation15 + $0x18] sm:$0xf]
    %v7464 = vld [vmem:[#allocation15 + $0x1c] sm:$0xf]
    %v7465 = vld [vmem:[#allocation15 + $0x20] sm:$0xf]
    %v7466 = vld [vmem:[#allocation15 + $0x24] sm:$0xf]
    %v7467 = vld [vmem:[#allocation15 + $0x28] sm:$0xf]
    %v7468 = vld [vmem:[#allocation15 + $0x2c] sm:$0xf]
    %v7469 = vld [vmem:[#allocation15 + $0x30] sm:$0xf]
    %v7470 = vld [vmem:[#allocation15 + $0x34] sm:$0xf]
    %v7471 = vld [vmem:[#allocation15 + $0x38] sm:$0xf]
    %v7472 = vld [vmem:[#allocation15 + $0x3c] sm:$0xf]
    %v7473 = vld [vmem:[%s10] sm:$0x1]
    %v7475 = vlaneseq
    %v7476 = vshrl.u32 %v7475, 7
    %v7477 = vsub.s32 0, %v7476
    %v7478 = vrot.slane %v7473, %v7477
    %v7496 = vunpack.c.l.b16 %v7457
    %v7497 = vunpack.c.l.b16 %v7458
    %v7498 = vunpack.c.l.b16 %v7459
    %v7499 = vunpack.c.l.b16 %v7460
    %v7500 = vunpack.c.l.b16 %v7461
    %v7501 = vunpack.c.l.b16 %v7462
    %v7502 = vunpack.c.l.b16 %v7463
    %v7503 = vunpack.c.l.b16 %v7464
    %v7504 = vunpack.c.l.b16 %v7465
    %v7505 = vunpack.c.l.b16 %v7466
    %v7506 = vunpack.c.l.b16 %v7467
    %v7507 = vunpack.c.l.b16 %v7468
    %v7508 = vunpack.c.l.b16 %v7469
    %v7509 = vunpack.c.l.b16 %v7470
    %v7510 = vunpack.c.l.b16 %v7471
    %v7511 = vunpack.c.l.b16 %v7472
    %v7512 = vpack.c.b16 %v7497, %v7496
    %v7513 = vpack.c.b16 %v7499, %v7498
    %v7514 = vpack.c.b16 %v7501, %v7500
    %v7515 = vpack.c.b16 %v7503, %v7502
    %v7516 = vpack.c.b16 %v7505, %v7504
    %v7517 = vpack.c.b16 %v7507, %v7506
    %v7518 = vpack.c.b16 %v7509, %v7508
    %v7519 = vpack.c.b16 %v7511, %v7510
    %7528 = vmatprep.subr.bf16.mxu0 0
    %7529 = vmatpush1.bf16.msra.mxu0 %v7519
    %7530 = vmatprep.subr.bf16.mxu0 0
    %7531 = vmatpush1.bf16.msra.mxu0 %v7518
    %7532 = vmatprep.subr.bf16.mxu0 0
    %7533 = vmatpush1.bf16.msra.mxu0 %v7517
    %7534 = vmatprep.subr.bf16.mxu0 0
    %7535 = vmatpush1.bf16.msra.mxu0 %v7516
    %7536 = vmatprep.subr.bf16.mxu0 0
    %7537 = vmatpush1.bf16.msra.mxu0 %v7515
    %7538 = vmatprep.subr.bf16.mxu0 0
    %7539 = vmatpush1.bf16.msra.mxu0 %v7514
    %7540 = vmatprep.subr.bf16.mxu0 0
    %7541 = vmatpush1.bf16.msra.mxu0 %v7513
    %7542 = vmatprep.subr.bf16.mxu0 0
    %7543 = vmatpush1.bf16.msra.mxu0 %v7512
    %7544 = vmatprep.subr.bf16.mxu0 0
    %7545 = vmatpush2.bf16.msra.mxu0 0
    %7546 = vmatprep.subr.bf16.mxu0 0
    %7547 = vmatpush2.bf16.msra.mxu0 0
    %7548 = vmatprep.subr.bf16.mxu0 0
    %7549 = vmatpush2.bf16.msra.mxu0 0
    %7550 = vmatprep.subr.bf16.mxu0 0
    %7551 = vmatpush2.bf16.msra.mxu0 0
    %7552 = vmatprep.subr.bf16.mxu0 0
    %7553 = vmatpush2.bf16.msra.mxu0 0
    %7554 = vmatprep.subr.bf16.mxu0 0
    %7555 = vmatpush2.bf16.msra.mxu0 0
    %7556 = vmatprep.subr.bf16.mxu0 0
    %7557 = vmatpush2.bf16.msra.mxu0 0
    %7558 = vmatprep.subr.bf16.mxu0 0
    %7559 = vmatpush2.bf16.msra.mxu0 0
    %7560 = vmatprep.mubr.bf16.mxu0 0
    %7561 = vmatmul.mubr.bf16.gmra.mxu0 %v7456
    %v7562 = vpop.f32.mrf.mxu0
    %v7563 = vadd.f32 %v7478, %v7562
    %v7564 = vpop.f32.mrf.mxu0
    %v7565 = vpop.f32.mrf.mxu0
    %v7566 = vpop.f32.mrf.mxu0
    %7567 = vdwg.mxu0
    %s7568 = scalar_lea.vmem %s11, 24
    %7569 = vst [vmem:[%s7568] sm:$0xff] %v7563
    %7570 = vmax.xlane.f32.xlu0 %v7563
    %v7571 = vpop.xlane.xlu0 %7570
    %vm7572 = vcmp.eq.f32.partialorder %v7563, %v7571
    %v7573 = vsel %vm7572, %v121, 128
    %v7574 = vand.u32 %v7573, 65535
    %v7575 = vshra.s32 %v7573, 16
    %v7576 = vcvt.s32.f32 %v7574
    %v7577 = vcvt.s32.f32 %v7575
    %7578 = vmin.xlane.f32.xlu0 %v7577
    %v7579 = vpop.xlane.xlu0 %7578
    %vm7580 = vcmp.eq.f32.partialorder %v7577, %v7579
    %v7581 = vsel %vm7580, %v7576, inf
    %7582 = vmin.xlane.f32.xlu0 %v7581
    %v7583 = vpop.xlane.xlu0 %7582
    %v7584 = vcvt.f32.s32 %v7583
    %v7585 = vcvt.f32.s32 %v7579
    %v7586 = vshll.u32 %v7585, 16
    %v7587 = vadd.s32 %v7586, %v7584
    %vm7588 = vcmp.eq.s32.totalorder %v121, %v7587
    %v7589 = vsel %vm7588, 1, 0
    %v7590 = vcvt.s32.f32 %v7589
    %s7591 = sld [smem:[#allocation6 + $0xc]]
    %v7592 = vstv %s7591
    %v7593 = vsel %vm122, %v7592, 4294967295
    %s7594 = sld [smem:[#allocation6 + $0xd]]
    %v7595 = vstv %s7594
    %v7596 = vsel %vm126, %v7595, %v7593
    %s7597 = sld [smem:[#allocation6 + $0xe]]
    %v7598 = vstv %s7597
    %v7599 = vsel %vm130, %v7598, %v7596
    %s7600 = sld [smem:[#allocation6 + $0xf]]
    %v7601 = vstv %s7600
    %v7602 = vsel %vm134, %v7601, %v7599
    %vm7603 = vcmp.eq.s32.totalorder %v121, %v7602
    %v7604 = vsel %vm7603, 1, 0
    %v7605 = vcvt.s32.f32 %v7604
    %s7606 = sld [smem:[#allocation7 + $0x2]]
    %p7607 = scmp.ne.s32.totalorder %s7606, 0
    %s7608 = scalar_select %p7607, 1, 0
    %s7609 = scvt.s32.f32 %s7608
    %v7610 = vstv %s7609
    %v7611 = vmul.f32 %v7610, %v7605
    %s7612 = ssub.f32 1.0, %s7609
    %v7613 = vstv %s7612
    %v7614 = vmul.f32 %v7613, %v7590
    %v7615 = vadd.f32 %v7611, %v7614
    %v7616 = vpack.c.bf16 %v7615, %v7615
    %v7617 = vld [vmem:[#allocation12] sm:$0xf]
    %v7618 = vld [vmem:[#allocation12 + $0x4] sm:$0xf]
    %v7619 = vld [vmem:[#allocation12 + $0x8] sm:$0xf]
    %v7620 = vld [vmem:[#allocation12 + $0xc] sm:$0xf]
    %v7621 = vld [vmem:[#allocation12 + $0x10] sm:$0xf]
    %v7622 = vld [vmem:[#allocation12 + $0x14] sm:$0xf]
    %v7623 = vld [vmem:[#allocation12 + $0x18] sm:$0xf]
    %v7624 = vld [vmem:[#allocation12 + $0x1c] sm:$0xf]
    %v7625 = vld [vmem:[#allocation12 + $0x20] sm:$0xf]
    %v7626 = vld [vmem:[#allocation12 + $0x24] sm:$0xf]
    %v7627 = vld [vmem:[#allocation12 + $0x28] sm:$0xf]
    %v7628 = vld [vmem:[#allocation12 + $0x2c] sm:$0xf]
    %v7629 = vld [vmem:[#allocation12 + $0x30] sm:$0xf]
    %v7630 = vld [vmem:[#allocation12 + $0x34] sm:$0xf]
    %v7631 = vld [vmem:[#allocation12 + $0x38] sm:$0xf]
    %v7632 = vld [vmem:[#allocation12 + $0x3c] sm:$0xf]
    %v7649 = vunpack.c.l.b16 %v7617
    %v7650 = vunpack.c.l.b16 %v7618
    %v7651 = vunpack.c.l.b16 %v7619
    %v7652 = vunpack.c.l.b16 %v7620
    %v7653 = vunpack.c.l.b16 %v7621
    %v7654 = vunpack.c.l.b16 %v7622
    %v7655 = vunpack.c.l.b16 %v7623
    %v7656 = vunpack.c.l.b16 %v7624
    %v7657 = vunpack.c.l.b16 %v7625
    %v7658 = vunpack.c.l.b16 %v7626
    %v7659 = vunpack.c.l.b16 %v7627
    %v7660 = vunpack.c.l.b16 %v7628
    %v7661 = vunpack.c.l.b16 %v7629
    %v7662 = vunpack.c.l.b16 %v7630
    %v7663 = vunpack.c.l.b16 %v7631
    %v7664 = vunpack.c.l.b16 %v7632
    %v7665 = vpack.c.b16 %v7650, %v7649
    %v7666 = vpack.c.b16 %v7652, %v7651
    %v7667 = vpack.c.b16 %v7654, %v7653
    %v7668 = vpack.c.b16 %v7656, %v7655
    %v7669 = vpack.c.b16 %v7658, %v7657
    %v7670 = vpack.c.b16 %v7660, %v7659
    %v7671 = vpack.c.b16 %v7662, %v7661
    %v7672 = vpack.c.b16 %v7664, %v7663
    %7681 = vmatprep.subr.bf16.mxu0 0
    %7682 = vmatpush1.bf16.msra.mxu0 %v7672
    %7683 = vmatprep.subr.bf16.mxu0 0
    %7684 = vmatpush1.bf16.msra.mxu0 %v7671
    %7685 = vmatprep.subr.bf16.mxu0 0
    %7686 = vmatpush1.bf16.msra.mxu0 %v7670
    %7687 = vmatprep.subr.bf16.mxu0 0
    %7688 = vmatpush1.bf16.msra.mxu0 %v7669
    %7689 = vmatprep.subr.bf16.mxu0 0
    %7690 = vmatpush1.bf16.msra.mxu0 %v7668
    %7691 = vmatprep.subr.bf16.mxu0 0
    %7692 = vmatpush1.bf16.msra.mxu0 %v7667
    %7693 = vmatprep.subr.bf16.mxu0 0
    %7694 = vmatpush1.bf16.msra.mxu0 %v7666
    %7695 = vmatprep.subr.bf16.mxu0 0
    %7696 = vmatpush1.bf16.msra.mxu0 %v7665
    %7697 = vmatprep.subr.bf16.mxu0 0
    %7698 = vmatpush2.bf16.msra.mxu0 0
    %7699 = vmatprep.subr.bf16.mxu0 0
    %7700 = vmatpush2.bf16.msra.mxu0 0
    %7701 = vmatprep.subr.bf16.mxu0 0
    %7702 = vmatpush2.bf16.msra.mxu0 0
    %7703 = vmatprep.subr.bf16.mxu0 0
    %7704 = vmatpush2.bf16.msra.mxu0 0
    %7705 = vmatprep.subr.bf16.mxu0 0
    %7706 = vmatpush2.bf16.msra.mxu0 0
    %7707 = vmatprep.subr.bf16.mxu0 0
    %7708 = vmatpush2.bf16.msra.mxu0 0
    %7709 = vmatprep.subr.bf16.mxu0 0
    %7710 = vmatpush2.bf16.msra.mxu0 0
    %7711 = vmatprep.subr.bf16.mxu0 0
    %7712 = vmatpush2.bf16.msra.mxu0 0
    %7713 = vmatprep.mubr.bf16.mxu0 0
    %7714 = vmatmul.mubr.bf16.gmra.mxu0 %v7616
    %v7715 = vpop.f32.mrf.mxu0
    %v7716 = vadd.f32 0.0, %v7715
    %v7717 = vpop.f32.mrf.mxu0
    %v7718 = vpop.f32.mrf.mxu0
    %v7719 = vpop.f32.mrf.mxu0
    %7720 = vdwg.mxu0
    %7721 = vst [vmem:[#allocation2] sm:$0xff] %v7716
    %v7722 = vld [vmem:[#allocation2] sm:$0xff]
    %v7723 = vld [vmem:[#allocation2 + $0x8] sm:$0xff]
    %v7724 = vpack.c.bf16 %v7722, %v7722
    %v7725 = vpack.c.bf16 %v7723, %v7723
    %v7726 = vld [vmem:[#allocation13] sm:$0xff]
    %v7727 = vld [vmem:[#allocation13 + $0x8] sm:$0xff]
    %v7728 = vld [vmem:[#allocation13 + $0x10] sm:$0xff]
    %v7729 = vld [vmem:[#allocation13 + $0x18] sm:$0xff]
    %v7730 = vld [vmem:[#allocation13 + $0x20] sm:$0xff]
    %v7731 = vld [vmem:[#allocation13 + $0x28] sm:$0xff]
    %v7732 = vld [vmem:[#allocation13 + $0x30] sm:$0xff]
    %v7733 = vld [vmem:[#allocation13 + $0x38] sm:$0xff]
    %v7734 = vld [vmem:[#allocation13 + $0x40] sm:$0xff]
    %v7735 = vld [vmem:[#allocation13 + $0x48] sm:$0xff]
    %v7736 = vld [vmem:[#allocation13 + $0x50] sm:$0xff]
    %v7737 = vld [vmem:[#allocation13 + $0x58] sm:$0xff]
    %v7738 = vld [vmem:[#allocation13 + $0x60] sm:$0xff]
    %v7739 = vld [vmem:[#allocation13 + $0x68] sm:$0xff]
    %v7740 = vld [vmem:[#allocation13 + $0x70] sm:$0xff]
    %v7741 = vld [vmem:[#allocation13 + $0x78] sm:$0xff]
    %v7742 = vld [vmem:[#allocation13 + $0x80] sm:$0xff]
    %v7743 = vld [vmem:[#allocation13 + $0x88] sm:$0xff]
    %v7744 = vld [vmem:[#allocation13 + $0x90] sm:$0xff]
    %v7745 = vld [vmem:[#allocation13 + $0x98] sm:$0xff]
    %v7746 = vld [vmem:[#allocation13 + $0xa0] sm:$0xff]
    %v7747 = vld [vmem:[#allocation13 + $0xa8] sm:$0xff]
    %v7748 = vld [vmem:[#allocation13 + $0xb0] sm:$0xff]
    %v7749 = vld [vmem:[#allocation13 + $0xb8] sm:$0xff]
    %v7750 = vld [vmem:[#allocation13 + $0xc0] sm:$0xff]
    %v7751 = vld [vmem:[#allocation13 + $0xc8] sm:$0xff]
    %v7752 = vld [vmem:[#allocation13 + $0xd0] sm:$0xff]
    %v7753 = vld [vmem:[#allocation13 + $0xd8] sm:$0xff]
    %v7754 = vld [vmem:[#allocation13 + $0xe0] sm:$0xff]
    %v7755 = vld [vmem:[#allocation13 + $0xe8] sm:$0xff]
    %v7756 = vld [vmem:[#allocation13 + $0xf0] sm:$0xff]
    %v7757 = vld [vmem:[#allocation13 + $0xf8] sm:$0xff]
    %v7758 = vld [vmem:[#allocation13 + $0x100] sm:$0xff]
    %v7759 = vld [vmem:[#allocation13 + $0x108] sm:$0xff]
    %v7760 = vld [vmem:[#allocation13 + $0x110] sm:$0xff]
    %v7761 = vld [vmem:[#allocation13 + $0x118] sm:$0xff]
    %v7762 = vld [vmem:[#allocation13 + $0x120] sm:$0xff]
    %v7763 = vld [vmem:[#allocation13 + $0x128] sm:$0xff]
    %v7764 = vld [vmem:[#allocation13 + $0x130] sm:$0xff]
    %v7765 = vld [vmem:[#allocation13 + $0x138] sm:$0xff]
    %v7766 = vld [vmem:[#allocation13 + $0x140] sm:$0xff]
    %v7767 = vld [vmem:[#allocation13 + $0x148] sm:$0xff]
    %v7768 = vld [vmem:[#allocation13 + $0x150] sm:$0xff]
    %v7769 = vld [vmem:[#allocation13 + $0x158] sm:$0xff]
    %v7770 = vld [vmem:[#allocation13 + $0x160] sm:$0xff]
    %v7771 = vld [vmem:[#allocation13 + $0x168] sm:$0xff]
    %v7772 = vld [vmem:[#allocation13 + $0x170] sm:$0xff]
    %v7773 = vld [vmem:[#allocation13 + $0x178] sm:$0xff]
    %v7774 = vld [vmem:[#allocation13 + $0x180] sm:$0xff]
    %v7775 = vld [vmem:[#allocation13 + $0x188] sm:$0xff]
    %v7776 = vld [vmem:[#allocation13 + $0x190] sm:$0xff]
    %v7777 = vld [vmem:[#allocation13 + $0x198] sm:$0xff]
    %v7778 = vld [vmem:[#allocation13 + $0x1a0] sm:$0xff]
    %v7779 = vld [vmem:[#allocation13 + $0x1a8] sm:$0xff]
    %v7780 = vld [vmem:[#allocation13 + $0x1b0] sm:$0xff]
    %v7781 = vld [vmem:[#allocation13 + $0x1b8] sm:$0xff]
    %v7782 = vld [vmem:[#allocation13 + $0x1c0] sm:$0xff]
    %v7783 = vld [vmem:[#allocation13 + $0x1c8] sm:$0xff]
    %v7784 = vld [vmem:[#allocation13 + $0x1d0] sm:$0xff]
    %v7785 = vld [vmem:[#allocation13 + $0x1d8] sm:$0xff]
    %v7786 = vld [vmem:[#allocation13 + $0x1e0] sm:$0xff]
    %v7787 = vld [vmem:[#allocation13 + $0x1e8] sm:$0xff]
    %v7788 = vld [vmem:[#allocation13 + $0x1f0] sm:$0xff]
    %v7789 = vld [vmem:[#allocation13 + $0x1f8] sm:$0xff]
    %v7790 = vld [vmem:[%s8] sm:$0xf]
    %v7792 = vlaneseq
    %v7793 = vshrl.u32 %v7792, 7
    %v7794 = vsub.s32 0, %v7793
    %v7795 = vrot.slane %v7790, %v7794
    %v7796 = vlaneseq
    %v7797 = vshrl.u32 %v7796, 7
    %v7798 = vsub.s32 1, %v7797
    %v7799 = vrot.slane %v7790, %v7798
    %v7800 = vlaneseq
    %v7801 = vshrl.u32 %v7800, 7
    %v7802 = vsub.s32 2, %v7801
    %v7803 = vrot.slane %v7790, %v7802
    %v7804 = vlaneseq
    %v7805 = vshrl.u32 %v7804, 7
    %v7806 = vsub.s32 3, %v7805
    %v7807 = vrot.slane %v7790, %v7806
    %v7876 = vunpack.c.l.b16 %v7726
    %v7877 = vunpack.c.h.b16 %v7726
    %v7878 = vunpack.c.l.b16 %v7727
    %v7879 = vunpack.c.h.b16 %v7727
    %v7880 = vunpack.c.l.b16 %v7728
    %v7881 = vunpack.c.h.b16 %v7728
    %v7882 = vunpack.c.l.b16 %v7729
    %v7883 = vunpack.c.h.b16 %v7729
    %v7884 = vunpack.c.l.b16 %v7730
    %v7885 = vunpack.c.h.b16 %v7730
    %v7886 = vunpack.c.l.b16 %v7731
    %v7887 = vunpack.c.h.b16 %v7731
    %v7888 = vunpack.c.l.b16 %v7732
    %v7889 = vunpack.c.h.b16 %v7732
    %v7890 = vunpack.c.l.b16 %v7733
    %v7891 = vunpack.c.h.b16 %v7733
    %v7892 = vunpack.c.l.b16 %v7734
    %v7893 = vunpack.c.h.b16 %v7734
    %v7894 = vunpack.c.l.b16 %v7735
    %v7895 = vunpack.c.h.b16 %v7735
    %v7896 = vunpack.c.l.b16 %v7736
    %v7897 = vunpack.c.h.b16 %v7736
    %v7898 = vunpack.c.l.b16 %v7737
    %v7899 = vunpack.c.h.b16 %v7737
    %v7900 = vunpack.c.l.b16 %v7738
    %v7901 = vunpack.c.h.b16 %v7738
    %v7902 = vunpack.c.l.b16 %v7739
    %v7903 = vunpack.c.h.b16 %v7739
    %v7904 = vunpack.c.l.b16 %v7740
    %v7905 = vunpack.c.h.b16 %v7740
    %v7906 = vunpack.c.l.b16 %v7741
    %v7907 = vunpack.c.h.b16 %v7741
    %v7908 = vunpack.c.l.b16 %v7742
    %v7909 = vunpack.c.h.b16 %v7742
    %v7910 = vunpack.c.l.b16 %v7743
    %v7911 = vunpack.c.h.b16 %v7743
    %v7912 = vunpack.c.l.b16 %v7744
    %v7913 = vunpack.c.h.b16 %v7744
    %v7914 = vunpack.c.l.b16 %v7745
    %v7915 = vunpack.c.h.b16 %v7745
    %v7916 = vunpack.c.l.b16 %v7746
    %v7917 = vunpack.c.h.b16 %v7746
    %v7918 = vunpack.c.l.b16 %v7747
    %v7919 = vunpack.c.h.b16 %v7747
    %v7920 = vunpack.c.l.b16 %v7748
    %v7921 = vunpack.c.h.b16 %v7748
    %v7922 = vunpack.c.l.b16 %v7749
    %v7923 = vunpack.c.h.b16 %v7749
    %v7924 = vunpack.c.l.b16 %v7750
    %v7925 = vunpack.c.h.b16 %v7750
    %v7926 = vunpack.c.l.b16 %v7751
    %v7927 = vunpack.c.h.b16 %v7751
    %v7928 = vunpack.c.l.b16 %v7752
    %v7929 = vunpack.c.h.b16 %v7752
    %v7930 = vunpack.c.l.b16 %v7753
    %v7931 = vunpack.c.h.b16 %v7753
    %v7932 = vunpack.c.l.b16 %v7754
    %v7933 = vunpack.c.h.b16 %v7754
    %v7934 = vunpack.c.l.b16 %v7755
    %v7935 = vunpack.c.h.b16 %v7755
    %v7936 = vunpack.c.l.b16 %v7756
    %v7937 = vunpack.c.h.b16 %v7756
    %v7938 = vunpack.c.l.b16 %v7757
    %v7939 = vunpack.c.h.b16 %v7757
    %v7940 = vunpack.c.l.b16 %v7758
    %v7941 = vunpack.c.h.b16 %v7758
    %v7942 = vunpack.c.l.b16 %v7759
    %v7943 = vunpack.c.h.b16 %v7759
    %v7944 = vunpack.c.l.b16 %v7760
    %v7945 = vunpack.c.h.b16 %v7760
    %v7946 = vunpack.c.l.b16 %v7761
    %v7947 = vunpack.c.h.b16 %v7761
    %v7948 = vunpack.c.l.b16 %v7762
    %v7949 = vunpack.c.h.b16 %v7762
    %v7950 = vunpack.c.l.b16 %v7763
    %v7951 = vunpack.c.h.b16 %v7763
    %v7952 = vunpack.c.l.b16 %v7764
    %v7953 = vunpack.c.h.b16 %v7764
    %v7954 = vunpack.c.l.b16 %v7765
    %v7955 = vunpack.c.h.b16 %v7765
    %v7956 = vunpack.c.l.b16 %v7766
    %v7957 = vunpack.c.h.b16 %v7766
    %v7958 = vunpack.c.l.b16 %v7767
    %v7959 = vunpack.c.h.b16 %v7767
    %v7960 = vunpack.c.l.b16 %v7768
    %v7961 = vunpack.c.h.b16 %v7768
    %v7962 = vunpack.c.l.b16 %v7769
    %v7963 = vunpack.c.h.b16 %v7769
    %v7964 = vunpack.c.l.b16 %v7770
    %v7965 = vunpack.c.h.b16 %v7770
    %v7966 = vunpack.c.l.b16 %v7771
    %v7967 = vunpack.c.h.b16 %v7771
    %v7968 = vunpack.c.l.b16 %v7772
    %v7969 = vunpack.c.h.b16 %v7772
    %v7970 = vunpack.c.l.b16 %v7773
    %v7971 = vunpack.c.h.b16 %v7773
    %v7972 = vunpack.c.l.b16 %v7774
    %v7973 = vunpack.c.h.b16 %v7774
    %v7974 = vunpack.c.l.b16 %v7775
    %v7975 = vunpack.c.h.b16 %v7775
    %v7976 = vunpack.c.l.b16 %v7776
    %v7977 = vunpack.c.h.b16 %v7776
    %v7978 = vunpack.c.l.b16 %v7777
    %v7979 = vunpack.c.h.b16 %v7777
    %v7980 = vunpack.c.l.b16 %v7778
    %v7981 = vunpack.c.h.b16 %v7778
    %v7982 = vunpack.c.l.b16 %v7779
    %v7983 = vunpack.c.h.b16 %v7779
    %v7984 = vunpack.c.l.b16 %v7780
    %v7985 = vunpack.c.h.b16 %v7780
    %v7986 = vunpack.c.l.b16 %v7781
    %v7987 = vunpack.c.h.b16 %v7781
    %v7988 = vunpack.c.l.b16 %v7782
    %v7989 = vunpack.c.h.b16 %v7782
    %v7990 = vunpack.c.l.b16 %v7783
    %v7991 = vunpack.c.h.b16 %v7783
    %v7992 = vunpack.c.l.b16 %v7784
    %v7993 = vunpack.c.h.b16 %v7784
    %v7994 = vunpack.c.l.b16 %v7785
    %v7995 = vunpack.c.h.b16 %v7785
    %v7996 = vunpack.c.l.b16 %v7786
    %v7997 = vunpack.c.h.b16 %v7786
    %v7998 = vunpack.c.l.b16 %v7787
    %v7999 = vunpack.c.h.b16 %v7787
    %v8000 = vunpack.c.l.b16 %v7788
    %v8001 = vunpack.c.h.b16 %v7788
    %v8002 = vunpack.c.l.b16 %v7789
    %v8003 = vunpack.c.h.b16 %v7789
    %v8004 = vpack.c.b16 %v7880, %v7876
    %v8005 = vpack.c.b16 %v7881, %v7877
    %v8006 = vpack.c.b16 %v7882, %v7878
    %v8007 = vpack.c.b16 %v7883, %v7879
    %v8008 = vpack.c.b16 %v7888, %v7884
    %v8009 = vpack.c.b16 %v7889, %v7885
    %v8010 = vpack.c.b16 %v7890, %v7886
    %v8011 = vpack.c.b16 %v7891, %v7887
    %v8012 = vpack.c.b16 %v7896, %v7892
    %v8013 = vpack.c.b16 %v7897, %v7893
    %v8014 = vpack.c.b16 %v7898, %v7894
    %v8015 = vpack.c.b16 %v7899, %v7895
    %v8016 = vpack.c.b16 %v7904, %v7900
    %v8017 = vpack.c.b16 %v7905, %v7901
    %v8018 = vpack.c.b16 %v7906, %v7902
    %v8019 = vpack.c.b16 %v7907, %v7903
    %v8020 = vpack.c.b16 %v7912, %v7908
    %v8021 = vpack.c.b16 %v7913, %v7909
    %v8022 = vpack.c.b16 %v7914, %v7910
    %v8023 = vpack.c.b16 %v7915, %v7911
    %v8024 = vpack.c.b16 %v7920, %v7916
    %v8025 = vpack.c.b16 %v7921, %v7917
    %v8026 = vpack.c.b16 %v7922, %v7918
    %v8027 = vpack.c.b16 %v7923, %v7919
    %v8028 = vpack.c.b16 %v7928, %v7924
    %v8029 = vpack.c.b16 %v7929, %v7925
    %v8030 = vpack.c.b16 %v7930, %v7926
    %v8031 = vpack.c.b16 %v7931, %v7927
    %v8032 = vpack.c.b16 %v7936, %v7932
    %v8033 = vpack.c.b16 %v7937, %v7933
    %v8034 = vpack.c.b16 %v7938, %v7934
    %v8035 = vpack.c.b16 %v7939, %v7935
    %v8036 = vpack.c.b16 %v7944, %v7940
    %v8037 = vpack.c.b16 %v7945, %v7941
    %v8038 = vpack.c.b16 %v7946, %v7942
    %v8039 = vpack.c.b16 %v7947, %v7943
    %v8040 = vpack.c.b16 %v7952, %v7948
    %v8041 = vpack.c.b16 %v7953, %v7949
    %v8042 = vpack.c.b16 %v7954, %v7950
    %v8043 = vpack.c.b16 %v7955, %v7951
    %v8044 = vpack.c.b16 %v7960, %v7956
    %v8045 = vpack.c.b16 %v7961, %v7957
    %v8046 = vpack.c.b16 %v7962, %v7958
    %v8047 = vpack.c.b16 %v7963, %v7959
    %v8048 = vpack.c.b16 %v7968, %v7964
    %v8049 = vpack.c.b16 %v7969, %v7965
    %v8050 = vpack.c.b16 %v7970, %v7966
    %v8051 = vpack.c.b16 %v7971, %v7967
    %v8052 = vpack.c.b16 %v7976, %v7972
    %v8053 = vpack.c.b16 %v7977, %v7973
    %v8054 = vpack.c.b16 %v7978, %v7974
    %v8055 = vpack.c.b16 %v7979, %v7975
    %v8056 = vpack.c.b16 %v7984, %v7980
    %v8057 = vpack.c.b16 %v7985, %v7981
    %v8058 = vpack.c.b16 %v7986, %v7982
    %v8059 = vpack.c.b16 %v7987, %v7983
    %v8060 = vpack.c.b16 %v7992, %v7988
    %v8061 = vpack.c.b16 %v7993, %v7989
    %v8062 = vpack.c.b16 %v7994, %v7990
    %v8063 = vpack.c.b16 %v7995, %v7991
    %v8064 = vpack.c.b16 %v8000, %v7996
    %v8065 = vpack.c.b16 %v8001, %v7997
    %v8066 = vpack.c.b16 %v8002, %v7998
    %v8067 = vpack.c.b16 %v8003, %v7999
    %8132 = vmatprep.subr.bf16.mxu0 %v8033
    %8133 = vmatpush1.bf16.msra.mxu0 %v8032
    %8134 = vmatprep.subr.bf16.mxu0 %v8029
    %8135 = vmatpush1.bf16.msra.mxu0 %v8028
    %8136 = vmatprep.subr.bf16.mxu0 %v8025
    %8137 = vmatpush1.bf16.msra.mxu0 %v8024
    %8138 = vmatprep.subr.bf16.mxu0 %v8021
    %8139 = vmatpush1.bf16.msra.mxu0 %v8020
    %8140 = vmatprep.subr.bf16.mxu0 %v8017
    %8141 = vmatpush1.bf16.msra.mxu0 %v8016
    %8142 = vmatprep.subr.bf16.mxu0 %v8013
    %8143 = vmatpush1.bf16.msra.mxu0 %v8012
    %8144 = vmatprep.subr.bf16.mxu0 %v8009
    %8145 = vmatpush1.bf16.msra.mxu0 %v8008
    %8146 = vmatprep.subr.bf16.mxu0 %v8005
    %8147 = vmatpush1.bf16.msra.mxu0 %v8004
    %8148 = vmatprep.subr.bf16.mxu0 %v8065
    %8149 = vmatpush2.bf16.msra.mxu0 %v8064
    %8150 = vmatprep.subr.bf16.mxu0 %v8061
    %8151 = vmatpush2.bf16.msra.mxu0 %v8060
    %8152 = vmatprep.subr.bf16.mxu0 %v8057
    %8153 = vmatpush2.bf16.msra.mxu0 %v8056
    %8154 = vmatprep.subr.bf16.mxu0 %v8053
    %8155 = vmatpush2.bf16.msra.mxu0 %v8052
    %8156 = vmatprep.subr.bf16.mxu0 %v8049
    %8157 = vmatpush2.bf16.msra.mxu0 %v8048
    %8158 = vmatprep.subr.bf16.mxu0 %v8045
    %8159 = vmatpush2.bf16.msra.mxu0 %v8044
    %8160 = vmatprep.subr.bf16.mxu0 %v8041
    %8161 = vmatpush2.bf16.msra.mxu0 %v8040
    %8162 = vmatprep.subr.bf16.mxu0 %v8037
    %8163 = vmatpush2.bf16.msra.mxu0 %v8036
    %8164 = vmatprep.mubr.bf16.mxu0 %v7725
    %8165 = vmatmul.mubr.bf16.gmra.mxu0 %v7724
    %v8166 = vpop.f32.mrf.mxu0
    %v8167 = vadd.f32 %v7795, %v8166
    %v8168 = vpop.f32.mrf.mxu0
    %v8169 = vadd.f32 %v7799, %v8168
    %v8170 = vpop.f32.mrf.mxu0
    %v8171 = vpop.f32.mrf.mxu0
    %8172 = vdwg.mxu0
    %8173 = vmatprep.subr.bf16.mxu0 %v8035
    %8174 = vmatpush1.bf16.msra.mxu0 %v8034
    %8175 = vmatprep.subr.bf16.mxu0 %v8031
    %8176 = vmatpush1.bf16.msra.mxu0 %v8030
    %8177 = vmatprep.subr.bf16.mxu0 %v8027
    %8178 = vmatpush1.bf16.msra.mxu0 %v8026
    %8179 = vmatprep.subr.bf16.mxu0 %v8023
    %8180 = vmatpush1.bf16.msra.mxu0 %v8022
    %8181 = vmatprep.subr.bf16.mxu0 %v8019
    %8182 = vmatpush1.bf16.msra.mxu0 %v8018
    %8183 = vmatprep.subr.bf16.mxu0 %v8015
    %8184 = vmatpush1.bf16.msra.mxu0 %v8014
    %8185 = vmatprep.subr.bf16.mxu0 %v8011
    %8186 = vmatpush1.bf16.msra.mxu0 %v8010
    %8187 = vmatprep.subr.bf16.mxu0 %v8007
    %8188 = vmatpush1.bf16.msra.mxu0 %v8006
    %8189 = vmatprep.subr.bf16.mxu0 %v8067
    %8190 = vmatpush2.bf16.msra.mxu0 %v8066
    %8191 = vmatprep.subr.bf16.mxu0 %v8063
    %8192 = vmatpush2.bf16.msra.mxu0 %v8062
    %8193 = vmatprep.subr.bf16.mxu0 %v8059
    %8194 = vmatpush2.bf16.msra.mxu0 %v8058
    %8195 = vmatprep.subr.bf16.mxu0 %v8055
    %8196 = vmatpush2.bf16.msra.mxu0 %v8054
    %8197 = vmatprep.subr.bf16.mxu0 %v8051
    %8198 = vmatpush2.bf16.msra.mxu0 %v8050
    %8199 = vmatprep.subr.bf16.mxu0 %v8047
    %8200 = vmatpush2.bf16.msra.mxu0 %v8046
    %8201 = vmatprep.subr.bf16.mxu0 %v8043
    %8202 = vmatpush2.bf16.msra.mxu0 %v8042
    %8203 = vmatprep.subr.bf16.mxu0 %v8039
    %8204 = vmatpush2.bf16.msra.mxu0 %v8038
    %8205 = vmatprep.mubr.bf16.mxu0 %v7725
    %8206 = vmatmul.mubr.bf16.gmra.mxu0 %v7724
    %v8207 = vpop.f32.mrf.mxu0
    %v8208 = vadd.f32 %v7803, %v8207
    %v8209 = vpop.f32.mrf.mxu0
    %v8210 = vadd.f32 %v7807, %v8209
    %v8211 = vpop.f32.mrf.mxu0
    %v8212 = vpop.f32.mrf.mxu0
    %8213 = vdwg.mxu0
    %v8214 = vxor.u32 %v8167, 2147483648
    %v8215 = vmul.f32 %v8214, 1.442695
    %v8216 = vpow.pop %v8215
    %v8217 = vadd.f32 %v8216, 1.0
    %v8218 = vrcp.pop %v8217
    %v8219 = vmul.f32 1.0, %v8218
    %v8220 = vxor.u32 %v8169, 2147483648
    %v8221 = vmul.f32 %v8220, 1.442695
    %v8222 = vpow.pop %v8221
    %v8223 = vadd.f32 %v8222, 1.0
    %v8224 = vrcp.pop %v8223
    %v8225 = vmul.f32 1.0, %v8224
    %v8226 = vtanh.pop %v8208
    %v8227 = vxor.u32 %v8210, 2147483648
    %v8228 = vmul.f32 %v8227, 1.442695
    %v8229 = vpow.pop %v8228
    %v8230 = vadd.f32 %v8229, 1.0
    %v8231 = vrcp.pop %v8230
    %v8232 = vmul.f32 1.0, %v8231
    %v8233 = vld [vmem:[#allocation3] sm:$0xff]
    %v8234 = vmul.f32 %v8225, %v8233
    %v8235 = vmul.f32 %v8219, %v8226
    %v8236 = vadd.f32 %v8234, %v8235
    %v8237 = vtanh.pop %v8236
    %v8238 = vmul.f32 %v8232, %v8237
    %8239 = vst [vmem:[#allocation3] sm:$0xff] %v8236
    %8240 = vst [vmem:[#allocation2 + $0x8] sm:$0xff] %v8238
    %v8241 = vpack.c.bf16 %v8238, %v8238
    %v8242 = vld [vmem:[#allocation15] sm:$0xf]
    %v8243 = vld [vmem:[#allocation15 + $0x4] sm:$0xf]
    %v8244 = vld [vmem:[#allocation15 + $0x8] sm:$0xf]
    %v8245 = vld [vmem:[#allocation15 + $0xc] sm:$0xf]
    %v8246 = vld [vmem:[#allocation15 + $0x10] sm:$0xf]
    %v8247 = vld [vmem:[#allocation15 + $0x14] sm:$0xf]
    %v8248 = vld [vmem:[#allocation15 + $0x18] sm:$0xf]
    %v8249 = vld [vmem:[#allocation15 + $0x1c] sm:$0xf]
    %v8250 = vld [vmem:[#allocation15 + $0x20] sm:$0xf]
    %v8251 = vld [vmem:[#allocation15 + $0x24] sm:$0xf]
    %v8252 = vld [vmem:[#allocation15 + $0x28] sm:$0xf]
    %v8253 = vld [vmem:[#allocation15 + $0x2c] sm:$0xf]
    %v8254 = vld [vmem:[#allocation15 + $0x30] sm:$0xf]
    %v8255 = vld [vmem:[#allocation15 + $0x34] sm:$0xf]
    %v8256 = vld [vmem:[#allocation15 + $0x38] sm:$0xf]
    %v8257 = vld [vmem:[#allocation15 + $0x3c] sm:$0xf]
    %v8258 = vld [vmem:[%s10] sm:$0x1]
    %v8260 = vlaneseq
    %v8261 = vshrl.u32 %v8260, 7
    %v8262 = vsub.s32 0, %v8261
    %v8263 = vrot.slane %v8258, %v8262
    %v8281 = vunpack.c.l.b16 %v8242
    %v8282 = vunpack.c.l.b16 %v8243
    %v8283 = vunpack.c.l.b16 %v8244
    %v8284 = vunpack.c.l.b16 %v8245
    %v8285 = vunpack.c.l.b16 %v8246
    %v8286 = vunpack.c.l.b16 %v8247
    %v8287 = vunpack.c.l.b16 %v8248
    %v8288 = vunpack.c.l.b16 %v8249
    %v8289 = vunpack.c.l.b16 %v8250
    %v8290 = vunpack.c.l.b16 %v8251
    %v8291 = vunpack.c.l.b16 %v8252
    %v8292 = vunpack.c.l.b16 %v8253
    %v8293 = vunpack.c.l.b16 %v8254
    %v8294 = vunpack.c.l.b16 %v8255
    %v8295 = vunpack.c.l.b16 %v8256
    %v8296 = vunpack.c.l.b16 %v8257
    %v8297 = vpack.c.b16 %v8282, %v8281
    %v8298 = vpack.c.b16 %v8284, %v8283
    %v8299 = vpack.c.b16 %v8286, %v8285
    %v8300 = vpack.c.b16 %v8288, %v8287
    %v8301 = vpack.c.b16 %v8290, %v8289
    %v8302 = vpack.c.b16 %v8292, %v8291
    %v8303 = vpack.c.b16 %v8294, %v8293
    %v8304 = vpack.c.b16 %v8296, %v8295
    %8313 = vmatprep.subr.bf16.mxu0 0
    %8314 = vmatpush1.bf16.msra.mxu0 %v8304
    %8315 = vmatprep.subr.bf16.mxu0 0
    %8316 = vmatpush1.bf16.msra.mxu0 %v8303
    %8317 = vmatprep.subr.bf16.mxu0 0
    %8318 = vmatpush1.bf16.msra.mxu0 %v8302
    %8319 = vmatprep.subr.bf16.mxu0 0
    %8320 = vmatpush1.bf16.msra.mxu0 %v8301
    %8321 = vmatprep.subr.bf16.mxu0 0
    %8322 = vmatpush1.bf16.msra.mxu0 %v8300
    %8323 = vmatprep.subr.bf16.mxu0 0
    %8324 = vmatpush1.bf16.msra.mxu0 %v8299
    %8325 = vmatprep.subr.bf16.mxu0 0
    %8326 = vmatpush1.bf16.msra.mxu0 %v8298
    %8327 = vmatprep.subr.bf16.mxu0 0
    %8328 = vmatpush1.bf16.msra.mxu0 %v8297
    %8329 = vmatprep.subr.bf16.mxu0 0
    %8330 = vmatpush2.bf16.msra.mxu0 0
    %8331 = vmatprep.subr.bf16.mxu0 0
    %8332 = vmatpush2.bf16.msra.mxu0 0
    %8333 = vmatprep.subr.bf16.mxu0 0
    %8334 = vmatpush2.bf16.msra.mxu0 0
    %8335 = vmatprep.subr.bf16.mxu0 0
    %8336 = vmatpush2.bf16.msra.mxu0 0
    %8337 = vmatprep.subr.bf16.mxu0 0
    %8338 = vmatpush2.bf16.msra.mxu0 0
    %8339 = vmatprep.subr.bf16.mxu0 0
    %8340 = vmatpush2.bf16.msra.mxu0 0
    %8341 = vmatprep.subr.bf16.mxu0 0
    %8342 = vmatpush2.bf16.msra.mxu0 0
    %8343 = vmatprep.subr.bf16.mxu0 0
    %8344 = vmatpush2.bf16.msra.mxu0 0
    %8345 = vmatprep.mubr.bf16.mxu0 0
    %8346 = vmatmul.mubr.bf16.gmra.mxu0 %v8241
    %v8347 = vpop.f32.mrf.mxu0
    %v8348 = vadd.f32 %v8263, %v8347
    %v8349 = vpop.f32.mrf.mxu0
    %v8350 = vpop.f32.mrf.mxu0
    %v8351 = vpop.f32.mrf.mxu0
    %8352 = vdwg.mxu0
    %s8353 = scalar_lea.vmem %s11, 32
    %8354 = vst [vmem:[%s8353] sm:$0xff] %v8348
    %8355 = vmax.xlane.f32.xlu0 %v8348
    %v8356 = vpop.xlane.xlu0 %8355
    %vm8357 = vcmp.eq.f32.partialorder %v8348, %v8356
    %v8358 = vsel %vm8357, %v121, 128
    %v8359 = vand.u32 %v8358, 65535
    %v8360 = vshra.s32 %v8358, 16
    %v8361 = vcvt.s32.f32 %v8359
    %v8362 = vcvt.s32.f32 %v8360
    %8363 = vmin.xlane.f32.xlu0 %v8362
    %v8364 = vpop.xlane.xlu0 %8363
    %vm8365 = vcmp.eq.f32.partialorder %v8362, %v8364
    %v8366 = vsel %vm8365, %v8361, inf
    %8367 = vmin.xlane.f32.xlu0 %v8366
    %v8368 = vpop.xlane.xlu0 %8367
    %v8369 = vcvt.f32.s32 %v8368
    %v8370 = vcvt.f32.s32 %v8364
    %v8371 = vshll.u32 %v8370, 16
    %v8372 = vadd.s32 %v8371, %v8369
    %vm8373 = vcmp.eq.s32.totalorder %v121, %v8372
    %v8374 = vsel %vm8373, 1, 0
    %v8375 = vcvt.s32.f32 %v8374
    %s8376 = sld [smem:[#allocation6 + $0x10]]
    %v8377 = vstv %s8376
    %v8378 = vsel %vm122, %v8377, 4294967295
    %s8379 = sld [smem:[#allocation6 + $0x11]]
    %v8380 = vstv %s8379
    %v8381 = vsel %vm126, %v8380, %v8378
    %s8382 = sld [smem:[#allocation6 + $0x12]]
    %v8383 = vstv %s8382
    %v8384 = vsel %vm130, %v8383, %v8381
    %s8385 = sld [smem:[#allocation6 + $0x13]]
    %v8386 = vstv %s8385
    %v8387 = vsel %vm134, %v8386, %v8384
    %vm8388 = vcmp.eq.s32.totalorder %v121, %v8387
    %v8389 = vsel %vm8388, 1, 0
    %v8390 = vcvt.s32.f32 %v8389
    %s8391 = sld [smem:[#allocation7 + $0x3]]
    %p8392 = scmp.ne.s32.totalorder %s8391, 0
    %s8393 = scalar_select %p8392, 1, 0
    %s8394 = scvt.s32.f32 %s8393
    %v8395 = vstv %s8394
    %v8396 = vmul.f32 %v8395, %v8390
    %s8397 = ssub.f32 1.0, %s8394
    %v8398 = vstv %s8397
    %v8399 = vmul.f32 %v8398, %v8375
    %v8400 = vadd.f32 %v8396, %v8399
    %v8401 = vpack.c.bf16 %v8400, %v8400
    %v8402 = vld [vmem:[#allocation12] sm:$0xf]
    %v8403 = vld [vmem:[#allocation12 + $0x4] sm:$0xf]
    %v8404 = vld [vmem:[#allocation12 + $0x8] sm:$0xf]
    %v8405 = vld [vmem:[#allocation12 + $0xc] sm:$0xf]
    %v8406 = vld [vmem:[#allocation12 + $0x10] sm:$0xf]
    %v8407 = vld [vmem:[#allocation12 + $0x14] sm:$0xf]
    %v8408 = vld [vmem:[#allocation12 + $0x18] sm:$0xf]
    %v8409 = vld [vmem:[#allocation12 + $0x1c] sm:$0xf]
    %v8410 = vld [vmem:[#allocation12 + $0x20] sm:$0xf]
    %v8411 = vld [vmem:[#allocation12 + $0x24] sm:$0xf]
    %v8412 = vld [vmem:[#allocation12 + $0x28] sm:$0xf]
    %v8413 = vld [vmem:[#allocation12 + $0x2c] sm:$0xf]
    %v8414 = vld [vmem:[#allocation12 + $0x30] sm:$0xf]
    %v8415 = vld [vmem:[#allocation12 + $0x34] sm:$0xf]
    %v8416 = vld [vmem:[#allocation12 + $0x38] sm:$0xf]
    %v8417 = vld [vmem:[#allocation12 + $0x3c] sm:$0xf]
    %v8434 = vunpack.c.l.b16 %v8402
    %v8435 = vunpack.c.l.b16 %v8403
    %v8436 = vunpack.c.l.b16 %v8404
    %v8437 = vunpack.c.l.b16 %v8405
    %v8438 = vunpack.c.l.b16 %v8406
    %v8439 = vunpack.c.l.b16 %v8407
    %v8440 = vunpack.c.l.b16 %v8408
    %v8441 = vunpack.c.l.b16 %v8409
    %v8442 = vunpack.c.l.b16 %v8410
    %v8443 = vunpack.c.l.b16 %v8411
    %v8444 = vunpack.c.l.b16 %v8412
    %v8445 = vunpack.c.l.b16 %v8413
    %v8446 = vunpack.c.l.b16 %v8414
    %v8447 = vunpack.c.l.b16 %v8415
    %v8448 = vunpack.c.l.b16 %v8416
    %v8449 = vunpack.c.l.b16 %v8417
    %v8450 = vpack.c.b16 %v8435, %v8434
    %v8451 = vpack.c.b16 %v8437, %v8436
    %v8452 = vpack.c.b16 %v8439, %v8438
    %v8453 = vpack.c.b16 %v8441, %v8440
    %v8454 = vpack.c.b16 %v8443, %v8442
    %v8455 = vpack.c.b16 %v8445, %v8444
    %v8456 = vpack.c.b16 %v8447, %v8446
    %v8457 = vpack.c.b16 %v8449, %v8448
    %8466 = vmatprep.subr.bf16.mxu0 0
    %8467 = vmatpush1.bf16.msra.mxu0 %v8457
    %8468 = vmatprep.subr.bf16.mxu0 0
    %8469 = vmatpush1.bf16.msra.mxu0 %v8456
    %8470 = vmatprep.subr.bf16.mxu0 0
    %8471 = vmatpush1.bf16.msra.mxu0 %v8455
    %8472 = vmatprep.subr.bf16.mxu0 0
    %8473 = vmatpush1.bf16.msra.mxu0 %v8454
    %8474 = vmatprep.subr.bf16.mxu0 0
    %8475 = vmatpush1.bf16.msra.mxu0 %v8453
    %8476 = vmatprep.subr.bf16.mxu0 0
    %8477 = vmatpush1.bf16.msra.mxu0 %v8452
    %8478 = vmatprep.subr.bf16.mxu0 0
    %8479 = vmatpush1.bf16.msra.mxu0 %v8451
    %8480 = vmatprep.subr.bf16.mxu0 0
    %8481 = vmatpush1.bf16.msra.mxu0 %v8450
    %8482 = vmatprep.subr.bf16.mxu0 0
    %8483 = vmatpush2.bf16.msra.mxu0 0
    %8484 = vmatprep.subr.bf16.mxu0 0
    %8485 = vmatpush2.bf16.msra.mxu0 0
    %8486 = vmatprep.subr.bf16.mxu0 0
    %8487 = vmatpush2.bf16.msra.mxu0 0
    %8488 = vmatprep.subr.bf16.mxu0 0
    %8489 = vmatpush2.bf16.msra.mxu0 0
    %8490 = vmatprep.subr.bf16.mxu0 0
    %8491 = vmatpush2.bf16.msra.mxu0 0
    %8492 = vmatprep.subr.bf16.mxu0 0
    %8493 = vmatpush2.bf16.msra.mxu0 0
    %8494 = vmatprep.subr.bf16.mxu0 0
    %8495 = vmatpush2.bf16.msra.mxu0 0
    %8496 = vmatprep.subr.bf16.mxu0 0
    %8497 = vmatpush2.bf16.msra.mxu0 0
    %8498 = vmatprep.mubr.bf16.mxu0 0
    %8499 = vmatmul.mubr.bf16.gmra.mxu0 %v8401
    %v8500 = vpop.f32.mrf.mxu0
    %v8501 = vadd.f32 0.0, %v8500
    %v8502 = vpop.f32.mrf.mxu0
    %v8503 = vpop.f32.mrf.mxu0
    %v8504 = vpop.f32.mrf.mxu0
    %8505 = vdwg.mxu0
    %8506 = vst [vmem:[#allocation2] sm:$0xff] %v8501
    %v8507 = vld [vmem:[#allocation2] sm:$0xff]
    %v8508 = vld [vmem:[#allocation2 + $0x8] sm:$0xff]
    %v8509 = vpack.c.bf16 %v8507, %v8507
    %v8510 = vpack.c.bf16 %v8508, %v8508
    %v8511 = vld [vmem:[#allocation13] sm:$0xff]
    %v8512 = vld [vmem:[#allocation13 + $0x8] sm:$0xff]
    %v8513 = vld [vmem:[#allocation13 + $0x10] sm:$0xff]
    %v8514 = vld [vmem:[#allocation13 + $0x18] sm:$0xff]
    %v8515 = vld [vmem:[#allocation13 + $0x20] sm:$0xff]
    %v8516 = vld [vmem:[#allocation13 + $0x28] sm:$0xff]
    %v8517 = vld [vmem:[#allocation13 + $0x30] sm:$0xff]
    %v8518 = vld [vmem:[#allocation13 + $0x38] sm:$0xff]
    %v8519 = vld [vmem:[#allocation13 + $0x40] sm:$0xff]
    %v8520 = vld [vmem:[#allocation13 + $0x48] sm:$0xff]
    %v8521 = vld [vmem:[#allocation13 + $0x50] sm:$0xff]
    %v8522 = vld [vmem:[#allocation13 + $0x58] sm:$0xff]
    %v8523 = vld [vmem:[#allocation13 + $0x60] sm:$0xff]
    %v8524 = vld [vmem:[#allocation13 + $0x68] sm:$0xff]
    %v8525 = vld [vmem:[#allocation13 + $0x70] sm:$0xff]
    %v8526 = vld [vmem:[#allocation13 + $0x78] sm:$0xff]
    %v8527 = vld [vmem:[#allocation13 + $0x80] sm:$0xff]
    %v8528 = vld [vmem:[#allocation13 + $0x88] sm:$0xff]
    %v8529 = vld [vmem:[#allocation13 + $0x90] sm:$0xff]
    %v8530 = vld [vmem:[#allocation13 + $0x98] sm:$0xff]
    %v8531 = vld [vmem:[#allocation13 + $0xa0] sm:$0xff]
    %v8532 = vld [vmem:[#allocation13 + $0xa8] sm:$0xff]
    %v8533 = vld [vmem:[#allocation13 + $0xb0] sm:$0xff]
    %v8534 = vld [vmem:[#allocation13 + $0xb8] sm:$0xff]
    %v8535 = vld [vmem:[#allocation13 + $0xc0] sm:$0xff]
    %v8536 = vld [vmem:[#allocation13 + $0xc8] sm:$0xff]
    %v8537 = vld [vmem:[#allocation13 + $0xd0] sm:$0xff]
    %v8538 = vld [vmem:[#allocation13 + $0xd8] sm:$0xff]
    %v8539 = vld [vmem:[#allocation13 + $0xe0] sm:$0xff]
    %v8540 = vld [vmem:[#allocation13 + $0xe8] sm:$0xff]
    %v8541 = vld [vmem:[#allocation13 + $0xf0] sm:$0xff]
    %v8542 = vld [vmem:[#allocation13 + $0xf8] sm:$0xff]
    %v8543 = vld [vmem:[#allocation13 + $0x100] sm:$0xff]
    %v8544 = vld [vmem:[#allocation13 + $0x108] sm:$0xff]
    %v8545 = vld [vmem:[#allocation13 + $0x110] sm:$0xff]
    %v8546 = vld [vmem:[#allocation13 + $0x118] sm:$0xff]
    %v8547 = vld [vmem:[#allocation13 + $0x120] sm:$0xff]
    %v8548 = vld [vmem:[#allocation13 + $0x128] sm:$0xff]
    %v8549 = vld [vmem:[#allocation13 + $0x130] sm:$0xff]
    %v8550 = vld [vmem:[#allocation13 + $0x138] sm:$0xff]
    %v8551 = vld [vmem:[#allocation13 + $0x140] sm:$0xff]
    %v8552 = vld [vmem:[#allocation13 + $0x148] sm:$0xff]
    %v8553 = vld [vmem:[#allocation13 + $0x150] sm:$0xff]
    %v8554 = vld [vmem:[#allocation13 + $0x158] sm:$0xff]
    %v8555 = vld [vmem:[#allocation13 + $0x160] sm:$0xff]
    %v8556 = vld [vmem:[#allocation13 + $0x168] sm:$0xff]
    %v8557 = vld [vmem:[#allocation13 + $0x170] sm:$0xff]
    %v8558 = vld [vmem:[#allocation13 + $0x178] sm:$0xff]
    %v8559 = vld [vmem:[#allocation13 + $0x180] sm:$0xff]
    %v8560 = vld [vmem:[#allocation13 + $0x188] sm:$0xff]
    %v8561 = vld [vmem:[#allocation13 + $0x190] sm:$0xff]
    %v8562 = vld [vmem:[#allocation13 + $0x198] sm:$0xff]
    %v8563 = vld [vmem:[#allocation13 + $0x1a0] sm:$0xff]
    %v8564 = vld [vmem:[#allocation13 + $0x1a8] sm:$0xff]
    %v8565 = vld [vmem:[#allocation13 + $0x1b0] sm:$0xff]
    %v8566 = vld [vmem:[#allocation13 + $0x1b8] sm:$0xff]
    %v8567 = vld [vmem:[#allocation13 + $0x1c0] sm:$0xff]
    %v8568 = vld [vmem:[#allocation13 + $0x1c8] sm:$0xff]
    %v8569 = vld [vmem:[#allocation13 + $0x1d0] sm:$0xff]
    %v8570 = vld [vmem:[#allocation13 + $0x1d8] sm:$0xff]
    %v8571 = vld [vmem:[#allocation13 + $0x1e0] sm:$0xff]
    %v8572 = vld [vmem:[#allocation13 + $0x1e8] sm:$0xff]
    %v8573 = vld [vmem:[#allocation13 + $0x1f0] sm:$0xff]
    %v8574 = vld [vmem:[#allocation13 + $0x1f8] sm:$0xff]
    %v8575 = vld [vmem:[%s8] sm:$0xf]
    %v8577 = vlaneseq
    %v8578 = vshrl.u32 %v8577, 7
    %v8579 = vsub.s32 0, %v8578
    %v8580 = vrot.slane %v8575, %v8579
    %v8581 = vlaneseq
    %v8582 = vshrl.u32 %v8581, 7
    %v8583 = vsub.s32 1, %v8582
    %v8584 = vrot.slane %v8575, %v8583
    %v8585 = vlaneseq
    %v8586 = vshrl.u32 %v8585, 7
    %v8587 = vsub.s32 2, %v8586
    %v8588 = vrot.slane %v8575, %v8587
    %v8589 = vlaneseq
    %v8590 = vshrl.u32 %v8589, 7
    %v8591 = vsub.s32 3, %v8590
    %v8592 = vrot.slane %v8575, %v8591
    %v8661 = vunpack.c.l.b16 %v8511
    %v8662 = vunpack.c.h.b16 %v8511
    %v8663 = vunpack.c.l.b16 %v8512
    %v8664 = vunpack.c.h.b16 %v8512
    %v8665 = vunpack.c.l.b16 %v8513
    %v8666 = vunpack.c.h.b16 %v8513
    %v8667 = vunpack.c.l.b16 %v8514
    %v8668 = vunpack.c.h.b16 %v8514
    %v8669 = vunpack.c.l.b16 %v8515
    %v8670 = vunpack.c.h.b16 %v8515
    %v8671 = vunpack.c.l.b16 %v8516
    %v8672 = vunpack.c.h.b16 %v8516
    %v8673 = vunpack.c.l.b16 %v8517
    %v8674 = vunpack.c.h.b16 %v8517
    %v8675 = vunpack.c.l.b16 %v8518
    %v8676 = vunpack.c.h.b16 %v8518
    %v8677 = vunpack.c.l.b16 %v8519
    %v8678 = vunpack.c.h.b16 %v8519
    %v8679 = vunpack.c.l.b16 %v8520
    %v8680 = vunpack.c.h.b16 %v8520
    %v8681 = vunpack.c.l.b16 %v8521
    %v8682 = vunpack.c.h.b16 %v8521
    %v8683 = vunpack.c.l.b16 %v8522
    %v8684 = vunpack.c.h.b16 %v8522
    %v8685 = vunpack.c.l.b16 %v8523
    %v8686 = vunpack.c.h.b16 %v8523
    %v8687 = vunpack.c.l.b16 %v8524
    %v8688 = vunpack.c.h.b16 %v8524
    %v8689 = vunpack.c.l.b16 %v8525
    %v8690 = vunpack.c.h.b16 %v8525
    %v8691 = vunpack.c.l.b16 %v8526
    %v8692 = vunpack.c.h.b16 %v8526
    %v8693 = vunpack.c.l.b16 %v8527
    %v8694 = vunpack.c.h.b16 %v8527
    %v8695 = vunpack.c.l.b16 %v8528
    %v8696 = vunpack.c.h.b16 %v8528
    %v8697 = vunpack.c.l.b16 %v8529
    %v8698 = vunpack.c.h.b16 %v8529
    %v8699 = vunpack.c.l.b16 %v8530
    %v8700 = vunpack.c.h.b16 %v8530
    %v8701 = vunpack.c.l.b16 %v8531
    %v8702 = vunpack.c.h.b16 %v8531
    %v8703 = vunpack.c.l.b16 %v8532
    %v8704 = vunpack.c.h.b16 %v8532
    %v8705 = vunpack.c.l.b16 %v8533
    %v8706 = vunpack.c.h.b16 %v8533
    %v8707 = vunpack.c.l.b16 %v8534
    %v8708 = vunpack.c.h.b16 %v8534
    %v8709 = vunpack.c.l.b16 %v8535
    %v8710 = vunpack.c.h.b16 %v8535
    %v8711 = vunpack.c.l.b16 %v8536
    %v8712 = vunpack.c.h.b16 %v8536
    %v8713 = vunpack.c.l.b16 %v8537
    %v8714 = vunpack.c.h.b16 %v8537
    %v8715 = vunpack.c.l.b16 %v8538
    %v8716 = vunpack.c.h.b16 %v8538
    %v8717 = vunpack.c.l.b16 %v8539
    %v8718 = vunpack.c.h.b16 %v8539
    %v8719 = vunpack.c.l.b16 %v8540
    %v8720 = vunpack.c.h.b16 %v8540
    %v8721 = vunpack.c.l.b16 %v8541
    %v8722 = vunpack.c.h.b16 %v8541
    %v8723 = vunpack.c.l.b16 %v8542
    %v8724 = vunpack.c.h.b16 %v8542
    %v8725 = vunpack.c.l.b16 %v8543
    %v8726 = vunpack.c.h.b16 %v8543
    %v8727 = vunpack.c.l.b16 %v8544
    %v8728 = vunpack.c.h.b16 %v8544
    %v8729 = vunpack.c.l.b16 %v8545
    %v8730 = vunpack.c.h.b16 %v8545
    %v8731 = vunpack.c.l.b16 %v8546
    %v8732 = vunpack.c.h.b16 %v8546
    %v8733 = vunpack.c.l.b16 %v8547
    %v8734 = vunpack.c.h.b16 %v8547
    %v8735 = vunpack.c.l.b16 %v8548
    %v8736 = vunpack.c.h.b16 %v8548
    %v8737 = vunpack.c.l.b16 %v8549
    %v8738 = vunpack.c.h.b16 %v8549
    %v8739 = vunpack.c.l.b16 %v8550
    %v8740 = vunpack.c.h.b16 %v8550
    %v8741 = vunpack.c.l.b16 %v8551
    %v8742 = vunpack.c.h.b16 %v8551
    %v8743 = vunpack.c.l.b16 %v8552
    %v8744 = vunpack.c.h.b16 %v8552
    %v8745 = vunpack.c.l.b16 %v8553
    %v8746 = vunpack.c.h.b16 %v8553
    %v8747 = vunpack.c.l.b16 %v8554
    %v8748 = vunpack.c.h.b16 %v8554
    %v8749 = vunpack.c.l.b16 %v8555
    %v8750 = vunpack.c.h.b16 %v8555
    %v8751 = vunpack.c.l.b16 %v8556
    %v8752 = vunpack.c.h.b16 %v8556
    %v8753 = vunpack.c.l.b16 %v8557
    %v8754 = vunpack.c.h.b16 %v8557
    %v8755 = vunpack.c.l.b16 %v8558
    %v8756 = vunpack.c.h.b16 %v8558
    %v8757 = vunpack.c.l.b16 %v8559
    %v8758 = vunpack.c.h.b16 %v8559
    %v8759 = vunpack.c.l.b16 %v8560
    %v8760 = vunpack.c.h.b16 %v8560
    %v8761 = vunpack.c.l.b16 %v8561
    %v8762 = vunpack.c.h.b16 %v8561
    %v8763 = vunpack.c.l.b16 %v8562
    %v8764 = vunpack.c.h.b16 %v8562
    %v8765 = vunpack.c.l.b16 %v8563
    %v8766 = vunpack.c.h.b16 %v8563
    %v8767 = vunpack.c.l.b16 %v8564
    %v8768 = vunpack.c.h.b16 %v8564
    %v8769 = vunpack.c.l.b16 %v8565
    %v8770 = vunpack.c.h.b16 %v8565
    %v8771 = vunpack.c.l.b16 %v8566
    %v8772 = vunpack.c.h.b16 %v8566
    %v8773 = vunpack.c.l.b16 %v8567
    %v8774 = vunpack.c.h.b16 %v8567
    %v8775 = vunpack.c.l.b16 %v8568
    %v8776 = vunpack.c.h.b16 %v8568
    %v8777 = vunpack.c.l.b16 %v8569
    %v8778 = vunpack.c.h.b16 %v8569
    %v8779 = vunpack.c.l.b16 %v8570
    %v8780 = vunpack.c.h.b16 %v8570
    %v8781 = vunpack.c.l.b16 %v8571
    %v8782 = vunpack.c.h.b16 %v8571
    %v8783 = vunpack.c.l.b16 %v8572
    %v8784 = vunpack.c.h.b16 %v8572
    %v8785 = vunpack.c.l.b16 %v8573
    %v8786 = vunpack.c.h.b16 %v8573
    %v8787 = vunpack.c.l.b16 %v8574
    %v8788 = vunpack.c.h.b16 %v8574
    %v8789 = vpack.c.b16 %v8665, %v8661
    %v8790 = vpack.c.b16 %v8666, %v8662
    %v8791 = vpack.c.b16 %v8667, %v8663
    %v8792 = vpack.c.b16 %v8668, %v8664
    %v8793 = vpack.c.b16 %v8673, %v8669
    %v8794 = vpack.c.b16 %v8674, %v8670
    %v8795 = vpack.c.b16 %v8675, %v8671
    %v8796 = vpack.c.b16 %v8676, %v8672
    %v8797 = vpack.c.b16 %v8681, %v8677
    %v8798 = vpack.c.b16 %v8682, %v8678
    %v8799 = vpack.c.b16 %v8683, %v8679
    %v8800 = vpack.c.b16 %v8684, %v8680
    %v8801 = vpack.c.b16 %v8689, %v8685
    %v8802 = vpack.c.b16 %v8690, %v8686
    %v8803 = vpack.c.b16 %v8691, %v8687
    %v8804 = vpack.c.b16 %v8692, %v8688
    %v8805 = vpack.c.b16 %v8697, %v8693
    %v8806 = vpack.c.b16 %v8698, %v8694
    %v8807 = vpack.c.b16 %v8699, %v8695
    %v8808 = vpack.c.b16 %v8700, %v8696
    %v8809 = vpack.c.b16 %v8705, %v8701
    %v8810 = vpack.c.b16 %v8706, %v8702
    %v8811 = vpack.c.b16 %v8707, %v8703
    %v8812 = vpack.c.b16 %v8708, %v8704
    %v8813 = vpack.c.b16 %v8713, %v8709
    %v8814 = vpack.c.b16 %v8714, %v8710
    %v8815 = vpack.c.b16 %v8715, %v8711
    %v8816 = vpack.c.b16 %v8716, %v8712
    %v8817 = vpack.c.b16 %v8721, %v8717
    %v8818 = vpack.c.b16 %v8722, %v8718
    %v8819 = vpack.c.b16 %v8723, %v8719
    %v8820 = vpack.c.b16 %v8724, %v8720
    %v8821 = vpack.c.b16 %v8729, %v8725
    %v8822 = vpack.c.b16 %v8730, %v8726
    %v8823 = vpack.c.b16 %v8731, %v8727
    %v8824 = vpack.c.b16 %v8732, %v8728
    %v8825 = vpack.c.b16 %v8737, %v8733
    %v8826 = vpack.c.b16 %v8738, %v8734
    %v8827 = vpack.c.b16 %v8739, %v8735
    %v8828 = vpack.c.b16 %v8740, %v8736
    %v8829 = vpack.c.b16 %v8745, %v8741
    %v8830 = vpack.c.b16 %v8746, %v8742
    %v8831 = vpack.c.b16 %v8747, %v8743
    %v8832 = vpack.c.b16 %v8748, %v8744
    %v8833 = vpack.c.b16 %v8753, %v8749
    %v8834 = vpack.c.b16 %v8754, %v8750
    %v8835 = vpack.c.b16 %v8755, %v8751
    %v8836 = vpack.c.b16 %v8756, %v8752
    %v8837 = vpack.c.b16 %v8761, %v8757
    %v8838 = vpack.c.b16 %v8762, %v8758
    %v8839 = vpack.c.b16 %v8763, %v8759
    %v8840 = vpack.c.b16 %v8764, %v8760
    %v8841 = vpack.c.b16 %v8769, %v8765
    %v8842 = vpack.c.b16 %v8770, %v8766
    %v8843 = vpack.c.b16 %v8771, %v8767
    %v8844 = vpack.c.b16 %v8772, %v8768
    %v8845 = vpack.c.b16 %v8777, %v8773
    %v8846 = vpack.c.b16 %v8778, %v8774
    %v8847 = vpack.c.b16 %v8779, %v8775
    %v8848 = vpack.c.b16 %v8780, %v8776
    %v8849 = vpack.c.b16 %v8785, %v8781
    %v8850 = vpack.c.b16 %v8786, %v8782
    %v8851 = vpack.c.b16 %v8787, %v8783
    %v8852 = vpack.c.b16 %v8788, %v8784
    %8917 = vmatprep.subr.bf16.mxu0 %v8818
    %8918 = vmatpush1.bf16.msra.mxu0 %v8817
    %8919 = vmatprep.subr.bf16.mxu0 %v8814
    %8920 = vmatpush1.bf16.msra.mxu0 %v8813
    %8921 = vmatprep.subr.bf16.mxu0 %v8810
    %8922 = vmatpush1.bf16.msra.mxu0 %v8809
    %8923 = vmatprep.subr.bf16.mxu0 %v8806
    %8924 = vmatpush1.bf16.msra.mxu0 %v8805
    %8925 = vmatprep.subr.bf16.mxu0 %v8802
    %8926 = vmatpush1.bf16.msra.mxu0 %v8801
    %8927 = vmatprep.subr.bf16.mxu0 %v8798
    %8928 = vmatpush1.bf16.msra.mxu0 %v8797
    %8929 = vmatprep.subr.bf16.mxu0 %v8794
    %8930 = vmatpush1.bf16.msra.mxu0 %v8793
    %8931 = vmatprep.subr.bf16.mxu0 %v8790
    %8932 = vmatpush1.bf16.msra.mxu0 %v8789
    %8933 = vmatprep.subr.bf16.mxu0 %v8850
    %8934 = vmatpush2.bf16.msra.mxu0 %v8849
    %8935 = vmatprep.subr.bf16.mxu0 %v8846
    %8936 = vmatpush2.bf16.msra.mxu0 %v8845
    %8937 = vmatprep.subr.bf16.mxu0 %v8842
    %8938 = vmatpush2.bf16.msra.mxu0 %v8841
    %8939 = vmatprep.subr.bf16.mxu0 %v8838
    %8940 = vmatpush2.bf16.msra.mxu0 %v8837
    %8941 = vmatprep.subr.bf16.mxu0 %v8834
    %8942 = vmatpush2.bf16.msra.mxu0 %v8833
    %8943 = vmatprep.subr.bf16.mxu0 %v8830
    %8944 = vmatpush2.bf16.msra.mxu0 %v8829
    %8945 = vmatprep.subr.bf16.mxu0 %v8826
    %8946 = vmatpush2.bf16.msra.mxu0 %v8825
    %8947 = vmatprep.subr.bf16.mxu0 %v8822
    %8948 = vmatpush2.bf16.msra.mxu0 %v8821
    %8949 = vmatprep.mubr.bf16.mxu0 %v8510
    %8950 = vmatmul.mubr.bf16.gmra.mxu0 %v8509
    %v8951 = vpop.f32.mrf.mxu0
    %v8952 = vadd.f32 %v8580, %v8951
    %v8953 = vpop.f32.mrf.mxu0
    %v8954 = vadd.f32 %v8584, %v8953
    %v8955 = vpop.f32.mrf.mxu0
    %v8956 = vpop.f32.mrf.mxu0
    %8957 = vdwg.mxu0
    %8958 = vmatprep.subr.bf16.mxu0 %v8820
    %8959 = vmatpush1.bf16.msra.mxu0 %v8819
    %8960 = vmatprep.subr.bf16.mxu0 %v8816
    %8961 = vmatpush1.bf16.msra.mxu0 %v8815
    %8962 = vmatprep.subr.bf16.mxu0 %v8812
    %8963 = vmatpush1.bf16.msra.mxu0 %v8811
    %8964 = vmatprep.subr.bf16.mxu0 %v8808
    %8965 = vmatpush1.bf16.msra.mxu0 %v8807
    %8966 = vmatprep.subr.bf16.mxu0 %v8804
    %8967 = vmatpush1.bf16.msra.mxu0 %v8803
    %8968 = vmatprep.subr.bf16.mxu0 %v8800
    %8969 = vmatpush1.bf16.msra.mxu0 %v8799
    %8970 = vmatprep.subr.bf16.mxu0 %v8796
    %8971 = vmatpush1.bf16.msra.mxu0 %v8795
    %8972 = vmatprep.subr.bf16.mxu0 %v8792
    %8973 = vmatpush1.bf16.msra.mxu0 %v8791
    %8974 = vmatprep.subr.bf16.mxu0 %v8852
    %8975 = vmatpush2.bf16.msra.mxu0 %v8851
    %8976 = vmatprep.subr.bf16.mxu0 %v8848
    %8977 = vmatpush2.bf16.msra.mxu0 %v8847
    %8978 = vmatprep.subr.bf16.mxu0 %v8844
    %8979 = vmatpush2.bf16.msra.mxu0 %v8843
    %8980 = vmatprep.subr.bf16.mxu0 %v8840
    %8981 = vmatpush2.bf16.msra.mxu0 %v8839
    %8982 = vmatprep.subr.bf16.mxu0 %v8836
    %8983 = vmatpush2.bf16.msra.mxu0 %v8835
    %8984 = vmatprep.subr.bf16.mxu0 %v8832
    %8985 = vmatpush2.bf16.msra.mxu0 %v8831
    %8986 = vmatprep.subr.bf16.mxu0 %v8828
    %8987 = vmatpush2.bf16.msra.mxu0 %v8827
    %8988 = vmatprep.subr.bf16.mxu0 %v8824
    %8989 = vmatpush2.bf16.msra.mxu0 %v8823
    %8990 = vmatprep.mubr.bf16.mxu0 %v8510
    %8991 = vmatmul.mubr.bf16.gmra.mxu0 %v8509
    %v8992 = vpop.f32.mrf.mxu0
    %v8993 = vadd.f32 %v8588, %v8992
    %v8994 = vpop.f32.mrf.mxu0
    %v8995 = vadd.f32 %v8592, %v8994
    %v8996 = vpop.f32.mrf.mxu0
    %v8997 = vpop.f32.mrf.mxu0
    %8998 = vdwg.mxu0
    %v8999 = vxor.u32 %v8952, 2147483648
    %v9000 = vmul.f32 %v8999, 1.442695
    %v9001 = vpow.pop %v9000
    %v9002 = vadd.f32 %v9001, 1.0
    %v9003 = vrcp.pop %v9002
    %v9004 = vmul.f32 1.0, %v9003
    %v9005 = vxor.u32 %v8954, 2147483648
    %v9006 = vmul.f32 %v9005, 1.442695
    %v9007 = vpow.pop %v9006
    %v9008 = vadd.f32 %v9007, 1.0
    %v9009 = vrcp.pop %v9008
    %v9010 = vmul.f32 1.0, %v9009
    %v9011 = vtanh.pop %v8993
    %v9012 = vxor.u32 %v8995, 2147483648
    %v9013 = vmul.f32 %v9012, 1.442695
    %v9014 = vpow.pop %v9013
    %v9015 = vadd.f32 %v9014, 1.0
    %v9016 = vrcp.pop %v9015
    %v9017 = vmul.f32 1.0, %v9016
    %v9018 = vld [vmem:[#allocation3] sm:$0xff]
    %v9019 = vmul.f32 %v9010, %v9018
    %v9020 = vmul.f32 %v9004, %v9011
    %v9021 = vadd.f32 %v9019, %v9020
    %v9022 = vtanh.pop %v9021
    %v9023 = vmul.f32 %v9017, %v9022
    %9024 = vst [vmem:[#allocation3] sm:$0xff] %v9021
    %9025 = vst [vmem:[#allocation2 + $0x8] sm:$0xff] %v9023
    %v9026 = vpack.c.bf16 %v9023, %v9023
    %v9027 = vld [vmem:[#allocation15] sm:$0xf]
    %v9028 = vld [vmem:[#allocation15 + $0x4] sm:$0xf]
    %v9029 = vld [vmem:[#allocation15 + $0x8] sm:$0xf]
    %v9030 = vld [vmem:[#allocation15 + $0xc] sm:$0xf]
    %v9031 = vld [vmem:[#allocation15 + $0x10] sm:$0xf]
    %v9032 = vld [vmem:[#allocation15 + $0x14] sm:$0xf]
    %v9033 = vld [vmem:[#allocation15 + $0x18] sm:$0xf]
    %v9034 = vld [vmem:[#allocation15 + $0x1c] sm:$0xf]
    %v9035 = vld [vmem:[#allocation15 + $0x20] sm:$0xf]
    %v9036 = vld [vmem:[#allocation15 + $0x24] sm:$0xf]
    %v9037 = vld [vmem:[#allocation15 + $0x28] sm:$0xf]
    %v9038 = vld [vmem:[#allocation15 + $0x2c] sm:$0xf]
    %v9039 = vld [vmem:[#allocation15 + $0x30] sm:$0xf]
    %v9040 = vld [vmem:[#allocation15 + $0x34] sm:$0xf]
    %v9041 = vld [vmem:[#allocation15 + $0x38] sm:$0xf]
    %v9042 = vld [vmem:[#allocation15 + $0x3c] sm:$0xf]
    %v9043 = vld [vmem:[%s10] sm:$0x1]
    %v9045 = vlaneseq
    %v9046 = vshrl.u32 %v9045, 7
    %v9047 = vsub.s32 0, %v9046
    %v9048 = vrot.slane %v9043, %v9047
    %v9066 = vunpack.c.l.b16 %v9027
    %v9067 = vunpack.c.l.b16 %v9028
    %v9068 = vunpack.c.l.b16 %v9029
    %v9069 = vunpack.c.l.b16 %v9030
    %v9070 = vunpack.c.l.b16 %v9031
    %v9071 = vunpack.c.l.b16 %v9032
    %v9072 = vunpack.c.l.b16 %v9033
    %v9073 = vunpack.c.l.b16 %v9034
    %v9074 = vunpack.c.l.b16 %v9035
    %v9075 = vunpack.c.l.b16 %v9036
    %v9076 = vunpack.c.l.b16 %v9037
    %v9077 = vunpack.c.l.b16 %v9038
    %v9078 = vunpack.c.l.b16 %v9039
    %v9079 = vunpack.c.l.b16 %v9040
    %v9080 = vunpack.c.l.b16 %v9041
    %v9081 = vunpack.c.l.b16 %v9042
    %v9082 = vpack.c.b16 %v9067, %v9066
    %v9083 = vpack.c.b16 %v9069, %v9068
    %v9084 = vpack.c.b16 %v9071, %v9070
    %v9085 = vpack.c.b16 %v9073, %v9072
    %v9086 = vpack.c.b16 %v9075, %v9074
    %v9087 = vpack.c.b16 %v9077, %v9076
    %v9088 = vpack.c.b16 %v9079, %v9078
    %v9089 = vpack.c.b16 %v9081, %v9080
    %9098 = vmatprep.subr.bf16.mxu0 0
    %9099 = vmatpush1.bf16.msra.mxu0 %v9089
    %9100 = vmatprep.subr.bf16.mxu0 0
    %9101 = vmatpush1.bf16.msra.mxu0 %v9088
    %9102 = vmatprep.subr.bf16.mxu0 0
    %9103 = vmatpush1.bf16.msra.mxu0 %v9087
    %9104 = vmatprep.subr.bf16.mxu0 0
    %9105 = vmatpush1.bf16.msra.mxu0 %v9086
    %9106 = vmatprep.subr.bf16.mxu0 0
    %9107 = vmatpush1.bf16.msra.mxu0 %v9085
    %9108 = vmatprep.subr.bf16.mxu0 0
    %9109 = vmatpush1.bf16.msra.mxu0 %v9084
    %9110 = vmatprep.subr.bf16.mxu0 0
    %9111 = vmatpush1.bf16.msra.mxu0 %v9083
    %9112 = vmatprep.subr.bf16.mxu0 0
    %9113 = vmatpush1.bf16.msra.mxu0 %v9082
    %9114 = vmatprep.subr.bf16.mxu0 0
    %9115 = vmatpush2.bf16.msra.mxu0 0
    %9116 = vmatprep.subr.bf16.mxu0 0
    %9117 = vmatpush2.bf16.msra.mxu0 0
    %9118 = vmatprep.subr.bf16.mxu0 0
    %9119 = vmatpush2.bf16.msra.mxu0 0
    %9120 = vmatprep.subr.bf16.mxu0 0
    %9121 = vmatpush2.bf16.msra.mxu0 0
    %9122 = vmatprep.subr.bf16.mxu0 0
    %9123 = vmatpush2.bf16.msra.mxu0 0
    %9124 = vmatprep.subr.bf16.mxu0 0
    %9125 = vmatpush2.bf16.msra.mxu0 0
    %9126 = vmatprep.subr.bf16.mxu0 0
    %9127 = vmatpush2.bf16.msra.mxu0 0
    %9128 = vmatprep.subr.bf16.mxu0 0
    %9129 = vmatpush2.bf16.msra.mxu0 0
    %9130 = vmatprep.mubr.bf16.mxu0 0
    %9131 = vmatmul.mubr.bf16.gmra.mxu0 %v9026
    %v9132 = vpop.f32.mrf.mxu0
    %v9133 = vadd.f32 %v9048, %v9132
    %v9134 = vpop.f32.mrf.mxu0
    %v9135 = vpop.f32.mrf.mxu0
    %v9136 = vpop.f32.mrf.mxu0
    %9137 = vdwg.mxu0
    %s9138 = scalar_lea.vmem %s11, 40
    %9139 = vst [vmem:[%s9138] sm:$0xff] %v9133
    %9140 = vmax.xlane.f32.xlu0 %v9133
    %v9141 = vpop.xlane.xlu0 %9140
    %vm9142 = vcmp.eq.f32.partialorder %v9133, %v9141
    %v9143 = vsel %vm9142, %v121, 128
    %v9144 = vand.u32 %v9143, 65535
    %v9145 = vshra.s32 %v9143, 16
    %v9146 = vcvt.s32.f32 %v9144
    %v9147 = vcvt.s32.f32 %v9145
    %9148 = vmin.xlane.f32.xlu0 %v9147
    %v9149 = vpop.xlane.xlu0 %9148
    %vm9150 = vcmp.eq.f32.partialorder %v9147, %v9149
    %v9151 = vsel %vm9150, %v9146, inf
    %9152 = vmin.xlane.f32.xlu0 %v9151
    %v9153 = vpop.xlane.xlu0 %9152
    %v9154 = vcvt.f32.s32 %v9153
    %v9155 = vcvt.f32.s32 %v9149
    %v9156 = vshll.u32 %v9155, 16
    %v9157 = vadd.s32 %v9156, %v9154
    %vm9158 = vcmp.eq.s32.totalorder %v121, %v9157
    %v9159 = vsel %vm9158, 1, 0
    %v9160 = vcvt.s32.f32 %v9159
    %s9161 = sld [smem:[#allocation6 + $0x14]]
    %v9162 = vstv %s9161
    %v9163 = vsel %vm122, %v9162, 4294967295
    %s9164 = sld [smem:[#allocation6 + $0x15]]
    %v9165 = vstv %s9164
    %v9166 = vsel %vm126, %v9165, %v9163
    %s9167 = sld [smem:[#allocation6 + $0x16]]
    %v9168 = vstv %s9167
    %v9169 = vsel %vm130, %v9168, %v9166
    %s9170 = sld [smem:[#allocation6 + $0x17]]
    %v9171 = vstv %s9170
    %v9172 = vsel %vm134, %v9171, %v9169
    %vm9173 = vcmp.eq.s32.totalorder %v121, %v9172
    %v9174 = vsel %vm9173, 1, 0
    %v9175 = vcvt.s32.f32 %v9174
    %s9176 = sld [smem:[#allocation7 + $0x4]]
    %p9177 = scmp.ne.s32.totalorder %s9176, 0
    %s9178 = scalar_select %p9177, 1, 0
    %s9179 = scvt.s32.f32 %s9178
    %v9180 = vstv %s9179
    %v9181 = vmul.f32 %v9180, %v9175
    %s9182 = ssub.f32 1.0, %s9179
    %v9183 = vstv %s9182
    %v9184 = vmul.f32 %v9183, %v9160
    %v9185 = vadd.f32 %v9181, %v9184
    %v9186 = vpack.c.bf16 %v9185, %v9185
    %v9187 = vld [vmem:[#allocation12] sm:$0xf]
    %v9188 = vld [vmem:[#allocation12 + $0x4] sm:$0xf]
    %v9189 = vld [vmem:[#allocation12 + $0x8] sm:$0xf]
    %v9190 = vld [vmem:[#allocation12 + $0xc] sm:$0xf]
    %v9191 = vld [vmem:[#allocation12 + $0x10] sm:$0xf]
    %v9192 = vld [vmem:[#allocation12 + $0x14] sm:$0xf]
    %v9193 = vld [vmem:[#allocation12 + $0x18] sm:$0xf]
    %v9194 = vld [vmem:[#allocation12 + $0x1c] sm:$0xf]
    %v9195 = vld [vmem:[#allocation12 + $0x20] sm:$0xf]
    %v9196 = vld [vmem:[#allocation12 + $0x24] sm:$0xf]
    %v9197 = vld [vmem:[#allocation12 + $0x28] sm:$0xf]
    %v9198 = vld [vmem:[#allocation12 + $0x2c] sm:$0xf]
    %v9199 = vld [vmem:[#allocation12 + $0x30] sm:$0xf]
    %v9200 = vld [vmem:[#allocation12 + $0x34] sm:$0xf]
    %v9201 = vld [vmem:[#allocation12 + $0x38] sm:$0xf]
    %v9202 = vld [vmem:[#allocation12 + $0x3c] sm:$0xf]
    %v9219 = vunpack.c.l.b16 %v9187
    %v9220 = vunpack.c.l.b16 %v9188
    %v9221 = vunpack.c.l.b16 %v9189
    %v9222 = vunpack.c.l.b16 %v9190
    %v9223 = vunpack.c.l.b16 %v9191
    %v9224 = vunpack.c.l.b16 %v9192
    %v9225 = vunpack.c.l.b16 %v9193
    %v9226 = vunpack.c.l.b16 %v9194
    %v9227 = vunpack.c.l.b16 %v9195
    %v9228 = vunpack.c.l.b16 %v9196
    %v9229 = vunpack.c.l.b16 %v9197
    %v9230 = vunpack.c.l.b16 %v9198
    %v9231 = vunpack.c.l.b16 %v9199
    %v9232 = vunpack.c.l.b16 %v9200
    %v9233 = vunpack.c.l.b16 %v9201
    %v9234 = vunpack.c.l.b16 %v9202
    %v9235 = vpack.c.b16 %v9220, %v9219
    %v9236 = vpack.c.b16 %v9222, %v9221
    %v9237 = vpack.c.b16 %v9224, %v9223
    %v9238 = vpack.c.b16 %v9226, %v9225
    %v9239 = vpack.c.b16 %v9228, %v9227
    %v9240 = vpack.c.b16 %v9230, %v9229
    %v9241 = vpack.c.b16 %v9232, %v9231
    %v9242 = vpack.c.b16 %v9234, %v9233
    %9251 = vmatprep.subr.bf16.mxu0 0
    %9252 = vmatpush1.bf16.msra.mxu0 %v9242
    %9253 = vmatprep.subr.bf16.mxu0 0
    %9254 = vmatpush1.bf16.msra.mxu0 %v9241
    %9255 = vmatprep.subr.bf16.mxu0 0
    %9256 = vmatpush1.bf16.msra.mxu0 %v9240
    %9257 = vmatprep.subr.bf16.mxu0 0
    %9258 = vmatpush1.bf16.msra.mxu0 %v9239
    %9259 = vmatprep.subr.bf16.mxu0 0
    %9260 = vmatpush1.bf16.msra.mxu0 %v9238
    %9261 = vmatprep.subr.bf16.mxu0 0
    %9262 = vmatpush1.bf16.msra.mxu0 %v9237
    %9263 = vmatprep.subr.bf16.mxu0 0
    %9264 = vmatpush1.bf16.msra.mxu0 %v9236
    %9265 = vmatprep.subr.bf16.mxu0 0
    %9266 = vmatpush1.bf16.msra.mxu0 %v9235
    %9267 = vmatprep.subr.bf16.mxu0 0
    %9268 = vmatpush2.bf16.msra.mxu0 0
    %9269 = vmatprep.subr.bf16.mxu0 0
    %9270 = vmatpush2.bf16.msra.mxu0 0
    %9271 = vmatprep.subr.bf16.mxu0 0
    %9272 = vmatpush2.bf16.msra.mxu0 0
    %9273 = vmatprep.subr.bf16.mxu0 0
    %9274 = vmatpush2.bf16.msra.mxu0 0
    %9275 = vmatprep.subr.bf16.mxu0 0
    %9276 = vmatpush2.bf16.msra.mxu0 0
    %9277 = vmatprep.subr.bf16.mxu0 0
    %9278 = vmatpush2.bf16.msra.mxu0 0
    %9279 = vmatprep.subr.bf16.mxu0 0
    %9280 = vmatpush2.bf16.msra.mxu0 0
    %9281 = vmatprep.subr.bf16.mxu0 0
    %9282 = vmatpush2.bf16.msra.mxu0 0
    %9283 = vmatprep.mubr.bf16.mxu0 0
    %9284 = vmatmul.mubr.bf16.gmra.mxu0 %v9186
    %v9285 = vpop.f32.mrf.mxu0
    %v9286 = vadd.f32 0.0, %v9285
    %v9287 = vpop.f32.mrf.mxu0
    %v9288 = vpop.f32.mrf.mxu0
    %v9289 = vpop.f32.mrf.mxu0
    %9290 = vdwg.mxu0
    %9291 = vst [vmem:[#allocation2] sm:$0xff] %v9286
    %v9292 = vld [vmem:[#allocation2] sm:$0xff]
    %v9293 = vld [vmem:[#allocation2 + $0x8] sm:$0xff]
    %v9294 = vpack.c.bf16 %v9292, %v9292
    %v9295 = vpack.c.bf16 %v9293, %v9293
    %v9296 = vld [vmem:[#allocation13] sm:$0xff]
    %v9297 = vld [vmem:[#allocation13 + $0x8] sm:$0xff]
    %v9298 = vld [vmem:[#allocation13 + $0x10] sm:$0xff]
    %v9299 = vld [vmem:[#allocation13 + $0x18] sm:$0xff]
    %v9300 = vld [vmem:[#allocation13 + $0x20] sm:$0xff]
    %v9301 = vld [vmem:[#allocation13 + $0x28] sm:$0xff]
    %v9302 = vld [vmem:[#allocation13 + $0x30] sm:$0xff]
    %v9303 = vld [vmem:[#allocation13 + $0x38] sm:$0xff]
    %v9304 = vld [vmem:[#allocation13 + $0x40] sm:$0xff]
    %v9305 = vld [vmem:[#allocation13 + $0x48] sm:$0xff]
    %v9306 = vld [vmem:[#allocation13 + $0x50] sm:$0xff]
    %v9307 = vld [vmem:[#allocation13 + $0x58] sm:$0xff]
    %v9308 = vld [vmem:[#allocation13 + $0x60] sm:$0xff]
    %v9309 = vld [vmem:[#allocation13 + $0x68] sm:$0xff]
    %v9310 = vld [vmem:[#allocation13 + $0x70] sm:$0xff]
    %v9311 = vld [vmem:[#allocation13 + $0x78] sm:$0xff]
    %v9312 = vld [vmem:[#allocation13 + $0x80] sm:$0xff]
    %v9313 = vld [vmem:[#allocation13 + $0x88] sm:$0xff]
    %v9314 = vld [vmem:[#allocation13 + $0x90] sm:$0xff]
    %v9315 = vld [vmem:[#allocation13 + $0x98] sm:$0xff]
    %v9316 = vld [vmem:[#allocation13 + $0xa0] sm:$0xff]
    %v9317 = vld [vmem:[#allocation13 + $0xa8] sm:$0xff]
    %v9318 = vld [vmem:[#allocation13 + $0xb0] sm:$0xff]
    %v9319 = vld [vmem:[#allocation13 + $0xb8] sm:$0xff]
    %v9320 = vld [vmem:[#allocation13 + $0xc0] sm:$0xff]
    %v9321 = vld [vmem:[#allocation13 + $0xc8] sm:$0xff]
    %v9322 = vld [vmem:[#allocation13 + $0xd0] sm:$0xff]
    %v9323 = vld [vmem:[#allocation13 + $0xd8] sm:$0xff]
    %v9324 = vld [vmem:[#allocation13 + $0xe0] sm:$0xff]
    %v9325 = vld [vmem:[#allocation13 + $0xe8] sm:$0xff]
    %v9326 = vld [vmem:[#allocation13 + $0xf0] sm:$0xff]
    %v9327 = vld [vmem:[#allocation13 + $0xf8] sm:$0xff]
    %v9328 = vld [vmem:[#allocation13 + $0x100] sm:$0xff]
    %v9329 = vld [vmem:[#allocation13 + $0x108] sm:$0xff]
    %v9330 = vld [vmem:[#allocation13 + $0x110] sm:$0xff]
    %v9331 = vld [vmem:[#allocation13 + $0x118] sm:$0xff]
    %v9332 = vld [vmem:[#allocation13 + $0x120] sm:$0xff]
    %v9333 = vld [vmem:[#allocation13 + $0x128] sm:$0xff]
    %v9334 = vld [vmem:[#allocation13 + $0x130] sm:$0xff]
    %v9335 = vld [vmem:[#allocation13 + $0x138] sm:$0xff]
    %v9336 = vld [vmem:[#allocation13 + $0x140] sm:$0xff]
    %v9337 = vld [vmem:[#allocation13 + $0x148] sm:$0xff]
    %v9338 = vld [vmem:[#allocation13 + $0x150] sm:$0xff]
    %v9339 = vld [vmem:[#allocation13 + $0x158] sm:$0xff]
    %v9340 = vld [vmem:[#allocation13 + $0x160] sm:$0xff]
    %v9341 = vld [vmem:[#allocation13 + $0x168] sm:$0xff]
    %v9342 = vld [vmem:[#allocation13 + $0x170] sm:$0xff]
    %v9343 = vld [vmem:[#allocation13 + $0x178] sm:$0xff]
    %v9344 = vld [vmem:[#allocation13 + $0x180] sm:$0xff]
    %v9345 = vld [vmem:[#allocation13 + $0x188] sm:$0xff]
    %v9346 = vld [vmem:[#allocation13 + $0x190] sm:$0xff]
    %v9347 = vld [vmem:[#allocation13 + $0x198] sm:$0xff]
    %v9348 = vld [vmem:[#allocation13 + $0x1a0] sm:$0xff]
    %v9349 = vld [vmem:[#allocation13 + $0x1a8] sm:$0xff]
    %v9350 = vld [vmem:[#allocation13 + $0x1b0] sm:$0xff]
    %v9351 = vld [vmem:[#allocation13 + $0x1b8] sm:$0xff]
    %v9352 = vld [vmem:[#allocation13 + $0x1c0] sm:$0xff]
    %v9353 = vld [vmem:[#allocation13 + $0x1c8] sm:$0xff]
    %v9354 = vld [vmem:[#allocation13 + $0x1d0] sm:$0xff]
    %v9355 = vld [vmem:[#allocation13 + $0x1d8] sm:$0xff]
    %v9356 = vld [vmem:[#allocation13 + $0x1e0] sm:$0xff]
    %v9357 = vld [vmem:[#allocation13 + $0x1e8] sm:$0xff]
    %v9358 = vld [vmem:[#allocation13 + $0x1f0] sm:$0xff]
    %v9359 = vld [vmem:[#allocation13 + $0x1f8] sm:$0xff]
    %v9360 = vld [vmem:[%s8] sm:$0xf]
    %v9362 = vlaneseq
    %v9363 = vshrl.u32 %v9362, 7
    %v9364 = vsub.s32 0, %v9363
    %v9365 = vrot.slane %v9360, %v9364
    %v9366 = vlaneseq
    %v9367 = vshrl.u32 %v9366, 7
    %v9368 = vsub.s32 1, %v9367
    %v9369 = vrot.slane %v9360, %v9368
    %v9370 = vlaneseq
    %v9371 = vshrl.u32 %v9370, 7
    %v9372 = vsub.s32 2, %v9371
    %v9373 = vrot.slane %v9360, %v9372
    %v9374 = vlaneseq
    %v9375 = vshrl.u32 %v9374, 7
    %v9376 = vsub.s32 3, %v9375
    %v9377 = vrot.slane %v9360, %v9376
    %v9446 = vunpack.c.l.b16 %v9296
    %v9447 = vunpack.c.h.b16 %v9296
    %v9448 = vunpack.c.l.b16 %v9297
    %v9449 = vunpack.c.h.b16 %v9297
    %v9450 = vunpack.c.l.b16 %v9298
    %v9451 = vunpack.c.h.b16 %v9298
    %v9452 = vunpack.c.l.b16 %v9299
    %v9453 = vunpack.c.h.b16 %v9299
    %v9454 = vunpack.c.l.b16 %v9300
    %v9455 = vunpack.c.h.b16 %v9300
    %v9456 = vunpack.c.l.b16 %v9301
    %v9457 = vunpack.c.h.b16 %v9301
    %v9458 = vunpack.c.l.b16 %v9302
    %v9459 = vunpack.c.h.b16 %v9302
    %v9460 = vunpack.c.l.b16 %v9303
    %v9461 = vunpack.c.h.b16 %v9303
    %v9462 = vunpack.c.l.b16 %v9304
    %v9463 = vunpack.c.h.b16 %v9304
    %v9464 = vunpack.c.l.b16 %v9305
    %v9465 = vunpack.c.h.b16 %v9305
    %v9466 = vunpack.c.l.b16 %v9306
    %v9467 = vunpack.c.h.b16 %v9306
    %v9468 = vunpack.c.l.b16 %v9307
    %v9469 = vunpack.c.h.b16 %v9307
    %v9470 = vunpack.c.l.b16 %v9308
    %v9471 = vunpack.c.h.b16 %v9308
    %v9472 = vunpack.c.l.b16 %v9309
    %v9473 = vunpack.c.h.b16 %v9309
    %v9474 = vunpack.c.l.b16 %v9310
    %v9475 = vunpack.c.h.b16 %v9310
    %v9476 = vunpack.c.l.b16 %v9311
    %v9477 = vunpack.c.h.b16 %v9311
    %v9478 = vunpack.c.l.b16 %v9312
    %v9479 = vunpack.c.h.b16 %v9312
    %v9480 = vunpack.c.l.b16 %v9313
    %v9481 = vunpack.c.h.b16 %v9313
    %v9482 = vunpack.c.l.b16 %v9314
    %v9483 = vunpack.c.h.b16 %v9314
    %v9484 = vunpack.c.l.b16 %v9315
    %v9485 = vunpack.c.h.b16 %v9315
    %v9486 = vunpack.c.l.b16 %v9316
    %v9487 = vunpack.c.h.b16 %v9316
    %v9488 = vunpack.c.l.b16 %v9317
    %v9489 = vunpack.c.h.b16 %v9317
    %v9490 = vunpack.c.l.b16 %v9318
    %v9491 = vunpack.c.h.b16 %v9318
    %v9492 = vunpack.c.l.b16 %v9319
    %v9493 = vunpack.c.h.b16 %v9319
    %v9494 = vunpack.c.l.b16 %v9320
    %v9495 = vunpack.c.h.b16 %v9320
    %v9496 = vunpack.c.l.b16 %v9321
    %v9497 = vunpack.c.h.b16 %v9321
    %v9498 = vunpack.c.l.b16 %v9322
    %v9499 = vunpack.c.h.b16 %v9322
    %v9500 = vunpack.c.l.b16 %v9323
    %v9501 = vunpack.c.h.b16 %v9323
    %v9502 = vunpack.c.l.b16 %v9324
    %v9503 = vunpack.c.h.b16 %v9324
    %v9504 = vunpack.c.l.b16 %v9325
    %v9505 = vunpack.c.h.b16 %v9325
    %v9506 = vunpack.c.l.b16 %v9326
    %v9507 = vunpack.c.h.b16 %v9326
    %v9508 = vunpack.c.l.b16 %v9327
    %v9509 = vunpack.c.h.b16 %v9327
    %v9510 = vunpack.c.l.b16 %v9328
    %v9511 = vunpack.c.h.b16 %v9328
    %v9512 = vunpack.c.l.b16 %v9329
    %v9513 = vunpack.c.h.b16 %v9329
    %v9514 = vunpack.c.l.b16 %v9330
    %v9515 = vunpack.c.h.b16 %v9330
    %v9516 = vunpack.c.l.b16 %v9331
    %v9517 = vunpack.c.h.b16 %v9331
    %v9518 = vunpack.c.l.b16 %v9332
    %v9519 = vunpack.c.h.b16 %v9332
    %v9520 = vunpack.c.l.b16 %v9333
    %v9521 = vunpack.c.h.b16 %v9333
    %v9522 = vunpack.c.l.b16 %v9334
    %v9523 = vunpack.c.h.b16 %v9334
    %v9524 = vunpack.c.l.b16 %v9335
    %v9525 = vunpack.c.h.b16 %v9335
    %v9526 = vunpack.c.l.b16 %v9336
    %v9527 = vunpack.c.h.b16 %v9336
    %v9528 = vunpack.c.l.b16 %v9337
    %v9529 = vunpack.c.h.b16 %v9337
    %v9530 = vunpack.c.l.b16 %v9338
    %v9531 = vunpack.c.h.b16 %v9338
    %v9532 = vunpack.c.l.b16 %v9339
    %v9533 = vunpack.c.h.b16 %v9339
    %v9534 = vunpack.c.l.b16 %v9340
    %v9535 = vunpack.c.h.b16 %v9340
    %v9536 = vunpack.c.l.b16 %v9341
    %v9537 = vunpack.c.h.b16 %v9341
    %v9538 = vunpack.c.l.b16 %v9342
    %v9539 = vunpack.c.h.b16 %v9342
    %v9540 = vunpack.c.l.b16 %v9343
    %v9541 = vunpack.c.h.b16 %v9343
    %v9542 = vunpack.c.l.b16 %v9344
    %v9543 = vunpack.c.h.b16 %v9344
    %v9544 = vunpack.c.l.b16 %v9345
    %v9545 = vunpack.c.h.b16 %v9345
    %v9546 = vunpack.c.l.b16 %v9346
    %v9547 = vunpack.c.h.b16 %v9346
    %v9548 = vunpack.c.l.b16 %v9347
    %v9549 = vunpack.c.h.b16 %v9347
    %v9550 = vunpack.c.l.b16 %v9348
    %v9551 = vunpack.c.h.b16 %v9348
    %v9552 = vunpack.c.l.b16 %v9349
    %v9553 = vunpack.c.h.b16 %v9349
    %v9554 = vunpack.c.l.b16 %v9350
    %v9555 = vunpack.c.h.b16 %v9350
    %v9556 = vunpack.c.l.b16 %v9351
    %v9557 = vunpack.c.h.b16 %v9351
    %v9558 = vunpack.c.l.b16 %v9352
    %v9559 = vunpack.c.h.b16 %v9352
    %v9560 = vunpack.c.l.b16 %v9353
    %v9561 = vunpack.c.h.b16 %v9353
    %v9562 = vunpack.c.l.b16 %v9354
    %v9563 = vunpack.c.h.b16 %v9354
    %v9564 = vunpack.c.l.b16 %v9355
    %v9565 = vunpack.c.h.b16 %v9355
    %v9566 = vunpack.c.l.b16 %v9356
    %v9567 = vunpack.c.h.b16 %v9356
    %v9568 = vunpack.c.l.b16 %v9357
    %v9569 = vunpack.c.h.b16 %v9357
    %v9570 = vunpack.c.l.b16 %v9358
    %v9571 = vunpack.c.h.b16 %v9358
    %v9572 = vunpack.c.l.b16 %v9359
    %v9573 = vunpack.c.h.b16 %v9359
    %v9574 = vpack.c.b16 %v9450, %v9446
    %v9575 = vpack.c.b16 %v9451, %v9447
    %v9576 = vpack.c.b16 %v9452, %v9448
    %v9577 = vpack.c.b16 %v9453, %v9449
    %v9578 = vpack.c.b16 %v9458, %v9454
    %v9579 = vpack.c.b16 %v9459, %v9455
    %v9580 = vpack.c.b16 %v9460, %v9456
    %v9581 = vpack.c.b16 %v9461, %v9457
    %v9582 = vpack.c.b16 %v9466, %v9462
    %v9583 = vpack.c.b16 %v9467, %v9463
    %v9584 = vpack.c.b16 %v9468, %v9464
    %v9585 = vpack.c.b16 %v9469, %v9465
    %v9586 = vpack.c.b16 %v9474, %v9470
    %v9587 = vpack.c.b16 %v9475, %v9471
    %v9588 = vpack.c.b16 %v9476, %v9472
    %v9589 = vpack.c.b16 %v9477, %v9473
    %v9590 = vpack.c.b16 %v9482, %v9478
    %v9591 = vpack.c.b16 %v9483, %v9479
    %v9592 = vpack.c.b16 %v9484, %v9480
    %v9593 = vpack.c.b16 %v9485, %v9481
    %v9594 = vpack.c.b16 %v9490, %v9486
    %v9595 = vpack.c.b16 %v9491, %v9487
    %v9596 = vpack.c.b16 %v9492, %v9488
    %v9597 = vpack.c.b16 %v9493, %v9489
    %v9598 = vpack.c.b16 %v9498, %v9494
    %v9599 = vpack.c.b16 %v9499, %v9495
    %v9600 = vpack.c.b16 %v9500, %v9496
    %v9601 = vpack.c.b16 %v9501, %v9497
    %v9602 = vpack.c.b16 %v9506, %v9502
    %v9603 = vpack.c.b16 %v9507, %v9503
    %v9604 = vpack.c.b16 %v9508, %v9504
    %v9605 = vpack.c.b16 %v9509, %v9505
    %v9606 = vpack.c.b16 %v9514, %v9510
    %v9607 = vpack.c.b16 %v9515, %v9511
    %v9608 = vpack.c.b16 %v9516, %v9512
    %v9609 = vpack.c.b16 %v9517, %v9513
    %v9610 = vpack.c.b16 %v9522, %v9518
    %v9611 = vpack.c.b16 %v9523, %v9519
    %v9612 = vpack.c.b16 %v9524, %v9520
    %v9613 = vpack.c.b16 %v9525, %v9521
    %v9614 = vpack.c.b16 %v9530, %v9526
    %v9615 = vpack.c.b16 %v9531, %v9527
    %v9616 = vpack.c.b16 %v9532, %v9528
    %v9617 = vpack.c.b16 %v9533, %v9529
    %v9618 = vpack.c.b16 %v9538, %v9534
    %v9619 = vpack.c.b16 %v9539, %v9535
    %v9620 = vpack.c.b16 %v9540, %v9536
    %v9621 = vpack.c.b16 %v9541, %v9537
    %v9622 = vpack.c.b16 %v9546, %v9542
    %v9623 = vpack.c.b16 %v9547, %v9543
    %v9624 = vpack.c.b16 %v9548, %v9544
    %v9625 = vpack.c.b16 %v9549, %v9545
    %v9626 = vpack.c.b16 %v9554, %v9550
    %v9627 = vpack.c.b16 %v9555, %v9551
    %v9628 = vpack.c.b16 %v9556, %v9552
    %v9629 = vpack.c.b16 %v9557, %v9553
    %v9630 = vpack.c.b16 %v9562, %v9558
    %v9631 = vpack.c.b16 %v9563, %v9559
    %v9632 = vpack.c.b16 %v9564, %v9560
    %v9633 = vpack.c.b16 %v9565, %v9561
    %v9634 = vpack.c.b16 %v9570, %v9566
    %v9635 = vpack.c.b16 %v9571, %v9567
    %v9636 = vpack.c.b16 %v9572, %v9568
    %v9637 = vpack.c.b16 %v9573, %v9569
    %9702 = vmatprep.subr.bf16.mxu0 %v9603
    %9703 = vmatpush1.bf16.msra.mxu0 %v9602
    %9704 = vmatprep.subr.bf16.mxu0 %v9599
    %9705 = vmatpush1.bf16.msra.mxu0 %v9598
    %9706 = vmatprep.subr.bf16.mxu0 %v9595
    %9707 = vmatpush1.bf16.msra.mxu0 %v9594
    %9708 = vmatprep.subr.bf16.mxu0 %v9591
    %9709 = vmatpush1.bf16.msra.mxu0 %v9590
    %9710 = vmatprep.subr.bf16.mxu0 %v9587
    %9711 = vmatpush1.bf16.msra.mxu0 %v9586
    %9712 = vmatprep.subr.bf16.mxu0 %v9583
    %9713 = vmatpush1.bf16.msra.mxu0 %v9582
    %9714 = vmatprep.subr.bf16.mxu0 %v9579
    %9715 = vmatpush1.bf16.msra.mxu0 %v9578
    %9716 = vmatprep.subr.bf16.mxu0 %v9575
    %9717 = vmatpush1.bf16.msra.mxu0 %v9574
    %9718 = vmatprep.subr.bf16.mxu0 %v9635
    %9719 = vmatpush2.bf16.msra.mxu0 %v9634
    %9720 = vmatprep.subr.bf16.mxu0 %v9631
    %9721 = vmatpush2.bf16.msra.mxu0 %v9630
    %9722 = vmatprep.subr.bf16.mxu0 %v9627
    %9723 = vmatpush2.bf16.msra.mxu0 %v9626
    %9724 = vmatprep.subr.bf16.mxu0 %v9623
    %9725 = vmatpush2.bf16.msra.mxu0 %v9622
    %9726 = vmatprep.subr.bf16.mxu0 %v9619
    %9727 = vmatpush2.bf16.msra.mxu0 %v9618
    %9728 = vmatprep.subr.bf16.mxu0 %v9615
    %9729 = vmatpush2.bf16.msra.mxu0 %v9614
    %9730 = vmatprep.subr.bf16.mxu0 %v9611
    %9731 = vmatpush2.bf16.msra.mxu0 %v9610
    %9732 = vmatprep.subr.bf16.mxu0 %v9607
    %9733 = vmatpush2.bf16.msra.mxu0 %v9606
    %9734 = vmatprep.mubr.bf16.mxu0 %v9295
    %9735 = vmatmul.mubr.bf16.gmra.mxu0 %v9294
    %v9736 = vpop.f32.mrf.mxu0
    %v9737 = vadd.f32 %v9365, %v9736
    %v9738 = vpop.f32.mrf.mxu0
    %v9739 = vadd.f32 %v9369, %v9738
    %v9740 = vpop.f32.mrf.mxu0
    %v9741 = vpop.f32.mrf.mxu0
    %9742 = vdwg.mxu0
    %9743 = vmatprep.subr.bf16.mxu0 %v9605
    %9744 = vmatpush1.bf16.msra.mxu0 %v9604
    %9745 = vmatprep.subr.bf16.mxu0 %v9601
    %9746 = vmatpush1.bf16.msra.mxu0 %v9600
    %9747 = vmatprep.subr.bf16.mxu0 %v9597
    %9748 = vmatpush1.bf16.msra.mxu0 %v9596
    %9749 = vmatprep.subr.bf16.mxu0 %v9593
    %9750 = vmatpush1.bf16.msra.mxu0 %v9592
    %9751 = vmatprep.subr.bf16.mxu0 %v9589
    %9752 = vmatpush1.bf16.msra.mxu0 %v9588
    %9753 = vmatprep.subr.bf16.mxu0 %v9585
    %9754 = vmatpush1.bf16.msra.mxu0 %v9584
    %9755 = vmatprep.subr.bf16.mxu0 %v9581
    %9756 = vmatpush1.bf16.msra.mxu0 %v9580
    %9757 = vmatprep.subr.bf16.mxu0 %v9577
    %9758 = vmatpush1.bf16.msra.mxu0 %v9576
    %9759 = vmatprep.subr.bf16.mxu0 %v9637
    %9760 = vmatpush2.bf16.msra.mxu0 %v9636
    %9761 = vmatprep.subr.bf16.mxu0 %v9633
    %9762 = vmatpush2.bf16.msra.mxu0 %v9632
    %9763 = vmatprep.subr.bf16.mxu0 %v9629
    %9764 = vmatpush2.bf16.msra.mxu0 %v9628
    %9765 = vmatprep.subr.bf16.mxu0 %v9625
    %9766 = vmatpush2.bf16.msra.mxu0 %v9624
    %9767 = vmatprep.subr.bf16.mxu0 %v9621
    %9768 = vmatpush2.bf16.msra.mxu0 %v9620
    %9769 = vmatprep.subr.bf16.mxu0 %v9617
    %9770 = vmatpush2.bf16.msra.mxu0 %v9616
    %9771 = vmatprep.subr.bf16.mxu0 %v9613
    %9772 = vmatpush2.bf16.msra.mxu0 %v9612
    %9773 = vmatprep.subr.bf16.mxu0 %v9609
    %9774 = vmatpush2.bf16.msra.mxu0 %v9608
    %9775 = vmatprep.mubr.bf16.mxu0 %v9295
    %9776 = vmatmul.mubr.bf16.gmra.mxu0 %v9294
    %v9777 = vpop.f32.mrf.mxu0
    %v9778 = vadd.f32 %v9373, %v9777
    %v9779 = vpop.f32.mrf.mxu0
    %v9780 = vadd.f32 %v9377, %v9779
    %v9781 = vpop.f32.mrf.mxu0
    %v9782 = vpop.f32.mrf.mxu0
    %9783 = vdwg.mxu0
    %v9784 = vxor.u32 %v9737, 2147483648
    %v9785 = vmul.f32 %v9784, 1.442695
    %v9786 = vpow.pop %v9785
    %v9787 = vadd.f32 %v9786, 1.0
    %v9788 = vrcp.pop %v9787
    %v9789 = vmul.f32 1.0, %v9788
    %v9790 = vxor.u32 %v9739, 2147483648
    %v9791 = vmul.f32 %v9790, 1.442695
    %v9792 = vpow.pop %v9791
    %v9793 = vadd.f32 %v9792, 1.0
    %v9794 = vrcp.pop %v9793
    %v9795 = vmul.f32 1.0, %v9794
    %v9796 = vtanh.pop %v9778
    %v9797 = vxor.u32 %v9780, 2147483648
    %v9798 = vmul.f32 %v9797, 1.442695
    %v9799 = vpow.pop %v9798
    %v9800 = vadd.f32 %v9799, 1.0
    %v9801 = vrcp.pop %v9800
    %v9802 = vmul.f32 1.0, %v9801
    %v9803 = vld [vmem:[#allocation3] sm:$0xff]
    %v9804 = vmul.f32 %v9795, %v9803
    %v9805 = vmul.f32 %v9789, %v9796
    %v9806 = vadd.f32 %v9804, %v9805
    %v9807 = vtanh.pop %v9806
    %v9808 = vmul.f32 %v9802, %v9807
    %9809 = vst [vmem:[#allocation3] sm:$0xff] %v9806
    %9810 = vst [vmem:[#allocation2 + $0x8] sm:$0xff] %v9808
    %v9811 = vpack.c.bf16 %v9808, %v9808
    %v9812 = vld [vmem:[#allocation15] sm:$0xf]
    %v9813 = vld [vmem:[#allocation15 + $0x4] sm:$0xf]
    %v9814 = vld [vmem:[#allocation15 + $0x8] sm:$0xf]
    %v9815 = vld [vmem:[#allocation15 + $0xc] sm:$0xf]
    %v9816 = vld [vmem:[#allocation15 + $0x10] sm:$0xf]
    %v9817 = vld [vmem:[#allocation15 + $0x14] sm:$0xf]
    %v9818 = vld [vmem:[#allocation15 + $0x18] sm:$0xf]
    %v9819 = vld [vmem:[#allocation15 + $0x1c] sm:$0xf]
    %v9820 = vld [vmem:[#allocation15 + $0x20] sm:$0xf]
    %v9821 = vld [vmem:[#allocation15 + $0x24] sm:$0xf]
    %v9822 = vld [vmem:[#allocation15 + $0x28] sm:$0xf]
    %v9823 = vld [vmem:[#allocation15 + $0x2c] sm:$0xf]
    %v9824 = vld [vmem:[#allocation15 + $0x30] sm:$0xf]
    %v9825 = vld [vmem:[#allocation15 + $0x34] sm:$0xf]
    %v9826 = vld [vmem:[#allocation15 + $0x38] sm:$0xf]
    %v9827 = vld [vmem:[#allocation15 + $0x3c] sm:$0xf]
    %v9828 = vld [vmem:[%s10] sm:$0x1]
    %v9830 = vlaneseq
    %v9831 = vshrl.u32 %v9830, 7
    %v9832 = vsub.s32 0, %v9831
    %v9833 = vrot.slane %v9828, %v9832
    %v9851 = vunpack.c.l.b16 %v9812
    %v9852 = vunpack.c.l.b16 %v9813
    %v9853 = vunpack.c.l.b16 %v9814
    %v9854 = vunpack.c.l.b16 %v9815
    %v9855 = vunpack.c.l.b16 %v9816
    %v9856 = vunpack.c.l.b16 %v9817
    %v9857 = vunpack.c.l.b16 %v9818
    %v9858 = vunpack.c.l.b16 %v9819
    %v9859 = vunpack.c.l.b16 %v9820
    %v9860 = vunpack.c.l.b16 %v9821
    %v9861 = vunpack.c.l.b16 %v9822
    %v9862 = vunpack.c.l.b16 %v9823
    %v9863 = vunpack.c.l.b16 %v9824
    %v9864 = vunpack.c.l.b16 %v9825
    %v9865 = vunpack.c.l.b16 %v9826
    %v9866 = vunpack.c.l.b16 %v9827
    %v9867 = vpack.c.b16 %v9852, %v9851
    %v9868 = vpack.c.b16 %v9854, %v9853
    %v9869 = vpack.c.b16 %v9856, %v9855
    %v9870 = vpack.c.b16 %v9858, %v9857
    %v9871 = vpack.c.b16 %v9860, %v9859
    %v9872 = vpack.c.b16 %v9862, %v9861
    %v9873 = vpack.c.b16 %v9864, %v9863
    %v9874 = vpack.c.b16 %v9866, %v9865
    %9883 = vmatprep.subr.bf16.mxu0 0
    %9884 = vmatpush1.bf16.msra.mxu0 %v9874
    %9885 = vmatprep.subr.bf16.mxu0 0
    %9886 = vmatpush1.bf16.msra.mxu0 %v9873
    %9887 = vmatprep.subr.bf16.mxu0 0
    %9888 = vmatpush1.bf16.msra.mxu0 %v9872
    %9889 = vmatprep.subr.bf16.mxu0 0
    %9890 = vmatpush1.bf16.msra.mxu0 %v9871
    %9891 = vmatprep.subr.bf16.mxu0 0
    %9892 = vmatpush1.bf16.msra.mxu0 %v9870
    %9893 = vmatprep.subr.bf16.mxu0 0
    %9894 = vmatpush1.bf16.msra.mxu0 %v9869
    %9895 = vmatprep.subr.bf16.mxu0 0
    %9896 = vmatpush1.bf16.msra.mxu0 %v9868
    %9897 = vmatprep.subr.bf16.mxu0 0
    %9898 = vmatpush1.bf16.msra.mxu0 %v9867
    %9899 = vmatprep.subr.bf16.mxu0 0
    %9900 = vmatpush2.bf16.msra.mxu0 0
    %9901 = vmatprep.subr.bf16.mxu0 0
    %9902 = vmatpush2.bf16.msra.mxu0 0
    %9903 = vmatprep.subr.bf16.mxu0 0
    %9904 = vmatpush2.bf16.msra.mxu0 0
    %9905 = vmatprep.subr.bf16.mxu0 0
    %9906 = vmatpush2.bf16.msra.mxu0 0
    %9907 = vmatprep.subr.bf16.mxu0 0
    %9908 = vmatpush2.bf16.msra.mxu0 0
    %9909 = vmatprep.subr.bf16.mxu0 0
    %9910 = vmatpush2.bf16.msra.mxu0 0
    %9911 = vmatprep.subr.bf16.mxu0 0
    %9912 = vmatpush2.bf16.msra.mxu0 0
    %9913 = vmatprep.subr.bf16.mxu0 0
    %9914 = vmatpush2.bf16.msra.mxu0 0
    %9915 = vmatprep.mubr.bf16.mxu0 0
    %9916 = vmatmul.mubr.bf16.gmra.mxu0 %v9811
    %v9917 = vpop.f32.mrf.mxu0
    %v9918 = vadd.f32 %v9833, %v9917
    %v9919 = vpop.f32.mrf.mxu0
    %v9920 = vpop.f32.mrf.mxu0
    %v9921 = vpop.f32.mrf.mxu0
    %9922 = vdwg.mxu0
    %s9923 = scalar_lea.vmem %s11, 48
    %9924 = vst [vmem:[%s9923] sm:$0xff] %v9918
    %9925 = vmax.xlane.f32.xlu0 %v9918
    %v9926 = vpop.xlane.xlu0 %9925
    %vm9927 = vcmp.eq.f32.partialorder %v9918, %v9926
    %v9928 = vsel %vm9927, %v121, 128
    %v9929 = vand.u32 %v9928, 65535
    %v9930 = vshra.s32 %v9928, 16
    %v9931 = vcvt.s32.f32 %v9929
    %v9932 = vcvt.s32.f32 %v9930
    %9933 = vmin.xlane.f32.xlu0 %v9932
    %v9934 = vpop.xlane.xlu0 %9933
    %vm9935 = vcmp.eq.f32.partialorder %v9932, %v9934
    %v9936 = vsel %vm9935, %v9931, inf
    %9937 = vmin.xlane.f32.xlu0 %v9936
    %v9938 = vpop.xlane.xlu0 %9937
    %v9939 = vcvt.f32.s32 %v9938
    %v9940 = vcvt.f32.s32 %v9934
    %v9941 = vshll.u32 %v9940, 16
    %v9942 = vadd.s32 %v9941, %v9939
    %vm9943 = vcmp.eq.s32.totalorder %v121, %v9942
    %v9944 = vsel %vm9943, 1, 0
    %v9945 = vcvt.s32.f32 %v9944
    %s9946 = sld [smem:[#allocation6 + $0x18]]
    %v9947 = vstv %s9946
    %v9948 = vsel %vm122, %v9947, 4294967295
    %s9949 = sld [smem:[#allocation6 + $0x19]]
    %v9950 = vstv %s9949
    %v9951 = vsel %vm126, %v9950, %v9948
    %s9952 = sld [smem:[#allocation6 + $0x1a]]
    %v9953 = vstv %s9952
    %v9954 = vsel %vm130, %v9953, %v9951
    %s9955 = sld [smem:[#allocation6 + $0x1b]]
    %v9956 = vstv %s9955
    %v9957 = vsel %vm134, %v9956, %v9954
    %vm9958 = vcmp.eq.s32.totalorder %v121, %v9957
    %v9959 = vsel %vm9958, 1, 0
    %v9960 = vcvt.s32.f32 %v9959
    %s9961 = sld [smem:[#allocation7 + $0x5]]
    %p9962 = scmp.ne.s32.totalorder %s9961, 0
    %s9963 = scalar_select %p9962, 1, 0
    %s9964 = scvt.s32.f32 %s9963
    %v9965 = vstv %s9964
    %v9966 = vmul.f32 %v9965, %v9960
    %s9967 = ssub.f32 1.0, %s9964
    %v9968 = vstv %s9967
    %v9969 = vmul.f32 %v9968, %v9945
    %v9970 = vadd.f32 %v9966, %v9969
    %v9971 = vpack.c.bf16 %v9970, %v9970
    %v9972 = vld [vmem:[#allocation12] sm:$0xf]
    %v9973 = vld [vmem:[#allocation12 + $0x4] sm:$0xf]
    %v9974 = vld [vmem:[#allocation12 + $0x8] sm:$0xf]
    %v9975 = vld [vmem:[#allocation12 + $0xc] sm:$0xf]
    %v9976 = vld [vmem:[#allocation12 + $0x10] sm:$0xf]
    %v9977 = vld [vmem:[#allocation12 + $0x14] sm:$0xf]
    %v9978 = vld [vmem:[#allocation12 + $0x18] sm:$0xf]
    %v9979 = vld [vmem:[#allocation12 + $0x1c] sm:$0xf]
    %v9980 = vld [vmem:[#allocation12 + $0x20] sm:$0xf]
    %v9981 = vld [vmem:[#allocation12 + $0x24] sm:$0xf]
    %v9982 = vld [vmem:[#allocation12 + $0x28] sm:$0xf]
    %v9983 = vld [vmem:[#allocation12 + $0x2c] sm:$0xf]
    %v9984 = vld [vmem:[#allocation12 + $0x30] sm:$0xf]
    %v9985 = vld [vmem:[#allocation12 + $0x34] sm:$0xf]
    %v9986 = vld [vmem:[#allocation12 + $0x38] sm:$0xf]
    %v9987 = vld [vmem:[#allocation12 + $0x3c] sm:$0xf]
    %v10004 = vunpack.c.l.b16 %v9972
    %v10005 = vunpack.c.l.b16 %v9973
    %v10006 = vunpack.c.l.b16 %v9974
    %v10007 = vunpack.c.l.b16 %v9975
    %v10008 = vunpack.c.l.b16 %v9976
    %v10009 = vunpack.c.l.b16 %v9977
    %v10010 = vunpack.c.l.b16 %v9978
    %v10011 = vunpack.c.l.b16 %v9979
    %v10012 = vunpack.c.l.b16 %v9980
    %v10013 = vunpack.c.l.b16 %v9981
    %v10014 = vunpack.c.l.b16 %v9982
    %v10015 = vunpack.c.l.b16 %v9983
    %v10016 = vunpack.c.l.b16 %v9984
    %v10017 = vunpack.c.l.b16 %v9985
    %v10018 = vunpack.c.l.b16 %v9986
    %v10019 = vunpack.c.l.b16 %v9987
    %v10020 = vpack.c.b16 %v10005, %v10004
    %v10021 = vpack.c.b16 %v10007, %v10006
    %v10022 = vpack.c.b16 %v10009, %v10008
    %v10023 = vpack.c.b16 %v10011, %v10010
    %v10024 = vpack.c.b16 %v10013, %v10012
    %v10025 = vpack.c.b16 %v10015, %v10014
    %v10026 = vpack.c.b16 %v10017, %v10016
    %v10027 = vpack.c.b16 %v10019, %v10018
    %10036 = vmatprep.subr.bf16.mxu0 0
    %10037 = vmatpush1.bf16.msra.mxu0 %v10027
    %10038 = vmatprep.subr.bf16.mxu0 0
    %10039 = vmatpush1.bf16.msra.mxu0 %v10026
    %10040 = vmatprep.subr.bf16.mxu0 0
    %10041 = vmatpush1.bf16.msra.mxu0 %v10025
    %10042 = vmatprep.subr.bf16.mxu0 0
    %10043 = vmatpush1.bf16.msra.mxu0 %v10024
    %10044 = vmatprep.subr.bf16.mxu0 0
    %10045 = vmatpush1.bf16.msra.mxu0 %v10023
    %10046 = vmatprep.subr.bf16.mxu0 0
    %10047 = vmatpush1.bf16.msra.mxu0 %v10022
    %10048 = vmatprep.subr.bf16.mxu0 0
    %10049 = vmatpush1.bf16.msra.mxu0 %v10021
    %10050 = vmatprep.subr.bf16.mxu0 0
    %10051 = vmatpush1.bf16.msra.mxu0 %v10020
    %10052 = vmatprep.subr.bf16.mxu0 0
    %10053 = vmatpush2.bf16.msra.mxu0 0
    %10054 = vmatprep.subr.bf16.mxu0 0
    %10055 = vmatpush2.bf16.msra.mxu0 0
    %10056 = vmatprep.subr.bf16.mxu0 0
    %10057 = vmatpush2.bf16.msra.mxu0 0
    %10058 = vmatprep.subr.bf16.mxu0 0
    %10059 = vmatpush2.bf16.msra.mxu0 0
    %10060 = vmatprep.subr.bf16.mxu0 0
    %10061 = vmatpush2.bf16.msra.mxu0 0
    %10062 = vmatprep.subr.bf16.mxu0 0
    %10063 = vmatpush2.bf16.msra.mxu0 0
    %10064 = vmatprep.subr.bf16.mxu0 0
    %10065 = vmatpush2.bf16.msra.mxu0 0
    %10066 = vmatprep.subr.bf16.mxu0 0
    %10067 = vmatpush2.bf16.msra.mxu0 0
    %10068 = vmatprep.mubr.bf16.mxu0 0
    %10069 = vmatmul.mubr.bf16.gmra.mxu0 %v9971
    %v10070 = vpop.f32.mrf.mxu0
    %v10071 = vadd.f32 0.0, %v10070
    %v10072 = vpop.f32.mrf.mxu0
    %v10073 = vpop.f32.mrf.mxu0
    %v10074 = vpop.f32.mrf.mxu0
    %10075 = vdwg.mxu0
    %10076 = vst [vmem:[#allocation2] sm:$0xff] %v10071
    %v10077 = vld [vmem:[#allocation2] sm:$0xff]
    %v10078 = vld [vmem:[#allocation2 + $0x8] sm:$0xff]
    %v10079 = vpack.c.bf16 %v10077, %v10077
    %v10080 = vpack.c.bf16 %v10078, %v10078
    %v10081 = vld [vmem:[#allocation13] sm:$0xff]
    %v10082 = vld [vmem:[#allocation13 + $0x8] sm:$0xff]
    %v10083 = vld [vmem:[#allocation13 + $0x10] sm:$0xff]
    %v10084 = vld [vmem:[#allocation13 + $0x18] sm:$0xff]
    %v10085 = vld [vmem:[#allocation13 + $0x20] sm:$0xff]
    %v10086 = vld [vmem:[#allocation13 + $0x28] sm:$0xff]
    %v10087 = vld [vmem:[#allocation13 + $0x30] sm:$0xff]
    %v10088 = vld [vmem:[#allocation13 + $0x38] sm:$0xff]
    %v10089 = vld [vmem:[#allocation13 + $0x40] sm:$0xff]
    %v10090 = vld [vmem:[#allocation13 + $0x48] sm:$0xff]
    %v10091 = vld [vmem:[#allocation13 + $0x50] sm:$0xff]
    %v10092 = vld [vmem:[#allocation13 + $0x58] sm:$0xff]
    %v10093 = vld [vmem:[#allocation13 + $0x60] sm:$0xff]
    %v10094 = vld [vmem:[#allocation13 + $0x68] sm:$0xff]
    %v10095 = vld [vmem:[#allocation13 + $0x70] sm:$0xff]
    %v10096 = vld [vmem:[#allocation13 + $0x78] sm:$0xff]
    %v10097 = vld [vmem:[#allocation13 + $0x80] sm:$0xff]
    %v10098 = vld [vmem:[#allocation13 + $0x88] sm:$0xff]
    %v10099 = vld [vmem:[#allocation13 + $0x90] sm:$0xff]
    %v10100 = vld [vmem:[#allocation13 + $0x98] sm:$0xff]
    %v10101 = vld [vmem:[#allocation13 + $0xa0] sm:$0xff]
    %v10102 = vld [vmem:[#allocation13 + $0xa8] sm:$0xff]
    %v10103 = vld [vmem:[#allocation13 + $0xb0] sm:$0xff]
    %v10104 = vld [vmem:[#allocation13 + $0xb8] sm:$0xff]
    %v10105 = vld [vmem:[#allocation13 + $0xc0] sm:$0xff]
    %v10106 = vld [vmem:[#allocation13 + $0xc8] sm:$0xff]
    %v10107 = vld [vmem:[#allocation13 + $0xd0] sm:$0xff]
    %v10108 = vld [vmem:[#allocation13 + $0xd8] sm:$0xff]
    %v10109 = vld [vmem:[#allocation13 + $0xe0] sm:$0xff]
    %v10110 = vld [vmem:[#allocation13 + $0xe8] sm:$0xff]
    %v10111 = vld [vmem:[#allocation13 + $0xf0] sm:$0xff]
    %v10112 = vld [vmem:[#allocation13 + $0xf8] sm:$0xff]
    %v10113 = vld [vmem:[#allocation13 + $0x100] sm:$0xff]
    %v10114 = vld [vmem:[#allocation13 + $0x108] sm:$0xff]
    %v10115 = vld [vmem:[#allocation13 + $0x110] sm:$0xff]
    %v10116 = vld [vmem:[#allocation13 + $0x118] sm:$0xff]
    %v10117 = vld [vmem:[#allocation13 + $0x120] sm:$0xff]
    %v10118 = vld [vmem:[#allocation13 + $0x128] sm:$0xff]
    %v10119 = vld [vmem:[#allocation13 + $0x130] sm:$0xff]
    %v10120 = vld [vmem:[#allocation13 + $0x138] sm:$0xff]
    %v10121 = vld [vmem:[#allocation13 + $0x140] sm:$0xff]
    %v10122 = vld [vmem:[#allocation13 + $0x148] sm:$0xff]
    %v10123 = vld [vmem:[#allocation13 + $0x150] sm:$0xff]
    %v10124 = vld [vmem:[#allocation13 + $0x158] sm:$0xff]
    %v10125 = vld [vmem:[#allocation13 + $0x160] sm:$0xff]
    %v10126 = vld [vmem:[#allocation13 + $0x168] sm:$0xff]
    %v10127 = vld [vmem:[#allocation13 + $0x170] sm:$0xff]
    %v10128 = vld [vmem:[#allocation13 + $0x178] sm:$0xff]
    %v10129 = vld [vmem:[#allocation13 + $0x180] sm:$0xff]
    %v10130 = vld [vmem:[#allocation13 + $0x188] sm:$0xff]
    %v10131 = vld [vmem:[#allocation13 + $0x190] sm:$0xff]
    %v10132 = vld [vmem:[#allocation13 + $0x198] sm:$0xff]
    %v10133 = vld [vmem:[#allocation13 + $0x1a0] sm:$0xff]
    %v10134 = vld [vmem:[#allocation13 + $0x1a8] sm:$0xff]
    %v10135 = vld [vmem:[#allocation13 + $0x1b0] sm:$0xff]
    %v10136 = vld [vmem:[#allocation13 + $0x1b8] sm:$0xff]
    %v10137 = vld [vmem:[#allocation13 + $0x1c0] sm:$0xff]
    %v10138 = vld [vmem:[#allocation13 + $0x1c8] sm:$0xff]
    %v10139 = vld [vmem:[#allocation13 + $0x1d0] sm:$0xff]
    %v10140 = vld [vmem:[#allocation13 + $0x1d8] sm:$0xff]
    %v10141 = vld [vmem:[#allocation13 + $0x1e0] sm:$0xff]
    %v10142 = vld [vmem:[#allocation13 + $0x1e8] sm:$0xff]
    %v10143 = vld [vmem:[#allocation13 + $0x1f0] sm:$0xff]
    %v10144 = vld [vmem:[#allocation13 + $0x1f8] sm:$0xff]
    %v10145 = vld [vmem:[%s8] sm:$0xf]
    %v10147 = vlaneseq
    %v10148 = vshrl.u32 %v10147, 7
    %v10149 = vsub.s32 0, %v10148
    %v10150 = vrot.slane %v10145, %v10149
    %v10151 = vlaneseq
    %v10152 = vshrl.u32 %v10151, 7
    %v10153 = vsub.s32 1, %v10152
    %v10154 = vrot.slane %v10145, %v10153
    %v10155 = vlaneseq
    %v10156 = vshrl.u32 %v10155, 7
    %v10157 = vsub.s32 2, %v10156
    %v10158 = vrot.slane %v10145, %v10157
    %v10159 = vlaneseq
    %v10160 = vshrl.u32 %v10159, 7
    %v10161 = vsub.s32 3, %v10160
    %v10162 = vrot.slane %v10145, %v10161
    %v10231 = vunpack.c.l.b16 %v10081
    %v10232 = vunpack.c.h.b16 %v10081
    %v10233 = vunpack.c.l.b16 %v10082
    %v10234 = vunpack.c.h.b16 %v10082
    %v10235 = vunpack.c.l.b16 %v10083
    %v10236 = vunpack.c.h.b16 %v10083
    %v10237 = vunpack.c.l.b16 %v10084
    %v10238 = vunpack.c.h.b16 %v10084
    %v10239 = vunpack.c.l.b16 %v10085
    %v10240 = vunpack.c.h.b16 %v10085
    %v10241 = vunpack.c.l.b16 %v10086
    %v10242 = vunpack.c.h.b16 %v10086
    %v10243 = vunpack.c.l.b16 %v10087
    %v10244 = vunpack.c.h.b16 %v10087
    %v10245 = vunpack.c.l.b16 %v10088
    %v10246 = vunpack.c.h.b16 %v10088
    %v10247 = vunpack.c.l.b16 %v10089
    %v10248 = vunpack.c.h.b16 %v10089
    %v10249 = vunpack.c.l.b16 %v10090
    %v10250 = vunpack.c.h.b16 %v10090
    %v10251 = vunpack.c.l.b16 %v10091
    %v10252 = vunpack.c.h.b16 %v10091
    %v10253 = vunpack.c.l.b16 %v10092
    %v10254 = vunpack.c.h.b16 %v10092
    %v10255 = vunpack.c.l.b16 %v10093
    %v10256 = vunpack.c.h.b16 %v10093
    %v10257 = vunpack.c.l.b16 %v10094
    %v10258 = vunpack.c.h.b16 %v10094
    %v10259 = vunpack.c.l.b16 %v10095
    %v10260 = vunpack.c.h.b16 %v10095
    %v10261 = vunpack.c.l.b16 %v10096
    %v10262 = vunpack.c.h.b16 %v10096
    %v10263 = vunpack.c.l.b16 %v10097
    %v10264 = vunpack.c.h.b16 %v10097
    %v10265 = vunpack.c.l.b16 %v10098
    %v10266 = vunpack.c.h.b16 %v10098
    %v10267 = vunpack.c.l.b16 %v10099
    %v10268 = vunpack.c.h.b16 %v10099
    %v10269 = vunpack.c.l.b16 %v10100
    %v10270 = vunpack.c.h.b16 %v10100
    %v10271 = vunpack.c.l.b16 %v10101
    %v10272 = vunpack.c.h.b16 %v10101
    %v10273 = vunpack.c.l.b16 %v10102
    %v10274 = vunpack.c.h.b16 %v10102
    %v10275 = vunpack.c.l.b16 %v10103
    %v10276 = vunpack.c.h.b16 %v10103
    %v10277 = vunpack.c.l.b16 %v10104
    %v10278 = vunpack.c.h.b16 %v10104
    %v10279 = vunpack.c.l.b16 %v10105
    %v10280 = vunpack.c.h.b16 %v10105
    %v10281 = vunpack.c.l.b16 %v10106
    %v10282 = vunpack.c.h.b16 %v10106
    %v10283 = vunpack.c.l.b16 %v10107
    %v10284 = vunpack.c.h.b16 %v10107
    %v10285 = vunpack.c.l.b16 %v10108
    %v10286 = vunpack.c.h.b16 %v10108
    %v10287 = vunpack.c.l.b16 %v10109
    %v10288 = vunpack.c.h.b16 %v10109
    %v10289 = vunpack.c.l.b16 %v10110
    %v10290 = vunpack.c.h.b16 %v10110
    %v10291 = vunpack.c.l.b16 %v10111
    %v10292 = vunpack.c.h.b16 %v10111
    %v10293 = vunpack.c.l.b16 %v10112
    %v10294 = vunpack.c.h.b16 %v10112
    %v10295 = vunpack.c.l.b16 %v10113
    %v10296 = vunpack.c.h.b16 %v10113
    %v10297 = vunpack.c.l.b16 %v10114
    %v10298 = vunpack.c.h.b16 %v10114
    %v10299 = vunpack.c.l.b16 %v10115
    %v10300 = vunpack.c.h.b16 %v10115
    %v10301 = vunpack.c.l.b16 %v10116
    %v10302 = vunpack.c.h.b16 %v10116
    %v10303 = vunpack.c.l.b16 %v10117
    %v10304 = vunpack.c.h.b16 %v10117
    %v10305 = vunpack.c.l.b16 %v10118
    %v10306 = vunpack.c.h.b16 %v10118
    %v10307 = vunpack.c.l.b16 %v10119
    %v10308 = vunpack.c.h.b16 %v10119
    %v10309 = vunpack.c.l.b16 %v10120
    %v10310 = vunpack.c.h.b16 %v10120
    %v10311 = vunpack.c.l.b16 %v10121
    %v10312 = vunpack.c.h.b16 %v10121
    %v10313 = vunpack.c.l.b16 %v10122
    %v10314 = vunpack.c.h.b16 %v10122
    %v10315 = vunpack.c.l.b16 %v10123
    %v10316 = vunpack.c.h.b16 %v10123
    %v10317 = vunpack.c.l.b16 %v10124
    %v10318 = vunpack.c.h.b16 %v10124
    %v10319 = vunpack.c.l.b16 %v10125
    %v10320 = vunpack.c.h.b16 %v10125
    %v10321 = vunpack.c.l.b16 %v10126
    %v10322 = vunpack.c.h.b16 %v10126
    %v10323 = vunpack.c.l.b16 %v10127
    %v10324 = vunpack.c.h.b16 %v10127
    %v10325 = vunpack.c.l.b16 %v10128
    %v10326 = vunpack.c.h.b16 %v10128
    %v10327 = vunpack.c.l.b16 %v10129
    %v10328 = vunpack.c.h.b16 %v10129
    %v10329 = vunpack.c.l.b16 %v10130
    %v10330 = vunpack.c.h.b16 %v10130
    %v10331 = vunpack.c.l.b16 %v10131
    %v10332 = vunpack.c.h.b16 %v10131
    %v10333 = vunpack.c.l.b16 %v10132
    %v10334 = vunpack.c.h.b16 %v10132
    %v10335 = vunpack.c.l.b16 %v10133
    %v10336 = vunpack.c.h.b16 %v10133
    %v10337 = vunpack.c.l.b16 %v10134
    %v10338 = vunpack.c.h.b16 %v10134
    %v10339 = vunpack.c.l.b16 %v10135
    %v10340 = vunpack.c.h.b16 %v10135
    %v10341 = vunpack.c.l.b16 %v10136
    %v10342 = vunpack.c.h.b16 %v10136
    %v10343 = vunpack.c.l.b16 %v10137
    %v10344 = vunpack.c.h.b16 %v10137
    %v10345 = vunpack.c.l.b16 %v10138
    %v10346 = vunpack.c.h.b16 %v10138
    %v10347 = vunpack.c.l.b16 %v10139
    %v10348 = vunpack.c.h.b16 %v10139
    %v10349 = vunpack.c.l.b16 %v10140
    %v10350 = vunpack.c.h.b16 %v10140
    %v10351 = vunpack.c.l.b16 %v10141
    %v10352 = vunpack.c.h.b16 %v10141
    %v10353 = vunpack.c.l.b16 %v10142
    %v10354 = vunpack.c.h.b16 %v10142
    %v10355 = vunpack.c.l.b16 %v10143
    %v10356 = vunpack.c.h.b16 %v10143
    %v10357 = vunpack.c.l.b16 %v10144
    %v10358 = vunpack.c.h.b16 %v10144
    %v10359 = vpack.c.b16 %v10235, %v10231
    %v10360 = vpack.c.b16 %v10236, %v10232
    %v10361 = vpack.c.b16 %v10237, %v10233
    %v10362 = vpack.c.b16 %v10238, %v10234
    %v10363 = vpack.c.b16 %v10243, %v10239
    %v10364 = vpack.c.b16 %v10244, %v10240
    %v10365 = vpack.c.b16 %v10245, %v10241
    %v10366 = vpack.c.b16 %v10246, %v10242
    %v10367 = vpack.c.b16 %v10251, %v10247
    %v10368 = vpack.c.b16 %v10252, %v10248
    %v10369 = vpack.c.b16 %v10253, %v10249
    %v10370 = vpack.c.b16 %v10254, %v10250
    %v10371 = vpack.c.b16 %v10259, %v10255
    %v10372 = vpack.c.b16 %v10260, %v10256
    %v10373 = vpack.c.b16 %v10261, %v10257
    %v10374 = vpack.c.b16 %v10262, %v10258
    %v10375 = vpack.c.b16 %v10267, %v10263
    %v10376 = vpack.c.b16 %v10268, %v10264
    %v10377 = vpack.c.b16 %v10269, %v10265
    %v10378 = vpack.c.b16 %v10270, %v10266
    %v10379 = vpack.c.b16 %v10275, %v10271
    %v10380 = vpack.c.b16 %v10276, %v10272
    %v10381 = vpack.c.b16 %v10277, %v10273
    %v10382 = vpack.c.b16 %v10278, %v10274
    %v10383 = vpack.c.b16 %v10283, %v10279
    %v10384 = vpack.c.b16 %v10284, %v10280
    %v10385 = vpack.c.b16 %v10285, %v10281
    %v10386 = vpack.c.b16 %v10286, %v10282
    %v10387 = vpack.c.b16 %v10291, %v10287
    %v10388 = vpack.c.b16 %v10292, %v10288
    %v10389 = vpack.c.b16 %v10293, %v10289
    %v10390 = vpack.c.b16 %v10294, %v10290
    %v10391 = vpack.c.b16 %v10299, %v10295
    %v10392 = vpack.c.b16 %v10300, %v10296
    %v10393 = vpack.c.b16 %v10301, %v10297
    %v10394 = vpack.c.b16 %v10302, %v10298
    %v10395 = vpack.c.b16 %v10307, %v10303
    %v10396 = vpack.c.b16 %v10308, %v10304
    %v10397 = vpack.c.b16 %v10309, %v10305
    %v10398 = vpack.c.b16 %v10310, %v10306
    %v10399 = vpack.c.b16 %v10315, %v10311
    %v10400 = vpack.c.b16 %v10316, %v10312
    %v10401 = vpack.c.b16 %v10317, %v10313
    %v10402 = vpack.c.b16 %v10318, %v10314
    %v10403 = vpack.c.b16 %v10323, %v10319
    %v10404 = vpack.c.b16 %v10324, %v10320
    %v10405 = vpack.c.b16 %v10325, %v10321
    %v10406 = vpack.c.b16 %v10326, %v10322
    %v10407 = vpack.c.b16 %v10331, %v10327
    %v10408 = vpack.c.b16 %v10332, %v10328
    %v10409 = vpack.c.b16 %v10333, %v10329
    %v10410 = vpack.c.b16 %v10334, %v10330
    %v10411 = vpack.c.b16 %v10339, %v10335
    %v10412 = vpack.c.b16 %v10340, %v10336
    %v10413 = vpack.c.b16 %v10341, %v10337
    %v10414 = vpack.c.b16 %v10342, %v10338
    %v10415 = vpack.c.b16 %v10347, %v10343
    %v10416 = vpack.c.b16 %v10348, %v10344
    %v10417 = vpack.c.b16 %v10349, %v10345
    %v10418 = vpack.c.b16 %v10350, %v10346
    %v10419 = vpack.c.b16 %v10355, %v10351
    %v10420 = vpack.c.b16 %v10356, %v10352
    %v10421 = vpack.c.b16 %v10357, %v10353
    %v10422 = vpack.c.b16 %v10358, %v10354
    %10487 = vmatprep.subr.bf16.mxu0 %v10388
    %10488 = vmatpush1.bf16.msra.mxu0 %v10387
    %10489 = vmatprep.subr.bf16.mxu0 %v10384
    %10490 = vmatpush1.bf16.msra.mxu0 %v10383
    %10491 = vmatprep.subr.bf16.mxu0 %v10380
    %10492 = vmatpush1.bf16.msra.mxu0 %v10379
    %10493 = vmatprep.subr.bf16.mxu0 %v10376
    %10494 = vmatpush1.bf16.msra.mxu0 %v10375
    %10495 = vmatprep.subr.bf16.mxu0 %v10372
    %10496 = vmatpush1.bf16.msra.mxu0 %v10371
    %10497 = vmatprep.subr.bf16.mxu0 %v10368
    %10498 = vmatpush1.bf16.msra.mxu0 %v10367
    %10499 = vmatprep.subr.bf16.mxu0 %v10364
    %10500 = vmatpush1.bf16.msra.mxu0 %v10363
    %10501 = vmatprep.subr.bf16.mxu0 %v10360
    %10502 = vmatpush1.bf16.msra.mxu0 %v10359
    %10503 = vmatprep.subr.bf16.mxu0 %v10420
    %10504 = vmatpush2.bf16.msra.mxu0 %v10419
    %10505 = vmatprep.subr.bf16.mxu0 %v10416
    %10506 = vmatpush2.bf16.msra.mxu0 %v10415
    %10507 = vmatprep.subr.bf16.mxu0 %v10412
    %10508 = vmatpush2.bf16.msra.mxu0 %v10411
    %10509 = vmatprep.subr.bf16.mxu0 %v10408
    %10510 = vmatpush2.bf16.msra.mxu0 %v10407
    %10511 = vmatprep.subr.bf16.mxu0 %v10404
    %10512 = vmatpush2.bf16.msra.mxu0 %v10403
    %10513 = vmatprep.subr.bf16.mxu0 %v10400
    %10514 = vmatpush2.bf16.msra.mxu0 %v10399
    %10515 = vmatprep.subr.bf16.mxu0 %v10396
    %10516 = vmatpush2.bf16.msra.mxu0 %v10395
    %10517 = vmatprep.subr.bf16.mxu0 %v10392
    %10518 = vmatpush2.bf16.msra.mxu0 %v10391
    %10519 = vmatprep.mubr.bf16.mxu0 %v10080
    %10520 = vmatmul.mubr.bf16.gmra.mxu0 %v10079
    %v10521 = vpop.f32.mrf.mxu0
    %v10522 = vadd.f32 %v10150, %v10521
    %v10523 = vpop.f32.mrf.mxu0
    %v10524 = vadd.f32 %v10154, %v10523
    %v10525 = vpop.f32.mrf.mxu0
    %v10526 = vpop.f32.mrf.mxu0
    %10527 = vdwg.mxu0
    %10528 = vmatprep.subr.bf16.mxu0 %v10390
    %10529 = vmatpush1.bf16.msra.mxu0 %v10389
    %10530 = vmatprep.subr.bf16.mxu0 %v10386
    %10531 = vmatpush1.bf16.msra.mxu0 %v10385
    %10532 = vmatprep.subr.bf16.mxu0 %v10382
    %10533 = vmatpush1.bf16.msra.mxu0 %v10381
    %10534 = vmatprep.subr.bf16.mxu0 %v10378
    %10535 = vmatpush1.bf16.msra.mxu0 %v10377
    %10536 = vmatprep.subr.bf16.mxu0 %v10374
    %10537 = vmatpush1.bf16.msra.mxu0 %v10373
    %10538 = vmatprep.subr.bf16.mxu0 %v10370
    %10539 = vmatpush1.bf16.msra.mxu0 %v10369
    %10540 = vmatprep.subr.bf16.mxu0 %v10366
    %10541 = vmatpush1.bf16.msra.mxu0 %v10365
    %10542 = vmatprep.subr.bf16.mxu0 %v10362
    %10543 = vmatpush1.bf16.msra.mxu0 %v10361
    %10544 = vmatprep.subr.bf16.mxu0 %v10422
    %10545 = vmatpush2.bf16.msra.mxu0 %v10421
    %10546 = vmatprep.subr.bf16.mxu0 %v10418
    %10547 = vmatpush2.bf16.msra.mxu0 %v10417
    %10548 = vmatprep.subr.bf16.mxu0 %v10414
    %10549 = vmatpush2.bf16.msra.mxu0 %v10413
    %10550 = vmatprep.subr.bf16.mxu0 %v10410
    %10551 = vmatpush2.bf16.msra.mxu0 %v10409
    %10552 = vmatprep.subr.bf16.mxu0 %v10406
    %10553 = vmatpush2.bf16.msra.mxu0 %v10405
    %10554 = vmatprep.subr.bf16.mxu0 %v10402
    %10555 = vmatpush2.bf16.msra.mxu0 %v10401
    %10556 = vmatprep.subr.bf16.mxu0 %v10398
    %10557 = vmatpush2.bf16.msra.mxu0 %v10397
    %10558 = vmatprep.subr.bf16.mxu0 %v10394
    %10559 = vmatpush2.bf16.msra.mxu0 %v10393
    %10560 = vmatprep.mubr.bf16.mxu0 %v10080
    %10561 = vmatmul.mubr.bf16.gmra.mxu0 %v10079
    %v10562 = vpop.f32.mrf.mxu0
    %v10563 = vadd.f32 %v10158, %v10562
    %v10564 = vpop.f32.mrf.mxu0
    %v10565 = vadd.f32 %v10162, %v10564
    %v10566 = vpop.f32.mrf.mxu0
    %v10567 = vpop.f32.mrf.mxu0
    %10568 = vdwg.mxu0
    %v10569 = vxor.u32 %v10522, 2147483648
    %v10570 = vmul.f32 %v10569, 1.442695
    %v10571 = vpow.pop %v10570
    %v10572 = vadd.f32 %v10571, 1.0
    %v10573 = vrcp.pop %v10572
    %v10574 = vmul.f32 1.0, %v10573
    %v10575 = vxor.u32 %v10524, 2147483648
    %v10576 = vmul.f32 %v10575, 1.442695
    %v10577 = vpow.pop %v10576
    %v10578 = vadd.f32 %v10577, 1.0
    %v10579 = vrcp.pop %v10578
    %v10580 = vmul.f32 1.0, %v10579
    %v10581 = vtanh.pop %v10563
    %v10582 = vxor.u32 %v10565, 2147483648
    %v10583 = vmul.f32 %v10582, 1.442695
    %v10584 = vpow.pop %v10583
    %v10585 = vadd.f32 %v10584, 1.0
    %v10586 = vrcp.pop %v10585
    %v10587 = vmul.f32 1.0, %v10586
    %v10588 = vld [vmem:[#allocation3] sm:$0xff]
    %v10589 = vmul.f32 %v10580, %v10588
    %v10590 = vmul.f32 %v10574, %v10581
    %v10591 = vadd.f32 %v10589, %v10590
    %v10592 = vtanh.pop %v10591
    %v10593 = vmul.f32 %v10587, %v10592
    %10594 = vst [vmem:[#allocation3] sm:$0xff] %v10591
    %10595 = vst [vmem:[#allocation2 + $0x8] sm:$0xff] %v10593
    %v10596 = vpack.c.bf16 %v10593, %v10593
    %v10597 = vld [vmem:[#allocation15] sm:$0xf]
    %v10598 = vld [vmem:[#allocation15 + $0x4] sm:$0xf]
    %v10599 = vld [vmem:[#allocation15 + $0x8] sm:$0xf]
    %v10600 = vld [vmem:[#allocation15 + $0xc] sm:$0xf]
    %v10601 = vld [vmem:[#allocation15 + $0x10] sm:$0xf]
    %v10602 = vld [vmem:[#allocation15 + $0x14] sm:$0xf]
    %v10603 = vld [vmem:[#allocation15 + $0x18] sm:$0xf]
    %v10604 = vld [vmem:[#allocation15 + $0x1c] sm:$0xf]
    %v10605 = vld [vmem:[#allocation15 + $0x20] sm:$0xf]
    %v10606 = vld [vmem:[#allocation15 + $0x24] sm:$0xf]
    %v10607 = vld [vmem:[#allocation15 + $0x28] sm:$0xf]
    %v10608 = vld [vmem:[#allocation15 + $0x2c] sm:$0xf]
    %v10609 = vld [vmem:[#allocation15 + $0x30] sm:$0xf]
    %v10610 = vld [vmem:[#allocation15 + $0x34] sm:$0xf]
    %v10611 = vld [vmem:[#allocation15 + $0x38] sm:$0xf]
    %v10612 = vld [vmem:[#allocation15 + $0x3c] sm:$0xf]
    %v10613 = vld [vmem:[%s10] sm:$0x1]
    %v10615 = vlaneseq
    %v10616 = vshrl.u32 %v10615, 7
    %v10617 = vsub.s32 0, %v10616
    %v10618 = vrot.slane %v10613, %v10617
    %v10636 = vunpack.c.l.b16 %v10597
    %v10637 = vunpack.c.l.b16 %v10598
    %v10638 = vunpack.c.l.b16 %v10599
    %v10639 = vunpack.c.l.b16 %v10600
    %v10640 = vunpack.c.l.b16 %v10601
    %v10641 = vunpack.c.l.b16 %v10602
    %v10642 = vunpack.c.l.b16 %v10603
    %v10643 = vunpack.c.l.b16 %v10604
    %v10644 = vunpack.c.l.b16 %v10605
    %v10645 = vunpack.c.l.b16 %v10606
    %v10646 = vunpack.c.l.b16 %v10607
    %v10647 = vunpack.c.l.b16 %v10608
    %v10648 = vunpack.c.l.b16 %v10609
    %v10649 = vunpack.c.l.b16 %v10610
    %v10650 = vunpack.c.l.b16 %v10611
    %v10651 = vunpack.c.l.b16 %v10612
    %v10652 = vpack.c.b16 %v10637, %v10636
    %v10653 = vpack.c.b16 %v10639, %v10638
    %v10654 = vpack.c.b16 %v10641, %v10640
    %v10655 = vpack.c.b16 %v10643, %v10642
    %v10656 = vpack.c.b16 %v10645, %v10644
    %v10657 = vpack.c.b16 %v10647, %v10646
    %v10658 = vpack.c.b16 %v10649, %v10648
    %v10659 = vpack.c.b16 %v10651, %v10650
    %10668 = vmatprep.subr.bf16.mxu0 0
    %10669 = vmatpush1.bf16.msra.mxu0 %v10659
    %10670 = vmatprep.subr.bf16.mxu0 0
    %10671 = vmatpush1.bf16.msra.mxu0 %v10658
    %10672 = vmatprep.subr.bf16.mxu0 0
    %10673 = vmatpush1.bf16.msra.mxu0 %v10657
    %10674 = vmatprep.subr.bf16.mxu0 0
    %10675 = vmatpush1.bf16.msra.mxu0 %v10656
    %10676 = vmatprep.subr.bf16.mxu0 0
    %10677 = vmatpush1.bf16.msra.mxu0 %v10655
    %10678 = vmatprep.subr.bf16.mxu0 0
    %10679 = vmatpush1.bf16.msra.mxu0 %v10654
    %10680 = vmatprep.subr.bf16.mxu0 0
    %10681 = vmatpush1.bf16.msra.mxu0 %v10653
    %10682 = vmatprep.subr.bf16.mxu0 0
    %10683 = vmatpush1.bf16.msra.mxu0 %v10652
    %10684 = vmatprep.subr.bf16.mxu0 0
    %10685 = vmatpush2.bf16.msra.mxu0 0
    %10686 = vmatprep.subr.bf16.mxu0 0
    %10687 = vmatpush2.bf16.msra.mxu0 0
    %10688 = vmatprep.subr.bf16.mxu0 0
    %10689 = vmatpush2.bf16.msra.mxu0 0
    %10690 = vmatprep.subr.bf16.mxu0 0
    %10691 = vmatpush2.bf16.msra.mxu0 0
    %10692 = vmatprep.subr.bf16.mxu0 0
    %10693 = vmatpush2.bf16.msra.mxu0 0
    %10694 = vmatprep.subr.bf16.mxu0 0
    %10695 = vmatpush2.bf16.msra.mxu0 0
    %10696 = vmatprep.subr.bf16.mxu0 0
    %10697 = vmatpush2.bf16.msra.mxu0 0
    %10698 = vmatprep.subr.bf16.mxu0 0
    %10699 = vmatpush2.bf16.msra.mxu0 0
    %10700 = vmatprep.mubr.bf16.mxu0 0
    %10701 = vmatmul.mubr.bf16.gmra.mxu0 %v10596
    %v10702 = vpop.f32.mrf.mxu0
    %v10703 = vadd.f32 %v10618, %v10702
    %v10704 = vpop.f32.mrf.mxu0
    %v10705 = vpop.f32.mrf.mxu0
    %v10706 = vpop.f32.mrf.mxu0
    %10707 = vdwg.mxu0
    %s10708 = scalar_lea.vmem %s11, 56
    %10709 = vst [vmem:[%s10708] sm:$0xff] %v10703
    // Predicated region
    $region54: #{_seq2seq_jit.1} parent=1 // pred_check
      _
    $region55: #{_seq2seq_jit.1} parent=1 // pred_check_branch
      %10711 = sbr.rel (0) target = $region57
    $region56: #{_seq2seq_jit.1} parent=1 // pred_region
      _
    $region57: #{_seq2seq_jit.1} parent=1 // pred_fallthru
      _
    // Predicated region
    $region58: #{_seq2seq_jit.1} parent=1 // pred_check
      _
    $region59: #{_seq2seq_jit.1} parent=1 // pred_check_branch
      %10713 = sbr.rel (0) target = $region61
    $region60: #{_seq2seq_jit.1} parent=1 // pred_region
      _
    $region61: #{_seq2seq_jit.1} parent=1 // pred_fallthru
      _
    %10714 = vsyncpa [#allocation9], 1
    %10715 = vsyncpa [#allocation11], 1
    %10716 = vsyncpa [#allocation14], 1

</llo_original>
